<compile_context>
chip_gen: v7x
topology: tpu7x:2x2x1
jax: 0.10.0
libtpu: 0.0.40
codegen_flags: <defaults>
</compile_context>

<pallas_src>
import functools

import jax
import jax.numpy as jnp
from jax import lax
from jax.experimental import pallas as pl
from jax.experimental.pallas import tpu as pltpu


def _dpq_kernel(x_ref, cb_ref, cn_ref, codes_ref, stats_ref, *, M, K, n_rows):
    i = pl.program_id(0)

    x = x_ref[...].astype(jnp.float32)            # (tn, D)
    tn = x.shape[0]

    # Row-validity mask for the zero-padded tail tile (static decision).
    needs_mask = (n_rows % tn) != 0
    if needs_mask:
        row = lax.broadcasted_iota(jnp.int32, (tn, 1), 0)
        mask = ((i * tn + row) < n_rows).astype(jnp.float32)

    cn_all = cn_ref[...]                          # (M, K) precomputed ||c||^2

    residual = x
    qsoft = jnp.zeros_like(x)
    qhard = jnp.zeros_like(x)
    soft_sse = jnp.zeros((1, 1), jnp.float32)
    hard_sse = jnp.zeros((1, 1), jnp.float32)
    code_cols = []

    for m in range(M):                            # M is small and static
        cb = cb_ref[m].astype(jnp.float32)        # (K, D)
        cn_m = cn_all[m:m + 1, :]                 # (1, K)

        # dist = 2 r.c^T - ||c||^2   (the -||r||^2 term is constant over K so
        # softmax / argmax are unaffected; it is intentionally dropped).
        cross = lax.dot_general(residual, cb, (((1,), (1,)), ((), ())),
                                preferred_element_type=jnp.float32)   # (tn, K)
        dist = 2.0 * cross - cn_m

        # softmax over K (exp + approx reciprocal both run on the EUP slot)
        mx = jnp.max(dist, axis=-1, keepdims=True)
        e = jnp.exp(dist - mx)
        w = e * pl.reciprocal(jnp.sum(e, axis=-1, keepdims=True), approx=True)

        # hard assignment
        code2d = jnp.argmax(dist, axis=-1, keepdims=True).astype(jnp.int32)   # (tn, 1)
        onehot = (lax.broadcasted_iota(jnp.int32, (tn, K), 1)
                  == code2d).astype(jnp.float32)                              # (tn, K)

        # fused soft + hard reconstruction: one (2*tn, K) x (K, D) MXU call
        stacked = jnp.concatenate([w, onehot], axis=0)                        # (2tn, K)
        sh = lax.dot_general(stacked, cb, (((1,), (0,)), ((), ())),
                             preferred_element_type=jnp.float32)              # (2tn, D)
        soft = sh[:tn]
        hard = sh[tn:]
        if needs_mask:
            soft = soft * mask
            hard = hard * mask

        residual = residual - hard
        qsoft = qsoft + soft
        qhard = qhard + hard
        code_cols.append(code2d.astype(jnp.float32))

        ds = x - qsoft
        dh = x - qhard
        soft_sse = soft_sse + jnp.sum(jnp.sum(ds * ds, axis=1, keepdims=True),
                                      axis=0, keepdims=True)
        hard_sse = hard_sse + jnp.sum(jnp.sum(dh * dh, axis=1, keepdims=True),
                                      axis=0, keepdims=True)

    dj = qsoft - qhard
    joint_sse = jnp.sum(jnp.sum(dj * dj, axis=1, keepdims=True),
                        axis=0, keepdims=True)

    # Lane-dense codes store: pad the (tn, M) code columns to a 128-lane slab,
    # transpose once, and do a single (M, tn) store per tile ((M, N) layout).
    lane_pad = (-M) % 128
    cols = code_cols
    if lane_pad:
        cols = cols + [jnp.zeros((tn, lane_pad), jnp.float32)]
    codes_mat = jnp.concatenate(cols, axis=1)            # (tn, M + lane_pad)
    codes_t = jnp.transpose(codes_mat)                   # (M + lane_pad, tn)
    codes_ref[...] = codes_t[:M, :].astype(jnp.int32)

    # Per-tile SSE stats as one full (8, 128) block -> no cross-grid
    # accumulator, so the grid axis can be 'parallel' (megacore-sharded).
    lane = lax.broadcasted_iota(jnp.int32, (8, 128), 1)
    sub = lax.broadcasted_iota(jnp.int32, (8, 128), 0)
    r0 = sub == 0
    stats_ref[...] = jnp.where(
        r0 & (lane == 0), soft_sse,
        jnp.where(r0 & (lane == 1), hard_sse,
                  jnp.where(r0 & (lane == 2), joint_sse, 0.0)))


def dpq_forward(x, codebook, *, tile_n=256):
    """x: (N, D) f32, codebook: (M, K, D) f32 -> (codes (N, M) i32, loss scalar)."""
    N, D = x.shape
    M, K, _ = codebook.shape
    assert tile_n % 128 == 0, "tile_n must be a multiple of 128 (lane-aligned)"

    n_pad = ((N + tile_n - 1) // tile_n) * tile_n
    num_tiles = n_pad // tile_n
    x32 = x.astype(jnp.float32)
    x_p = jnp.pad(x32, ((0, n_pad - N), (0, 0))) if n_pad != N else x32
    cb32 = codebook.astype(jnp.float32)
    cn = jnp.sum(cb32 * cb32, axis=-1)                   # (M, K), hoisted out of the kernel

    kernel = functools.partial(_dpq_kernel, M=M, K=K, n_rows=N)
    codes_t, stats = pl.pallas_call(
        kernel,
        out_shape=(
            jax.ShapeDtypeStruct((M, n_pad), jnp.int32),
            jax.ShapeDtypeStruct((num_tiles * 8, 128), jnp.float32),
        ),
        grid_spec=pltpu.PrefetchScalarGridSpec(
            num_scalar_prefetch=0,
            grid=(num_tiles,),
            in_specs=[
                pl.BlockSpec((tile_n, D), lambda i: (i, 0)),
                pl.BlockSpec((M, K, D), lambda i: (0, 0, 0)),
                pl.BlockSpec((M, K), lambda i: (0, 0)),
            ],
            out_specs=[
                pl.BlockSpec((M, tile_n), lambda i: (0, i)),
                pl.BlockSpec((8, 128), lambda i: (i, 0)),
            ],
        ),
        compiler_params=pltpu.CompilerParams(
            dimension_semantics=("parallel",),
            vmem_limit_bytes=32 * 1024 * 1024,
        ),
    )(x_p, cb32, cn)

    denom = jnp.float32(N * D)
    totals = jnp.sum(stats, axis=0)                      # (128,); padded slots are zero
    # sum_m mse_m = (sum over tiles/m of SSE) / (N*D)
    loss = (0.1 * totals[0] + totals[1] + 0.1 * totals[2]) / denom
    codes = codes_t[:, :N].T                             # (N, M) int32
    return codes, loss


def dpq_reference(x, codebook):
    """Plain-JAX reference mirroring the PyTorch forward."""
    N, D = x.shape
    M, K, _ = codebook.shape
    residual = x
    qsoft = jnp.zeros_like(x)
    qhard = jnp.zeros_like(x)
    softs, hards, codes = [], [], []
    hp = jax.lax.Precision.HIGHEST
    for m in range(M):
        cb = codebook[m]
        dist = -(jnp.sum(residual ** 2, -1, keepdims=True)
                 + jnp.sum(cb ** 2, -1)[None, :]
                 - 2.0 * jnp.matmul(residual, cb.T, precision=hp))
        soft = jnp.matmul(jax.nn.softmax(dist, -1), cb, precision=hp)
        code = jnp.argmax(dist, -1)
        hard = cb[code]
        residual = residual - hard
        qsoft = qsoft + soft
        qhard = qhard + hard
        codes.append(code.astype(jnp.int32))
        softs.append(jnp.mean((x - qsoft) ** 2))
        hards.append(jnp.mean((x - qhard) ** 2))
    loss = (0.1 * sum(softs) + sum(hards)
            + 0.1 * jnp.mean((qsoft - qhard) ** 2))
    return jnp.stack(codes, -1), loss


if __name__ == "__main__":
    # Small, deterministic problem: M codebooks of K codewords in D dims, N samples.
    # N is deliberately not a multiple of tile_n to exercise multi-tile + masking.
    M, K, D, N = 4, 16, 32, 300
    key = jax.random.PRNGKey(0)
    kx, kc = jax.random.split(key)
    x = jax.random.normal(kx, (N, D), dtype=jnp.float32)
    codebook = jax.random.normal(kc, (M, K, D), dtype=jnp.float32)  # torch.randn(K, D) x M

    codes, loss = jax.block_until_ready(dpq_forward(x, codebook))

    ref_codes, ref_loss = dpq_reference(x, codebook)
    assert codes.shape == (N, M) and codes.dtype == jnp.int32
    assert bool(jnp.all(codes == ref_codes)), "hard code mismatch vs reference"
    assert bool(jnp.allclose(loss, ref_loss, rtol=1e-2, atol=1e-2)), (
        f"loss mismatch: {loss} vs {ref_loss}")

    print("KERNEL_OK")
</pallas_src>

<mosaic_0001>
module attributes {stable_mosaic.version = 11 : i64} {
  func.func @_dpq_kernel(%arg0: i32, %arg1: memref<256x32xf32, #tpu.memory_space<vmem>>, %arg2: memref<4x16x32xf32, #tpu.memory_space<vmem>>, %arg3: memref<4x16xf32, #tpu.memory_space<vmem>>, %arg4: memref<4x256xi32, #tpu.memory_space<vmem>>, %arg5: memref<8x128xf32, #tpu.memory_space<vmem>>) attributes {dimension_semantics = [#tpu.dimension_semantics<parallel>], iteration_bounds = array<i64: 2>, scalar_prefetch = 0 : i64, scratch_operands = 0 : i64, tpu.core_type = #tpu.core_type<tc>, window_params = [{transform_indices = @transform_0, window_bounds = array<i64: 256, 32>}, {pipeline_mode = #tpu.pipeline_mode<synchronous>, transform_indices = @transform_1, window_bounds = array<i64: 4, 16, 32>}, {pipeline_mode = #tpu.pipeline_mode<synchronous>, transform_indices = @transform_2, window_bounds = array<i64: 4, 16>}, {transform_indices = @transform_3, window_bounds = array<i64: 4, 256>}, {transform_indices = @transform_4, window_bounds = array<i64: 8, 128>}]} {
    %c0 = arith.constant 0 : index
    %c0_0 = arith.constant 0 : index
    %0 = vector.load %arg1[%c0, %c0_0] : memref<256x32xf32, #tpu.memory_space<vmem>>, vector<256x32xf32>
    %1 = tpu.iota {dimensions = array<i32: 0>} : vector<256x1xi32>
    %c256_i32 = arith.constant 256 : i32
    %2 = arith.muli %arg0, %c256_i32 : i32
    %3 = vector.broadcast %2 : i32 to vector<256x1xi32>
    %4 = arith.addi %3, %1 : vector<256x1xi32>
    %c300_i32 = arith.constant 300 : i32
    %5 = vector.broadcast %c300_i32 : i32 to vector<256x1xi32>
    %6 = arith.cmpi slt, %4, %5 : vector<256x1xi32>
    %7 = arith.extui %6 : vector<256x1xi1> to vector<256x1xi32>
    %8 = arith.sitofp %7 : vector<256x1xi32> to vector<256x1xf32>
    %c0_1 = arith.constant 0 : index
    %c0_2 = arith.constant 0 : index
    %9 = vector.load %arg3[%c0_1, %c0_2] : memref<4x16xf32, #tpu.memory_space<vmem>>, vector<4x16xf32>
    %cst = arith.constant 0.000000e+00 : f32
    %10 = vector.broadcast %cst : f32 to vector<256x32xf32>
    %cst_3 = arith.constant 0.000000e+00 : f32
    %11 = vector.broadcast %cst_3 : f32 to vector<256x32xf32>
    %cst_4 = arith.constant 0.000000e+00 : f32
    %12 = vector.broadcast %cst_4 : f32 to vector<1x1xf32>
    %cst_5 = arith.constant 0.000000e+00 : f32
    %13 = vector.broadcast %cst_5 : f32 to vector<1x1xf32>
    %c0_6 = arith.constant 0 : index
    %c0_7 = arith.constant 0 : index
    %c0_8 = arith.constant 0 : index
    %14 = vector.load %arg2[%c0_6, %c0_7, %c0_8] : memref<4x16x32xf32, #tpu.memory_space<vmem>>, vector<1x16x32xf32>
    %15 = vector.shape_cast %14 : vector<1x16x32xf32> to vector<16x32xf32>
    %16 = vector.extract_strided_slice %9 {offsets = [0, 0], sizes = [1, 16], strides = [1, 1]} : vector<4x16xf32> to vector<1x16xf32>
    %cst_9 = arith.constant dense<0.000000e+00> : vector<256x16xf32>
    %17 = tpu.matmul %0, %15, %cst_9 {dimension_numbers = #tpu.dot_dimension_numbers<[1], [1], [0], [0], [0, 0, 1, 0], [], []>} : vector<256x32xf32>, vector<16x32xf32>, vector<256x16xf32> -> vector<256x16xf32>
    %cst_10 = arith.constant 2.000000e+00 : f32
    %18 = vector.broadcast %cst_10 : f32 to vector<256x16xf32>
    %19 = arith.mulf %18, %17 : vector<256x16xf32>
    %20 = vector.broadcast %16 : vector<1x16xf32> to vector<256x16xf32>
    %21 = arith.subf %19, %20 : vector<256x16xf32>
    %cst_11 = arith.constant dense<0xFF800000> : vector<256xf32>
    %22 = vector.multi_reduction <maximumf>, %21, %cst_11 [1] : vector<256x16xf32> to vector<256xf32>
    %23 = vector.shape_cast %22 : vector<256xf32> to vector<256x1xf32>
    %24 = vector.broadcast %23 : vector<256x1xf32> to vector<256x16xf32>
    %25 = arith.subf %21, %24 : vector<256x16xf32>
    %26 = math.exp %25 : vector<256x16xf32>
    %cst_12 = arith.constant dense<0.000000e+00> : vector<256xf32>
    %27 = vector.multi_reduction <add>, %26, %cst_12 [1] : vector<256x16xf32> to vector<256xf32>
    %28 = vector.shape_cast %27 : vector<256xf32> to vector<256x1xf32>
    %29 = tpu.reciprocal %28 {approx = true} : vector<256x1xf32> -> vector<256x1xf32>
    %30 = vector.broadcast %29 : vector<256x1xf32> to vector<256x16xf32>
    %31 = arith.mulf %26, %30 : vector<256x16xf32>
    %32 = tpu.reduce_index %21 {axis = 1 : i32, kind = #tpu.reduction_kind<arg_max>} : vector<256x16xf32> -> vector<256xi32>
    %33 = vector.shape_cast %32 : vector<256xi32> to vector<256x1xi32>
    %34 = tpu.iota {dimensions = array<i32: 1>} : vector<256x16xi32>
    %35 = vector.broadcast %33 : vector<256x1xi32> to vector<256x16xi32>
    %36 = arith.cmpi eq, %34, %35 : vector<256x16xi32>
    %37 = arith.extui %36 : vector<256x16xi1> to vector<256x16xi32>
    %38 = arith.sitofp %37 : vector<256x16xi32> to vector<256x16xf32>
    %39 = tpu.concatenate %31, %38 in 0 : vector<256x16xf32>, vector<256x16xf32> -> vector<512x16xf32>
    %cst_13 = arith.constant dense<0.000000e+00> : vector<512x32xf32>
    %40 = tpu.matmul %39, %15, %cst_13 {dimension_numbers = #tpu.dot_dimension_numbers<[1], [0], [0], [1], [0, 0, 1, 1], [], []>} : vector<512x16xf32>, vector<16x32xf32>, vector<512x32xf32> -> vector<512x32xf32>
    %41 = vector.extract_strided_slice %40 {offsets = [0, 0], sizes = [256, 32], strides = [1, 1]} : vector<512x32xf32> to vector<256x32xf32>
    %42 = vector.extract_strided_slice %40 {offsets = [256, 0], sizes = [256, 32], strides = [1, 1]} : vector<512x32xf32> to vector<256x32xf32>
    %43 = vector.broadcast %8 : vector<256x1xf32> to vector<256x32xf32>
    %44 = arith.mulf %41, %43 : vector<256x32xf32>
    %45 = vector.broadcast %8 : vector<256x1xf32> to vector<256x32xf32>
    %46 = arith.mulf %42, %45 : vector<256x32xf32>
    %47 = arith.subf %0, %46 : vector<256x32xf32>
    %48 = arith.addf %10, %44 : vector<256x32xf32>
    %49 = arith.addf %11, %46 : vector<256x32xf32>
    %50 = arith.sitofp %33 : vector<256x1xi32> to vector<256x1xf32>
    %51 = arith.subf %0, %48 : vector<256x32xf32>
    %52 = arith.subf %0, %49 : vector<256x32xf32>
    %53 = arith.mulf %51, %51 : vector<256x32xf32>
    %cst_14 = arith.constant dense<0.000000e+00> : vector<256xf32>
    %54 = vector.multi_reduction <add>, %53, %cst_14 [1] : vector<256x32xf32> to vector<256xf32>
    %55 = vector.shape_cast %54 : vector<256xf32> to vector<256x1xf32>
    %cst_15 = arith.constant dense<0.000000e+00> : vector<1xf32>
    %56 = vector.multi_reduction <add>, %55, %cst_15 [0] : vector<256x1xf32> to vector<1xf32>
    %57 = vector.shape_cast %56 : vector<1xf32> to vector<1x1xf32>
    %58 = arith.addf %12, %57 : vector<1x1xf32>
    %59 = arith.mulf %52, %52 : vector<256x32xf32>
    %cst_16 = arith.constant dense<0.000000e+00> : vector<256xf32>
    %60 = vector.multi_reduction <add>, %59, %cst_16 [1] : vector<256x32xf32> to vector<256xf32>
    %61 = vector.shape_cast %60 : vector<256xf32> to vector<256x1xf32>
    %cst_17 = arith.constant dense<0.000000e+00> : vector<1xf32>
    %62 = vector.multi_reduction <add>, %61, %cst_17 [0] : vector<256x1xf32> to vector<1xf32>
    %63 = vector.shape_cast %62 : vector<1xf32> to vector<1x1xf32>
    %64 = arith.addf %13, %63 : vector<1x1xf32>
    %c1 = arith.constant 1 : index
    %c0_18 = arith.constant 0 : index
    %c0_19 = arith.constant 0 : index
    %65 = vector.load %arg2[%c1, %c0_18, %c0_19] : memref<4x16x32xf32, #tpu.memory_space<vmem>>, vector<1x16x32xf32>
    %66 = vector.shape_cast %65 : vector<1x16x32xf32> to vector<16x32xf32>
    %67 = vector.extract_strided_slice %9 {offsets = [1, 0], sizes = [1, 16], strides = [1, 1]} : vector<4x16xf32> to vector<1x16xf32>
    %cst_20 = arith.constant dense<0.000000e+00> : vector<256x16xf32>
    %68 = tpu.matmul %47, %66, %cst_20 {dimension_numbers = #tpu.dot_dimension_numbers<[1], [1], [0], [0], [0, 0, 1, 0], [], []>} : vector<256x32xf32>, vector<16x32xf32>, vector<256x16xf32> -> vector<256x16xf32>
    %cst_21 = arith.constant 2.000000e+00 : f32
    %69 = vector.broadcast %cst_21 : f32 to vector<256x16xf32>
    %70 = arith.mulf %69, %68 : vector<256x16xf32>
    %71 = vector.broadcast %67 : vector<1x16xf32> to vector<256x16xf32>
    %72 = arith.subf %70, %71 : vector<256x16xf32>
    %cst_22 = arith.constant dense<0xFF800000> : vector<256xf32>
    %73 = vector.multi_reduction <maximumf>, %72, %cst_22 [1] : vector<256x16xf32> to vector<256xf32>
    %74 = vector.shape_cast %73 : vector<256xf32> to vector<256x1xf32>
    %75 = vector.broadcast %74 : vector<256x1xf32> to vector<256x16xf32>
    %76 = arith.subf %72, %75 : vector<256x16xf32>
    %77 = math.exp %76 : vector<256x16xf32>
    %cst_23 = arith.constant dense<0.000000e+00> : vector<256xf32>
    %78 = vector.multi_reduction <add>, %77, %cst_23 [1] : vector<256x16xf32> to vector<256xf32>
    %79 = vector.shape_cast %78 : vector<256xf32> to vector<256x1xf32>
    %80 = tpu.reciprocal %79 {approx = true} : vector<256x1xf32> -> vector<256x1xf32>
    %81 = vector.broadcast %80 : vector<256x1xf32> to vector<256x16xf32>
    %82 = arith.mulf %77, %81 : vector<256x16xf32>
    %83 = tpu.reduce_index %72 {axis = 1 : i32, kind = #tpu.reduction_kind<arg_max>} : vector<256x16xf32> -> vector<256xi32>
    %84 = vector.shape_cast %83 : vector<256xi32> to vector<256x1xi32>
    %85 = tpu.iota {dimensions = array<i32: 1>} : vector<256x16xi32>
    %86 = vector.broadcast %84 : vector<256x1xi32> to vector<256x16xi32>
    %87 = arith.cmpi eq, %85, %86 : vector<256x16xi32>
    %88 = arith.extui %87 : vector<256x16xi1> to vector<256x16xi32>
    %89 = arith.sitofp %88 : vector<256x16xi32> to vector<256x16xf32>
    %90 = tpu.concatenate %82, %89 in 0 : vector<256x16xf32>, vector<256x16xf32> -> vector<512x16xf32>
    %cst_24 = arith.constant dense<0.000000e+00> : vector<512x32xf32>
    %91 = tpu.matmul %90, %66, %cst_24 {dimension_numbers = #tpu.dot_dimension_numbers<[1], [0], [0], [1], [0, 0, 1, 1], [], []>} : vector<512x16xf32>, vector<16x32xf32>, vector<512x32xf32> -> vector<512x32xf32>
    %92 = vector.extract_strided_slice %91 {offsets = [0, 0], sizes = [256, 32], strides = [1, 1]} : vector<512x32xf32> to vector<256x32xf32>
    %93 = vector.extract_strided_slice %91 {offsets = [256, 0], sizes = [256, 32], strides = [1, 1]} : vector<512x32xf32> to vector<256x32xf32>
    %94 = vector.broadcast %8 : vector<256x1xf32> to vector<256x32xf32>
    %95 = arith.mulf %92, %94 : vector<256x32xf32>
    %96 = vector.broadcast %8 : vector<256x1xf32> to vector<256x32xf32>
    %97 = arith.mulf %93, %96 : vector<256x32xf32>
    %98 = arith.subf %47, %97 : vector<256x32xf32>
    %99 = arith.addf %48, %95 : vector<256x32xf32>
    %100 = arith.addf %49, %97 : vector<256x32xf32>
    %101 = arith.sitofp %84 : vector<256x1xi32> to vector<256x1xf32>
    %102 = arith.subf %0, %99 : vector<256x32xf32>
    %103 = arith.subf %0, %100 : vector<256x32xf32>
    %104 = arith.mulf %102, %102 : vector<256x32xf32>
    %cst_25 = arith.constant dense<0.000000e+00> : vector<256xf32>
    %105 = vector.multi_reduction <add>, %104, %cst_25 [1] : vector<256x32xf32> to vector<256xf32>
    %106 = vector.shape_cast %105 : vector<256xf32> to vector<256x1xf32>
    %cst_26 = arith.constant dense<0.000000e+00> : vector<1xf32>
    %107 = vector.multi_reduction <add>, %106, %cst_26 [0] : vector<256x1xf32> to vector<1xf32>
    %108 = vector.shape_cast %107 : vector<1xf32> to vector<1x1xf32>
    %109 = arith.addf %58, %108 : vector<1x1xf32>
    %110 = arith.mulf %103, %103 : vector<256x32xf32>
    %cst_27 = arith.constant dense<0.000000e+00> : vector<256xf32>
    %111 = vector.multi_reduction <add>, %110, %cst_27 [1] : vector<256x32xf32> to vector<256xf32>
    %112 = vector.shape_cast %111 : vector<256xf32> to vector<256x1xf32>
    %cst_28 = arith.constant dense<0.000000e+00> : vector<1xf32>
    %113 = vector.multi_reduction <add>, %112, %cst_28 [0] : vector<256x1xf32> to vector<1xf32>
    %114 = vector.shape_cast %113 : vector<1xf32> to vector<1x1xf32>
    %115 = arith.addf %64, %114 : vector<1x1xf32>
    %c2 = arith.constant 2 : index
    %c0_29 = arith.constant 0 : index
    %c0_30 = arith.constant 0 : index
    %116 = vector.load %arg2[%c2, %c0_29, %c0_30] : memref<4x16x32xf32, #tpu.memory_space<vmem>>, vector<1x16x32xf32>
    %117 = vector.shape_cast %116 : vector<1x16x32xf32> to vector<16x32xf32>
    %118 = vector.extract_strided_slice %9 {offsets = [2, 0], sizes = [1, 16], strides = [1, 1]} : vector<4x16xf32> to vector<1x16xf32>
    %cst_31 = arith.constant dense<0.000000e+00> : vector<256x16xf32>
    %119 = tpu.matmul %98, %117, %cst_31 {dimension_numbers = #tpu.dot_dimension_numbers<[1], [1], [0], [0], [0, 0, 1, 0], [], []>} : vector<256x32xf32>, vector<16x32xf32>, vector<256x16xf32> -> vector<256x16xf32>
    %cst_32 = arith.constant 2.000000e+00 : f32
    %120 = vector.broadcast %cst_32 : f32 to vector<256x16xf32>
    %121 = arith.mulf %120, %119 : vector<256x16xf32>
    %122 = vector.broadcast %118 : vector<1x16xf32> to vector<256x16xf32>
    %123 = arith.subf %121, %122 : vector<256x16xf32>
    %cst_33 = arith.constant dense<0xFF800000> : vector<256xf32>
    %124 = vector.multi_reduction <maximumf>, %123, %cst_33 [1] : vector<256x16xf32> to vector<256xf32>
    %125 = vector.shape_cast %124 : vector<256xf32> to vector<256x1xf32>
    %126 = vector.broadcast %125 : vector<256x1xf32> to vector<256x16xf32>
    %127 = arith.subf %123, %126 : vector<256x16xf32>
    %128 = math.exp %127 : vector<256x16xf32>
    %cst_34 = arith.constant dense<0.000000e+00> : vector<256xf32>
    %129 = vector.multi_reduction <add>, %128, %cst_34 [1] : vector<256x16xf32> to vector<256xf32>
    %130 = vector.shape_cast %129 : vector<256xf32> to vector<256x1xf32>
    %131 = tpu.reciprocal %130 {approx = true} : vector<256x1xf32> -> vector<256x1xf32>
    %132 = vector.broadcast %131 : vector<256x1xf32> to vector<256x16xf32>
    %133 = arith.mulf %128, %132 : vector<256x16xf32>
    %134 = tpu.reduce_index %123 {axis = 1 : i32, kind = #tpu.reduction_kind<arg_max>} : vector<256x16xf32> -> vector<256xi32>
    %135 = vector.shape_cast %134 : vector<256xi32> to vector<256x1xi32>
    %136 = tpu.iota {dimensions = array<i32: 1>} : vector<256x16xi32>
    %137 = vector.broadcast %135 : vector<256x1xi32> to vector<256x16xi32>
    %138 = arith.cmpi eq, %136, %137 : vector<256x16xi32>
    %139 = arith.extui %138 : vector<256x16xi1> to vector<256x16xi32>
    %140 = arith.sitofp %139 : vector<256x16xi32> to vector<256x16xf32>
    %141 = tpu.concatenate %133, %140 in 0 : vector<256x16xf32>, vector<256x16xf32> -> vector<512x16xf32>
    %cst_35 = arith.constant dense<0.000000e+00> : vector<512x32xf32>
    %142 = tpu.matmul %141, %117, %cst_35 {dimension_numbers = #tpu.dot_dimension_numbers<[1], [0], [0], [1], [0, 0, 1, 1], [], []>} : vector<512x16xf32>, vector<16x32xf32>, vector<512x32xf32> -> vector<512x32xf32>
    %143 = vector.extract_strided_slice %142 {offsets = [0, 0], sizes = [256, 32], strides = [1, 1]} : vector<512x32xf32> to vector<256x32xf32>
    %144 = vector.extract_strided_slice %142 {offsets = [256, 0], sizes = [256, 32], strides = [1, 1]} : vector<512x32xf32> to vector<256x32xf32>
    %145 = vector.broadcast %8 : vector<256x1xf32> to vector<256x32xf32>
    %146 = arith.mulf %143, %145 : vector<256x32xf32>
    %147 = vector.broadcast %8 : vector<256x1xf32> to vector<256x32xf32>
    %148 = arith.mulf %144, %147 : vector<256x32xf32>
    %149 = arith.subf %98, %148 : vector<256x32xf32>
    %150 = arith.addf %99, %146 : vector<256x32xf32>
    %151 = arith.addf %100, %148 : vector<256x32xf32>
    %152 = arith.sitofp %135 : vector<256x1xi32> to vector<256x1xf32>
    %153 = arith.subf %0, %150 : vector<256x32xf32>
    %154 = arith.subf %0, %151 : vector<256x32xf32>
    %155 = arith.mulf %153, %153 : vector<256x32xf32>
    %cst_36 = arith.constant dense<0.000000e+00> : vector<256xf32>
    %156 = vector.multi_reduction <add>, %155, %cst_36 [1] : vector<256x32xf32> to vector<256xf32>
    %157 = vector.shape_cast %156 : vector<256xf32> to vector<256x1xf32>
    %cst_37 = arith.constant dense<0.000000e+00> : vector<1xf32>
    %158 = vector.multi_reduction <add>, %157, %cst_37 [0] : vector<256x1xf32> to vector<1xf32>
    %159 = vector.shape_cast %158 : vector<1xf32> to vector<1x1xf32>
    %160 = arith.addf %109, %159 : vector<1x1xf32>
    %161 = arith.mulf %154, %154 : vector<256x32xf32>
    %cst_38 = arith.constant dense<0.000000e+00> : vector<256xf32>
    %162 = vector.multi_reduction <add>, %161, %cst_38 [1] : vector<256x32xf32> to vector<256xf32>
    %163 = vector.shape_cast %162 : vector<256xf32> to vector<256x1xf32>
    %cst_39 = arith.constant dense<0.000000e+00> : vector<1xf32>
    %164 = vector.multi_reduction <add>, %163, %cst_39 [0] : vector<256x1xf32> to vector<1xf32>
    %165 = vector.shape_cast %164 : vector<1xf32> to vector<1x1xf32>
    %166 = arith.addf %115, %165 : vector<1x1xf32>
    %c3 = arith.constant 3 : index
    %c0_40 = arith.constant 0 : index
    %c0_41 = arith.constant 0 : index
    %167 = vector.load %arg2[%c3, %c0_40, %c0_41] : memref<4x16x32xf32, #tpu.memory_space<vmem>>, vector<1x16x32xf32>
    %168 = vector.shape_cast %167 : vector<1x16x32xf32> to vector<16x32xf32>
    %169 = vector.extract_strided_slice %9 {offsets = [3, 0], sizes = [1, 16], strides = [1, 1]} : vector<4x16xf32> to vector<1x16xf32>
    %cst_42 = arith.constant dense<0.000000e+00> : vector<256x16xf32>
    %170 = tpu.matmul %149, %168, %cst_42 {dimension_numbers = #tpu.dot_dimension_numbers<[1], [1], [0], [0], [0, 0, 1, 0], [], []>} : vector<256x32xf32>, vector<16x32xf32>, vector<256x16xf32> -> vector<256x16xf32>
    %cst_43 = arith.constant 2.000000e+00 : f32
    %171 = vector.broadcast %cst_43 : f32 to vector<256x16xf32>
    %172 = arith.mulf %171, %170 : vector<256x16xf32>
    %173 = vector.broadcast %169 : vector<1x16xf32> to vector<256x16xf32>
    %174 = arith.subf %172, %173 : vector<256x16xf32>
    %cst_44 = arith.constant dense<0xFF800000> : vector<256xf32>
    %175 = vector.multi_reduction <maximumf>, %174, %cst_44 [1] : vector<256x16xf32> to vector<256xf32>
    %176 = vector.shape_cast %175 : vector<256xf32> to vector<256x1xf32>
    %177 = vector.broadcast %176 : vector<256x1xf32> to vector<256x16xf32>
    %178 = arith.subf %174, %177 : vector<256x16xf32>
    %179 = math.exp %178 : vector<256x16xf32>
    %cst_45 = arith.constant dense<0.000000e+00> : vector<256xf32>
    %180 = vector.multi_reduction <add>, %179, %cst_45 [1] : vector<256x16xf32> to vector<256xf32>
    %181 = vector.shape_cast %180 : vector<256xf32> to vector<256x1xf32>
    %182 = tpu.reciprocal %181 {approx = true} : vector<256x1xf32> -> vector<256x1xf32>
    %183 = vector.broadcast %182 : vector<256x1xf32> to vector<256x16xf32>
    %184 = arith.mulf %179, %183 : vector<256x16xf32>
    %185 = tpu.reduce_index %174 {axis = 1 : i32, kind = #tpu.reduction_kind<arg_max>} : vector<256x16xf32> -> vector<256xi32>
    %186 = vector.shape_cast %185 : vector<256xi32> to vector<256x1xi32>
    %187 = tpu.iota {dimensions = array<i32: 1>} : vector<256x16xi32>
    %188 = vector.broadcast %186 : vector<256x1xi32> to vector<256x16xi32>
    %189 = arith.cmpi eq, %187, %188 : vector<256x16xi32>
    %190 = arith.extui %189 : vector<256x16xi1> to vector<256x16xi32>
    %191 = arith.sitofp %190 : vector<256x16xi32> to vector<256x16xf32>
    %192 = tpu.concatenate %184, %191 in 0 : vector<256x16xf32>, vector<256x16xf32> -> vector<512x16xf32>
    %cst_46 = arith.constant dense<0.000000e+00> : vector<512x32xf32>
    %193 = tpu.matmul %192, %168, %cst_46 {dimension_numbers = #tpu.dot_dimension_numbers<[1], [0], [0], [1], [0, 0, 1, 1], [], []>} : vector<512x16xf32>, vector<16x32xf32>, vector<512x32xf32> -> vector<512x32xf32>
    %194 = vector.extract_strided_slice %193 {offsets = [0, 0], sizes = [256, 32], strides = [1, 1]} : vector<512x32xf32> to vector<256x32xf32>
    %195 = vector.extract_strided_slice %193 {offsets = [256, 0], sizes = [256, 32], strides = [1, 1]} : vector<512x32xf32> to vector<256x32xf32>
    %196 = vector.broadcast %8 : vector<256x1xf32> to vector<256x32xf32>
    %197 = arith.mulf %194, %196 : vector<256x32xf32>
    %198 = vector.broadcast %8 : vector<256x1xf32> to vector<256x32xf32>
    %199 = arith.mulf %195, %198 : vector<256x32xf32>
    %200 = arith.addf %150, %197 : vector<256x32xf32>
    %201 = arith.addf %151, %199 : vector<256x32xf32>
    %202 = arith.sitofp %186 : vector<256x1xi32> to vector<256x1xf32>
    %203 = arith.subf %0, %200 : vector<256x32xf32>
    %204 = arith.subf %0, %201 : vector<256x32xf32>
    %205 = arith.mulf %203, %203 : vector<256x32xf32>
    %cst_47 = arith.constant dense<0.000000e+00> : vector<256xf32>
    %206 = vector.multi_reduction <add>, %205, %cst_47 [1] : vector<256x32xf32> to vector<256xf32>
    %207 = vector.shape_cast %206 : vector<256xf32> to vector<256x1xf32>
    %cst_48 = arith.constant dense<0.000000e+00> : vector<1xf32>
    %208 = vector.multi_reduction <add>, %207, %cst_48 [0] : vector<256x1xf32> to vector<1xf32>
    %209 = vector.shape_cast %208 : vector<1xf32> to vector<1x1xf32>
    %210 = arith.addf %160, %209 : vector<1x1xf32>
    %211 = arith.mulf %204, %204 : vector<256x32xf32>
    %cst_49 = arith.constant dense<0.000000e+00> : vector<256xf32>
    %212 = vector.multi_reduction <add>, %211, %cst_49 [1] : vector<256x32xf32> to vector<256xf32>
    %213 = vector.shape_cast %212 : vector<256xf32> to vector<256x1xf32>
    %cst_50 = arith.constant dense<0.000000e+00> : vector<1xf32>
    %214 = vector.multi_reduction <add>, %213, %cst_50 [0] : vector<256x1xf32> to vector<1xf32>
    %215 = vector.shape_cast %214 : vector<1xf32> to vector<1x1xf32>
    %216 = arith.addf %166, %215 : vector<1x1xf32>
    %217 = arith.subf %200, %201 : vector<256x32xf32>
    %218 = arith.mulf %217, %217 : vector<256x32xf32>
    %cst_51 = arith.constant dense<0.000000e+00> : vector<256xf32>
    %219 = vector.multi_reduction <add>, %218, %cst_51 [1] : vector<256x32xf32> to vector<256xf32>
    %220 = vector.shape_cast %219 : vector<256xf32> to vector<256x1xf32>
    %cst_52 = arith.constant dense<0.000000e+00> : vector<1xf32>
    %221 = vector.multi_reduction <add>, %220, %cst_52 [0] : vector<256x1xf32> to vector<1xf32>
    %222 = vector.shape_cast %221 : vector<1xf32> to vector<1x1xf32>
    %cst_53 = arith.constant 0.000000e+00 : f32
    %223 = vector.broadcast %cst_53 : f32 to vector<256x124xf32>
    %224 = tpu.concatenate %50, %101, %152, %202, %223 in 1 : vector<256x1xf32>, vector<256x1xf32>, vector<256x1xf32>, vector<256x1xf32>, vector<256x124xf32> -> vector<256x128xf32>
    %225 = tpu.transpose %224, [1, 0] : vector<256x128xf32> -> vector<128x256xf32>
    %226 = vector.extract_strided_slice %225 {offsets = [0, 0], sizes = [4, 256], strides = [1, 1]} : vector<128x256xf32> to vector<4x256xf32>
    %227 = arith.fptosi %226 : vector<4x256xf32> to vector<4x256xi32>
    %c0_54 = arith.constant 0 : index
    %c0_55 = arith.constant 0 : index
    %228 = vector.load %arg4[%c0_54, %c0_55] : memref<4x256xi32, #tpu.memory_space<vmem>>, vector<4x256xi32>
    tpu.vector_store %arg4[%c0_54, %c0_55], %227 {strides = array<i32>} : memref<4x256xi32, #tpu.memory_space<vmem>>, vector<4x256xi32>,
    %229 = tpu.iota {dimensions = array<i32: 1>} : vector<8x128xi32>
    %230 = tpu.iota {dimensions = array<i32: 0>} : vector<8x128xi32>
    %c0_i32 = arith.constant 0 : i32
    %231 = vector.broadcast %c0_i32 : i32 to vector<8x128xi32>
    %232 = arith.cmpi eq, %230, %231 : vector<8x128xi32>
    %c0_i32_56 = arith.constant 0 : i32
    %233 = vector.broadcast %c0_i32_56 : i32 to vector<8x128xi32>
    %234 = arith.cmpi eq, %229, %233 : vector<8x128xi32>
    %235 = arith.andi %232, %234 : vector<8x128xi1>
    %c1_i32 = arith.constant 1 : i32
    %236 = vector.broadcast %c1_i32 : i32 to vector<8x128xi32>
    %237 = arith.cmpi eq, %229, %236 : vector<8x128xi32>
    %238 = arith.andi %232, %237 : vector<8x128xi1>
    %c2_i32 = arith.constant 2 : i32
    %239 = vector.broadcast %c2_i32 : i32 to vector<8x128xi32>
    %240 = arith.cmpi eq, %229, %239 : vector<8x128xi32>
    %241 = arith.andi %232, %240 : vector<8x128xi1>
    %cst_57 = arith.constant 0.000000e+00 : f32
    %242 = vector.shape_cast %222 : vector<1x1xf32> to vector<1x1xf32>
    %243 = vector.broadcast %242 : vector<1x1xf32> to vector<8x128xf32>
    %244 = vector.broadcast %cst_57 : f32 to vector<8x128xf32>
    %245 = arith.select %241, %243, %244 : vector<8x128xi1>, vector<8x128xf32>
    %246 = vector.shape_cast %216 : vector<1x1xf32> to vector<1x1xf32>
    %247 = vector.broadcast %246 : vector<1x1xf32> to vector<8x128xf32>
    %248 = arith.select %238, %247, %245 : vector<8x128xi1>, vector<8x128xf32>
    %249 = vector.shape_cast %210 : vector<1x1xf32> to vector<1x1xf32>
    %250 = vector.broadcast %249 : vector<1x1xf32> to vector<8x128xf32>
    %251 = arith.select %235, %250, %248 : vector<8x128xi1>, vector<8x128xf32>
    %c0_58 = arith.constant 0 : index
    %c0_59 = arith.constant 0 : index
    %252 = vector.load %arg5[%c0_58, %c0_59] : memref<8x128xf32, #tpu.memory_space<vmem>>, vector<8x128xf32>
    tpu.vector_store %arg5[%c0_58, %c0_59], %251 {strides = array<i32>} : memref<8x128xf32, #tpu.memory_space<vmem>>, vector<8x128xf32>,
    return
  }
  func.func @transform_0(%arg0: i32) -> (i32, i32) {
    %c0_i32 = arith.constant 0 : i32
    %c0_i32_0 = arith.constant 0 : i32
    return %arg0, %c0_i32 : i32, i32
  }
  func.func @transform_1(%arg0: i32) -> (i32, i32, i32) {
    %c0_i32 = arith.constant 0 : i32
    %c0_i32_0 = arith.constant 0 : i32
    %c0_i32_1 = arith.constant 0 : i32
    %c0_i32_2 = arith.constant 0 : i32
    return %c0_i32, %c0_i32_0, %c0_i32_1 : i32, i32, i32
  }
  func.func @transform_2(%arg0: i32) -> (i32, i32) {
    %c0_i32 = arith.constant 0 : i32
    %c0_i32_0 = arith.constant 0 : i32
    %c0_i32_1 = arith.constant 0 : i32
    return %c0_i32, %c0_i32_0 : i32, i32
  }
  func.func @transform_3(%arg0: i32) -> (i32, i32) {
    %c0_i32 = arith.constant 0 : i32
    %c0_i32_0 = arith.constant 0 : i32
    return %c0_i32, %arg0 : i32, i32
  }
  func.func @transform_4(%arg0: i32) -> (i32, i32) {
    %c0_i32 = arith.constant 0 : i32
    %c0_i32_0 = arith.constant 0 : i32
    return %arg0, %c0_i32 : i32, i32
  }
}

</mosaic_0001>

<llo_original>
// kernel: tpu_custom_call.1
$region0: #{tpu_custom_call.1}
  #allocation0 [shape = 'u32[]', space=smem, size = 0x4, offset = 0x4, fixed_abs, tag = 'smem constant byte address 0x4 - core index']
  #allocation1 [shape = 'u32[144,128]{1,0:T(1,128)}', space=vmem, size = 0x12000, scoped, tag = 'internal scratch']
  %s0 = inlined_call_operand.vmem [shape: f32[512,32], index: 0, kind: input, shape index: {}]
  %s1 = inlined_call_operand.vmem [shape: f32[4,16,32], index: 1, kind: input, shape index: {}]
  %s2 = inlined_call_operand.vmem [shape: f32[4,16], index: 2, kind: input, shape index: {}]
  %s3 = inlined_call_operand.hbm [shape: s32[4,512], index: 3, kind: output, shape index: {0}]
  %s4 = inlined_call_operand.hbm [shape: f32[16,128], index: 4, kind: output, shape index: {1}]
  %5 = xla_tuple %s3, %s4
  %s6 = sld [smem:[#allocation0]]
  $region53: #{tpu_custom_call.1} parent=0
    _
  %s8 = ssub.s32 1, %s6
  %s9 = scalar_select 0, %s8, %s6
  $region1: #{tpu_custom_call.1} parent=0
    #allocation2 [shape = 'u8[8192]{0}', space=vmem, size = 0x2000, scoped, tag = 'output window, operand 0']
    #allocation3 [shape = 's32[2]{0}', space=sflag, size = 0x8, scoped, tag = 'scoped memory for tpu_custom_call.1']
    #allocation4 [shape = 'u8[8192]{0}', space=vmem, size = 0x2000, scoped, tag = 'output window, operand 1']
    #allocation5 [shape = 's32[2]{0}', space=sflag, size = 0x8, scoped, tag = 'scoped memory for tpu_custom_call.1']
    %10 = vsyncpa [#allocation3], 0
    %s11 = scalar_lea.sflag [#allocation3], 1
    %12 = vsyncpa %s11, 0
    %13 = vsyncpa [#allocation5], 0
    %s14 = scalar_lea.sflag [#allocation5], 1
    %15 = vsyncpa %s14, 0
    loop: start=0, step=1, limit=4
    $region2: #{tpu_custom_call.1} parent=1 // loop_pre_header
      _
    $region3: #{tpu_custom_call.1} parent=1 // loop_header
      %s17 = sphi 0, %s21
      %p18 = scmp.ge.s32.totalorder %s17, 4
      %s27 = sphi 0, %s29
      %s30 = sphi 0, %s27
      %s31 = sphi 0, %s30
      %s47 = sphi 0, %s31
      %s51 = sphi 0, %s51
      %s53 = sphi 0, %s51
      %s54 = sphi 0, %s53
      %s68 = sphi 0, %s54
      %s72 = sphi 0, %s72
      %s74 = sphi 0, %s72
      %s75 = sphi 0, %s74
      %s89 = sphi 0, %s75
      %s95 = sphi 0, %s97
      %s98 = sphi 0, %s95
      %s99 = sphi 0, %s98
      %s115 = sphi 0, %s99
      %s121 = sphi 0, %s123
      %s124 = sphi 0, %s121
      %s125 = sphi 0, %s124
      %s141 = sphi 0, %s125
    $region4: #{tpu_custom_call.1} parent=1 // loop_header_branch
      %20 = sbr.rel (%p18) target = $region8
    $region5: #{tpu_custom_call.1} parent=1 // loop_body
      %s22 = ssub.s32 %s17, 1
      %s23 = ssub.s32 %s17, 2
      %s24 = sadd.s32 %s17, 1
      %s25 = ssub.s32 %s17, %s24
      %p26 = scmp.eq.s32.totalorder %s25, 0
      %s28 = sadd.s32 %s27, 1
      %s29 = scalar_select %p26, %s27, %s28
      %p32 = pneg %p26
      %p33 = scmp.eq.s32.totalorder %s17, 1
      %p34 = por %p32, %p33
      %p35 = scmp.ne.s32.totalorder %s27, %s30
      %p36 = scmp.eq.s32.totalorder %s17, 0
      %p37 = por %p35, %p36
      %p38 = scmp.ne.s32.totalorder %s27, %s30
      %p39 = scmp.eq.s32.totalorder %s22, 1
      %p40 = por %p38, %p39
      %p41 = scmp.ne.s32.totalorder %s30, %s31
      %p42 = scmp.eq.s32.totalorder %s22, 0
      %p43 = por %p41, %p42
      %p44 = scmp.ne.s32.totalorder %s30, %s31
      %p45 = scmp.eq.s32.totalorder %s23, 1
      %p46 = por %p44, %p45
      %p48 = scmp.ne.s32.totalorder %s31, %s47
      %p49 = scmp.eq.s32.totalorder %s23, 0
      %p50 = por %p48, %p49
      %s52 = sadd.s32 %s51, 1
      %p55 = scmp.eq.s32.totalorder %s17, 1
      %p56 = scmp.ne.s32.totalorder %s51, %s53
      %p57 = scmp.eq.s32.totalorder %s17, 0
      %p58 = por %p56, %p57
      %p59 = scmp.ne.s32.totalorder %s51, %s53
      %p60 = scmp.eq.s32.totalorder %s22, 1
      %p61 = por %p59, %p60
      %p62 = scmp.ne.s32.totalorder %s53, %s54
      %p63 = scmp.eq.s32.totalorder %s22, 0
      %p64 = por %p62, %p63
      %p65 = scmp.ne.s32.totalorder %s53, %s54
      %p66 = scmp.eq.s32.totalorder %s23, 1
      %p67 = por %p65, %p66
      %p69 = scmp.ne.s32.totalorder %s54, %s68
      %p70 = scmp.eq.s32.totalorder %s23, 0
      %p71 = por %p69, %p70
      %s73 = sadd.s32 %s72, 1
      %p76 = scmp.eq.s32.totalorder %s17, 1
      %p77 = scmp.ne.s32.totalorder %s72, %s74
      %p78 = scmp.eq.s32.totalorder %s17, 0
      %p79 = por %p77, %p78
      %p80 = scmp.ne.s32.totalorder %s72, %s74
      %p81 = scmp.eq.s32.totalorder %s22, 1
      %p82 = por %p80, %p81
      %p83 = scmp.ne.s32.totalorder %s74, %s75
      %p84 = scmp.eq.s32.totalorder %s22, 0
      %p85 = por %p83, %p84
      %p86 = scmp.ne.s32.totalorder %s74, %s75
      %p87 = scmp.eq.s32.totalorder %s23, 1
      %p88 = por %p86, %p87
      %p90 = scmp.ne.s32.totalorder %s75, %s89
      %p91 = scmp.eq.s32.totalorder %s23, 0
      %p92 = por %p90, %p91
      %s93 = ssub.s32 %s17, %s24
      %p94 = scmp.eq.s32.totalorder %s93, 0
      %s96 = sadd.s32 %s95, 1
      %s97 = scalar_select %p94, %s95, %s96
      %p100 = pneg %p94
      %p101 = scmp.eq.s32.totalorder %s17, 1
      %p102 = por %p100, %p101
      %p103 = scmp.ne.s32.totalorder %s95, %s98
      %p104 = scmp.eq.s32.totalorder %s17, 0
      %p105 = por %p103, %p104
      %p106 = scmp.ne.s32.totalorder %s95, %s98
      %p107 = scmp.eq.s32.totalorder %s22, 1
      %p108 = por %p106, %p107
      %p109 = scmp.ne.s32.totalorder %s98, %s99
      %p110 = scmp.eq.s32.totalorder %s22, 0
      %p111 = por %p109, %p110
      %p112 = scmp.ne.s32.totalorder %s98, %s99
      %p113 = scmp.eq.s32.totalorder %s23, 1
      %p114 = por %p112, %p113
      %p116 = scmp.ne.s32.totalorder %s99, %s115
      %p117 = scmp.eq.s32.totalorder %s23, 0
      %p118 = por %p116, %p117
      %s119 = ssub.s32 %s17, %s24
      %p120 = scmp.eq.s32.totalorder %s119, 0
      %s122 = sadd.s32 %s121, 1
      %s123 = scalar_select %p120, %s121, %s122
      %p126 = pneg %p120
      %p127 = scmp.eq.s32.totalorder %s17, 1
      %p128 = por %p126, %p127
      %p129 = scmp.ne.s32.totalorder %s121, %s124
      %p130 = scmp.eq.s32.totalorder %s17, 0
      %p131 = por %p129, %p130
      %p132 = scmp.ne.s32.totalorder %s121, %s124
      %p133 = scmp.eq.s32.totalorder %s22, 1
      %p134 = por %p132, %p133
      %p135 = scmp.ne.s32.totalorder %s124, %s125
      %p136 = scmp.eq.s32.totalorder %s22, 0
      %p137 = por %p135, %p136
      %p138 = scmp.ne.s32.totalorder %s124, %s125
      %p139 = scmp.eq.s32.totalorder %s23, 1
      %p140 = por %p138, %p139
      %p142 = scmp.ne.s32.totalorder %s125, %s141
      %p143 = scmp.eq.s32.totalorder %s23, 0
      %p144 = por %p142, %p143
      %p145 = scmp.le.s32.totalorder 1, %s17
      %p146 = scmp.lt.s32.totalorder %s17, 3
      %p147 = pnand %p145, %p146
      %p148 = pneg %p147
      // Predicated region
      $region9: #{tpu_custom_call.1} parent=5 // pred_check
        _
      $region10: #{tpu_custom_call.1} parent=5 // pred_check_branch
        %150 = sbr.rel (%p147) target = $region12
      $region11: #{tpu_custom_call.1} parent=5 // pred_region
        %s151 = ssub.s32 %s17, 1
        // Predicated region
        $region13: #{tpu_custom_call.1} parent=11 // pred_check
          %p152 = pneg %p64
        $region14: #{tpu_custom_call.1} parent=11 // pred_check_branch
          %154 = sbr.rel (%p152) target = $region16
        $region15: #{tpu_custom_call.1} parent=11 // pred_region
          _
        $region16: #{tpu_custom_call.1} parent=11 // pred_fallthru
          _
        // Predicated region
        $region17: #{tpu_custom_call.1} parent=11 // pred_check
          %p155 = pneg %p85
        $region18: #{tpu_custom_call.1} parent=11 // pred_check_branch
          %157 = sbr.rel (%p155) target = $region20
        $region19: #{tpu_custom_call.1} parent=11 // pred_region
          _
        $region20: #{tpu_custom_call.1} parent=11 // pred_fallthru
          _
      $region12: #{tpu_custom_call.1} parent=5 // pred_fallthru
        _
      %p158 = scmp.lt.s32.totalorder %s17, 2
      // Predicated region
      $region21: #{tpu_custom_call.1} parent=5 // pred_check
        %p159 = pneg %p158
      $region22: #{tpu_custom_call.1} parent=5 // pred_check_branch
        %161 = sbr.rel (%p159) target = $region24
      $region23: #{tpu_custom_call.1} parent=5 // pred_region
        // Predicated region
        $region25: #{tpu_custom_call.1} parent=23 // pred_check
          %p162 = pneg %p37
        $region26: #{tpu_custom_call.1} parent=23 // pred_check_branch
          %164 = sbr.rel (%p162) target = $region28
        $region27: #{tpu_custom_call.1} parent=23 // pred_region
          %s165 = smul.u32 32, %s17
          %p166 = scmp.lt.s32.totalorder %s165, 63
          %s167 = scalar_select %p166, %s165, 63
          %s168 = smul.addr %s167, 8
          %s169 = scalar_lea.vmem %s0, %s168
          %s170 = smul.u32 32, %s17
        $region28: #{tpu_custom_call.1} parent=23 // pred_fallthru
          _
      $region24: #{tpu_custom_call.1} parent=5 // pred_fallthru
        _
      %p171 = scmp.le.s32.totalorder 1, %s17
      %p172 = scmp.lt.s32.totalorder %s17, 3
      %p173 = pnand %p171, %p172
      %p174 = pneg %p173
      // Predicated region
      $region29: #{tpu_custom_call.1} parent=5 // pred_check
        _
      $region30: #{tpu_custom_call.1} parent=5 // pred_check_branch
        %176 = sbr.rel (%p173) target = $region32
      $region31: #{tpu_custom_call.1} parent=5 // pred_region
        %s177 = ssub.s32 %s17, 1
        %s178 = smul.u32 32, %s22
        %p179 = scmp.lt.s32.totalorder %s178, 63
        %s180 = scalar_select %p179, %s178, 63
        %s181 = smul.addr %s180, 8
        %s182 = scalar_lea.vmem %s0, %s181
        %p183 = pneg %p43
        %p184 = pneg %p40
        %p185 = pneg %p64
        %p186 = pneg %p61
        %p187 = pneg %p85
        %p188 = pneg %p82
        %p189 = pneg %p111
        %p190 = pneg %p108
        %s191 = sand.u32 %s98, 1
        %s192 = scalar_lea.sflag [#allocation3], %s191
        %s193 = sand.u32 %s98, 1
        %s194 = smul.addr %s193, 8
        %s195 = scalar_lea.vmem [#allocation2], %s194
        %p196 = pneg %p137
        %p197 = pneg %p134
        %s198 = sand.u32 %s124, 1
        %s199 = scalar_lea.sflag [#allocation5], %s198
        %s200 = sand.u32 %s124, 1
        %s201 = smul.addr %s200, 8
        %s202 = scalar_lea.vmem [#allocation4], %s201
        %s203 = smul.u32 32, %s22
        %p204 = scmp.lt.s32.totalorder %s203, 63
        %s205 = scalar_select %p204, %s203, 63
        %s206 = smul.addr %s205, 8
        %s207 = scalar_lea.vmem %s0, %s206
        %s208 = smul.u32 32, %s22
        %s209 = smul.u32 2, %s22
        %v210 = vld [vmem:[%s207] sm:$0xff]
        %v211 = vld [vmem:[%s207 + $0x8] sm:$0xff]
        %v212 = vld [vmem:[%s207 + $0x10] sm:$0xff]
        %v213 = vld [vmem:[%s207 + $0x18] sm:$0xff]
        %v214 = vld [vmem:[%s207 + $0x20] sm:$0xff]
        %v215 = vld [vmem:[%s207 + $0x28] sm:$0xff]
        %v216 = vld [vmem:[%s207 + $0x30] sm:$0xff]
        %v217 = vld [vmem:[%s207 + $0x38] sm:$0xff]
        %v218 = vld [vmem:[%s207 + $0x40] sm:$0xff]
        %v219 = vld [vmem:[%s207 + $0x48] sm:$0xff]
        %v220 = vld [vmem:[%s207 + $0x50] sm:$0xff]
        %v221 = vld [vmem:[%s207 + $0x58] sm:$0xff]
        %v222 = vld [vmem:[%s207 + $0x60] sm:$0xff]
        %v223 = vld [vmem:[%s207 + $0x68] sm:$0xff]
        %v224 = vld [vmem:[%s207 + $0x70] sm:$0xff]
        %v225 = vld [vmem:[%s207 + $0x78] sm:$0xff]
        %v226 = vld [vmem:[%s207 + $0x80] sm:$0xff]
        %v227 = vld [vmem:[%s207 + $0x88] sm:$0xff]
        %v228 = vld [vmem:[%s207 + $0x90] sm:$0xff]
        %v229 = vld [vmem:[%s207 + $0x98] sm:$0xff]
        %v230 = vld [vmem:[%s207 + $0xa0] sm:$0xff]
        %v231 = vld [vmem:[%s207 + $0xa8] sm:$0xff]
        %v232 = vld [vmem:[%s207 + $0xb0] sm:$0xff]
        %v233 = vld [vmem:[%s207 + $0xb8] sm:$0xff]
        %v234 = vld [vmem:[%s207 + $0xc0] sm:$0xff]
        %v235 = vld [vmem:[%s207 + $0xc8] sm:$0xff]
        %v236 = vld [vmem:[%s207 + $0xd0] sm:$0xff]
        %v237 = vld [vmem:[%s207 + $0xd8] sm:$0xff]
        %v238 = vld [vmem:[%s207 + $0xe0] sm:$0xff]
        %v239 = vld [vmem:[%s207 + $0xe8] sm:$0xff]
        %v240 = vld [vmem:[%s207 + $0xf0] sm:$0xff]
        %v241 = vld [vmem:[%s207 + $0xf8] sm:$0xff]
        %v242 = vlaneseq
        %v243 = vshrl.u32 %v242, 7
        %v244 = vadd.s32 %v243, 8
        %v245 = vadd.s32 %v243, 16
        %v246 = vadd.s32 %v243, 24
        %v247 = vadd.s32 %v243, 32
        %v248 = vadd.s32 %v243, 40
        %v249 = vadd.s32 %v243, 48
        %v250 = vadd.s32 %v243, 56
        %v251 = vadd.s32 %v243, 64
        %v252 = vadd.s32 %v243, 72
        %v253 = vadd.s32 %v243, 80
        %v254 = vadd.s32 %v243, 88
        %v255 = vadd.s32 %v243, 96
        %v256 = vadd.s32 %v243, 104
        %v257 = vadd.s32 %v243, 112
        %v258 = vadd.s32 %v243, 120
        %v259 = vadd.s32 %v243, 128
        %v260 = vadd.s32 %v243, 136
        %v261 = vadd.s32 %v243, 144
        %v262 = vadd.s32 %v243, 152
        %v263 = vadd.s32 %v243, 160
        %v264 = vadd.s32 %v243, 168
        %v265 = vadd.s32 %v243, 176
        %v266 = vadd.s32 %v243, 184
        %v267 = vadd.s32 %v243, 192
        %v268 = vadd.s32 %v243, 200
        %v269 = vadd.s32 %v243, 208
        %v270 = vadd.s32 %v243, 216
        %v271 = vadd.s32 %v243, 224
        %v272 = vadd.s32 %v243, 232
        %v273 = vadd.s32 %v243, 240
        %v274 = vadd.s32 %v243, 248
        %s275 = smul.u32 %s22, 256
        %v276 = vstv %s275
        %v277 = vadd.s32 %v276, %v243
        %v278 = vadd.s32 %v276, %v244
        %v279 = vadd.s32 %v276, %v245
        %v280 = vadd.s32 %v276, %v246
        %v281 = vadd.s32 %v276, %v247
        %v282 = vadd.s32 %v276, %v248
        %v283 = vadd.s32 %v276, %v249
        %v284 = vadd.s32 %v276, %v250
        %v285 = vadd.s32 %v276, %v251
        %v286 = vadd.s32 %v276, %v252
        %v287 = vadd.s32 %v276, %v253
        %v288 = vadd.s32 %v276, %v254
        %v289 = vadd.s32 %v276, %v255
        %v290 = vadd.s32 %v276, %v256
        %v291 = vadd.s32 %v276, %v257
        %v292 = vadd.s32 %v276, %v258
        %v293 = vadd.s32 %v276, %v259
        %v294 = vadd.s32 %v276, %v260
        %v295 = vadd.s32 %v276, %v261
        %v296 = vadd.s32 %v276, %v262
        %v297 = vadd.s32 %v276, %v263
        %v298 = vadd.s32 %v276, %v264
        %v299 = vadd.s32 %v276, %v265
        %v300 = vadd.s32 %v276, %v266
        %v301 = vadd.s32 %v276, %v267
        %v302 = vadd.s32 %v276, %v268
        %v303 = vadd.s32 %v276, %v269
        %v304 = vadd.s32 %v276, %v270
        %v305 = vadd.s32 %v276, %v271
        %v306 = vadd.s32 %v276, %v272
        %v307 = vadd.s32 %v276, %v273
        %v308 = vadd.s32 %v276, %v274
        %vm309 = vcmp.lt.s32.totalorder %v277, 300
        %vm310 = vcmp.lt.s32.totalorder %v278, 300
        %vm311 = vcmp.lt.s32.totalorder %v279, 300
        %vm312 = vcmp.lt.s32.totalorder %v280, 300
        %vm313 = vcmp.lt.s32.totalorder %v281, 300
        %vm314 = vcmp.lt.s32.totalorder %v282, 300
        %vm315 = vcmp.lt.s32.totalorder %v283, 300
        %vm316 = vcmp.lt.s32.totalorder %v284, 300
        %vm317 = vcmp.lt.s32.totalorder %v285, 300
        %vm318 = vcmp.lt.s32.totalorder %v286, 300
        %vm319 = vcmp.lt.s32.totalorder %v287, 300
        %vm320 = vcmp.lt.s32.totalorder %v288, 300
        %vm321 = vcmp.lt.s32.totalorder %v289, 300
        %vm322 = vcmp.lt.s32.totalorder %v290, 300
        %vm323 = vcmp.lt.s32.totalorder %v291, 300
        %vm324 = vcmp.lt.s32.totalorder %v292, 300
        %vm325 = vcmp.lt.s32.totalorder %v293, 300
        %vm326 = vcmp.lt.s32.totalorder %v294, 300
        %vm327 = vcmp.lt.s32.totalorder %v295, 300
        %vm328 = vcmp.lt.s32.totalorder %v296, 300
        %vm329 = vcmp.lt.s32.totalorder %v297, 300
        %vm330 = vcmp.lt.s32.totalorder %v298, 300
        %vm331 = vcmp.lt.s32.totalorder %v299, 300
        %vm332 = vcmp.lt.s32.totalorder %v300, 300
        %vm333 = vcmp.lt.s32.totalorder %v301, 300
        %vm334 = vcmp.lt.s32.totalorder %v302, 300
        %vm335 = vcmp.lt.s32.totalorder %v303, 300
        %vm336 = vcmp.lt.s32.totalorder %v304, 300
        %vm337 = vcmp.lt.s32.totalorder %v305, 300
        %vm338 = vcmp.lt.s32.totalorder %v306, 300
        %vm339 = vcmp.lt.s32.totalorder %v307, 300
        %vm340 = vcmp.lt.s32.totalorder %v308, 300
        %v341 = vsel %vm309, 1, 0
        %v342 = vsel %vm310, 1, 0
        %v343 = vsel %vm311, 1, 0
        %v344 = vsel %vm312, 1, 0
        %v345 = vsel %vm313, 1, 0
        %v346 = vsel %vm314, 1, 0
        %v347 = vsel %vm315, 1, 0
        %v348 = vsel %vm316, 1, 0
        %v349 = vsel %vm317, 1, 0
        %v350 = vsel %vm318, 1, 0
        %v351 = vsel %vm319, 1, 0
        %v352 = vsel %vm320, 1, 0
        %v353 = vsel %vm321, 1, 0
        %v354 = vsel %vm322, 1, 0
        %v355 = vsel %vm323, 1, 0
        %v356 = vsel %vm324, 1, 0
        %v357 = vsel %vm325, 1, 0
        %v358 = vsel %vm326, 1, 0
        %v359 = vsel %vm327, 1, 0
        %v360 = vsel %vm328, 1, 0
        %v361 = vsel %vm329, 1, 0
        %v362 = vsel %vm330, 1, 0
        %v363 = vsel %vm331, 1, 0
        %v364 = vsel %vm332, 1, 0
        %v365 = vsel %vm333, 1, 0
        %v366 = vsel %vm334, 1, 0
        %v367 = vsel %vm335, 1, 0
        %v368 = vsel %vm336, 1, 0
        %v369 = vsel %vm337, 1, 0
        %v370 = vsel %vm338, 1, 0
        %v371 = vsel %vm339, 1, 0
        %v372 = vsel %vm340, 1, 0
        %v373 = vcvt.s32.f32 %v341
        %v374 = vcvt.s32.f32 %v342
        %v375 = vcvt.s32.f32 %v343
        %v376 = vcvt.s32.f32 %v344
        %v377 = vcvt.s32.f32 %v345
        %v378 = vcvt.s32.f32 %v346
        %v379 = vcvt.s32.f32 %v347
        %v380 = vcvt.s32.f32 %v348
        %v381 = vcvt.s32.f32 %v349
        %v382 = vcvt.s32.f32 %v350
        %v383 = vcvt.s32.f32 %v351
        %v384 = vcvt.s32.f32 %v352
        %v385 = vcvt.s32.f32 %v353
        %v386 = vcvt.s32.f32 %v354
        %v387 = vcvt.s32.f32 %v355
        %v388 = vcvt.s32.f32 %v356
        %v389 = vcvt.s32.f32 %v357
        %v390 = vcvt.s32.f32 %v358
        %v391 = vcvt.s32.f32 %v359
        %v392 = vcvt.s32.f32 %v360
        %v393 = vcvt.s32.f32 %v361
        %v394 = vcvt.s32.f32 %v362
        %v395 = vcvt.s32.f32 %v363
        %v396 = vcvt.s32.f32 %v364
        %v397 = vcvt.s32.f32 %v365
        %v398 = vcvt.s32.f32 %v366
        %v399 = vcvt.s32.f32 %v367
        %v400 = vcvt.s32.f32 %v368
        %v401 = vcvt.s32.f32 %v369
        %v402 = vcvt.s32.f32 %v370
        %v403 = vcvt.s32.f32 %v371
        %v404 = vcvt.s32.f32 %v372
        %v405 = vld [vmem:[%s2] sm:$0xf]
        %v406 = vld [vmem:[%s1] sm:$0xff]
        %v407 = vld [vmem:[%s1 + $0x8] sm:$0xff]
        %vm408 = vcmask 261120
        %v410 = vsel %vm408, %v210, 0
        %v413 = vsel %vm408, %v211, 0
        %v416 = vsel %vm408, %v212, 0
        %v419 = vsel %vm408, %v213, 0
        %v422 = vsel %vm408, %v214, 0
        %v425 = vsel %vm408, %v215, 0
        %v428 = vsel %vm408, %v216, 0
        %v431 = vsel %vm408, %v217, 0
        %v434 = vsel %vm408, %v218, 0
        %v437 = vsel %vm408, %v219, 0
        %v440 = vsel %vm408, %v220, 0
        %v443 = vsel %vm408, %v221, 0
        %v446 = vsel %vm408, %v222, 0
        %v449 = vsel %vm408, %v223, 0
        %v452 = vsel %vm408, %v224, 0
        %v455 = vsel %vm408, %v225, 0
        %v458 = vsel %vm408, %v226, 0
        %v461 = vsel %vm408, %v227, 0
        %v464 = vsel %vm408, %v228, 0
        %v467 = vsel %vm408, %v229, 0
        %v470 = vsel %vm408, %v230, 0
        %v473 = vsel %vm408, %v231, 0
        %v476 = vsel %vm408, %v232, 0
        %v479 = vsel %vm408, %v233, 0
        %v482 = vsel %vm408, %v234, 0
        %v485 = vsel %vm408, %v235, 0
        %v488 = vsel %vm408, %v236, 0
        %v491 = vsel %vm408, %v237, 0
        %v494 = vsel %vm408, %v238, 0
        %v497 = vsel %vm408, %v239, 0
        %v500 = vsel %vm408, %v240, 0
        %v503 = vsel %vm408, %v241, 0
        %v506 = vsel %vm408, %v406, 0
        %v509 = vsel %vm408, %v407, 0
        %511 = vmatprep.subr.mxu0 0.0
        %512 = vmatpush1.xpose.msra.mxu0 %v506
        %513 = vmatprep.subr.mxu0 0.0
        %514 = vmatpush1.xpose.msra.mxu0 %v509
        %515 = vmatprep.subr.mxu0 0.0
        %516 = vmatpush1.xpose.msra.mxu0 0.0
        %517 = vmatprep.subr.mxu0 0.0
        %518 = vmatpush1.xpose.msra.mxu0 0.0
        %519 = vmatprep.subr.mxu0 0.0
        %520 = vmatpush1.xpose.msra.mxu0 0.0
        %521 = vmatprep.subr.mxu0 0.0
        %522 = vmatpush1.xpose.msra.mxu0 0.0
        %523 = vmatprep.subr.mxu0 0.0
        %524 = vmatpush1.xpose.msra.mxu0 0.0
        %525 = vmatprep.subr.mxu0 0.0
        %526 = vmatpush1.xpose.msra.mxu0 0.0
        %527 = vmatprep.subr.mxu0 0.0
        %528 = vmatpush1.xpose.msra.mxu0 0.0
        %529 = vmatprep.subr.mxu0 0.0
        %530 = vmatpush1.xpose.msra.mxu0 0.0
        %531 = vmatprep.subr.mxu0 0.0
        %532 = vmatpush1.xpose.msra.mxu0 0.0
        %533 = vmatprep.subr.mxu0 0.0
        %534 = vmatpush1.xpose.msra.mxu0 0.0
        %535 = vmatprep.subr.mxu0 0.0
        %536 = vmatpush1.xpose.msra.mxu0 0.0
        %537 = vmatprep.subr.mxu0 0.0
        %538 = vmatpush1.xpose.msra.mxu0 0.0
        %539 = vmatprep.subr.mxu0 0.0
        %540 = vmatpush1.xpose.msra.mxu0 0.0
        %541 = vmatprep.subr.mxu0 0.0
        %542 = vmatpush1.xpose.msra.mxu0 0.0
        %543 = vmatprep.subr.mxu0 0.0
        %544 = vmatpush1.xpose.msra.mxu0 0.0
        %545 = vmatprep.subr.mxu0 0.0
        %546 = vmatpush1.xpose.msra.mxu0 0.0
        %547 = vmatprep.subr.mxu0 0.0
        %548 = vmatpush1.xpose.msra.mxu0 0.0
        %549 = vmatprep.subr.mxu0 0.0
        %550 = vmatpush1.xpose.msra.mxu0 0.0
        %551 = vmatprep.subr.mxu0 0.0
        %552 = vmatpush1.xpose.msra.mxu0 0.0
        %553 = vmatprep.subr.mxu0 0.0
        %554 = vmatpush1.xpose.msra.mxu0 0.0
        %555 = vmatprep.subr.mxu0 0.0
        %556 = vmatpush1.xpose.msra.mxu0 0.0
        %557 = vmatprep.subr.mxu0 0.0
        %558 = vmatpush1.xpose.msra.mxu0 0.0
        %559 = vmatprep.subr.mxu0 0.0
        %560 = vmatpush1.xpose.msra.mxu0 0.0
        %561 = vmatprep.subr.mxu0 0.0
        %562 = vmatpush1.xpose.msra.mxu0 0.0
        %563 = vmatprep.subr.mxu0 0.0
        %564 = vmatpush1.xpose.msra.mxu0 0.0
        %565 = vmatprep.subr.mxu0 0.0
        %566 = vmatpush1.xpose.msra.mxu0 0.0
        %567 = vmatprep.subr.mxu0 0.0
        %568 = vmatpush1.xpose.msra.mxu0 0.0
        %569 = vmatprep.subr.mxu0 0.0
        %570 = vmatpush1.xpose.msra.mxu0 0.0
        %571 = vmatprep.subr.mxu0 0.0
        %572 = vmatpush1.xpose.msra.mxu0 0.0
        %573 = vmatprep.subr.mxu0 0.0
        %574 = vmatpush1.xpose.msra.mxu0 0.0
        %575 = vmatprep.mubr.f32.mxu0 0.0
        %576 = vmatmul.mubr.f32.gmra.mrb[0].mxu0 %v410
        %v577 = vpop.f32.mrb[0].mxu0
        %v578 = vadd.f32 0.0, %v577
        %v579 = vpop.f32.mrb[0].mxu0
        %580 = vmatprep.mubr.f32.mxu0 0.0
        %581 = vmatmul.mubr.f32.gmra.mrb[0].mxu0 %v413
        %v582 = vpop.f32.mrb[0].mxu0
        %v583 = vadd.f32 0.0, %v582
        %v584 = vpop.f32.mrb[0].mxu0
        %585 = vmatprep.mubr.f32.mxu0 0.0
        %586 = vmatmul.mubr.f32.gmra.mrb[0].mxu0 %v416
        %v587 = vpop.f32.mrb[0].mxu0
        %v588 = vadd.f32 0.0, %v587
        %v589 = vpop.f32.mrb[0].mxu0
        %590 = vmatprep.mubr.f32.mxu0 0.0
        %591 = vmatmul.mubr.f32.gmra.mrb[0].mxu0 %v419
        %v592 = vpop.f32.mrb[0].mxu0
        %v593 = vadd.f32 0.0, %v592
        %v594 = vpop.f32.mrb[0].mxu0
        %595 = vmatprep.mubr.f32.mxu0 0.0
        %596 = vmatmul.mubr.f32.gmra.mrb[0].mxu0 %v422
        %v597 = vpop.f32.mrb[0].mxu0
        %v598 = vadd.f32 0.0, %v597
        %v599 = vpop.f32.mrb[0].mxu0
        %600 = vmatprep.mubr.f32.mxu0 0.0
        %601 = vmatmul.mubr.f32.gmra.mrb[0].mxu0 %v425
        %v602 = vpop.f32.mrb[0].mxu0
        %v603 = vadd.f32 0.0, %v602
        %v604 = vpop.f32.mrb[0].mxu0
        %605 = vmatprep.mubr.f32.mxu0 0.0
        %606 = vmatmul.mubr.f32.gmra.mrb[0].mxu0 %v428
        %v607 = vpop.f32.mrb[0].mxu0
        %v608 = vadd.f32 0.0, %v607
        %v609 = vpop.f32.mrb[0].mxu0
        %610 = vmatprep.mubr.f32.mxu0 0.0
        %611 = vmatmul.mubr.f32.gmra.mrb[0].mxu0 %v431
        %v612 = vpop.f32.mrb[0].mxu0
        %v613 = vadd.f32 0.0, %v612
        %v614 = vpop.f32.mrb[0].mxu0
        %615 = vmatprep.mubr.f32.mxu0 0.0
        %616 = vmatmul.mubr.f32.gmra.mrb[0].mxu0 %v434
        %v617 = vpop.f32.mrb[0].mxu0
        %v618 = vadd.f32 0.0, %v617
        %v619 = vpop.f32.mrb[0].mxu0
        %620 = vmatprep.mubr.f32.mxu0 0.0
        %621 = vmatmul.mubr.f32.gmra.mrb[0].mxu0 %v437
        %v622 = vpop.f32.mrb[0].mxu0
        %v623 = vadd.f32 0.0, %v622
        %v624 = vpop.f32.mrb[0].mxu0
        %625 = vmatprep.mubr.f32.mxu0 0.0
        %626 = vmatmul.mubr.f32.gmra.mrb[0].mxu0 %v440
        %v627 = vpop.f32.mrb[0].mxu0
        %v628 = vadd.f32 0.0, %v627
        %v629 = vpop.f32.mrb[0].mxu0
        %630 = vmatprep.mubr.f32.mxu0 0.0
        %631 = vmatmul.mubr.f32.gmra.mrb[0].mxu0 %v443
        %v632 = vpop.f32.mrb[0].mxu0
        %v633 = vadd.f32 0.0, %v632
        %v634 = vpop.f32.mrb[0].mxu0
        %635 = vmatprep.mubr.f32.mxu0 0.0
        %636 = vmatmul.mubr.f32.gmra.mrb[0].mxu0 %v446
        %v637 = vpop.f32.mrb[0].mxu0
        %v638 = vadd.f32 0.0, %v637
        %v639 = vpop.f32.mrb[0].mxu0
        %640 = vmatprep.mubr.f32.mxu0 0.0
        %641 = vmatmul.mubr.f32.gmra.mrb[0].mxu0 %v449
        %v642 = vpop.f32.mrb[0].mxu0
        %v643 = vadd.f32 0.0, %v642
        %v644 = vpop.f32.mrb[0].mxu0
        %645 = vmatprep.mubr.f32.mxu0 0.0
        %646 = vmatmul.mubr.f32.gmra.mrb[0].mxu0 %v452
        %v647 = vpop.f32.mrb[0].mxu0
        %v648 = vadd.f32 0.0, %v647
        %v649 = vpop.f32.mrb[0].mxu0
        %650 = vmatprep.mubr.f32.mxu0 0.0
        %651 = vmatmul.mubr.f32.gmra.mrb[0].mxu0 %v455
        %v652 = vpop.f32.mrb[0].mxu0
        %v653 = vadd.f32 0.0, %v652
        %v654 = vpop.f32.mrb[0].mxu0
        %655 = vmatprep.mubr.f32.mxu0 0.0
        %656 = vmatmul.mubr.f32.gmra.mrb[0].mxu0 %v458
        %v657 = vpop.f32.mrb[0].mxu0
        %v658 = vadd.f32 0.0, %v657
        %v659 = vpop.f32.mrb[0].mxu0
        %660 = vmatprep.mubr.f32.mxu0 0.0
        %661 = vmatmul.mubr.f32.gmra.mrb[0].mxu0 %v461
        %v662 = vpop.f32.mrb[0].mxu0
        %v663 = vadd.f32 0.0, %v662
        %v664 = vpop.f32.mrb[0].mxu0
        %665 = vmatprep.mubr.f32.mxu0 0.0
        %666 = vmatmul.mubr.f32.gmra.mrb[0].mxu0 %v464
        %v667 = vpop.f32.mrb[0].mxu0
        %v668 = vadd.f32 0.0, %v667
        %v669 = vpop.f32.mrb[0].mxu0
        %670 = vmatprep.mubr.f32.mxu0 0.0
        %671 = vmatmul.mubr.f32.gmra.mrb[0].mxu0 %v467
        %v672 = vpop.f32.mrb[0].mxu0
        %v673 = vadd.f32 0.0, %v672
        %v674 = vpop.f32.mrb[0].mxu0
        %675 = vmatprep.mubr.f32.mxu0 0.0
        %676 = vmatmul.mubr.f32.gmra.mrb[0].mxu0 %v470
        %v677 = vpop.f32.mrb[0].mxu0
        %v678 = vadd.f32 0.0, %v677
        %v679 = vpop.f32.mrb[0].mxu0
        %680 = vmatprep.mubr.f32.mxu0 0.0
        %681 = vmatmul.mubr.f32.gmra.mrb[0].mxu0 %v473
        %v682 = vpop.f32.mrb[0].mxu0
        %v683 = vadd.f32 0.0, %v682
        %v684 = vpop.f32.mrb[0].mxu0
        %685 = vmatprep.mubr.f32.mxu0 0.0
        %686 = vmatmul.mubr.f32.gmra.mrb[0].mxu0 %v476
        %v687 = vpop.f32.mrb[0].mxu0
        %v688 = vadd.f32 0.0, %v687
        %v689 = vpop.f32.mrb[0].mxu0
        %690 = vmatprep.mubr.f32.mxu0 0.0
        %691 = vmatmul.mubr.f32.gmra.mrb[0].mxu0 %v479
        %v692 = vpop.f32.mrb[0].mxu0
        %v693 = vadd.f32 0.0, %v692
        %v694 = vpop.f32.mrb[0].mxu0
        %695 = vmatprep.mubr.f32.mxu0 0.0
        %696 = vmatmul.mubr.f32.gmra.mrb[0].mxu0 %v482
        %v697 = vpop.f32.mrb[0].mxu0
        %v698 = vadd.f32 0.0, %v697
        %v699 = vpop.f32.mrb[0].mxu0
        %700 = vmatprep.mubr.f32.mxu0 0.0
        %701 = vmatmul.mubr.f32.gmra.mrb[0].mxu0 %v485
        %v702 = vpop.f32.mrb[0].mxu0
        %v703 = vadd.f32 0.0, %v702
        %v704 = vpop.f32.mrb[0].mxu0
        %705 = vmatprep.mubr.f32.mxu0 0.0
        %706 = vmatmul.mubr.f32.gmra.mrb[0].mxu0 %v488
        %v707 = vpop.f32.mrb[0].mxu0
        %v708 = vadd.f32 0.0, %v707
        %v709 = vpop.f32.mrb[0].mxu0
        %710 = vmatprep.mubr.f32.mxu0 0.0
        %711 = vmatmul.mubr.f32.gmra.mrb[0].mxu0 %v491
        %v712 = vpop.f32.mrb[0].mxu0
        %v713 = vadd.f32 0.0, %v712
        %v714 = vpop.f32.mrb[0].mxu0
        %715 = vmatprep.mubr.f32.mxu0 0.0
        %716 = vmatmul.mubr.f32.gmra.mrb[0].mxu0 %v494
        %v717 = vpop.f32.mrb[0].mxu0
        %v718 = vadd.f32 0.0, %v717
        %v719 = vpop.f32.mrb[0].mxu0
        %720 = vmatprep.mubr.f32.mxu0 0.0
        %721 = vmatmul.mubr.f32.gmra.mrb[0].mxu0 %v497
        %v722 = vpop.f32.mrb[0].mxu0
        %v723 = vadd.f32 0.0, %v722
        %v724 = vpop.f32.mrb[0].mxu0
        %725 = vmatprep.mubr.f32.mxu0 0.0
        %726 = vmatmul.mubr.f32.gmra.mrb[0].mxu0 %v500
        %v727 = vpop.f32.mrb[0].mxu0
        %v728 = vadd.f32 0.0, %v727
        %v729 = vpop.f32.mrb[0].mxu0
        %730 = vmatprep.mubr.f32.mxu0 0.0
        %731 = vmatmul.mubr.f32.gmra.mrb[0].mxu0 %v503
        %v732 = vpop.f32.mrb[0].mxu0
        %v733 = vadd.f32 0.0, %v732
        %v734 = vpop.f32.mrb[0].mxu0
        %735 = vdwg.mxu0
        %v736 = vmul.f32 %v578, 2.0
        %v737 = vmul.f32 %v583, 2.0
        %v738 = vmul.f32 %v588, 2.0
        %v739 = vmul.f32 %v593, 2.0
        %v740 = vmul.f32 %v598, 2.0
        %v741 = vmul.f32 %v603, 2.0
        %v742 = vmul.f32 %v608, 2.0
        %v743 = vmul.f32 %v613, 2.0
        %v744 = vmul.f32 %v618, 2.0
        %v745 = vmul.f32 %v623, 2.0
        %v746 = vmul.f32 %v628, 2.0
        %v747 = vmul.f32 %v633, 2.0
        %v748 = vmul.f32 %v638, 2.0
        %v749 = vmul.f32 %v643, 2.0
        %v750 = vmul.f32 %v648, 2.0
        %v751 = vmul.f32 %v653, 2.0
        %v752 = vmul.f32 %v658, 2.0
        %v753 = vmul.f32 %v663, 2.0
        %v754 = vmul.f32 %v668, 2.0
        %v755 = vmul.f32 %v673, 2.0
        %v756 = vmul.f32 %v678, 2.0
        %v757 = vmul.f32 %v683, 2.0
        %v758 = vmul.f32 %v688, 2.0
        %v759 = vmul.f32 %v693, 2.0
        %v760 = vmul.f32 %v698, 2.0
        %v761 = vmul.f32 %v703, 2.0
        %v762 = vmul.f32 %v708, 2.0
        %v763 = vmul.f32 %v713, 2.0
        %v764 = vmul.f32 %v718, 2.0
        %v765 = vmul.f32 %v723, 2.0
        %v766 = vmul.f32 %v728, 2.0
        %v767 = vmul.f32 %v733, 2.0
        %v768 = vlaneseq
        %v769 = vshrl.u32 %v768, 7
        %v770 = vsub.s32 0, %v769
        %v771 = vrot.slane %v405, %v770
        %v772 = vsub.f32 %v736, %v771
        %v773 = vsub.f32 %v737, %v771
        %v774 = vsub.f32 %v738, %v771
        %v775 = vsub.f32 %v739, %v771
        %v776 = vsub.f32 %v740, %v771
        %v777 = vsub.f32 %v741, %v771
        %v778 = vsub.f32 %v742, %v771
        %v779 = vsub.f32 %v743, %v771
        %v780 = vsub.f32 %v744, %v771
        %v781 = vsub.f32 %v745, %v771
        %v782 = vsub.f32 %v746, %v771
        %v783 = vsub.f32 %v747, %v771
        %v784 = vsub.f32 %v748, %v771
        %v785 = vsub.f32 %v749, %v771
        %v786 = vsub.f32 %v750, %v771
        %v787 = vsub.f32 %v751, %v771
        %v788 = vsub.f32 %v752, %v771
        %v789 = vsub.f32 %v753, %v771
        %v790 = vsub.f32 %v754, %v771
        %v791 = vsub.f32 %v755, %v771
        %v792 = vsub.f32 %v756, %v771
        %v793 = vsub.f32 %v757, %v771
        %v794 = vsub.f32 %v758, %v771
        %v795 = vsub.f32 %v759, %v771
        %v796 = vsub.f32 %v760, %v771
        %v797 = vsub.f32 %v761, %v771
        %v798 = vsub.f32 %v762, %v771
        %v799 = vsub.f32 %v763, %v771
        %v800 = vsub.f32 %v764, %v771
        %v801 = vsub.f32 %v765, %v771
        %v802 = vsub.f32 %v766, %v771
        %v803 = vsub.f32 %v767, %v771
        %vm804 = vcmask 130048
        %v805 = vsel %vm804, %v772, -inf
        %806 = vmax.xlane.f32.xlu0 %v805
        %v807 = vpop.xlane.xlu0 %806
        %v808 = vsel %vm804, %v773, -inf
        %809 = vmax.xlane.f32.xlu0 %v808
        %v810 = vpop.xlane.xlu0 %809
        %v811 = vsel %vm804, %v774, -inf
        %812 = vmax.xlane.f32.xlu0 %v811
        %v813 = vpop.xlane.xlu0 %812
        %v814 = vsel %vm804, %v775, -inf
        %815 = vmax.xlane.f32.xlu0 %v814
        %v816 = vpop.xlane.xlu0 %815
        %v817 = vsel %vm804, %v776, -inf
        %818 = vmax.xlane.f32.xlu0 %v817
        %v819 = vpop.xlane.xlu0 %818
        %v820 = vsel %vm804, %v777, -inf
        %821 = vmax.xlane.f32.xlu0 %v820
        %v822 = vpop.xlane.xlu0 %821
        %v823 = vsel %vm804, %v778, -inf
        %824 = vmax.xlane.f32.xlu0 %v823
        %v825 = vpop.xlane.xlu0 %824
        %v826 = vsel %vm804, %v779, -inf
        %827 = vmax.xlane.f32.xlu0 %v826
        %v828 = vpop.xlane.xlu0 %827
        %v829 = vsel %vm804, %v780, -inf
        %830 = vmax.xlane.f32.xlu0 %v829
        %v831 = vpop.xlane.xlu0 %830
        %v832 = vsel %vm804, %v781, -inf
        %833 = vmax.xlane.f32.xlu0 %v832
        %v834 = vpop.xlane.xlu0 %833
        %v835 = vsel %vm804, %v782, -inf
        %836 = vmax.xlane.f32.xlu0 %v835
        %v837 = vpop.xlane.xlu0 %836
        %v838 = vsel %vm804, %v783, -inf
        %839 = vmax.xlane.f32.xlu0 %v838
        %v840 = vpop.xlane.xlu0 %839
        %v841 = vsel %vm804, %v784, -inf
        %842 = vmax.xlane.f32.xlu0 %v841
        %v843 = vpop.xlane.xlu0 %842
        %v844 = vsel %vm804, %v785, -inf
        %845 = vmax.xlane.f32.xlu0 %v844
        %v846 = vpop.xlane.xlu0 %845
        %v847 = vsel %vm804, %v786, -inf
        %848 = vmax.xlane.f32.xlu0 %v847
        %v849 = vpop.xlane.xlu0 %848
        %v850 = vsel %vm804, %v787, -inf
        %851 = vmax.xlane.f32.xlu0 %v850
        %v852 = vpop.xlane.xlu0 %851
        %v853 = vsel %vm804, %v788, -inf
        %854 = vmax.xlane.f32.xlu0 %v853
        %v855 = vpop.xlane.xlu0 %854
        %v856 = vsel %vm804, %v789, -inf
        %857 = vmax.xlane.f32.xlu0 %v856
        %v858 = vpop.xlane.xlu0 %857
        %v859 = vsel %vm804, %v790, -inf
        %860 = vmax.xlane.f32.xlu0 %v859
        %v861 = vpop.xlane.xlu0 %860
        %v862 = vsel %vm804, %v791, -inf
        %863 = vmax.xlane.f32.xlu0 %v862
        %v864 = vpop.xlane.xlu0 %863
        %v865 = vsel %vm804, %v792, -inf
        %866 = vmax.xlane.f32.xlu0 %v865
        %v867 = vpop.xlane.xlu0 %866
        %v868 = vsel %vm804, %v793, -inf
        %869 = vmax.xlane.f32.xlu0 %v868
        %v870 = vpop.xlane.xlu0 %869
        %v871 = vsel %vm804, %v794, -inf
        %872 = vmax.xlane.f32.xlu0 %v871
        %v873 = vpop.xlane.xlu0 %872
        %v874 = vsel %vm804, %v795, -inf
        %875 = vmax.xlane.f32.xlu0 %v874
        %v876 = vpop.xlane.xlu0 %875
        %v877 = vsel %vm804, %v796, -inf
        %878 = vmax.xlane.f32.xlu0 %v877
        %v879 = vpop.xlane.xlu0 %878
        %v880 = vsel %vm804, %v797, -inf
        %881 = vmax.xlane.f32.xlu0 %v880
        %v882 = vpop.xlane.xlu0 %881
        %v883 = vsel %vm804, %v798, -inf
        %884 = vmax.xlane.f32.xlu0 %v883
        %v885 = vpop.xlane.xlu0 %884
        %v886 = vsel %vm804, %v799, -inf
        %887 = vmax.xlane.f32.xlu0 %v886
        %v888 = vpop.xlane.xlu0 %887
        %v889 = vsel %vm804, %v800, -inf
        %890 = vmax.xlane.f32.xlu0 %v889
        %v891 = vpop.xlane.xlu0 %890
        %v892 = vsel %vm804, %v801, -inf
        %893 = vmax.xlane.f32.xlu0 %v892
        %v894 = vpop.xlane.xlu0 %893
        %v895 = vsel %vm804, %v802, -inf
        %896 = vmax.xlane.f32.xlu0 %v895
        %v897 = vpop.xlane.xlu0 %896
        %v898 = vsel %vm804, %v803, -inf
        %899 = vmax.xlane.f32.xlu0 %v898
        %v900 = vpop.xlane.xlu0 %899
        %v901 = vsub.f32 %v772, %v807
        %v902 = vsub.f32 %v773, %v810
        %v903 = vsub.f32 %v774, %v813
        %v904 = vsub.f32 %v775, %v816
        %v905 = vsub.f32 %v776, %v819
        %v906 = vsub.f32 %v777, %v822
        %v907 = vsub.f32 %v778, %v825
        %v908 = vsub.f32 %v779, %v828
        %v909 = vsub.f32 %v780, %v831
        %v910 = vsub.f32 %v781, %v834
        %v911 = vsub.f32 %v782, %v837
        %v912 = vsub.f32 %v783, %v840
        %v913 = vsub.f32 %v784, %v843
        %v914 = vsub.f32 %v785, %v846
        %v915 = vsub.f32 %v786, %v849
        %v916 = vsub.f32 %v787, %v852
        %v917 = vsub.f32 %v788, %v855
        %v918 = vsub.f32 %v789, %v858
        %v919 = vsub.f32 %v790, %v861
        %v920 = vsub.f32 %v791, %v864
        %v921 = vsub.f32 %v792, %v867
        %v922 = vsub.f32 %v793, %v870
        %v923 = vsub.f32 %v794, %v873
        %v924 = vsub.f32 %v795, %v876
        %v925 = vsub.f32 %v796, %v879
        %v926 = vsub.f32 %v797, %v882
        %v927 = vsub.f32 %v798, %v885
        %v928 = vsub.f32 %v799, %v888
        %v929 = vsub.f32 %v800, %v891
        %v930 = vsub.f32 %v801, %v894
        %v931 = vsub.f32 %v802, %v897
        %v932 = vsub.f32 %v803, %v900
        %v933 = vmul.f32 %v901, 1.442695
        %v934 = vpow.pop %v933
        %v935 = vmul.f32 %v902, 1.442695
        %v936 = vpow.pop %v935
        %v937 = vmul.f32 %v903, 1.442695
        %v938 = vpow.pop %v937
        %v939 = vmul.f32 %v904, 1.442695
        %v940 = vpow.pop %v939
        %v941 = vmul.f32 %v905, 1.442695
        %v942 = vpow.pop %v941
        %v943 = vmul.f32 %v906, 1.442695
        %v944 = vpow.pop %v943
        %v945 = vmul.f32 %v907, 1.442695
        %v946 = vpow.pop %v945
        %v947 = vmul.f32 %v908, 1.442695
        %v948 = vpow.pop %v947
        %v949 = vmul.f32 %v909, 1.442695
        %v950 = vpow.pop %v949
        %v951 = vmul.f32 %v910, 1.442695
        %v952 = vpow.pop %v951
        %v953 = vmul.f32 %v911, 1.442695
        %v954 = vpow.pop %v953
        %v955 = vmul.f32 %v912, 1.442695
        %v956 = vpow.pop %v955
        %v957 = vmul.f32 %v913, 1.442695
        %v958 = vpow.pop %v957
        %v959 = vmul.f32 %v914, 1.442695
        %v960 = vpow.pop %v959
        %v961 = vmul.f32 %v915, 1.442695
        %v962 = vpow.pop %v961
        %v963 = vmul.f32 %v916, 1.442695
        %v964 = vpow.pop %v963
        %v965 = vmul.f32 %v917, 1.442695
        %v966 = vpow.pop %v965
        %v967 = vmul.f32 %v918, 1.442695
        %v968 = vpow.pop %v967
        %v969 = vmul.f32 %v919, 1.442695
        %v970 = vpow.pop %v969
        %v971 = vmul.f32 %v920, 1.442695
        %v972 = vpow.pop %v971
        %v973 = vmul.f32 %v921, 1.442695
        %v974 = vpow.pop %v973
        %v975 = vmul.f32 %v922, 1.442695
        %v976 = vpow.pop %v975
        %v977 = vmul.f32 %v923, 1.442695
        %v978 = vpow.pop %v977
        %v979 = vmul.f32 %v924, 1.442695
        %v980 = vpow.pop %v979
        %v981 = vmul.f32 %v925, 1.442695
        %v982 = vpow.pop %v981
        %v983 = vmul.f32 %v926, 1.442695
        %v984 = vpow.pop %v983
        %v985 = vmul.f32 %v927, 1.442695
        %v986 = vpow.pop %v985
        %v987 = vmul.f32 %v928, 1.442695
        %v988 = vpow.pop %v987
        %v989 = vmul.f32 %v929, 1.442695
        %v990 = vpow.pop %v989
        %v991 = vmul.f32 %v930, 1.442695
        %v992 = vpow.pop %v991
        %v993 = vmul.f32 %v931, 1.442695
        %v994 = vpow.pop %v993
        %v995 = vmul.f32 %v932, 1.442695
        %v996 = vpow.pop %v995
        %v997 = vsel %vm804, %v934, 0.0
        %998 = vadd.xlane.f32.xlu0 %v997
        %v999 = vpop.xlane.xlu0 %998
        %v1000 = vsel %vm804, %v936, 0.0
        %1001 = vadd.xlane.f32.xlu0 %v1000
        %v1002 = vpop.xlane.xlu0 %1001
        %v1003 = vsel %vm804, %v938, 0.0
        %1004 = vadd.xlane.f32.xlu0 %v1003
        %v1005 = vpop.xlane.xlu0 %1004
        %v1006 = vsel %vm804, %v940, 0.0
        %1007 = vadd.xlane.f32.xlu0 %v1006
        %v1008 = vpop.xlane.xlu0 %1007
        %v1009 = vsel %vm804, %v942, 0.0
        %1010 = vadd.xlane.f32.xlu0 %v1009
        %v1011 = vpop.xlane.xlu0 %1010
        %v1012 = vsel %vm804, %v944, 0.0
        %1013 = vadd.xlane.f32.xlu0 %v1012
        %v1014 = vpop.xlane.xlu0 %1013
        %v1015 = vsel %vm804, %v946, 0.0
        %1016 = vadd.xlane.f32.xlu0 %v1015
        %v1017 = vpop.xlane.xlu0 %1016
        %v1018 = vsel %vm804, %v948, 0.0
        %1019 = vadd.xlane.f32.xlu0 %v1018
        %v1020 = vpop.xlane.xlu0 %1019
        %v1021 = vsel %vm804, %v950, 0.0
        %1022 = vadd.xlane.f32.xlu0 %v1021
        %v1023 = vpop.xlane.xlu0 %1022
        %v1024 = vsel %vm804, %v952, 0.0
        %1025 = vadd.xlane.f32.xlu0 %v1024
        %v1026 = vpop.xlane.xlu0 %1025
        %v1027 = vsel %vm804, %v954, 0.0
        %1028 = vadd.xlane.f32.xlu0 %v1027
        %v1029 = vpop.xlane.xlu0 %1028
        %v1030 = vsel %vm804, %v956, 0.0
        %1031 = vadd.xlane.f32.xlu0 %v1030
        %v1032 = vpop.xlane.xlu0 %1031
        %v1033 = vsel %vm804, %v958, 0.0
        %1034 = vadd.xlane.f32.xlu0 %v1033
        %v1035 = vpop.xlane.xlu0 %1034
        %v1036 = vsel %vm804, %v960, 0.0
        %1037 = vadd.xlane.f32.xlu0 %v1036
        %v1038 = vpop.xlane.xlu0 %1037
        %v1039 = vsel %vm804, %v962, 0.0
        %1040 = vadd.xlane.f32.xlu0 %v1039
        %v1041 = vpop.xlane.xlu0 %1040
        %v1042 = vsel %vm804, %v964, 0.0
        %1043 = vadd.xlane.f32.xlu0 %v1042
        %v1044 = vpop.xlane.xlu0 %1043
        %v1045 = vsel %vm804, %v966, 0.0
        %1046 = vadd.xlane.f32.xlu0 %v1045
        %v1047 = vpop.xlane.xlu0 %1046
        %v1048 = vsel %vm804, %v968, 0.0
        %1049 = vadd.xlane.f32.xlu0 %v1048
        %v1050 = vpop.xlane.xlu0 %1049
        %v1051 = vsel %vm804, %v970, 0.0
        %1052 = vadd.xlane.f32.xlu0 %v1051
        %v1053 = vpop.xlane.xlu0 %1052
        %v1054 = vsel %vm804, %v972, 0.0
        %1055 = vadd.xlane.f32.xlu0 %v1054
        %v1056 = vpop.xlane.xlu0 %1055
        %v1057 = vsel %vm804, %v974, 0.0
        %1058 = vadd.xlane.f32.xlu0 %v1057
        %v1059 = vpop.xlane.xlu0 %1058
        %v1060 = vsel %vm804, %v976, 0.0
        %1061 = vadd.xlane.f32.xlu0 %v1060
        %v1062 = vpop.xlane.xlu0 %1061
        %v1063 = vsel %vm804, %v978, 0.0
        %1064 = vadd.xlane.f32.xlu0 %v1063
        %v1065 = vpop.xlane.xlu0 %1064
        %v1066 = vsel %vm804, %v980, 0.0
        %1067 = vadd.xlane.f32.xlu0 %v1066
        %v1068 = vpop.xlane.xlu0 %1067
        %v1069 = vsel %vm804, %v982, 0.0
        %1070 = vadd.xlane.f32.xlu0 %v1069
        %v1071 = vpop.xlane.xlu0 %1070
        %v1072 = vsel %vm804, %v984, 0.0
        %1073 = vadd.xlane.f32.xlu0 %v1072
        %v1074 = vpop.xlane.xlu0 %1073
        %v1075 = vsel %vm804, %v986, 0.0
        %1076 = vadd.xlane.f32.xlu0 %v1075
        %v1077 = vpop.xlane.xlu0 %1076
        %v1078 = vsel %vm804, %v988, 0.0
        %1079 = vadd.xlane.f32.xlu0 %v1078
        %v1080 = vpop.xlane.xlu0 %1079
        %v1081 = vsel %vm804, %v990, 0.0
        %1082 = vadd.xlane.f32.xlu0 %v1081
        %v1083 = vpop.xlane.xlu0 %1082
        %v1084 = vsel %vm804, %v992, 0.0
        %1085 = vadd.xlane.f32.xlu0 %v1084
        %v1086 = vpop.xlane.xlu0 %1085
        %v1087 = vsel %vm804, %v994, 0.0
        %1088 = vadd.xlane.f32.xlu0 %v1087
        %v1089 = vpop.xlane.xlu0 %1088
        %v1090 = vsel %vm804, %v996, 0.0
        %1091 = vadd.xlane.f32.xlu0 %v1090
        %v1092 = vpop.xlane.xlu0 %1091
        %v1093 = vrcp.pop %v999
        %v1094 = vrcp.pop %v1002
        %v1095 = vrcp.pop %v1005
        %v1096 = vrcp.pop %v1008
        %v1097 = vrcp.pop %v1011
        %v1098 = vrcp.pop %v1014
        %v1099 = vrcp.pop %v1017
        %v1100 = vrcp.pop %v1020
        %v1101 = vrcp.pop %v1023
        %v1102 = vrcp.pop %v1026
        %v1103 = vrcp.pop %v1029
        %v1104 = vrcp.pop %v1032
        %v1105 = vrcp.pop %v1035
        %v1106 = vrcp.pop %v1038
        %v1107 = vrcp.pop %v1041
        %v1108 = vrcp.pop %v1044
        %v1109 = vrcp.pop %v1047
        %v1110 = vrcp.pop %v1050
        %v1111 = vrcp.pop %v1053
        %v1112 = vrcp.pop %v1056
        %v1113 = vrcp.pop %v1059
        %v1114 = vrcp.pop %v1062
        %v1115 = vrcp.pop %v1065
        %v1116 = vrcp.pop %v1068
        %v1117 = vrcp.pop %v1071
        %v1118 = vrcp.pop %v1074
        %v1119 = vrcp.pop %v1077
        %v1120 = vrcp.pop %v1080
        %v1121 = vrcp.pop %v1083
        %v1122 = vrcp.pop %v1086
        %v1123 = vrcp.pop %v1089
        %v1124 = vrcp.pop %v1092
        %v1125 = vmul.f32 %v934, %v1093
        %v1126 = vmul.f32 %v936, %v1094
        %v1127 = vmul.f32 %v938, %v1095
        %v1128 = vmul.f32 %v940, %v1096
        %v1129 = vmul.f32 %v942, %v1097
        %v1130 = vmul.f32 %v944, %v1098
        %v1131 = vmul.f32 %v946, %v1099
        %v1132 = vmul.f32 %v948, %v1100
        %v1133 = vmul.f32 %v950, %v1101
        %v1134 = vmul.f32 %v952, %v1102
        %v1135 = vmul.f32 %v954, %v1103
        %v1136 = vmul.f32 %v956, %v1104
        %v1137 = vmul.f32 %v958, %v1105
        %v1138 = vmul.f32 %v960, %v1106
        %v1139 = vmul.f32 %v962, %v1107
        %v1140 = vmul.f32 %v964, %v1108
        %v1141 = vmul.f32 %v966, %v1109
        %v1142 = vmul.f32 %v968, %v1110
        %v1143 = vmul.f32 %v970, %v1111
        %v1144 = vmul.f32 %v972, %v1112
        %v1145 = vmul.f32 %v974, %v1113
        %v1146 = vmul.f32 %v976, %v1114
        %v1147 = vmul.f32 %v978, %v1115
        %v1148 = vmul.f32 %v980, %v1116
        %v1149 = vmul.f32 %v982, %v1117
        %v1150 = vmul.f32 %v984, %v1118
        %v1151 = vmul.f32 %v986, %v1119
        %v1152 = vmul.f32 %v988, %v1120
        %v1153 = vmul.f32 %v990, %v1121
        %v1154 = vmul.f32 %v992, %v1122
        %v1155 = vmul.f32 %v994, %v1123
        %v1156 = vmul.f32 %v996, %v1124
        %1157 = vmax.index.xlane.f32.xlu0 %v805
        %v1158 = vpop.xlane.xlu0 %1157
        %1159 = vmax.index.xlane.f32.xlu0 %v808
        %v1160 = vpop.xlane.xlu0 %1159
        %1161 = vmax.index.xlane.f32.xlu0 %v811
        %v1162 = vpop.xlane.xlu0 %1161
        %1163 = vmax.index.xlane.f32.xlu0 %v814
        %v1164 = vpop.xlane.xlu0 %1163
        %1165 = vmax.index.xlane.f32.xlu0 %v817
        %v1166 = vpop.xlane.xlu0 %1165
        %1167 = vmax.index.xlane.f32.xlu0 %v820
        %v1168 = vpop.xlane.xlu0 %1167
        %1169 = vmax.index.xlane.f32.xlu0 %v823
        %v1170 = vpop.xlane.xlu0 %1169
        %1171 = vmax.index.xlane.f32.xlu0 %v826
        %v1172 = vpop.xlane.xlu0 %1171
        %1173 = vmax.index.xlane.f32.xlu0 %v829
        %v1174 = vpop.xlane.xlu0 %1173
        %1175 = vmax.index.xlane.f32.xlu0 %v832
        %v1176 = vpop.xlane.xlu0 %1175
        %1177 = vmax.index.xlane.f32.xlu0 %v835
        %v1178 = vpop.xlane.xlu0 %1177
        %1179 = vmax.index.xlane.f32.xlu0 %v838
        %v1180 = vpop.xlane.xlu0 %1179
        %1181 = vmax.index.xlane.f32.xlu0 %v841
        %v1182 = vpop.xlane.xlu0 %1181
        %1183 = vmax.index.xlane.f32.xlu0 %v844
        %v1184 = vpop.xlane.xlu0 %1183
        %1185 = vmax.index.xlane.f32.xlu0 %v847
        %v1186 = vpop.xlane.xlu0 %1185
        %1187 = vmax.index.xlane.f32.xlu0 %v850
        %v1188 = vpop.xlane.xlu0 %1187
        %1189 = vmax.index.xlane.f32.xlu0 %v853
        %v1190 = vpop.xlane.xlu0 %1189
        %1191 = vmax.index.xlane.f32.xlu0 %v856
        %v1192 = vpop.xlane.xlu0 %1191
        %1193 = vmax.index.xlane.f32.xlu0 %v859
        %v1194 = vpop.xlane.xlu0 %1193
        %1195 = vmax.index.xlane.f32.xlu0 %v862
        %v1196 = vpop.xlane.xlu0 %1195
        %1197 = vmax.index.xlane.f32.xlu0 %v865
        %v1198 = vpop.xlane.xlu0 %1197
        %1199 = vmax.index.xlane.f32.xlu0 %v868
        %v1200 = vpop.xlane.xlu0 %1199
        %1201 = vmax.index.xlane.f32.xlu0 %v871
        %v1202 = vpop.xlane.xlu0 %1201
        %1203 = vmax.index.xlane.f32.xlu0 %v874
        %v1204 = vpop.xlane.xlu0 %1203
        %1205 = vmax.index.xlane.f32.xlu0 %v877
        %v1206 = vpop.xlane.xlu0 %1205
        %1207 = vmax.index.xlane.f32.xlu0 %v880
        %v1208 = vpop.xlane.xlu0 %1207
        %1209 = vmax.index.xlane.f32.xlu0 %v883
        %v1210 = vpop.xlane.xlu0 %1209
        %1211 = vmax.index.xlane.f32.xlu0 %v886
        %v1212 = vpop.xlane.xlu0 %1211
        %1213 = vmax.index.xlane.f32.xlu0 %v889
        %v1214 = vpop.xlane.xlu0 %1213
        %1215 = vmax.index.xlane.f32.xlu0 %v892
        %v1216 = vpop.xlane.xlu0 %1215
        %1217 = vmax.index.xlane.f32.xlu0 %v895
        %v1218 = vpop.xlane.xlu0 %1217
        %1219 = vmax.index.xlane.f32.xlu0 %v898
        %v1220 = vpop.xlane.xlu0 %1219
        %v1221 = vlaneseq
        %v1222 = vand.u32 %v1221, 127
        %vm1223 = vcmp.eq.s32.totalorder %v1222, %v1158
        %vm1224 = vcmp.eq.s32.totalorder %v1222, %v1160
        %vm1225 = vcmp.eq.s32.totalorder %v1222, %v1162
        %vm1226 = vcmp.eq.s32.totalorder %v1222, %v1164
        %vm1227 = vcmp.eq.s32.totalorder %v1222, %v1166
        %vm1228 = vcmp.eq.s32.totalorder %v1222, %v1168
        %vm1229 = vcmp.eq.s32.totalorder %v1222, %v1170
        %vm1230 = vcmp.eq.s32.totalorder %v1222, %v1172
        %vm1231 = vcmp.eq.s32.totalorder %v1222, %v1174
        %vm1232 = vcmp.eq.s32.totalorder %v1222, %v1176
        %vm1233 = vcmp.eq.s32.totalorder %v1222, %v1178
        %vm1234 = vcmp.eq.s32.totalorder %v1222, %v1180
        %vm1235 = vcmp.eq.s32.totalorder %v1222, %v1182
        %vm1236 = vcmp.eq.s32.totalorder %v1222, %v1184
        %vm1237 = vcmp.eq.s32.totalorder %v1222, %v1186
        %vm1238 = vcmp.eq.s32.totalorder %v1222, %v1188
        %vm1239 = vcmp.eq.s32.totalorder %v1222, %v1190
        %vm1240 = vcmp.eq.s32.totalorder %v1222, %v1192
        %vm1241 = vcmp.eq.s32.totalorder %v1222, %v1194
        %vm1242 = vcmp.eq.s32.totalorder %v1222, %v1196
        %vm1243 = vcmp.eq.s32.totalorder %v1222, %v1198
        %vm1244 = vcmp.eq.s32.totalorder %v1222, %v1200
        %vm1245 = vcmp.eq.s32.totalorder %v1222, %v1202
        %vm1246 = vcmp.eq.s32.totalorder %v1222, %v1204
        %vm1247 = vcmp.eq.s32.totalorder %v1222, %v1206
        %vm1248 = vcmp.eq.s32.totalorder %v1222, %v1208
        %vm1249 = vcmp.eq.s32.totalorder %v1222, %v1210
        %vm1250 = vcmp.eq.s32.totalorder %v1222, %v1212
        %vm1251 = vcmp.eq.s32.totalorder %v1222, %v1214
        %vm1252 = vcmp.eq.s32.totalorder %v1222, %v1216
        %vm1253 = vcmp.eq.s32.totalorder %v1222, %v1218
        %vm1254 = vcmp.eq.s32.totalorder %v1222, %v1220
        %v1255 = vsel %vm1223, 1, 0
        %v1256 = vsel %vm1224, 1, 0
        %v1257 = vsel %vm1225, 1, 0
        %v1258 = vsel %vm1226, 1, 0
        %v1259 = vsel %vm1227, 1, 0
        %v1260 = vsel %vm1228, 1, 0
        %v1261 = vsel %vm1229, 1, 0
        %v1262 = vsel %vm1230, 1, 0
        %v1263 = vsel %vm1231, 1, 0
        %v1264 = vsel %vm1232, 1, 0
        %v1265 = vsel %vm1233, 1, 0
        %v1266 = vsel %vm1234, 1, 0
        %v1267 = vsel %vm1235, 1, 0
        %v1268 = vsel %vm1236, 1, 0
        %v1269 = vsel %vm1237, 1, 0
        %v1270 = vsel %vm1238, 1, 0
        %v1271 = vsel %vm1239, 1, 0
        %v1272 = vsel %vm1240, 1, 0
        %v1273 = vsel %vm1241, 1, 0
        %v1274 = vsel %vm1242, 1, 0
        %v1275 = vsel %vm1243, 1, 0
        %v1276 = vsel %vm1244, 1, 0
        %v1277 = vsel %vm1245, 1, 0
        %v1278 = vsel %vm1246, 1, 0
        %v1279 = vsel %vm1247, 1, 0
        %v1280 = vsel %vm1248, 1, 0
        %v1281 = vsel %vm1249, 1, 0
        %v1282 = vsel %vm1250, 1, 0
        %v1283 = vsel %vm1251, 1, 0
        %v1284 = vsel %vm1252, 1, 0
        %v1285 = vsel %vm1253, 1, 0
        %v1286 = vsel %vm1254, 1, 0
        %v1287 = vcvt.s32.f32 %v1255
        %v1288 = vcvt.s32.f32 %v1256
        %v1289 = vcvt.s32.f32 %v1257
        %v1290 = vcvt.s32.f32 %v1258
        %v1291 = vcvt.s32.f32 %v1259
        %v1292 = vcvt.s32.f32 %v1260
        %v1293 = vcvt.s32.f32 %v1261
        %v1294 = vcvt.s32.f32 %v1262
        %v1295 = vcvt.s32.f32 %v1263
        %v1296 = vcvt.s32.f32 %v1264
        %v1297 = vcvt.s32.f32 %v1265
        %v1298 = vcvt.s32.f32 %v1266
        %v1299 = vcvt.s32.f32 %v1267
        %v1300 = vcvt.s32.f32 %v1268
        %v1301 = vcvt.s32.f32 %v1269
        %v1302 = vcvt.s32.f32 %v1270
        %v1303 = vcvt.s32.f32 %v1271
        %v1304 = vcvt.s32.f32 %v1272
        %v1305 = vcvt.s32.f32 %v1273
        %v1306 = vcvt.s32.f32 %v1274
        %v1307 = vcvt.s32.f32 %v1275
        %v1308 = vcvt.s32.f32 %v1276
        %v1309 = vcvt.s32.f32 %v1277
        %v1310 = vcvt.s32.f32 %v1278
        %v1311 = vcvt.s32.f32 %v1279
        %v1312 = vcvt.s32.f32 %v1280
        %v1313 = vcvt.s32.f32 %v1281
        %v1314 = vcvt.s32.f32 %v1282
        %v1315 = vcvt.s32.f32 %v1283
        %v1316 = vcvt.s32.f32 %v1284
        %v1317 = vcvt.s32.f32 %v1285
        %v1318 = vcvt.s32.f32 %v1286
        %v1320 = vsel %vm804, %v1125, 0
        %v1323 = vsel %vm804, %v1126, 0
        %v1326 = vsel %vm804, %v1127, 0
        %v1329 = vsel %vm804, %v1128, 0
        %v1332 = vsel %vm804, %v1129, 0
        %v1335 = vsel %vm804, %v1130, 0
        %v1338 = vsel %vm804, %v1131, 0
        %v1341 = vsel %vm804, %v1132, 0
        %v1344 = vsel %vm804, %v1133, 0
        %v1347 = vsel %vm804, %v1134, 0
        %v1350 = vsel %vm804, %v1135, 0
        %v1353 = vsel %vm804, %v1136, 0
        %v1356 = vsel %vm804, %v1137, 0
        %v1359 = vsel %vm804, %v1138, 0
        %v1362 = vsel %vm804, %v1139, 0
        %v1365 = vsel %vm804, %v1140, 0
        %v1368 = vsel %vm804, %v1141, 0
        %v1371 = vsel %vm804, %v1142, 0
        %v1374 = vsel %vm804, %v1143, 0
        %v1377 = vsel %vm804, %v1144, 0
        %v1380 = vsel %vm804, %v1145, 0
        %v1383 = vsel %vm804, %v1146, 0
        %v1386 = vsel %vm804, %v1147, 0
        %v1389 = vsel %vm804, %v1148, 0
        %v1392 = vsel %vm804, %v1149, 0
        %v1395 = vsel %vm804, %v1150, 0
        %v1398 = vsel %vm804, %v1151, 0
        %v1401 = vsel %vm804, %v1152, 0
        %v1404 = vsel %vm804, %v1153, 0
        %v1407 = vsel %vm804, %v1154, 0
        %v1410 = vsel %vm804, %v1155, 0
        %v1413 = vsel %vm804, %v1156, 0
        %v1416 = vsel %vm804, %v1287, 0
        %v1419 = vsel %vm804, %v1288, 0
        %v1422 = vsel %vm804, %v1289, 0
        %v1425 = vsel %vm804, %v1290, 0
        %v1428 = vsel %vm804, %v1291, 0
        %v1431 = vsel %vm804, %v1292, 0
        %v1434 = vsel %vm804, %v1293, 0
        %v1437 = vsel %vm804, %v1294, 0
        %v1440 = vsel %vm804, %v1295, 0
        %v1443 = vsel %vm804, %v1296, 0
        %v1446 = vsel %vm804, %v1297, 0
        %v1449 = vsel %vm804, %v1298, 0
        %v1452 = vsel %vm804, %v1299, 0
        %v1455 = vsel %vm804, %v1300, 0
        %v1458 = vsel %vm804, %v1301, 0
        %v1461 = vsel %vm804, %v1302, 0
        %v1464 = vsel %vm804, %v1303, 0
        %v1467 = vsel %vm804, %v1304, 0
        %v1470 = vsel %vm804, %v1305, 0
        %v1473 = vsel %vm804, %v1306, 0
        %v1476 = vsel %vm804, %v1307, 0
        %v1479 = vsel %vm804, %v1308, 0
        %v1482 = vsel %vm804, %v1309, 0
        %v1485 = vsel %vm804, %v1310, 0
        %v1488 = vsel %vm804, %v1311, 0
        %v1491 = vsel %vm804, %v1312, 0
        %v1494 = vsel %vm804, %v1313, 0
        %v1497 = vsel %vm804, %v1314, 0
        %v1500 = vsel %vm804, %v1315, 0
        %v1503 = vsel %vm804, %v1316, 0
        %v1506 = vsel %vm804, %v1317, 0
        %v1509 = vsel %vm804, %v1318, 0
        %1511 = vmatprep.subr.mxu0 0.0
        %1512 = vmatpush1.msra.mxu0 %v406
        %1513 = vmatprep.subr.mxu0 0.0
        %1514 = vmatpush1.msra.mxu0 %v407
        %1515 = vmatprep.subr.mxu0 0.0
        %1516 = vmatpush1.msra.mxu0 0.0
        %1517 = vmatprep.subr.mxu0 0.0
        %1518 = vmatpush1.msra.mxu0 0.0
        %1519 = vmatprep.subr.mxu0 0.0
        %1520 = vmatpush1.msra.mxu0 0.0
        %1521 = vmatprep.subr.mxu0 0.0
        %1522 = vmatpush1.msra.mxu0 0.0
        %1523 = vmatprep.subr.mxu0 0.0
        %1524 = vmatpush1.msra.mxu0 0.0
        %1525 = vmatprep.subr.mxu0 0.0
        %1526 = vmatpush1.msra.mxu0 0.0
        %1527 = vmatprep.subr.mxu0 0.0
        %1528 = vmatpush1.msra.mxu0 0.0
        %1529 = vmatprep.subr.mxu0 0.0
        %1530 = vmatpush1.msra.mxu0 0.0
        %1531 = vmatprep.subr.mxu0 0.0
        %1532 = vmatpush1.msra.mxu0 0.0
        %1533 = vmatprep.subr.mxu0 0.0
        %1534 = vmatpush1.msra.mxu0 0.0
        %1535 = vmatprep.subr.mxu0 0.0
        %1536 = vmatpush1.msra.mxu0 0.0
        %1537 = vmatprep.subr.mxu0 0.0
        %1538 = vmatpush1.msra.mxu0 0.0
        %1539 = vmatprep.subr.mxu0 0.0
        %1540 = vmatpush1.msra.mxu0 0.0
        %1541 = vmatprep.subr.mxu0 0.0
        %1542 = vmatpush1.msra.mxu0 0.0
        %1543 = vmatprep.subr.mxu0 0.0
        %1544 = vmatpush1.msra.mxu0 0.0
        %1545 = vmatprep.subr.mxu0 0.0
        %1546 = vmatpush1.msra.mxu0 0.0
        %1547 = vmatprep.subr.mxu0 0.0
        %1548 = vmatpush1.msra.mxu0 0.0
        %1549 = vmatprep.subr.mxu0 0.0
        %1550 = vmatpush1.msra.mxu0 0.0
        %1551 = vmatprep.subr.mxu0 0.0
        %1552 = vmatpush1.msra.mxu0 0.0
        %1553 = vmatprep.subr.mxu0 0.0
        %1554 = vmatpush1.msra.mxu0 0.0
        %1555 = vmatprep.subr.mxu0 0.0
        %1556 = vmatpush1.msra.mxu0 0.0
        %1557 = vmatprep.subr.mxu0 0.0
        %1558 = vmatpush1.msra.mxu0 0.0
        %1559 = vmatprep.subr.mxu0 0.0
        %1560 = vmatpush1.msra.mxu0 0.0
        %1561 = vmatprep.subr.mxu0 0.0
        %1562 = vmatpush1.msra.mxu0 0.0
        %1563 = vmatprep.subr.mxu0 0.0
        %1564 = vmatpush1.msra.mxu0 0.0
        %1565 = vmatprep.subr.mxu0 0.0
        %1566 = vmatpush1.msra.mxu0 0.0
        %1567 = vmatprep.subr.mxu0 0.0
        %1568 = vmatpush1.msra.mxu0 0.0
        %1569 = vmatprep.subr.mxu0 0.0
        %1570 = vmatpush1.msra.mxu0 0.0
        %1571 = vmatprep.subr.mxu0 0.0
        %1572 = vmatpush1.msra.mxu0 0.0
        %1573 = vmatprep.subr.mxu0 0.0
        %1574 = vmatpush1.msra.mxu0 0.0
        %1575 = vmatprep.mubr.f32.mxu0 0.0
        %1576 = vmatmul.mubr.f32.gmra.mrb[0].mxu0 %v1320
        %v1577 = vpop.f32.mrb[0].mxu0
        %v1578 = vadd.f32 0.0, %v1577
        %v1579 = vpop.f32.mrb[0].mxu0
        %1580 = vmatprep.mubr.f32.mxu0 0.0
        %1581 = vmatmul.mubr.f32.gmra.mrb[0].mxu0 %v1323
        %v1582 = vpop.f32.mrb[0].mxu0
        %v1583 = vadd.f32 0.0, %v1582
        %v1584 = vpop.f32.mrb[0].mxu0
        %1585 = vmatprep.mubr.f32.mxu0 0.0
        %1586 = vmatmul.mubr.f32.gmra.mrb[0].mxu0 %v1326
        %v1587 = vpop.f32.mrb[0].mxu0
        %v1588 = vadd.f32 0.0, %v1587
        %v1589 = vpop.f32.mrb[0].mxu0
        %1590 = vmatprep.mubr.f32.mxu0 0.0
        %1591 = vmatmul.mubr.f32.gmra.mrb[0].mxu0 %v1329
        %v1592 = vpop.f32.mrb[0].mxu0
        %v1593 = vadd.f32 0.0, %v1592
        %v1594 = vpop.f32.mrb[0].mxu0
        %1595 = vmatprep.mubr.f32.mxu0 0.0
        %1596 = vmatmul.mubr.f32.gmra.mrb[0].mxu0 %v1332
        %v1597 = vpop.f32.mrb[0].mxu0
        %v1598 = vadd.f32 0.0, %v1597
        %v1599 = vpop.f32.mrb[0].mxu0
        %1600 = vmatprep.mubr.f32.mxu0 0.0
        %1601 = vmatmul.mubr.f32.gmra.mrb[0].mxu0 %v1335
        %v1602 = vpop.f32.mrb[0].mxu0
        %v1603 = vadd.f32 0.0, %v1602
        %v1604 = vpop.f32.mrb[0].mxu0
        %1605 = vmatprep.mubr.f32.mxu0 0.0
        %1606 = vmatmul.mubr.f32.gmra.mrb[0].mxu0 %v1338
        %v1607 = vpop.f32.mrb[0].mxu0
        %v1608 = vadd.f32 0.0, %v1607
        %v1609 = vpop.f32.mrb[0].mxu0
        %1610 = vmatprep.mubr.f32.mxu0 0.0
        %1611 = vmatmul.mubr.f32.gmra.mrb[0].mxu0 %v1341
        %v1612 = vpop.f32.mrb[0].mxu0
        %v1613 = vadd.f32 0.0, %v1612
        %v1614 = vpop.f32.mrb[0].mxu0
        %1615 = vmatprep.mubr.f32.mxu0 0.0
        %1616 = vmatmul.mubr.f32.gmra.mrb[0].mxu0 %v1344
        %v1617 = vpop.f32.mrb[0].mxu0
        %v1618 = vadd.f32 0.0, %v1617
        %v1619 = vpop.f32.mrb[0].mxu0
        %1620 = vmatprep.mubr.f32.mxu0 0.0
        %1621 = vmatmul.mubr.f32.gmra.mrb[0].mxu0 %v1347
        %v1622 = vpop.f32.mrb[0].mxu0
        %v1623 = vadd.f32 0.0, %v1622
        %v1624 = vpop.f32.mrb[0].mxu0
        %1625 = vmatprep.mubr.f32.mxu0 0.0
        %1626 = vmatmul.mubr.f32.gmra.mrb[0].mxu0 %v1350
        %v1627 = vpop.f32.mrb[0].mxu0
        %v1628 = vadd.f32 0.0, %v1627
        %v1629 = vpop.f32.mrb[0].mxu0
        %1630 = vmatprep.mubr.f32.mxu0 0.0
        %1631 = vmatmul.mubr.f32.gmra.mrb[0].mxu0 %v1353
        %v1632 = vpop.f32.mrb[0].mxu0
        %v1633 = vadd.f32 0.0, %v1632
        %v1634 = vpop.f32.mrb[0].mxu0
        %1635 = vmatprep.mubr.f32.mxu0 0.0
        %1636 = vmatmul.mubr.f32.gmra.mrb[0].mxu0 %v1356
        %v1637 = vpop.f32.mrb[0].mxu0
        %v1638 = vadd.f32 0.0, %v1637
        %v1639 = vpop.f32.mrb[0].mxu0
        %1640 = vmatprep.mubr.f32.mxu0 0.0
        %1641 = vmatmul.mubr.f32.gmra.mrb[0].mxu0 %v1359
        %v1642 = vpop.f32.mrb[0].mxu0
        %v1643 = vadd.f32 0.0, %v1642
        %v1644 = vpop.f32.mrb[0].mxu0
        %1645 = vmatprep.mubr.f32.mxu0 0.0
        %1646 = vmatmul.mubr.f32.gmra.mrb[0].mxu0 %v1362
        %v1647 = vpop.f32.mrb[0].mxu0
        %v1648 = vadd.f32 0.0, %v1647
        %v1649 = vpop.f32.mrb[0].mxu0
        %1650 = vmatprep.mubr.f32.mxu0 0.0
        %1651 = vmatmul.mubr.f32.gmra.mrb[0].mxu0 %v1365
        %v1652 = vpop.f32.mrb[0].mxu0
        %v1653 = vadd.f32 0.0, %v1652
        %v1654 = vpop.f32.mrb[0].mxu0
        %1655 = vmatprep.mubr.f32.mxu0 0.0
        %1656 = vmatmul.mubr.f32.gmra.mrb[0].mxu0 %v1368
        %v1657 = vpop.f32.mrb[0].mxu0
        %v1658 = vadd.f32 0.0, %v1657
        %v1659 = vpop.f32.mrb[0].mxu0
        %1660 = vmatprep.mubr.f32.mxu0 0.0
        %1661 = vmatmul.mubr.f32.gmra.mrb[0].mxu0 %v1371
        %v1662 = vpop.f32.mrb[0].mxu0
        %v1663 = vadd.f32 0.0, %v1662
        %v1664 = vpop.f32.mrb[0].mxu0
        %1665 = vmatprep.mubr.f32.mxu0 0.0
        %1666 = vmatmul.mubr.f32.gmra.mrb[0].mxu0 %v1374
        %v1667 = vpop.f32.mrb[0].mxu0
        %v1668 = vadd.f32 0.0, %v1667
        %v1669 = vpop.f32.mrb[0].mxu0
        %1670 = vmatprep.mubr.f32.mxu0 0.0
        %1671 = vmatmul.mubr.f32.gmra.mrb[0].mxu0 %v1377
        %v1672 = vpop.f32.mrb[0].mxu0
        %v1673 = vadd.f32 0.0, %v1672
        %v1674 = vpop.f32.mrb[0].mxu0
        %1675 = vmatprep.mubr.f32.mxu0 0.0
        %1676 = vmatmul.mubr.f32.gmra.mrb[0].mxu0 %v1380
        %v1677 = vpop.f32.mrb[0].mxu0
        %v1678 = vadd.f32 0.0, %v1677
        %v1679 = vpop.f32.mrb[0].mxu0
        %1680 = vmatprep.mubr.f32.mxu0 0.0
        %1681 = vmatmul.mubr.f32.gmra.mrb[0].mxu0 %v1383
        %v1682 = vpop.f32.mrb[0].mxu0
        %v1683 = vadd.f32 0.0, %v1682
        %v1684 = vpop.f32.mrb[0].mxu0
        %1685 = vmatprep.mubr.f32.mxu0 0.0
        %1686 = vmatmul.mubr.f32.gmra.mrb[0].mxu0 %v1386
        %v1687 = vpop.f32.mrb[0].mxu0
        %v1688 = vadd.f32 0.0, %v1687
        %v1689 = vpop.f32.mrb[0].mxu0
        %1690 = vmatprep.mubr.f32.mxu0 0.0
        %1691 = vmatmul.mubr.f32.gmra.mrb[0].mxu0 %v1389
        %v1692 = vpop.f32.mrb[0].mxu0
        %v1693 = vadd.f32 0.0, %v1692
        %v1694 = vpop.f32.mrb[0].mxu0
        %1695 = vmatprep.mubr.f32.mxu0 0.0
        %1696 = vmatmul.mubr.f32.gmra.mrb[0].mxu0 %v1392
        %v1697 = vpop.f32.mrb[0].mxu0
        %v1698 = vadd.f32 0.0, %v1697
        %v1699 = vpop.f32.mrb[0].mxu0
        %1700 = vmatprep.mubr.f32.mxu0 0.0
        %1701 = vmatmul.mubr.f32.gmra.mrb[0].mxu0 %v1395
        %v1702 = vpop.f32.mrb[0].mxu0
        %v1703 = vadd.f32 0.0, %v1702
        %v1704 = vpop.f32.mrb[0].mxu0
        %1705 = vmatprep.mubr.f32.mxu0 0.0
        %1706 = vmatmul.mubr.f32.gmra.mrb[0].mxu0 %v1398
        %v1707 = vpop.f32.mrb[0].mxu0
        %v1708 = vadd.f32 0.0, %v1707
        %v1709 = vpop.f32.mrb[0].mxu0
        %1710 = vmatprep.mubr.f32.mxu0 0.0
        %1711 = vmatmul.mubr.f32.gmra.mrb[0].mxu0 %v1401
        %v1712 = vpop.f32.mrb[0].mxu0
        %v1713 = vadd.f32 0.0, %v1712
        %v1714 = vpop.f32.mrb[0].mxu0
        %1715 = vmatprep.mubr.f32.mxu0 0.0
        %1716 = vmatmul.mubr.f32.gmra.mrb[0].mxu0 %v1404
        %v1717 = vpop.f32.mrb[0].mxu0
        %v1718 = vadd.f32 0.0, %v1717
        %v1719 = vpop.f32.mrb[0].mxu0
        %1720 = vmatprep.mubr.f32.mxu0 0.0
        %1721 = vmatmul.mubr.f32.gmra.mrb[0].mxu0 %v1407
        %v1722 = vpop.f32.mrb[0].mxu0
        %v1723 = vadd.f32 0.0, %v1722
        %v1724 = vpop.f32.mrb[0].mxu0
        %1725 = vmatprep.mubr.f32.mxu0 0.0
        %1726 = vmatmul.mubr.f32.gmra.mrb[0].mxu0 %v1410
        %v1727 = vpop.f32.mrb[0].mxu0
        %v1728 = vadd.f32 0.0, %v1727
        %v1729 = vpop.f32.mrb[0].mxu0
        %1730 = vmatprep.mubr.f32.mxu0 0.0
        %1731 = vmatmul.mubr.f32.gmra.mrb[0].mxu0 %v1413
        %v1732 = vpop.f32.mrb[0].mxu0
        %v1733 = vadd.f32 0.0, %v1732
        %v1734 = vpop.f32.mrb[0].mxu0
        %1735 = vmatprep.mubr.f32.mxu0 0.0
        %1736 = vmatmul.mubr.f32.gmra.mrb[0].mxu0 %v1416
        %v1737 = vpop.f32.mrb[0].mxu0
        %v1738 = vadd.f32 0.0, %v1737
        %v1739 = vpop.f32.mrb[0].mxu0
        %1740 = vmatprep.mubr.f32.mxu0 0.0
        %1741 = vmatmul.mubr.f32.gmra.mrb[0].mxu0 %v1419
        %v1742 = vpop.f32.mrb[0].mxu0
        %v1743 = vadd.f32 0.0, %v1742
        %v1744 = vpop.f32.mrb[0].mxu0
        %1745 = vmatprep.mubr.f32.mxu0 0.0
        %1746 = vmatmul.mubr.f32.gmra.mrb[0].mxu0 %v1422
        %v1747 = vpop.f32.mrb[0].mxu0
        %v1748 = vadd.f32 0.0, %v1747
        %v1749 = vpop.f32.mrb[0].mxu0
        %1750 = vmatprep.mubr.f32.mxu0 0.0
        %1751 = vmatmul.mubr.f32.gmra.mrb[0].mxu0 %v1425
        %v1752 = vpop.f32.mrb[0].mxu0
        %v1753 = vadd.f32 0.0, %v1752
        %v1754 = vpop.f32.mrb[0].mxu0
        %1755 = vmatprep.mubr.f32.mxu0 0.0
        %1756 = vmatmul.mubr.f32.gmra.mrb[0].mxu0 %v1428
        %v1757 = vpop.f32.mrb[0].mxu0
        %v1758 = vadd.f32 0.0, %v1757
        %v1759 = vpop.f32.mrb[0].mxu0
        %1760 = vmatprep.mubr.f32.mxu0 0.0
        %1761 = vmatmul.mubr.f32.gmra.mrb[0].mxu0 %v1431
        %v1762 = vpop.f32.mrb[0].mxu0
        %v1763 = vadd.f32 0.0, %v1762
        %v1764 = vpop.f32.mrb[0].mxu0
        %1765 = vmatprep.mubr.f32.mxu0 0.0
        %1766 = vmatmul.mubr.f32.gmra.mrb[0].mxu0 %v1434
        %v1767 = vpop.f32.mrb[0].mxu0
        %v1768 = vadd.f32 0.0, %v1767
        %v1769 = vpop.f32.mrb[0].mxu0
        %1770 = vmatprep.mubr.f32.mxu0 0.0
        %1771 = vmatmul.mubr.f32.gmra.mrb[0].mxu0 %v1437
        %v1772 = vpop.f32.mrb[0].mxu0
        %v1773 = vadd.f32 0.0, %v1772
        %v1774 = vpop.f32.mrb[0].mxu0
        %1775 = vmatprep.mubr.f32.mxu0 0.0
        %1776 = vmatmul.mubr.f32.gmra.mrb[0].mxu0 %v1440
        %v1777 = vpop.f32.mrb[0].mxu0
        %v1778 = vadd.f32 0.0, %v1777
        %v1779 = vpop.f32.mrb[0].mxu0
        %1780 = vmatprep.mubr.f32.mxu0 0.0
        %1781 = vmatmul.mubr.f32.gmra.mrb[0].mxu0 %v1443
        %v1782 = vpop.f32.mrb[0].mxu0
        %v1783 = vadd.f32 0.0, %v1782
        %v1784 = vpop.f32.mrb[0].mxu0
        %1785 = vmatprep.mubr.f32.mxu0 0.0
        %1786 = vmatmul.mubr.f32.gmra.mrb[0].mxu0 %v1446
        %v1787 = vpop.f32.mrb[0].mxu0
        %v1788 = vadd.f32 0.0, %v1787
        %v1789 = vpop.f32.mrb[0].mxu0
        %1790 = vmatprep.mubr.f32.mxu0 0.0
        %1791 = vmatmul.mubr.f32.gmra.mrb[0].mxu0 %v1449
        %v1792 = vpop.f32.mrb[0].mxu0
        %v1793 = vadd.f32 0.0, %v1792
        %v1794 = vpop.f32.mrb[0].mxu0
        %1795 = vmatprep.mubr.f32.mxu0 0.0
        %1796 = vmatmul.mubr.f32.gmra.mrb[0].mxu0 %v1452
        %v1797 = vpop.f32.mrb[0].mxu0
        %v1798 = vadd.f32 0.0, %v1797
        %v1799 = vpop.f32.mrb[0].mxu0
        %1800 = vmatprep.mubr.f32.mxu0 0.0
        %1801 = vmatmul.mubr.f32.gmra.mrb[0].mxu0 %v1455
        %v1802 = vpop.f32.mrb[0].mxu0
        %v1803 = vadd.f32 0.0, %v1802
        %v1804 = vpop.f32.mrb[0].mxu0
        %1805 = vmatprep.mubr.f32.mxu0 0.0
        %1806 = vmatmul.mubr.f32.gmra.mrb[0].mxu0 %v1458
        %v1807 = vpop.f32.mrb[0].mxu0
        %v1808 = vadd.f32 0.0, %v1807
        %v1809 = vpop.f32.mrb[0].mxu0
        %1810 = vmatprep.mubr.f32.mxu0 0.0
        %1811 = vmatmul.mubr.f32.gmra.mrb[0].mxu0 %v1461
        %v1812 = vpop.f32.mrb[0].mxu0
        %v1813 = vadd.f32 0.0, %v1812
        %v1814 = vpop.f32.mrb[0].mxu0
        %1815 = vmatprep.mubr.f32.mxu0 0.0
        %1816 = vmatmul.mubr.f32.gmra.mrb[0].mxu0 %v1464
        %v1817 = vpop.f32.mrb[0].mxu0
        %v1818 = vadd.f32 0.0, %v1817
        %v1819 = vpop.f32.mrb[0].mxu0
        %1820 = vmatprep.mubr.f32.mxu0 0.0
        %1821 = vmatmul.mubr.f32.gmra.mrb[0].mxu0 %v1467
        %v1822 = vpop.f32.mrb[0].mxu0
        %v1823 = vadd.f32 0.0, %v1822
        %v1824 = vpop.f32.mrb[0].mxu0
        %1825 = vmatprep.mubr.f32.mxu0 0.0
        %1826 = vmatmul.mubr.f32.gmra.mrb[0].mxu0 %v1470
        %v1827 = vpop.f32.mrb[0].mxu0
        %v1828 = vadd.f32 0.0, %v1827
        %v1829 = vpop.f32.mrb[0].mxu0
        %1830 = vmatprep.mubr.f32.mxu0 0.0
        %1831 = vmatmul.mubr.f32.gmra.mrb[0].mxu0 %v1473
        %v1832 = vpop.f32.mrb[0].mxu0
        %v1833 = vadd.f32 0.0, %v1832
        %v1834 = vpop.f32.mrb[0].mxu0
        %1835 = vmatprep.mubr.f32.mxu0 0.0
        %1836 = vmatmul.mubr.f32.gmra.mrb[0].mxu0 %v1476
        %v1837 = vpop.f32.mrb[0].mxu0
        %v1838 = vadd.f32 0.0, %v1837
        %v1839 = vpop.f32.mrb[0].mxu0
        %1840 = vmatprep.mubr.f32.mxu0 0.0
        %1841 = vmatmul.mubr.f32.gmra.mrb[0].mxu0 %v1479
        %v1842 = vpop.f32.mrb[0].mxu0
        %v1843 = vadd.f32 0.0, %v1842
        %v1844 = vpop.f32.mrb[0].mxu0
        %1845 = vmatprep.mubr.f32.mxu0 0.0
        %1846 = vmatmul.mubr.f32.gmra.mrb[0].mxu0 %v1482
        %v1847 = vpop.f32.mrb[0].mxu0
        %v1848 = vadd.f32 0.0, %v1847
        %v1849 = vpop.f32.mrb[0].mxu0
        %1850 = vmatprep.mubr.f32.mxu0 0.0
        %1851 = vmatmul.mubr.f32.gmra.mrb[0].mxu0 %v1485
        %v1852 = vpop.f32.mrb[0].mxu0
        %v1853 = vadd.f32 0.0, %v1852
        %v1854 = vpop.f32.mrb[0].mxu0
        %1855 = vmatprep.mubr.f32.mxu0 0.0
        %1856 = vmatmul.mubr.f32.gmra.mrb[0].mxu0 %v1488
        %v1857 = vpop.f32.mrb[0].mxu0
        %v1858 = vadd.f32 0.0, %v1857
        %v1859 = vpop.f32.mrb[0].mxu0
        %1860 = vmatprep.mubr.f32.mxu0 0.0
        %1861 = vmatmul.mubr.f32.gmra.mrb[0].mxu0 %v1491
        %v1862 = vpop.f32.mrb[0].mxu0
        %v1863 = vadd.f32 0.0, %v1862
        %v1864 = vpop.f32.mrb[0].mxu0
        %1865 = vmatprep.mubr.f32.mxu0 0.0
        %1866 = vmatmul.mubr.f32.gmra.mrb[0].mxu0 %v1494
        %v1867 = vpop.f32.mrb[0].mxu0
        %v1868 = vadd.f32 0.0, %v1867
        %v1869 = vpop.f32.mrb[0].mxu0
        %1870 = vmatprep.mubr.f32.mxu0 0.0
        %1871 = vmatmul.mubr.f32.gmra.mrb[0].mxu0 %v1497
        %v1872 = vpop.f32.mrb[0].mxu0
        %v1873 = vadd.f32 0.0, %v1872
        %v1874 = vpop.f32.mrb[0].mxu0
        %1875 = vmatprep.mubr.f32.mxu0 0.0
        %1876 = vmatmul.mubr.f32.gmra.mrb[0].mxu0 %v1500
        %v1877 = vpop.f32.mrb[0].mxu0
        %v1878 = vadd.f32 0.0, %v1877
        %v1879 = vpop.f32.mrb[0].mxu0
        %1880 = vmatprep.mubr.f32.mxu0 0.0
        %1881 = vmatmul.mubr.f32.gmra.mrb[0].mxu0 %v1503
        %v1882 = vpop.f32.mrb[0].mxu0
        %v1883 = vadd.f32 0.0, %v1882
        %v1884 = vpop.f32.mrb[0].mxu0
        %1885 = vmatprep.mubr.f32.mxu0 0.0
        %1886 = vmatmul.mubr.f32.gmra.mrb[0].mxu0 %v1506
        %v1887 = vpop.f32.mrb[0].mxu0
        %v1888 = vadd.f32 0.0, %v1887
        %v1889 = vpop.f32.mrb[0].mxu0
        %1890 = vmatprep.mubr.f32.mxu0 0.0
        %1891 = vmatmul.mubr.f32.gmra.mrb[0].mxu0 %v1509
        %v1892 = vpop.f32.mrb[0].mxu0
        %v1893 = vadd.f32 0.0, %v1892
        %v1894 = vpop.f32.mrb[0].mxu0
        %1895 = vdwg.mxu0
        %v1896 = vmul.f32 %v1578, %v373
        %v1897 = vmul.f32 %v1583, %v374
        %v1898 = vmul.f32 %v1588, %v375
        %v1899 = vmul.f32 %v1593, %v376
        %v1900 = vmul.f32 %v1598, %v377
        %v1901 = vmul.f32 %v1603, %v378
        %v1902 = vmul.f32 %v1608, %v379
        %v1903 = vmul.f32 %v1613, %v380
        %v1904 = vmul.f32 %v1618, %v381
        %v1905 = vmul.f32 %v1623, %v382
        %v1906 = vmul.f32 %v1628, %v383
        %v1907 = vmul.f32 %v1633, %v384
        %v1908 = vmul.f32 %v1638, %v385
        %v1909 = vmul.f32 %v1643, %v386
        %v1910 = vmul.f32 %v1648, %v387
        %v1911 = vmul.f32 %v1653, %v388
        %v1912 = vmul.f32 %v1658, %v389
        %v1913 = vmul.f32 %v1663, %v390
        %v1914 = vmul.f32 %v1668, %v391
        %v1915 = vmul.f32 %v1673, %v392
        %v1916 = vmul.f32 %v1678, %v393
        %v1917 = vmul.f32 %v1683, %v394
        %v1918 = vmul.f32 %v1688, %v395
        %v1919 = vmul.f32 %v1693, %v396
        %v1920 = vmul.f32 %v1698, %v397
        %v1921 = vmul.f32 %v1703, %v398
        %v1922 = vmul.f32 %v1708, %v399
        %v1923 = vmul.f32 %v1713, %v400
        %v1924 = vmul.f32 %v1718, %v401
        %v1925 = vmul.f32 %v1723, %v402
        %v1926 = vmul.f32 %v1728, %v403
        %v1927 = vmul.f32 %v1733, %v404
        %v1928 = vmul.f32 %v1738, %v373
        %v1929 = vmul.f32 %v1743, %v374
        %v1930 = vmul.f32 %v1748, %v375
        %v1931 = vmul.f32 %v1753, %v376
        %v1932 = vmul.f32 %v1758, %v377
        %v1933 = vmul.f32 %v1763, %v378
        %v1934 = vmul.f32 %v1768, %v379
        %v1935 = vmul.f32 %v1773, %v380
        %v1936 = vmul.f32 %v1778, %v381
        %v1937 = vmul.f32 %v1783, %v382
        %v1938 = vmul.f32 %v1788, %v383
        %v1939 = vmul.f32 %v1793, %v384
        %v1940 = vmul.f32 %v1798, %v385
        %v1941 = vmul.f32 %v1803, %v386
        %v1942 = vmul.f32 %v1808, %v387
        %v1943 = vmul.f32 %v1813, %v388
        %v1944 = vmul.f32 %v1818, %v389
        %v1945 = vmul.f32 %v1823, %v390
        %v1946 = vmul.f32 %v1828, %v391
        %v1947 = vmul.f32 %v1833, %v392
        %v1948 = vmul.f32 %v1838, %v393
        %v1949 = vmul.f32 %v1843, %v394
        %v1950 = vmul.f32 %v1848, %v395
        %v1951 = vmul.f32 %v1853, %v396
        %v1952 = vmul.f32 %v1858, %v397
        %v1953 = vmul.f32 %v1863, %v398
        %v1954 = vmul.f32 %v1868, %v399
        %v1955 = vmul.f32 %v1873, %v400
        %v1956 = vmul.f32 %v1878, %v401
        %v1957 = vmul.f32 %v1883, %v402
        %v1958 = vmul.f32 %v1888, %v403
        %v1959 = vmul.f32 %v1893, %v404
        %v1960 = vsub.f32 %v210, %v1928
        %v1961 = vsub.f32 %v211, %v1929
        %v1962 = vsub.f32 %v212, %v1930
        %v1963 = vsub.f32 %v213, %v1931
        %v1964 = vsub.f32 %v214, %v1932
        %v1965 = vsub.f32 %v215, %v1933
        %v1966 = vsub.f32 %v216, %v1934
        %v1967 = vsub.f32 %v217, %v1935
        %v1968 = vsub.f32 %v218, %v1936
        %v1969 = vsub.f32 %v219, %v1937
        %v1970 = vsub.f32 %v220, %v1938
        %v1971 = vsub.f32 %v221, %v1939
        %v1972 = vsub.f32 %v222, %v1940
        %v1973 = vsub.f32 %v223, %v1941
        %v1974 = vsub.f32 %v224, %v1942
        %v1975 = vsub.f32 %v225, %v1943
        %v1976 = vsub.f32 %v226, %v1944
        %v1977 = vsub.f32 %v227, %v1945
        %v1978 = vsub.f32 %v228, %v1946
        %v1979 = vsub.f32 %v229, %v1947
        %v1980 = vsub.f32 %v230, %v1948
        %v1981 = vsub.f32 %v231, %v1949
        %v1982 = vsub.f32 %v232, %v1950
        %v1983 = vsub.f32 %v233, %v1951
        %v1984 = vsub.f32 %v234, %v1952
        %v1985 = vsub.f32 %v235, %v1953
        %v1986 = vsub.f32 %v236, %v1954
        %v1987 = vsub.f32 %v237, %v1955
        %v1988 = vsub.f32 %v238, %v1956
        %v1989 = vsub.f32 %v239, %v1957
        %v1990 = vsub.f32 %v240, %v1958
        %v1991 = vsub.f32 %v241, %v1959
        %v1992 = vadd.f32 %v1896, 0.0
        %v1993 = vadd.f32 %v1897, 0.0
        %v1994 = vadd.f32 %v1898, 0.0
        %v1995 = vadd.f32 %v1899, 0.0
        %v1996 = vadd.f32 %v1900, 0.0
        %v1997 = vadd.f32 %v1901, 0.0
        %v1998 = vadd.f32 %v1902, 0.0
        %v1999 = vadd.f32 %v1903, 0.0
        %v2000 = vadd.f32 %v1904, 0.0
        %v2001 = vadd.f32 %v1905, 0.0
        %v2002 = vadd.f32 %v1906, 0.0
        %v2003 = vadd.f32 %v1907, 0.0
        %v2004 = vadd.f32 %v1908, 0.0
        %v2005 = vadd.f32 %v1909, 0.0
        %v2006 = vadd.f32 %v1910, 0.0
        %v2007 = vadd.f32 %v1911, 0.0
        %v2008 = vadd.f32 %v1912, 0.0
        %v2009 = vadd.f32 %v1913, 0.0
        %v2010 = vadd.f32 %v1914, 0.0
        %v2011 = vadd.f32 %v1915, 0.0
        %v2012 = vadd.f32 %v1916, 0.0
        %v2013 = vadd.f32 %v1917, 0.0
        %v2014 = vadd.f32 %v1918, 0.0
        %v2015 = vadd.f32 %v1919, 0.0
        %v2016 = vadd.f32 %v1920, 0.0
        %v2017 = vadd.f32 %v1921, 0.0
        %v2018 = vadd.f32 %v1922, 0.0
        %v2019 = vadd.f32 %v1923, 0.0
        %v2020 = vadd.f32 %v1924, 0.0
        %v2021 = vadd.f32 %v1925, 0.0
        %v2022 = vadd.f32 %v1926, 0.0
        %v2023 = vadd.f32 %v1927, 0.0
        %v2024 = vadd.f32 %v1928, 0.0
        %v2025 = vadd.f32 %v1929, 0.0
        %v2026 = vadd.f32 %v1930, 0.0
        %v2027 = vadd.f32 %v1931, 0.0
        %v2028 = vadd.f32 %v1932, 0.0
        %v2029 = vadd.f32 %v1933, 0.0
        %v2030 = vadd.f32 %v1934, 0.0
        %v2031 = vadd.f32 %v1935, 0.0
        %v2032 = vadd.f32 %v1936, 0.0
        %v2033 = vadd.f32 %v1937, 0.0
        %v2034 = vadd.f32 %v1938, 0.0
        %v2035 = vadd.f32 %v1939, 0.0
        %v2036 = vadd.f32 %v1940, 0.0
        %v2037 = vadd.f32 %v1941, 0.0
        %v2038 = vadd.f32 %v1942, 0.0
        %v2039 = vadd.f32 %v1943, 0.0
        %v2040 = vadd.f32 %v1944, 0.0
        %v2041 = vadd.f32 %v1945, 0.0
        %v2042 = vadd.f32 %v1946, 0.0
        %v2043 = vadd.f32 %v1947, 0.0
        %v2044 = vadd.f32 %v1948, 0.0
        %v2045 = vadd.f32 %v1949, 0.0
        %v2046 = vadd.f32 %v1950, 0.0
        %v2047 = vadd.f32 %v1951, 0.0
        %v2048 = vadd.f32 %v1952, 0.0
        %v2049 = vadd.f32 %v1953, 0.0
        %v2050 = vadd.f32 %v1954, 0.0
        %v2051 = vadd.f32 %v1955, 0.0
        %v2052 = vadd.f32 %v1956, 0.0
        %v2053 = vadd.f32 %v1957, 0.0
        %v2054 = vadd.f32 %v1958, 0.0
        %v2055 = vadd.f32 %v1959, 0.0
        %v2056 = vcvt.s32.f32 %v1158
        %v2057 = vcvt.s32.f32 %v1160
        %v2058 = vcvt.s32.f32 %v1162
        %v2059 = vcvt.s32.f32 %v1164
        %v2060 = vcvt.s32.f32 %v1166
        %v2061 = vcvt.s32.f32 %v1168
        %v2062 = vcvt.s32.f32 %v1170
        %v2063 = vcvt.s32.f32 %v1172
        %v2064 = vcvt.s32.f32 %v1174
        %v2065 = vcvt.s32.f32 %v1176
        %v2066 = vcvt.s32.f32 %v1178
        %v2067 = vcvt.s32.f32 %v1180
        %v2068 = vcvt.s32.f32 %v1182
        %v2069 = vcvt.s32.f32 %v1184
        %v2070 = vcvt.s32.f32 %v1186
        %v2071 = vcvt.s32.f32 %v1188
        %v2072 = vcvt.s32.f32 %v1190
        %v2073 = vcvt.s32.f32 %v1192
        %v2074 = vcvt.s32.f32 %v1194
        %v2075 = vcvt.s32.f32 %v1196
        %v2076 = vcvt.s32.f32 %v1198
        %v2077 = vcvt.s32.f32 %v1200
        %v2078 = vcvt.s32.f32 %v1202
        %v2079 = vcvt.s32.f32 %v1204
        %v2080 = vcvt.s32.f32 %v1206
        %v2081 = vcvt.s32.f32 %v1208
        %v2082 = vcvt.s32.f32 %v1210
        %v2083 = vcvt.s32.f32 %v1212
        %v2084 = vcvt.s32.f32 %v1214
        %v2085 = vcvt.s32.f32 %v1216
        %v2086 = vcvt.s32.f32 %v1218
        %v2087 = vcvt.s32.f32 %v1220
        %v2088 = vsub.f32 %v210, %v1992
        %v2089 = vsub.f32 %v211, %v1993
        %v2090 = vsub.f32 %v212, %v1994
        %v2091 = vsub.f32 %v213, %v1995
        %v2092 = vsub.f32 %v214, %v1996
        %v2093 = vsub.f32 %v215, %v1997
        %v2094 = vsub.f32 %v216, %v1998
        %v2095 = vsub.f32 %v217, %v1999
        %v2096 = vsub.f32 %v218, %v2000
        %v2097 = vsub.f32 %v219, %v2001
        %v2098 = vsub.f32 %v220, %v2002
        %v2099 = vsub.f32 %v221, %v2003
        %v2100 = vsub.f32 %v222, %v2004
        %v2101 = vsub.f32 %v223, %v2005
        %v2102 = vsub.f32 %v224, %v2006
        %v2103 = vsub.f32 %v225, %v2007
        %v2104 = vsub.f32 %v226, %v2008
        %v2105 = vsub.f32 %v227, %v2009
        %v2106 = vsub.f32 %v228, %v2010
        %v2107 = vsub.f32 %v229, %v2011
        %v2108 = vsub.f32 %v230, %v2012
        %v2109 = vsub.f32 %v231, %v2013
        %v2110 = vsub.f32 %v232, %v2014
        %v2111 = vsub.f32 %v233, %v2015
        %v2112 = vsub.f32 %v234, %v2016
        %v2113 = vsub.f32 %v235, %v2017
        %v2114 = vsub.f32 %v236, %v2018
        %v2115 = vsub.f32 %v237, %v2019
        %v2116 = vsub.f32 %v238, %v2020
        %v2117 = vsub.f32 %v239, %v2021
        %v2118 = vsub.f32 %v240, %v2022
        %v2119 = vsub.f32 %v241, %v2023
        %v2120 = vsub.f32 %v210, %v2024
        %v2121 = vsub.f32 %v211, %v2025
        %v2122 = vsub.f32 %v212, %v2026
        %v2123 = vsub.f32 %v213, %v2027
        %v2124 = vsub.f32 %v214, %v2028
        %v2125 = vsub.f32 %v215, %v2029
        %v2126 = vsub.f32 %v216, %v2030
        %v2127 = vsub.f32 %v217, %v2031
        %v2128 = vsub.f32 %v218, %v2032
        %v2129 = vsub.f32 %v219, %v2033
        %v2130 = vsub.f32 %v220, %v2034
        %v2131 = vsub.f32 %v221, %v2035
        %v2132 = vsub.f32 %v222, %v2036
        %v2133 = vsub.f32 %v223, %v2037
        %v2134 = vsub.f32 %v224, %v2038
        %v2135 = vsub.f32 %v225, %v2039
        %v2136 = vsub.f32 %v226, %v2040
        %v2137 = vsub.f32 %v227, %v2041
        %v2138 = vsub.f32 %v228, %v2042
        %v2139 = vsub.f32 %v229, %v2043
        %v2140 = vsub.f32 %v230, %v2044
        %v2141 = vsub.f32 %v231, %v2045
        %v2142 = vsub.f32 %v232, %v2046
        %v2143 = vsub.f32 %v233, %v2047
        %v2144 = vsub.f32 %v234, %v2048
        %v2145 = vsub.f32 %v235, %v2049
        %v2146 = vsub.f32 %v236, %v2050
        %v2147 = vsub.f32 %v237, %v2051
        %v2148 = vsub.f32 %v238, %v2052
        %v2149 = vsub.f32 %v239, %v2053
        %v2150 = vsub.f32 %v240, %v2054
        %v2151 = vsub.f32 %v241, %v2055
        %v2152 = vmul.f32 %v2088, %v2088
        %v2153 = vmul.f32 %v2089, %v2089
        %v2154 = vmul.f32 %v2090, %v2090
        %v2155 = vmul.f32 %v2091, %v2091
        %v2156 = vmul.f32 %v2092, %v2092
        %v2157 = vmul.f32 %v2093, %v2093
        %v2158 = vmul.f32 %v2094, %v2094
        %v2159 = vmul.f32 %v2095, %v2095
        %v2160 = vmul.f32 %v2096, %v2096
        %v2161 = vmul.f32 %v2097, %v2097
        %v2162 = vmul.f32 %v2098, %v2098
        %v2163 = vmul.f32 %v2099, %v2099
        %v2164 = vmul.f32 %v2100, %v2100
        %v2165 = vmul.f32 %v2101, %v2101
        %v2166 = vmul.f32 %v2102, %v2102
        %v2167 = vmul.f32 %v2103, %v2103
        %v2168 = vmul.f32 %v2104, %v2104
        %v2169 = vmul.f32 %v2105, %v2105
        %v2170 = vmul.f32 %v2106, %v2106
        %v2171 = vmul.f32 %v2107, %v2107
        %v2172 = vmul.f32 %v2108, %v2108
        %v2173 = vmul.f32 %v2109, %v2109
        %v2174 = vmul.f32 %v2110, %v2110
        %v2175 = vmul.f32 %v2111, %v2111
        %v2176 = vmul.f32 %v2112, %v2112
        %v2177 = vmul.f32 %v2113, %v2113
        %v2178 = vmul.f32 %v2114, %v2114
        %v2179 = vmul.f32 %v2115, %v2115
        %v2180 = vmul.f32 %v2116, %v2116
        %v2181 = vmul.f32 %v2117, %v2117
        %v2182 = vmul.f32 %v2118, %v2118
        %v2183 = vmul.f32 %v2119, %v2119
        %v2184 = vsel %vm408, %v2152, 0.0
        %2185 = vadd.xlane.f32.xlu0 %v2184
        %v2186 = vpop.xlane.xlu0 %2185
        %v2187 = vsel %vm408, %v2153, 0.0
        %2188 = vadd.xlane.f32.xlu0 %v2187
        %v2189 = vpop.xlane.xlu0 %2188
        %v2190 = vsel %vm408, %v2154, 0.0
        %2191 = vadd.xlane.f32.xlu0 %v2190
        %v2192 = vpop.xlane.xlu0 %2191
        %v2193 = vsel %vm408, %v2155, 0.0
        %2194 = vadd.xlane.f32.xlu0 %v2193
        %v2195 = vpop.xlane.xlu0 %2194
        %v2196 = vsel %vm408, %v2156, 0.0
        %2197 = vadd.xlane.f32.xlu0 %v2196
        %v2198 = vpop.xlane.xlu0 %2197
        %v2199 = vsel %vm408, %v2157, 0.0
        %2200 = vadd.xlane.f32.xlu0 %v2199
        %v2201 = vpop.xlane.xlu0 %2200
        %v2202 = vsel %vm408, %v2158, 0.0
        %2203 = vadd.xlane.f32.xlu0 %v2202
        %v2204 = vpop.xlane.xlu0 %2203
        %v2205 = vsel %vm408, %v2159, 0.0
        %2206 = vadd.xlane.f32.xlu0 %v2205
        %v2207 = vpop.xlane.xlu0 %2206
        %v2208 = vsel %vm408, %v2160, 0.0
        %2209 = vadd.xlane.f32.xlu0 %v2208
        %v2210 = vpop.xlane.xlu0 %2209
        %v2211 = vsel %vm408, %v2161, 0.0
        %2212 = vadd.xlane.f32.xlu0 %v2211
        %v2213 = vpop.xlane.xlu0 %2212
        %v2214 = vsel %vm408, %v2162, 0.0
        %2215 = vadd.xlane.f32.xlu0 %v2214
        %v2216 = vpop.xlane.xlu0 %2215
        %v2217 = vsel %vm408, %v2163, 0.0
        %2218 = vadd.xlane.f32.xlu0 %v2217
        %v2219 = vpop.xlane.xlu0 %2218
        %v2220 = vsel %vm408, %v2164, 0.0
        %2221 = vadd.xlane.f32.xlu0 %v2220
        %v2222 = vpop.xlane.xlu0 %2221
        %v2223 = vsel %vm408, %v2165, 0.0
        %2224 = vadd.xlane.f32.xlu0 %v2223
        %v2225 = vpop.xlane.xlu0 %2224
        %v2226 = vsel %vm408, %v2166, 0.0
        %2227 = vadd.xlane.f32.xlu0 %v2226
        %v2228 = vpop.xlane.xlu0 %2227
        %v2229 = vsel %vm408, %v2167, 0.0
        %2230 = vadd.xlane.f32.xlu0 %v2229
        %v2231 = vpop.xlane.xlu0 %2230
        %v2232 = vsel %vm408, %v2168, 0.0
        %2233 = vadd.xlane.f32.xlu0 %v2232
        %v2234 = vpop.xlane.xlu0 %2233
        %v2235 = vsel %vm408, %v2169, 0.0
        %2236 = vadd.xlane.f32.xlu0 %v2235
        %v2237 = vpop.xlane.xlu0 %2236
        %v2238 = vsel %vm408, %v2170, 0.0
        %2239 = vadd.xlane.f32.xlu0 %v2238
        %v2240 = vpop.xlane.xlu0 %2239
        %v2241 = vsel %vm408, %v2171, 0.0
        %2242 = vadd.xlane.f32.xlu0 %v2241
        %v2243 = vpop.xlane.xlu0 %2242
        %v2244 = vsel %vm408, %v2172, 0.0
        %2245 = vadd.xlane.f32.xlu0 %v2244
        %v2246 = vpop.xlane.xlu0 %2245
        %v2247 = vsel %vm408, %v2173, 0.0
        %2248 = vadd.xlane.f32.xlu0 %v2247
        %v2249 = vpop.xlane.xlu0 %2248
        %v2250 = vsel %vm408, %v2174, 0.0
        %2251 = vadd.xlane.f32.xlu0 %v2250
        %v2252 = vpop.xlane.xlu0 %2251
        %v2253 = vsel %vm408, %v2175, 0.0
        %2254 = vadd.xlane.f32.xlu0 %v2253
        %v2255 = vpop.xlane.xlu0 %2254
        %v2256 = vsel %vm408, %v2176, 0.0
        %2257 = vadd.xlane.f32.xlu0 %v2256
        %v2258 = vpop.xlane.xlu0 %2257
        %v2259 = vsel %vm408, %v2177, 0.0
        %2260 = vadd.xlane.f32.xlu0 %v2259
        %v2261 = vpop.xlane.xlu0 %2260
        %v2262 = vsel %vm408, %v2178, 0.0
        %2263 = vadd.xlane.f32.xlu0 %v2262
        %v2264 = vpop.xlane.xlu0 %2263
        %v2265 = vsel %vm408, %v2179, 0.0
        %2266 = vadd.xlane.f32.xlu0 %v2265
        %v2267 = vpop.xlane.xlu0 %2266
        %v2268 = vsel %vm408, %v2180, 0.0
        %2269 = vadd.xlane.f32.xlu0 %v2268
        %v2270 = vpop.xlane.xlu0 %2269
        %v2271 = vsel %vm408, %v2181, 0.0
        %2272 = vadd.xlane.f32.xlu0 %v2271
        %v2273 = vpop.xlane.xlu0 %2272
        %v2274 = vsel %vm408, %v2182, 0.0
        %2275 = vadd.xlane.f32.xlu0 %v2274
        %v2276 = vpop.xlane.xlu0 %2275
        %v2277 = vsel %vm408, %v2183, 0.0
        %2278 = vadd.xlane.f32.xlu0 %v2277
        %v2279 = vpop.xlane.xlu0 %2278
        %v2280 = vadd.f32 %v2186, %v2189
        %v2281 = vadd.f32 %v2280, %v2192
        %v2282 = vadd.f32 %v2281, %v2195
        %v2283 = vadd.f32 %v2282, %v2198
        %v2284 = vadd.f32 %v2283, %v2201
        %v2285 = vadd.f32 %v2284, %v2204
        %v2286 = vadd.f32 %v2285, %v2207
        %v2287 = vadd.f32 %v2286, %v2210
        %v2288 = vadd.f32 %v2287, %v2213
        %v2289 = vadd.f32 %v2288, %v2216
        %v2290 = vadd.f32 %v2289, %v2219
        %v2291 = vadd.f32 %v2290, %v2222
        %v2292 = vadd.f32 %v2291, %v2225
        %v2293 = vadd.f32 %v2292, %v2228
        %v2294 = vadd.f32 %v2293, %v2231
        %v2295 = vadd.f32 %v2294, %v2234
        %v2296 = vadd.f32 %v2295, %v2237
        %v2297 = vadd.f32 %v2296, %v2240
        %v2298 = vadd.f32 %v2297, %v2243
        %v2299 = vadd.f32 %v2298, %v2246
        %v2300 = vadd.f32 %v2299, %v2249
        %v2301 = vadd.f32 %v2300, %v2252
        %v2302 = vadd.f32 %v2301, %v2255
        %v2303 = vadd.f32 %v2302, %v2258
        %v2304 = vadd.f32 %v2303, %v2261
        %v2305 = vadd.f32 %v2304, %v2264
        %v2306 = vadd.f32 %v2305, %v2267
        %v2307 = vadd.f32 %v2306, %v2270
        %v2308 = vadd.f32 %v2307, %v2273
        %v2309 = vadd.f32 %v2308, %v2276
        %v2310 = vadd.f32 %v2309, %v2279
        %v2311 = vrot.slane %v2310, 4
        %v2312 = vadd.f32 %v2310, %v2311
        %v2313 = vrot.slane %v2312, 2
        %v2314 = vadd.f32 %v2312, %v2313
        %v2315 = vrot.slane %v2314, 1
        %v2316 = vadd.f32 %v2314, %v2315
        %v2317 = vadd.f32 %v2316, 0.0
        %v2318 = vmul.f32 %v2120, %v2120
        %v2319 = vmul.f32 %v2121, %v2121
        %v2320 = vmul.f32 %v2122, %v2122
        %v2321 = vmul.f32 %v2123, %v2123
        %v2322 = vmul.f32 %v2124, %v2124
        %v2323 = vmul.f32 %v2125, %v2125
        %v2324 = vmul.f32 %v2126, %v2126
        %v2325 = vmul.f32 %v2127, %v2127
        %v2326 = vmul.f32 %v2128, %v2128
        %v2327 = vmul.f32 %v2129, %v2129
        %v2328 = vmul.f32 %v2130, %v2130
        %v2329 = vmul.f32 %v2131, %v2131
        %v2330 = vmul.f32 %v2132, %v2132
        %v2331 = vmul.f32 %v2133, %v2133
        %v2332 = vmul.f32 %v2134, %v2134
        %v2333 = vmul.f32 %v2135, %v2135
        %v2334 = vmul.f32 %v2136, %v2136
        %v2335 = vmul.f32 %v2137, %v2137
        %v2336 = vmul.f32 %v2138, %v2138
        %v2337 = vmul.f32 %v2139, %v2139
        %v2338 = vmul.f32 %v2140, %v2140
        %v2339 = vmul.f32 %v2141, %v2141
        %v2340 = vmul.f32 %v2142, %v2142
        %v2341 = vmul.f32 %v2143, %v2143
        %v2342 = vmul.f32 %v2144, %v2144
        %v2343 = vmul.f32 %v2145, %v2145
        %v2344 = vmul.f32 %v2146, %v2146
        %v2345 = vmul.f32 %v2147, %v2147
        %v2346 = vmul.f32 %v2148, %v2148
        %v2347 = vmul.f32 %v2149, %v2149
        %v2348 = vmul.f32 %v2150, %v2150
        %v2349 = vmul.f32 %v2151, %v2151
        %v2350 = vsel %vm408, %v2318, 0.0
        %2351 = vadd.xlane.f32.xlu0 %v2350
        %v2352 = vpop.xlane.xlu0 %2351
        %v2353 = vsel %vm408, %v2319, 0.0
        %2354 = vadd.xlane.f32.xlu0 %v2353
        %v2355 = vpop.xlane.xlu0 %2354
        %v2356 = vsel %vm408, %v2320, 0.0
        %2357 = vadd.xlane.f32.xlu0 %v2356
        %v2358 = vpop.xlane.xlu0 %2357
        %v2359 = vsel %vm408, %v2321, 0.0
        %2360 = vadd.xlane.f32.xlu0 %v2359
        %v2361 = vpop.xlane.xlu0 %2360
        %v2362 = vsel %vm408, %v2322, 0.0
        %2363 = vadd.xlane.f32.xlu0 %v2362
        %v2364 = vpop.xlane.xlu0 %2363
        %v2365 = vsel %vm408, %v2323, 0.0
        %2366 = vadd.xlane.f32.xlu0 %v2365
        %v2367 = vpop.xlane.xlu0 %2366
        %v2368 = vsel %vm408, %v2324, 0.0
        %2369 = vadd.xlane.f32.xlu0 %v2368
        %v2370 = vpop.xlane.xlu0 %2369
        %v2371 = vsel %vm408, %v2325, 0.0
        %2372 = vadd.xlane.f32.xlu0 %v2371
        %v2373 = vpop.xlane.xlu0 %2372
        %v2374 = vsel %vm408, %v2326, 0.0
        %2375 = vadd.xlane.f32.xlu0 %v2374
        %v2376 = vpop.xlane.xlu0 %2375
        %v2377 = vsel %vm408, %v2327, 0.0
        %2378 = vadd.xlane.f32.xlu0 %v2377
        %v2379 = vpop.xlane.xlu0 %2378
        %v2380 = vsel %vm408, %v2328, 0.0
        %2381 = vadd.xlane.f32.xlu0 %v2380
        %v2382 = vpop.xlane.xlu0 %2381
        %v2383 = vsel %vm408, %v2329, 0.0
        %2384 = vadd.xlane.f32.xlu0 %v2383
        %v2385 = vpop.xlane.xlu0 %2384
        %v2386 = vsel %vm408, %v2330, 0.0
        %2387 = vadd.xlane.f32.xlu0 %v2386
        %v2388 = vpop.xlane.xlu0 %2387
        %v2389 = vsel %vm408, %v2331, 0.0
        %2390 = vadd.xlane.f32.xlu0 %v2389
        %v2391 = vpop.xlane.xlu0 %2390
        %v2392 = vsel %vm408, %v2332, 0.0
        %2393 = vadd.xlane.f32.xlu0 %v2392
        %v2394 = vpop.xlane.xlu0 %2393
        %v2395 = vsel %vm408, %v2333, 0.0
        %2396 = vadd.xlane.f32.xlu0 %v2395
        %v2397 = vpop.xlane.xlu0 %2396
        %v2398 = vsel %vm408, %v2334, 0.0
        %2399 = vadd.xlane.f32.xlu0 %v2398
        %v2400 = vpop.xlane.xlu0 %2399
        %v2401 = vsel %vm408, %v2335, 0.0
        %2402 = vadd.xlane.f32.xlu0 %v2401
        %v2403 = vpop.xlane.xlu0 %2402
        %v2404 = vsel %vm408, %v2336, 0.0
        %2405 = vadd.xlane.f32.xlu0 %v2404
        %v2406 = vpop.xlane.xlu0 %2405
        %v2407 = vsel %vm408, %v2337, 0.0
        %2408 = vadd.xlane.f32.xlu0 %v2407
        %v2409 = vpop.xlane.xlu0 %2408
        %v2410 = vsel %vm408, %v2338, 0.0
        %2411 = vadd.xlane.f32.xlu0 %v2410
        %v2412 = vpop.xlane.xlu0 %2411
        %v2413 = vsel %vm408, %v2339, 0.0
        %2414 = vadd.xlane.f32.xlu0 %v2413
        %v2415 = vpop.xlane.xlu0 %2414
        %v2416 = vsel %vm408, %v2340, 0.0
        %2417 = vadd.xlane.f32.xlu0 %v2416
        %v2418 = vpop.xlane.xlu0 %2417
        %v2419 = vsel %vm408, %v2341, 0.0
        %2420 = vadd.xlane.f32.xlu0 %v2419
        %v2421 = vpop.xlane.xlu0 %2420
        %v2422 = vsel %vm408, %v2342, 0.0
        %2423 = vadd.xlane.f32.xlu0 %v2422
        %v2424 = vpop.xlane.xlu0 %2423
        %v2425 = vsel %vm408, %v2343, 0.0
        %2426 = vadd.xlane.f32.xlu0 %v2425
        %v2427 = vpop.xlane.xlu0 %2426
        %v2428 = vsel %vm408, %v2344, 0.0
        %2429 = vadd.xlane.f32.xlu0 %v2428
        %v2430 = vpop.xlane.xlu0 %2429
        %v2431 = vsel %vm408, %v2345, 0.0
        %2432 = vadd.xlane.f32.xlu0 %v2431
        %v2433 = vpop.xlane.xlu0 %2432
        %v2434 = vsel %vm408, %v2346, 0.0
        %2435 = vadd.xlane.f32.xlu0 %v2434
        %v2436 = vpop.xlane.xlu0 %2435
        %v2437 = vsel %vm408, %v2347, 0.0
        %2438 = vadd.xlane.f32.xlu0 %v2437
        %v2439 = vpop.xlane.xlu0 %2438
        %v2440 = vsel %vm408, %v2348, 0.0
        %2441 = vadd.xlane.f32.xlu0 %v2440
        %v2442 = vpop.xlane.xlu0 %2441
        %v2443 = vsel %vm408, %v2349, 0.0
        %2444 = vadd.xlane.f32.xlu0 %v2443
        %v2445 = vpop.xlane.xlu0 %2444
        %v2446 = vadd.f32 %v2352, %v2355
        %v2447 = vadd.f32 %v2446, %v2358
        %v2448 = vadd.f32 %v2447, %v2361
        %v2449 = vadd.f32 %v2448, %v2364
        %v2450 = vadd.f32 %v2449, %v2367
        %v2451 = vadd.f32 %v2450, %v2370
        %v2452 = vadd.f32 %v2451, %v2373
        %v2453 = vadd.f32 %v2452, %v2376
        %v2454 = vadd.f32 %v2453, %v2379
        %v2455 = vadd.f32 %v2454, %v2382
        %v2456 = vadd.f32 %v2455, %v2385
        %v2457 = vadd.f32 %v2456, %v2388
        %v2458 = vadd.f32 %v2457, %v2391
        %v2459 = vadd.f32 %v2458, %v2394
        %v2460 = vadd.f32 %v2459, %v2397
        %v2461 = vadd.f32 %v2460, %v2400
        %v2462 = vadd.f32 %v2461, %v2403
        %v2463 = vadd.f32 %v2462, %v2406
        %v2464 = vadd.f32 %v2463, %v2409
        %v2465 = vadd.f32 %v2464, %v2412
        %v2466 = vadd.f32 %v2465, %v2415
        %v2467 = vadd.f32 %v2466, %v2418
        %v2468 = vadd.f32 %v2467, %v2421
        %v2469 = vadd.f32 %v2468, %v2424
        %v2470 = vadd.f32 %v2469, %v2427
        %v2471 = vadd.f32 %v2470, %v2430
        %v2472 = vadd.f32 %v2471, %v2433
        %v2473 = vadd.f32 %v2472, %v2436
        %v2474 = vadd.f32 %v2473, %v2439
        %v2475 = vadd.f32 %v2474, %v2442
        %v2476 = vadd.f32 %v2475, %v2445
        %v2477 = vrot.slane %v2476, 4
        %v2478 = vadd.f32 %v2476, %v2477
        %v2479 = vrot.slane %v2478, 2
        %v2480 = vadd.f32 %v2478, %v2479
        %v2481 = vrot.slane %v2480, 1
        %v2482 = vadd.f32 %v2480, %v2481
        %v2483 = vadd.f32 %v2482, 0.0
        %s2484 = scalar_lea.vmem %s1, 16
        %v2485 = vld [vmem:[%s2484] sm:$0xff]
        %v2486 = vld [vmem:[%s2484 + $0x8] sm:$0xff]
        %v2488 = vsel %vm408, %v1960, 0
        %v2491 = vsel %vm408, %v1961, 0
        %v2494 = vsel %vm408, %v1962, 0
        %v2497 = vsel %vm408, %v1963, 0
        %v2500 = vsel %vm408, %v1964, 0
        %v2503 = vsel %vm408, %v1965, 0
        %v2506 = vsel %vm408, %v1966, 0
        %v2509 = vsel %vm408, %v1967, 0
        %v2512 = vsel %vm408, %v1968, 0
        %v2515 = vsel %vm408, %v1969, 0
        %v2518 = vsel %vm408, %v1970, 0
        %v2521 = vsel %vm408, %v1971, 0
        %v2524 = vsel %vm408, %v1972, 0
        %v2527 = vsel %vm408, %v1973, 0
        %v2530 = vsel %vm408, %v1974, 0
        %v2533 = vsel %vm408, %v1975, 0
        %v2536 = vsel %vm408, %v1976, 0
        %v2539 = vsel %vm408, %v1977, 0
        %v2542 = vsel %vm408, %v1978, 0
        %v2545 = vsel %vm408, %v1979, 0
        %v2548 = vsel %vm408, %v1980, 0
        %v2551 = vsel %vm408, %v1981, 0
        %v2554 = vsel %vm408, %v1982, 0
        %v2557 = vsel %vm408, %v1983, 0
        %v2560 = vsel %vm408, %v1984, 0
        %v2563 = vsel %vm408, %v1985, 0
        %v2566 = vsel %vm408, %v1986, 0
        %v2569 = vsel %vm408, %v1987, 0
        %v2572 = vsel %vm408, %v1988, 0
        %v2575 = vsel %vm408, %v1989, 0
        %v2578 = vsel %vm408, %v1990, 0
        %v2581 = vsel %vm408, %v1991, 0
        %v2584 = vsel %vm408, %v2485, 0
        %v2587 = vsel %vm408, %v2486, 0
        %2589 = vmatprep.subr.mxu0 0.0
        %2590 = vmatpush1.xpose.msra.mxu0 %v2584
        %2591 = vmatprep.subr.mxu0 0.0
        %2592 = vmatpush1.xpose.msra.mxu0 %v2587
        %2593 = vmatprep.subr.mxu0 0.0
        %2594 = vmatpush1.xpose.msra.mxu0 0.0
        %2595 = vmatprep.subr.mxu0 0.0
        %2596 = vmatpush1.xpose.msra.mxu0 0.0
        %2597 = vmatprep.subr.mxu0 0.0
        %2598 = vmatpush1.xpose.msra.mxu0 0.0
        %2599 = vmatprep.subr.mxu0 0.0
        %2600 = vmatpush1.xpose.msra.mxu0 0.0
        %2601 = vmatprep.subr.mxu0 0.0
        %2602 = vmatpush1.xpose.msra.mxu0 0.0
        %2603 = vmatprep.subr.mxu0 0.0
        %2604 = vmatpush1.xpose.msra.mxu0 0.0
        %2605 = vmatprep.subr.mxu0 0.0
        %2606 = vmatpush1.xpose.msra.mxu0 0.0
        %2607 = vmatprep.subr.mxu0 0.0
        %2608 = vmatpush1.xpose.msra.mxu0 0.0
        %2609 = vmatprep.subr.mxu0 0.0
        %2610 = vmatpush1.xpose.msra.mxu0 0.0
        %2611 = vmatprep.subr.mxu0 0.0
        %2612 = vmatpush1.xpose.msra.mxu0 0.0
        %2613 = vmatprep.subr.mxu0 0.0
        %2614 = vmatpush1.xpose.msra.mxu0 0.0
        %2615 = vmatprep.subr.mxu0 0.0
        %2616 = vmatpush1.xpose.msra.mxu0 0.0
        %2617 = vmatprep.subr.mxu0 0.0
        %2618 = vmatpush1.xpose.msra.mxu0 0.0
        %2619 = vmatprep.subr.mxu0 0.0
        %2620 = vmatpush1.xpose.msra.mxu0 0.0
        %2621 = vmatprep.subr.mxu0 0.0
        %2622 = vmatpush1.xpose.msra.mxu0 0.0
        %2623 = vmatprep.subr.mxu0 0.0
        %2624 = vmatpush1.xpose.msra.mxu0 0.0
        %2625 = vmatprep.subr.mxu0 0.0
        %2626 = vmatpush1.xpose.msra.mxu0 0.0
        %2627 = vmatprep.subr.mxu0 0.0
        %2628 = vmatpush1.xpose.msra.mxu0 0.0
        %2629 = vmatprep.subr.mxu0 0.0
        %2630 = vmatpush1.xpose.msra.mxu0 0.0
        %2631 = vmatprep.subr.mxu0 0.0
        %2632 = vmatpush1.xpose.msra.mxu0 0.0
        %2633 = vmatprep.subr.mxu0 0.0
        %2634 = vmatpush1.xpose.msra.mxu0 0.0
        %2635 = vmatprep.subr.mxu0 0.0
        %2636 = vmatpush1.xpose.msra.mxu0 0.0
        %2637 = vmatprep.subr.mxu0 0.0
        %2638 = vmatpush1.xpose.msra.mxu0 0.0
        %2639 = vmatprep.subr.mxu0 0.0
        %2640 = vmatpush1.xpose.msra.mxu0 0.0
        %2641 = vmatprep.subr.mxu0 0.0
        %2642 = vmatpush1.xpose.msra.mxu0 0.0
        %2643 = vmatprep.subr.mxu0 0.0
        %2644 = vmatpush1.xpose.msra.mxu0 0.0
        %2645 = vmatprep.subr.mxu0 0.0
        %2646 = vmatpush1.xpose.msra.mxu0 0.0
        %2647 = vmatprep.subr.mxu0 0.0
        %2648 = vmatpush1.xpose.msra.mxu0 0.0
        %2649 = vmatprep.subr.mxu0 0.0
        %2650 = vmatpush1.xpose.msra.mxu0 0.0
        %2651 = vmatprep.subr.mxu0 0.0
        %2652 = vmatpush1.xpose.msra.mxu0 0.0
        %2653 = vmatprep.mubr.f32.mxu0 0.0
        %2654 = vmatmul.mubr.f32.gmra.mrb[0].mxu0 %v2488
        %v2655 = vpop.f32.mrb[0].mxu0
        %v2656 = vadd.f32 0.0, %v2655
        %v2657 = vpop.f32.mrb[0].mxu0
        %2658 = vmatprep.mubr.f32.mxu0 0.0
        %2659 = vmatmul.mubr.f32.gmra.mrb[0].mxu0 %v2491
        %v2660 = vpop.f32.mrb[0].mxu0
        %v2661 = vadd.f32 0.0, %v2660
        %v2662 = vpop.f32.mrb[0].mxu0
        %2663 = vmatprep.mubr.f32.mxu0 0.0
        %2664 = vmatmul.mubr.f32.gmra.mrb[0].mxu0 %v2494
        %v2665 = vpop.f32.mrb[0].mxu0
        %v2666 = vadd.f32 0.0, %v2665
        %v2667 = vpop.f32.mrb[0].mxu0
        %2668 = vmatprep.mubr.f32.mxu0 0.0
        %2669 = vmatmul.mubr.f32.gmra.mrb[0].mxu0 %v2497
        %v2670 = vpop.f32.mrb[0].mxu0
        %v2671 = vadd.f32 0.0, %v2670
        %v2672 = vpop.f32.mrb[0].mxu0
        %2673 = vmatprep.mubr.f32.mxu0 0.0
        %2674 = vmatmul.mubr.f32.gmra.mrb[0].mxu0 %v2500
        %v2675 = vpop.f32.mrb[0].mxu0
        %v2676 = vadd.f32 0.0, %v2675
        %v2677 = vpop.f32.mrb[0].mxu0
        %2678 = vmatprep.mubr.f32.mxu0 0.0
        %2679 = vmatmul.mubr.f32.gmra.mrb[0].mxu0 %v2503
        %v2680 = vpop.f32.mrb[0].mxu0
        %v2681 = vadd.f32 0.0, %v2680
        %v2682 = vpop.f32.mrb[0].mxu0
        %2683 = vmatprep.mubr.f32.mxu0 0.0
        %2684 = vmatmul.mubr.f32.gmra.mrb[0].mxu0 %v2506
        %v2685 = vpop.f32.mrb[0].mxu0
        %v2686 = vadd.f32 0.0, %v2685
        %v2687 = vpop.f32.mrb[0].mxu0
        %2688 = vmatprep.mubr.f32.mxu0 0.0
        %2689 = vmatmul.mubr.f32.gmra.mrb[0].mxu0 %v2509
        %v2690 = vpop.f32.mrb[0].mxu0
        %v2691 = vadd.f32 0.0, %v2690
        %v2692 = vpop.f32.mrb[0].mxu0
        %2693 = vmatprep.mubr.f32.mxu0 0.0
        %2694 = vmatmul.mubr.f32.gmra.mrb[0].mxu0 %v2512
        %v2695 = vpop.f32.mrb[0].mxu0
        %v2696 = vadd.f32 0.0, %v2695
        %v2697 = vpop.f32.mrb[0].mxu0
        %2698 = vmatprep.mubr.f32.mxu0 0.0
        %2699 = vmatmul.mubr.f32.gmra.mrb[0].mxu0 %v2515
        %v2700 = vpop.f32.mrb[0].mxu0
        %v2701 = vadd.f32 0.0, %v2700
        %v2702 = vpop.f32.mrb[0].mxu0
        %2703 = vmatprep.mubr.f32.mxu0 0.0
        %2704 = vmatmul.mubr.f32.gmra.mrb[0].mxu0 %v2518
        %v2705 = vpop.f32.mrb[0].mxu0
        %v2706 = vadd.f32 0.0, %v2705
        %v2707 = vpop.f32.mrb[0].mxu0
        %2708 = vmatprep.mubr.f32.mxu0 0.0
        %2709 = vmatmul.mubr.f32.gmra.mrb[0].mxu0 %v2521
        %v2710 = vpop.f32.mrb[0].mxu0
        %v2711 = vadd.f32 0.0, %v2710
        %v2712 = vpop.f32.mrb[0].mxu0
        %2713 = vmatprep.mubr.f32.mxu0 0.0
        %2714 = vmatmul.mubr.f32.gmra.mrb[0].mxu0 %v2524
        %v2715 = vpop.f32.mrb[0].mxu0
        %v2716 = vadd.f32 0.0, %v2715
        %v2717 = vpop.f32.mrb[0].mxu0
        %2718 = vmatprep.mubr.f32.mxu0 0.0
        %2719 = vmatmul.mubr.f32.gmra.mrb[0].mxu0 %v2527
        %v2720 = vpop.f32.mrb[0].mxu0
        %v2721 = vadd.f32 0.0, %v2720
        %v2722 = vpop.f32.mrb[0].mxu0
        %2723 = vmatprep.mubr.f32.mxu0 0.0
        %2724 = vmatmul.mubr.f32.gmra.mrb[0].mxu0 %v2530
        %v2725 = vpop.f32.mrb[0].mxu0
        %v2726 = vadd.f32 0.0, %v2725
        %v2727 = vpop.f32.mrb[0].mxu0
        %2728 = vmatprep.mubr.f32.mxu0 0.0
        %2729 = vmatmul.mubr.f32.gmra.mrb[0].mxu0 %v2533
        %v2730 = vpop.f32.mrb[0].mxu0
        %v2731 = vadd.f32 0.0, %v2730
        %v2732 = vpop.f32.mrb[0].mxu0
        %2733 = vmatprep.mubr.f32.mxu0 0.0
        %2734 = vmatmul.mubr.f32.gmra.mrb[0].mxu0 %v2536
        %v2735 = vpop.f32.mrb[0].mxu0
        %v2736 = vadd.f32 0.0, %v2735
        %v2737 = vpop.f32.mrb[0].mxu0
        %2738 = vmatprep.mubr.f32.mxu0 0.0
        %2739 = vmatmul.mubr.f32.gmra.mrb[0].mxu0 %v2539
        %v2740 = vpop.f32.mrb[0].mxu0
        %v2741 = vadd.f32 0.0, %v2740
        %v2742 = vpop.f32.mrb[0].mxu0
        %2743 = vmatprep.mubr.f32.mxu0 0.0
        %2744 = vmatmul.mubr.f32.gmra.mrb[0].mxu0 %v2542
        %v2745 = vpop.f32.mrb[0].mxu0
        %v2746 = vadd.f32 0.0, %v2745
        %v2747 = vpop.f32.mrb[0].mxu0
        %2748 = vmatprep.mubr.f32.mxu0 0.0
        %2749 = vmatmul.mubr.f32.gmra.mrb[0].mxu0 %v2545
        %v2750 = vpop.f32.mrb[0].mxu0
        %v2751 = vadd.f32 0.0, %v2750
        %v2752 = vpop.f32.mrb[0].mxu0
        %2753 = vmatprep.mubr.f32.mxu0 0.0
        %2754 = vmatmul.mubr.f32.gmra.mrb[0].mxu0 %v2548
        %v2755 = vpop.f32.mrb[0].mxu0
        %v2756 = vadd.f32 0.0, %v2755
        %v2757 = vpop.f32.mrb[0].mxu0
        %2758 = vmatprep.mubr.f32.mxu0 0.0
        %2759 = vmatmul.mubr.f32.gmra.mrb[0].mxu0 %v2551
        %v2760 = vpop.f32.mrb[0].mxu0
        %v2761 = vadd.f32 0.0, %v2760
        %v2762 = vpop.f32.mrb[0].mxu0
        %2763 = vmatprep.mubr.f32.mxu0 0.0
        %2764 = vmatmul.mubr.f32.gmra.mrb[0].mxu0 %v2554
        %v2765 = vpop.f32.mrb[0].mxu0
        %v2766 = vadd.f32 0.0, %v2765
        %v2767 = vpop.f32.mrb[0].mxu0
        %2768 = vmatprep.mubr.f32.mxu0 0.0
        %2769 = vmatmul.mubr.f32.gmra.mrb[0].mxu0 %v2557
        %v2770 = vpop.f32.mrb[0].mxu0
        %v2771 = vadd.f32 0.0, %v2770
        %v2772 = vpop.f32.mrb[0].mxu0
        %2773 = vmatprep.mubr.f32.mxu0 0.0
        %2774 = vmatmul.mubr.f32.gmra.mrb[0].mxu0 %v2560
        %v2775 = vpop.f32.mrb[0].mxu0
        %v2776 = vadd.f32 0.0, %v2775
        %v2777 = vpop.f32.mrb[0].mxu0
        %2778 = vmatprep.mubr.f32.mxu0 0.0
        %2779 = vmatmul.mubr.f32.gmra.mrb[0].mxu0 %v2563
        %v2780 = vpop.f32.mrb[0].mxu0
        %v2781 = vadd.f32 0.0, %v2780
        %v2782 = vpop.f32.mrb[0].mxu0
        %2783 = vmatprep.mubr.f32.mxu0 0.0
        %2784 = vmatmul.mubr.f32.gmra.mrb[0].mxu0 %v2566
        %v2785 = vpop.f32.mrb[0].mxu0
        %v2786 = vadd.f32 0.0, %v2785
        %v2787 = vpop.f32.mrb[0].mxu0
        %2788 = vmatprep.mubr.f32.mxu0 0.0
        %2789 = vmatmul.mubr.f32.gmra.mrb[0].mxu0 %v2569
        %v2790 = vpop.f32.mrb[0].mxu0
        %v2791 = vadd.f32 0.0, %v2790
        %v2792 = vpop.f32.mrb[0].mxu0
        %2793 = vmatprep.mubr.f32.mxu0 0.0
        %2794 = vmatmul.mubr.f32.gmra.mrb[0].mxu0 %v2572
        %v2795 = vpop.f32.mrb[0].mxu0
        %v2796 = vadd.f32 0.0, %v2795
        %v2797 = vpop.f32.mrb[0].mxu0
        %2798 = vmatprep.mubr.f32.mxu0 0.0
        %2799 = vmatmul.mubr.f32.gmra.mrb[0].mxu0 %v2575
        %v2800 = vpop.f32.mrb[0].mxu0
        %v2801 = vadd.f32 0.0, %v2800
        %v2802 = vpop.f32.mrb[0].mxu0
        %2803 = vmatprep.mubr.f32.mxu0 0.0
        %2804 = vmatmul.mubr.f32.gmra.mrb[0].mxu0 %v2578
        %v2805 = vpop.f32.mrb[0].mxu0
        %v2806 = vadd.f32 0.0, %v2805
        %v2807 = vpop.f32.mrb[0].mxu0
        %2808 = vmatprep.mubr.f32.mxu0 0.0
        %2809 = vmatmul.mubr.f32.gmra.mrb[0].mxu0 %v2581
        %v2810 = vpop.f32.mrb[0].mxu0
        %v2811 = vadd.f32 0.0, %v2810
        %v2812 = vpop.f32.mrb[0].mxu0
        %2813 = vdwg.mxu0
        %v2814 = vmul.f32 %v2656, 2.0
        %v2815 = vmul.f32 %v2661, 2.0
        %v2816 = vmul.f32 %v2666, 2.0
        %v2817 = vmul.f32 %v2671, 2.0
        %v2818 = vmul.f32 %v2676, 2.0
        %v2819 = vmul.f32 %v2681, 2.0
        %v2820 = vmul.f32 %v2686, 2.0
        %v2821 = vmul.f32 %v2691, 2.0
        %v2822 = vmul.f32 %v2696, 2.0
        %v2823 = vmul.f32 %v2701, 2.0
        %v2824 = vmul.f32 %v2706, 2.0
        %v2825 = vmul.f32 %v2711, 2.0
        %v2826 = vmul.f32 %v2716, 2.0
        %v2827 = vmul.f32 %v2721, 2.0
        %v2828 = vmul.f32 %v2726, 2.0
        %v2829 = vmul.f32 %v2731, 2.0
        %v2830 = vmul.f32 %v2736, 2.0
        %v2831 = vmul.f32 %v2741, 2.0
        %v2832 = vmul.f32 %v2746, 2.0
        %v2833 = vmul.f32 %v2751, 2.0
        %v2834 = vmul.f32 %v2756, 2.0
        %v2835 = vmul.f32 %v2761, 2.0
        %v2836 = vmul.f32 %v2766, 2.0
        %v2837 = vmul.f32 %v2771, 2.0
        %v2838 = vmul.f32 %v2776, 2.0
        %v2839 = vmul.f32 %v2781, 2.0
        %v2840 = vmul.f32 %v2786, 2.0
        %v2841 = vmul.f32 %v2791, 2.0
        %v2842 = vmul.f32 %v2796, 2.0
        %v2843 = vmul.f32 %v2801, 2.0
        %v2844 = vmul.f32 %v2806, 2.0
        %v2845 = vmul.f32 %v2811, 2.0
        %v2846 = vlaneseq
        %v2847 = vshrl.u32 %v2846, 7
        %v2848 = vsub.s32 1, %v2847
        %v2849 = vrot.slane %v405, %v2848
        %v2850 = vsub.f32 %v2814, %v2849
        %v2851 = vsub.f32 %v2815, %v2849
        %v2852 = vsub.f32 %v2816, %v2849
        %v2853 = vsub.f32 %v2817, %v2849
        %v2854 = vsub.f32 %v2818, %v2849
        %v2855 = vsub.f32 %v2819, %v2849
        %v2856 = vsub.f32 %v2820, %v2849
        %v2857 = vsub.f32 %v2821, %v2849
        %v2858 = vsub.f32 %v2822, %v2849
        %v2859 = vsub.f32 %v2823, %v2849
        %v2860 = vsub.f32 %v2824, %v2849
        %v2861 = vsub.f32 %v2825, %v2849
        %v2862 = vsub.f32 %v2826, %v2849
        %v2863 = vsub.f32 %v2827, %v2849
        %v2864 = vsub.f32 %v2828, %v2849
        %v2865 = vsub.f32 %v2829, %v2849
        %v2866 = vsub.f32 %v2830, %v2849
        %v2867 = vsub.f32 %v2831, %v2849
        %v2868 = vsub.f32 %v2832, %v2849
        %v2869 = vsub.f32 %v2833, %v2849
        %v2870 = vsub.f32 %v2834, %v2849
        %v2871 = vsub.f32 %v2835, %v2849
        %v2872 = vsub.f32 %v2836, %v2849
        %v2873 = vsub.f32 %v2837, %v2849
        %v2874 = vsub.f32 %v2838, %v2849
        %v2875 = vsub.f32 %v2839, %v2849
        %v2876 = vsub.f32 %v2840, %v2849
        %v2877 = vsub.f32 %v2841, %v2849
        %v2878 = vsub.f32 %v2842, %v2849
        %v2879 = vsub.f32 %v2843, %v2849
        %v2880 = vsub.f32 %v2844, %v2849
        %v2881 = vsub.f32 %v2845, %v2849
        %v2882 = vsel %vm804, %v2850, -inf
        %2883 = vmax.xlane.f32.xlu0 %v2882
        %v2884 = vpop.xlane.xlu0 %2883
        %v2885 = vsel %vm804, %v2851, -inf
        %2886 = vmax.xlane.f32.xlu0 %v2885
        %v2887 = vpop.xlane.xlu0 %2886
        %v2888 = vsel %vm804, %v2852, -inf
        %2889 = vmax.xlane.f32.xlu0 %v2888
        %v2890 = vpop.xlane.xlu0 %2889
        %v2891 = vsel %vm804, %v2853, -inf
        %2892 = vmax.xlane.f32.xlu0 %v2891
        %v2893 = vpop.xlane.xlu0 %2892
        %v2894 = vsel %vm804, %v2854, -inf
        %2895 = vmax.xlane.f32.xlu0 %v2894
        %v2896 = vpop.xlane.xlu0 %2895
        %v2897 = vsel %vm804, %v2855, -inf
        %2898 = vmax.xlane.f32.xlu0 %v2897
        %v2899 = vpop.xlane.xlu0 %2898
        %v2900 = vsel %vm804, %v2856, -inf
        %2901 = vmax.xlane.f32.xlu0 %v2900
        %v2902 = vpop.xlane.xlu0 %2901
        %v2903 = vsel %vm804, %v2857, -inf
        %2904 = vmax.xlane.f32.xlu0 %v2903
        %v2905 = vpop.xlane.xlu0 %2904
        %v2906 = vsel %vm804, %v2858, -inf
        %2907 = vmax.xlane.f32.xlu0 %v2906
        %v2908 = vpop.xlane.xlu0 %2907
        %v2909 = vsel %vm804, %v2859, -inf
        %2910 = vmax.xlane.f32.xlu0 %v2909
        %v2911 = vpop.xlane.xlu0 %2910
        %v2912 = vsel %vm804, %v2860, -inf
        %2913 = vmax.xlane.f32.xlu0 %v2912
        %v2914 = vpop.xlane.xlu0 %2913
        %v2915 = vsel %vm804, %v2861, -inf
        %2916 = vmax.xlane.f32.xlu0 %v2915
        %v2917 = vpop.xlane.xlu0 %2916
        %v2918 = vsel %vm804, %v2862, -inf
        %2919 = vmax.xlane.f32.xlu0 %v2918
        %v2920 = vpop.xlane.xlu0 %2919
        %v2921 = vsel %vm804, %v2863, -inf
        %2922 = vmax.xlane.f32.xlu0 %v2921
        %v2923 = vpop.xlane.xlu0 %2922
        %v2924 = vsel %vm804, %v2864, -inf
        %2925 = vmax.xlane.f32.xlu0 %v2924
        %v2926 = vpop.xlane.xlu0 %2925
        %v2927 = vsel %vm804, %v2865, -inf
        %2928 = vmax.xlane.f32.xlu0 %v2927
        %v2929 = vpop.xlane.xlu0 %2928
        %v2930 = vsel %vm804, %v2866, -inf
        %2931 = vmax.xlane.f32.xlu0 %v2930
        %v2932 = vpop.xlane.xlu0 %2931
        %v2933 = vsel %vm804, %v2867, -inf
        %2934 = vmax.xlane.f32.xlu0 %v2933
        %v2935 = vpop.xlane.xlu0 %2934
        %v2936 = vsel %vm804, %v2868, -inf
        %2937 = vmax.xlane.f32.xlu0 %v2936
        %v2938 = vpop.xlane.xlu0 %2937
        %v2939 = vsel %vm804, %v2869, -inf
        %2940 = vmax.xlane.f32.xlu0 %v2939
        %v2941 = vpop.xlane.xlu0 %2940
        %v2942 = vsel %vm804, %v2870, -inf
        %2943 = vmax.xlane.f32.xlu0 %v2942
        %v2944 = vpop.xlane.xlu0 %2943
        %v2945 = vsel %vm804, %v2871, -inf
        %2946 = vmax.xlane.f32.xlu0 %v2945
        %v2947 = vpop.xlane.xlu0 %2946
        %v2948 = vsel %vm804, %v2872, -inf
        %2949 = vmax.xlane.f32.xlu0 %v2948
        %v2950 = vpop.xlane.xlu0 %2949
        %v2951 = vsel %vm804, %v2873, -inf
        %2952 = vmax.xlane.f32.xlu0 %v2951
        %v2953 = vpop.xlane.xlu0 %2952
        %v2954 = vsel %vm804, %v2874, -inf
        %2955 = vmax.xlane.f32.xlu0 %v2954
        %v2956 = vpop.xlane.xlu0 %2955
        %v2957 = vsel %vm804, %v2875, -inf
        %2958 = vmax.xlane.f32.xlu0 %v2957
        %v2959 = vpop.xlane.xlu0 %2958
        %v2960 = vsel %vm804, %v2876, -inf
        %2961 = vmax.xlane.f32.xlu0 %v2960
        %v2962 = vpop.xlane.xlu0 %2961
        %v2963 = vsel %vm804, %v2877, -inf
        %2964 = vmax.xlane.f32.xlu0 %v2963
        %v2965 = vpop.xlane.xlu0 %2964
        %v2966 = vsel %vm804, %v2878, -inf
        %2967 = vmax.xlane.f32.xlu0 %v2966
        %v2968 = vpop.xlane.xlu0 %2967
        %v2969 = vsel %vm804, %v2879, -inf
        %2970 = vmax.xlane.f32.xlu0 %v2969
        %v2971 = vpop.xlane.xlu0 %2970
        %v2972 = vsel %vm804, %v2880, -inf
        %2973 = vmax.xlane.f32.xlu0 %v2972
        %v2974 = vpop.xlane.xlu0 %2973
        %v2975 = vsel %vm804, %v2881, -inf
        %2976 = vmax.xlane.f32.xlu0 %v2975
        %v2977 = vpop.xlane.xlu0 %2976
        %v2978 = vsub.f32 %v2850, %v2884
        %v2979 = vsub.f32 %v2851, %v2887
        %v2980 = vsub.f32 %v2852, %v2890
        %v2981 = vsub.f32 %v2853, %v2893
        %v2982 = vsub.f32 %v2854, %v2896
        %v2983 = vsub.f32 %v2855, %v2899
        %v2984 = vsub.f32 %v2856, %v2902
        %v2985 = vsub.f32 %v2857, %v2905
        %v2986 = vsub.f32 %v2858, %v2908
        %v2987 = vsub.f32 %v2859, %v2911
        %v2988 = vsub.f32 %v2860, %v2914
        %v2989 = vsub.f32 %v2861, %v2917
        %v2990 = vsub.f32 %v2862, %v2920
        %v2991 = vsub.f32 %v2863, %v2923
        %v2992 = vsub.f32 %v2864, %v2926
        %v2993 = vsub.f32 %v2865, %v2929
        %v2994 = vsub.f32 %v2866, %v2932
        %v2995 = vsub.f32 %v2867, %v2935
        %v2996 = vsub.f32 %v2868, %v2938
        %v2997 = vsub.f32 %v2869, %v2941
        %v2998 = vsub.f32 %v2870, %v2944
        %v2999 = vsub.f32 %v2871, %v2947
        %v3000 = vsub.f32 %v2872, %v2950
        %v3001 = vsub.f32 %v2873, %v2953
        %v3002 = vsub.f32 %v2874, %v2956
        %v3003 = vsub.f32 %v2875, %v2959
        %v3004 = vsub.f32 %v2876, %v2962
        %v3005 = vsub.f32 %v2877, %v2965
        %v3006 = vsub.f32 %v2878, %v2968
        %v3007 = vsub.f32 %v2879, %v2971
        %v3008 = vsub.f32 %v2880, %v2974
        %v3009 = vsub.f32 %v2881, %v2977
        %v3010 = vmul.f32 %v2978, 1.442695
        %v3011 = vpow.pop %v3010
        %v3012 = vmul.f32 %v2979, 1.442695
        %v3013 = vpow.pop %v3012
        %v3014 = vmul.f32 %v2980, 1.442695
        %v3015 = vpow.pop %v3014
        %v3016 = vmul.f32 %v2981, 1.442695
        %v3017 = vpow.pop %v3016
        %v3018 = vmul.f32 %v2982, 1.442695
        %v3019 = vpow.pop %v3018
        %v3020 = vmul.f32 %v2983, 1.442695
        %v3021 = vpow.pop %v3020
        %v3022 = vmul.f32 %v2984, 1.442695
        %v3023 = vpow.pop %v3022
        %v3024 = vmul.f32 %v2985, 1.442695
        %v3025 = vpow.pop %v3024
        %v3026 = vmul.f32 %v2986, 1.442695
        %v3027 = vpow.pop %v3026
        %v3028 = vmul.f32 %v2987, 1.442695
        %v3029 = vpow.pop %v3028
        %v3030 = vmul.f32 %v2988, 1.442695
        %v3031 = vpow.pop %v3030
        %v3032 = vmul.f32 %v2989, 1.442695
        %v3033 = vpow.pop %v3032
        %v3034 = vmul.f32 %v2990, 1.442695
        %v3035 = vpow.pop %v3034
        %v3036 = vmul.f32 %v2991, 1.442695
        %v3037 = vpow.pop %v3036
        %v3038 = vmul.f32 %v2992, 1.442695
        %v3039 = vpow.pop %v3038
        %v3040 = vmul.f32 %v2993, 1.442695
        %v3041 = vpow.pop %v3040
        %v3042 = vmul.f32 %v2994, 1.442695
        %v3043 = vpow.pop %v3042
        %v3044 = vmul.f32 %v2995, 1.442695
        %v3045 = vpow.pop %v3044
        %v3046 = vmul.f32 %v2996, 1.442695
        %v3047 = vpow.pop %v3046
        %v3048 = vmul.f32 %v2997, 1.442695
        %v3049 = vpow.pop %v3048
        %v3050 = vmul.f32 %v2998, 1.442695
        %v3051 = vpow.pop %v3050
        %v3052 = vmul.f32 %v2999, 1.442695
        %v3053 = vpow.pop %v3052
        %v3054 = vmul.f32 %v3000, 1.442695
        %v3055 = vpow.pop %v3054
        %v3056 = vmul.f32 %v3001, 1.442695
        %v3057 = vpow.pop %v3056
        %v3058 = vmul.f32 %v3002, 1.442695
        %v3059 = vpow.pop %v3058
        %v3060 = vmul.f32 %v3003, 1.442695
        %v3061 = vpow.pop %v3060
        %v3062 = vmul.f32 %v3004, 1.442695
        %v3063 = vpow.pop %v3062
        %v3064 = vmul.f32 %v3005, 1.442695
        %v3065 = vpow.pop %v3064
        %v3066 = vmul.f32 %v3006, 1.442695
        %v3067 = vpow.pop %v3066
        %v3068 = vmul.f32 %v3007, 1.442695
        %v3069 = vpow.pop %v3068
        %v3070 = vmul.f32 %v3008, 1.442695
        %v3071 = vpow.pop %v3070
        %v3072 = vmul.f32 %v3009, 1.442695
        %v3073 = vpow.pop %v3072
        %v3074 = vsel %vm804, %v3011, 0.0
        %3075 = vadd.xlane.f32.xlu0 %v3074
        %v3076 = vpop.xlane.xlu0 %3075
        %v3077 = vsel %vm804, %v3013, 0.0
        %3078 = vadd.xlane.f32.xlu0 %v3077
        %v3079 = vpop.xlane.xlu0 %3078
        %v3080 = vsel %vm804, %v3015, 0.0
        %3081 = vadd.xlane.f32.xlu0 %v3080
        %v3082 = vpop.xlane.xlu0 %3081
        %v3083 = vsel %vm804, %v3017, 0.0
        %3084 = vadd.xlane.f32.xlu0 %v3083
        %v3085 = vpop.xlane.xlu0 %3084
        %v3086 = vsel %vm804, %v3019, 0.0
        %3087 = vadd.xlane.f32.xlu0 %v3086
        %v3088 = vpop.xlane.xlu0 %3087
        %v3089 = vsel %vm804, %v3021, 0.0
        %3090 = vadd.xlane.f32.xlu0 %v3089
        %v3091 = vpop.xlane.xlu0 %3090
        %v3092 = vsel %vm804, %v3023, 0.0
        %3093 = vadd.xlane.f32.xlu0 %v3092
        %v3094 = vpop.xlane.xlu0 %3093
        %v3095 = vsel %vm804, %v3025, 0.0
        %3096 = vadd.xlane.f32.xlu0 %v3095
        %v3097 = vpop.xlane.xlu0 %3096
        %v3098 = vsel %vm804, %v3027, 0.0
        %3099 = vadd.xlane.f32.xlu0 %v3098
        %v3100 = vpop.xlane.xlu0 %3099
        %v3101 = vsel %vm804, %v3029, 0.0
        %3102 = vadd.xlane.f32.xlu0 %v3101
        %v3103 = vpop.xlane.xlu0 %3102
        %v3104 = vsel %vm804, %v3031, 0.0
        %3105 = vadd.xlane.f32.xlu0 %v3104
        %v3106 = vpop.xlane.xlu0 %3105
        %v3107 = vsel %vm804, %v3033, 0.0
        %3108 = vadd.xlane.f32.xlu0 %v3107
        %v3109 = vpop.xlane.xlu0 %3108
        %v3110 = vsel %vm804, %v3035, 0.0
        %3111 = vadd.xlane.f32.xlu0 %v3110
        %v3112 = vpop.xlane.xlu0 %3111
        %v3113 = vsel %vm804, %v3037, 0.0
        %3114 = vadd.xlane.f32.xlu0 %v3113
        %v3115 = vpop.xlane.xlu0 %3114
        %v3116 = vsel %vm804, %v3039, 0.0
        %3117 = vadd.xlane.f32.xlu0 %v3116
        %v3118 = vpop.xlane.xlu0 %3117
        %v3119 = vsel %vm804, %v3041, 0.0
        %3120 = vadd.xlane.f32.xlu0 %v3119
        %v3121 = vpop.xlane.xlu0 %3120
        %v3122 = vsel %vm804, %v3043, 0.0
        %3123 = vadd.xlane.f32.xlu0 %v3122
        %v3124 = vpop.xlane.xlu0 %3123
        %v3125 = vsel %vm804, %v3045, 0.0
        %3126 = vadd.xlane.f32.xlu0 %v3125
        %v3127 = vpop.xlane.xlu0 %3126
        %v3128 = vsel %vm804, %v3047, 0.0
        %3129 = vadd.xlane.f32.xlu0 %v3128
        %v3130 = vpop.xlane.xlu0 %3129
        %v3131 = vsel %vm804, %v3049, 0.0
        %3132 = vadd.xlane.f32.xlu0 %v3131
        %v3133 = vpop.xlane.xlu0 %3132
        %v3134 = vsel %vm804, %v3051, 0.0
        %3135 = vadd.xlane.f32.xlu0 %v3134
        %v3136 = vpop.xlane.xlu0 %3135
        %v3137 = vsel %vm804, %v3053, 0.0
        %3138 = vadd.xlane.f32.xlu0 %v3137
        %v3139 = vpop.xlane.xlu0 %3138
        %v3140 = vsel %vm804, %v3055, 0.0
        %3141 = vadd.xlane.f32.xlu0 %v3140
        %v3142 = vpop.xlane.xlu0 %3141
        %v3143 = vsel %vm804, %v3057, 0.0
        %3144 = vadd.xlane.f32.xlu0 %v3143
        %v3145 = vpop.xlane.xlu0 %3144
        %v3146 = vsel %vm804, %v3059, 0.0
        %3147 = vadd.xlane.f32.xlu0 %v3146
        %v3148 = vpop.xlane.xlu0 %3147
        %v3149 = vsel %vm804, %v3061, 0.0
        %3150 = vadd.xlane.f32.xlu0 %v3149
        %v3151 = vpop.xlane.xlu0 %3150
        %v3152 = vsel %vm804, %v3063, 0.0
        %3153 = vadd.xlane.f32.xlu0 %v3152
        %v3154 = vpop.xlane.xlu0 %3153
        %v3155 = vsel %vm804, %v3065, 0.0
        %3156 = vadd.xlane.f32.xlu0 %v3155
        %v3157 = vpop.xlane.xlu0 %3156
        %v3158 = vsel %vm804, %v3067, 0.0
        %3159 = vadd.xlane.f32.xlu0 %v3158
        %v3160 = vpop.xlane.xlu0 %3159
        %v3161 = vsel %vm804, %v3069, 0.0
        %3162 = vadd.xlane.f32.xlu0 %v3161
        %v3163 = vpop.xlane.xlu0 %3162
        %v3164 = vsel %vm804, %v3071, 0.0
        %3165 = vadd.xlane.f32.xlu0 %v3164
        %v3166 = vpop.xlane.xlu0 %3165
        %v3167 = vsel %vm804, %v3073, 0.0
        %3168 = vadd.xlane.f32.xlu0 %v3167
        %v3169 = vpop.xlane.xlu0 %3168
        %v3170 = vrcp.pop %v3076
        %v3171 = vrcp.pop %v3079
        %v3172 = vrcp.pop %v3082
        %v3173 = vrcp.pop %v3085
        %v3174 = vrcp.pop %v3088
        %v3175 = vrcp.pop %v3091
        %v3176 = vrcp.pop %v3094
        %v3177 = vrcp.pop %v3097
        %v3178 = vrcp.pop %v3100
        %v3179 = vrcp.pop %v3103
        %v3180 = vrcp.pop %v3106
        %v3181 = vrcp.pop %v3109
        %v3182 = vrcp.pop %v3112
        %v3183 = vrcp.pop %v3115
        %v3184 = vrcp.pop %v3118
        %v3185 = vrcp.pop %v3121
        %v3186 = vrcp.pop %v3124
        %v3187 = vrcp.pop %v3127
        %v3188 = vrcp.pop %v3130
        %v3189 = vrcp.pop %v3133
        %v3190 = vrcp.pop %v3136
        %v3191 = vrcp.pop %v3139
        %v3192 = vrcp.pop %v3142
        %v3193 = vrcp.pop %v3145
        %v3194 = vrcp.pop %v3148
        %v3195 = vrcp.pop %v3151
        %v3196 = vrcp.pop %v3154
        %v3197 = vrcp.pop %v3157
        %v3198 = vrcp.pop %v3160
        %v3199 = vrcp.pop %v3163
        %v3200 = vrcp.pop %v3166
        %v3201 = vrcp.pop %v3169
        %v3202 = vmul.f32 %v3011, %v3170
        %v3203 = vmul.f32 %v3013, %v3171
        %v3204 = vmul.f32 %v3015, %v3172
        %v3205 = vmul.f32 %v3017, %v3173
        %v3206 = vmul.f32 %v3019, %v3174
        %v3207 = vmul.f32 %v3021, %v3175
        %v3208 = vmul.f32 %v3023, %v3176
        %v3209 = vmul.f32 %v3025, %v3177
        %v3210 = vmul.f32 %v3027, %v3178
        %v3211 = vmul.f32 %v3029, %v3179
        %v3212 = vmul.f32 %v3031, %v3180
        %v3213 = vmul.f32 %v3033, %v3181
        %v3214 = vmul.f32 %v3035, %v3182
        %v3215 = vmul.f32 %v3037, %v3183
        %v3216 = vmul.f32 %v3039, %v3184
        %v3217 = vmul.f32 %v3041, %v3185
        %v3218 = vmul.f32 %v3043, %v3186
        %v3219 = vmul.f32 %v3045, %v3187
        %v3220 = vmul.f32 %v3047, %v3188
        %v3221 = vmul.f32 %v3049, %v3189
        %v3222 = vmul.f32 %v3051, %v3190
        %v3223 = vmul.f32 %v3053, %v3191
        %v3224 = vmul.f32 %v3055, %v3192
        %v3225 = vmul.f32 %v3057, %v3193
        %v3226 = vmul.f32 %v3059, %v3194
        %v3227 = vmul.f32 %v3061, %v3195
        %v3228 = vmul.f32 %v3063, %v3196
        %v3229 = vmul.f32 %v3065, %v3197
        %v3230 = vmul.f32 %v3067, %v3198
        %v3231 = vmul.f32 %v3069, %v3199
        %v3232 = vmul.f32 %v3071, %v3200
        %v3233 = vmul.f32 %v3073, %v3201
        %3234 = vmax.index.xlane.f32.xlu0 %v2882
        %v3235 = vpop.xlane.xlu0 %3234
        %3236 = vmax.index.xlane.f32.xlu0 %v2885
        %v3237 = vpop.xlane.xlu0 %3236
        %3238 = vmax.index.xlane.f32.xlu0 %v2888
        %v3239 = vpop.xlane.xlu0 %3238
        %3240 = vmax.index.xlane.f32.xlu0 %v2891
        %v3241 = vpop.xlane.xlu0 %3240
        %3242 = vmax.index.xlane.f32.xlu0 %v2894
        %v3243 = vpop.xlane.xlu0 %3242
        %3244 = vmax.index.xlane.f32.xlu0 %v2897
        %v3245 = vpop.xlane.xlu0 %3244
        %3246 = vmax.index.xlane.f32.xlu0 %v2900
        %v3247 = vpop.xlane.xlu0 %3246
        %3248 = vmax.index.xlane.f32.xlu0 %v2903
        %v3249 = vpop.xlane.xlu0 %3248
        %3250 = vmax.index.xlane.f32.xlu0 %v2906
        %v3251 = vpop.xlane.xlu0 %3250
        %3252 = vmax.index.xlane.f32.xlu0 %v2909
        %v3253 = vpop.xlane.xlu0 %3252
        %3254 = vmax.index.xlane.f32.xlu0 %v2912
        %v3255 = vpop.xlane.xlu0 %3254
        %3256 = vmax.index.xlane.f32.xlu0 %v2915
        %v3257 = vpop.xlane.xlu0 %3256
        %3258 = vmax.index.xlane.f32.xlu0 %v2918
        %v3259 = vpop.xlane.xlu0 %3258
        %3260 = vmax.index.xlane.f32.xlu0 %v2921
        %v3261 = vpop.xlane.xlu0 %3260
        %3262 = vmax.index.xlane.f32.xlu0 %v2924
        %v3263 = vpop.xlane.xlu0 %3262
        %3264 = vmax.index.xlane.f32.xlu0 %v2927
        %v3265 = vpop.xlane.xlu0 %3264
        %3266 = vmax.index.xlane.f32.xlu0 %v2930
        %v3267 = vpop.xlane.xlu0 %3266
        %3268 = vmax.index.xlane.f32.xlu0 %v2933
        %v3269 = vpop.xlane.xlu0 %3268
        %3270 = vmax.index.xlane.f32.xlu0 %v2936
        %v3271 = vpop.xlane.xlu0 %3270
        %3272 = vmax.index.xlane.f32.xlu0 %v2939
        %v3273 = vpop.xlane.xlu0 %3272
        %3274 = vmax.index.xlane.f32.xlu0 %v2942
        %v3275 = vpop.xlane.xlu0 %3274
        %3276 = vmax.index.xlane.f32.xlu0 %v2945
        %v3277 = vpop.xlane.xlu0 %3276
        %3278 = vmax.index.xlane.f32.xlu0 %v2948
        %v3279 = vpop.xlane.xlu0 %3278
        %3280 = vmax.index.xlane.f32.xlu0 %v2951
        %v3281 = vpop.xlane.xlu0 %3280
        %3282 = vmax.index.xlane.f32.xlu0 %v2954
        %v3283 = vpop.xlane.xlu0 %3282
        %3284 = vmax.index.xlane.f32.xlu0 %v2957
        %v3285 = vpop.xlane.xlu0 %3284
        %3286 = vmax.index.xlane.f32.xlu0 %v2960
        %v3287 = vpop.xlane.xlu0 %3286
        %3288 = vmax.index.xlane.f32.xlu0 %v2963
        %v3289 = vpop.xlane.xlu0 %3288
        %3290 = vmax.index.xlane.f32.xlu0 %v2966
        %v3291 = vpop.xlane.xlu0 %3290
        %3292 = vmax.index.xlane.f32.xlu0 %v2969
        %v3293 = vpop.xlane.xlu0 %3292
        %3294 = vmax.index.xlane.f32.xlu0 %v2972
        %v3295 = vpop.xlane.xlu0 %3294
        %3296 = vmax.index.xlane.f32.xlu0 %v2975
        %v3297 = vpop.xlane.xlu0 %3296
        %vm3298 = vcmp.eq.s32.totalorder %v1222, %v3235
        %vm3299 = vcmp.eq.s32.totalorder %v1222, %v3237
        %vm3300 = vcmp.eq.s32.totalorder %v1222, %v3239
        %vm3301 = vcmp.eq.s32.totalorder %v1222, %v3241
        %vm3302 = vcmp.eq.s32.totalorder %v1222, %v3243
        %vm3303 = vcmp.eq.s32.totalorder %v1222, %v3245
        %vm3304 = vcmp.eq.s32.totalorder %v1222, %v3247
        %vm3305 = vcmp.eq.s32.totalorder %v1222, %v3249
        %vm3306 = vcmp.eq.s32.totalorder %v1222, %v3251
        %vm3307 = vcmp.eq.s32.totalorder %v1222, %v3253
        %vm3308 = vcmp.eq.s32.totalorder %v1222, %v3255
        %vm3309 = vcmp.eq.s32.totalorder %v1222, %v3257
        %vm3310 = vcmp.eq.s32.totalorder %v1222, %v3259
        %vm3311 = vcmp.eq.s32.totalorder %v1222, %v3261
        %vm3312 = vcmp.eq.s32.totalorder %v1222, %v3263
        %vm3313 = vcmp.eq.s32.totalorder %v1222, %v3265
        %vm3314 = vcmp.eq.s32.totalorder %v1222, %v3267
        %vm3315 = vcmp.eq.s32.totalorder %v1222, %v3269
        %vm3316 = vcmp.eq.s32.totalorder %v1222, %v3271
        %vm3317 = vcmp.eq.s32.totalorder %v1222, %v3273
        %vm3318 = vcmp.eq.s32.totalorder %v1222, %v3275
        %vm3319 = vcmp.eq.s32.totalorder %v1222, %v3277
        %vm3320 = vcmp.eq.s32.totalorder %v1222, %v3279
        %vm3321 = vcmp.eq.s32.totalorder %v1222, %v3281
        %vm3322 = vcmp.eq.s32.totalorder %v1222, %v3283
        %vm3323 = vcmp.eq.s32.totalorder %v1222, %v3285
        %vm3324 = vcmp.eq.s32.totalorder %v1222, %v3287
        %vm3325 = vcmp.eq.s32.totalorder %v1222, %v3289
        %vm3326 = vcmp.eq.s32.totalorder %v1222, %v3291
        %vm3327 = vcmp.eq.s32.totalorder %v1222, %v3293
        %vm3328 = vcmp.eq.s32.totalorder %v1222, %v3295
        %vm3329 = vcmp.eq.s32.totalorder %v1222, %v3297
        %v3330 = vsel %vm3298, 1, 0
        %v3331 = vsel %vm3299, 1, 0
        %v3332 = vsel %vm3300, 1, 0
        %v3333 = vsel %vm3301, 1, 0
        %v3334 = vsel %vm3302, 1, 0
        %v3335 = vsel %vm3303, 1, 0
        %v3336 = vsel %vm3304, 1, 0
        %v3337 = vsel %vm3305, 1, 0
        %v3338 = vsel %vm3306, 1, 0
        %v3339 = vsel %vm3307, 1, 0
        %v3340 = vsel %vm3308, 1, 0
        %v3341 = vsel %vm3309, 1, 0
        %v3342 = vsel %vm3310, 1, 0
        %v3343 = vsel %vm3311, 1, 0
        %v3344 = vsel %vm3312, 1, 0
        %v3345 = vsel %vm3313, 1, 0
        %v3346 = vsel %vm3314, 1, 0
        %v3347 = vsel %vm3315, 1, 0
        %v3348 = vsel %vm3316, 1, 0
        %v3349 = vsel %vm3317, 1, 0
        %v3350 = vsel %vm3318, 1, 0
        %v3351 = vsel %vm3319, 1, 0
        %v3352 = vsel %vm3320, 1, 0
        %v3353 = vsel %vm3321, 1, 0
        %v3354 = vsel %vm3322, 1, 0
        %v3355 = vsel %vm3323, 1, 0
        %v3356 = vsel %vm3324, 1, 0
        %v3357 = vsel %vm3325, 1, 0
        %v3358 = vsel %vm3326, 1, 0
        %v3359 = vsel %vm3327, 1, 0
        %v3360 = vsel %vm3328, 1, 0
        %v3361 = vsel %vm3329, 1, 0
        %v3362 = vcvt.s32.f32 %v3330
        %v3363 = vcvt.s32.f32 %v3331
        %v3364 = vcvt.s32.f32 %v3332
        %v3365 = vcvt.s32.f32 %v3333
        %v3366 = vcvt.s32.f32 %v3334
        %v3367 = vcvt.s32.f32 %v3335
        %v3368 = vcvt.s32.f32 %v3336
        %v3369 = vcvt.s32.f32 %v3337
        %v3370 = vcvt.s32.f32 %v3338
        %v3371 = vcvt.s32.f32 %v3339
        %v3372 = vcvt.s32.f32 %v3340
        %v3373 = vcvt.s32.f32 %v3341
        %v3374 = vcvt.s32.f32 %v3342
        %v3375 = vcvt.s32.f32 %v3343
        %v3376 = vcvt.s32.f32 %v3344
        %v3377 = vcvt.s32.f32 %v3345
        %v3378 = vcvt.s32.f32 %v3346
        %v3379 = vcvt.s32.f32 %v3347
        %v3380 = vcvt.s32.f32 %v3348
        %v3381 = vcvt.s32.f32 %v3349
        %v3382 = vcvt.s32.f32 %v3350
        %v3383 = vcvt.s32.f32 %v3351
        %v3384 = vcvt.s32.f32 %v3352
        %v3385 = vcvt.s32.f32 %v3353
        %v3386 = vcvt.s32.f32 %v3354
        %v3387 = vcvt.s32.f32 %v3355
        %v3388 = vcvt.s32.f32 %v3356
        %v3389 = vcvt.s32.f32 %v3357
        %v3390 = vcvt.s32.f32 %v3358
        %v3391 = vcvt.s32.f32 %v3359
        %v3392 = vcvt.s32.f32 %v3360
        %v3393 = vcvt.s32.f32 %v3361
        %v3395 = vsel %vm804, %v3202, 0
        %v3398 = vsel %vm804, %v3203, 0
        %v3401 = vsel %vm804, %v3204, 0
        %v3404 = vsel %vm804, %v3205, 0
        %v3407 = vsel %vm804, %v3206, 0
        %v3410 = vsel %vm804, %v3207, 0
        %v3413 = vsel %vm804, %v3208, 0
        %v3416 = vsel %vm804, %v3209, 0
        %v3419 = vsel %vm804, %v3210, 0
        %v3422 = vsel %vm804, %v3211, 0
        %v3425 = vsel %vm804, %v3212, 0
        %v3428 = vsel %vm804, %v3213, 0
        %v3431 = vsel %vm804, %v3214, 0
        %v3434 = vsel %vm804, %v3215, 0
        %v3437 = vsel %vm804, %v3216, 0
        %v3440 = vsel %vm804, %v3217, 0
        %v3443 = vsel %vm804, %v3218, 0
        %v3446 = vsel %vm804, %v3219, 0
        %v3449 = vsel %vm804, %v3220, 0
        %v3452 = vsel %vm804, %v3221, 0
        %v3455 = vsel %vm804, %v3222, 0
        %v3458 = vsel %vm804, %v3223, 0
        %v3461 = vsel %vm804, %v3224, 0
        %v3464 = vsel %vm804, %v3225, 0
        %v3467 = vsel %vm804, %v3226, 0
        %v3470 = vsel %vm804, %v3227, 0
        %v3473 = vsel %vm804, %v3228, 0
        %v3476 = vsel %vm804, %v3229, 0
        %v3479 = vsel %vm804, %v3230, 0
        %v3482 = vsel %vm804, %v3231, 0
        %v3485 = vsel %vm804, %v3232, 0
        %v3488 = vsel %vm804, %v3233, 0
        %v3491 = vsel %vm804, %v3362, 0
        %v3494 = vsel %vm804, %v3363, 0
        %v3497 = vsel %vm804, %v3364, 0
        %v3500 = vsel %vm804, %v3365, 0
        %v3503 = vsel %vm804, %v3366, 0
        %v3506 = vsel %vm804, %v3367, 0
        %v3509 = vsel %vm804, %v3368, 0
        %v3512 = vsel %vm804, %v3369, 0
        %v3515 = vsel %vm804, %v3370, 0
        %v3518 = vsel %vm804, %v3371, 0
        %v3521 = vsel %vm804, %v3372, 0
        %v3524 = vsel %vm804, %v3373, 0
        %v3527 = vsel %vm804, %v3374, 0
        %v3530 = vsel %vm804, %v3375, 0
        %v3533 = vsel %vm804, %v3376, 0
        %v3536 = vsel %vm804, %v3377, 0
        %v3539 = vsel %vm804, %v3378, 0
        %v3542 = vsel %vm804, %v3379, 0
        %v3545 = vsel %vm804, %v3380, 0
        %v3548 = vsel %vm804, %v3381, 0
        %v3551 = vsel %vm804, %v3382, 0
        %v3554 = vsel %vm804, %v3383, 0
        %v3557 = vsel %vm804, %v3384, 0
        %v3560 = vsel %vm804, %v3385, 0
        %v3563 = vsel %vm804, %v3386, 0
        %v3566 = vsel %vm804, %v3387, 0
        %v3569 = vsel %vm804, %v3388, 0
        %v3572 = vsel %vm804, %v3389, 0
        %v3575 = vsel %vm804, %v3390, 0
        %v3578 = vsel %vm804, %v3391, 0
        %v3581 = vsel %vm804, %v3392, 0
        %v3584 = vsel %vm804, %v3393, 0
        %3586 = vmatprep.subr.mxu0 0.0
        %3587 = vmatpush1.msra.mxu0 %v2485
        %3588 = vmatprep.subr.mxu0 0.0
        %3589 = vmatpush1.msra.mxu0 %v2486
        %3590 = vmatprep.subr.mxu0 0.0
        %3591 = vmatpush1.msra.mxu0 0.0
        %3592 = vmatprep.subr.mxu0 0.0
        %3593 = vmatpush1.msra.mxu0 0.0
        %3594 = vmatprep.subr.mxu0 0.0
        %3595 = vmatpush1.msra.mxu0 0.0
        %3596 = vmatprep.subr.mxu0 0.0
        %3597 = vmatpush1.msra.mxu0 0.0
        %3598 = vmatprep.subr.mxu0 0.0
        %3599 = vmatpush1.msra.mxu0 0.0
        %3600 = vmatprep.subr.mxu0 0.0
        %3601 = vmatpush1.msra.mxu0 0.0
        %3602 = vmatprep.subr.mxu0 0.0
        %3603 = vmatpush1.msra.mxu0 0.0
        %3604 = vmatprep.subr.mxu0 0.0
        %3605 = vmatpush1.msra.mxu0 0.0
        %3606 = vmatprep.subr.mxu0 0.0
        %3607 = vmatpush1.msra.mxu0 0.0
        %3608 = vmatprep.subr.mxu0 0.0
        %3609 = vmatpush1.msra.mxu0 0.0
        %3610 = vmatprep.subr.mxu0 0.0
        %3611 = vmatpush1.msra.mxu0 0.0
        %3612 = vmatprep.subr.mxu0 0.0
        %3613 = vmatpush1.msra.mxu0 0.0
        %3614 = vmatprep.subr.mxu0 0.0
        %3615 = vmatpush1.msra.mxu0 0.0
        %3616 = vmatprep.subr.mxu0 0.0
        %3617 = vmatpush1.msra.mxu0 0.0
        %3618 = vmatprep.subr.mxu0 0.0
        %3619 = vmatpush1.msra.mxu0 0.0
        %3620 = vmatprep.subr.mxu0 0.0
        %3621 = vmatpush1.msra.mxu0 0.0
        %3622 = vmatprep.subr.mxu0 0.0
        %3623 = vmatpush1.msra.mxu0 0.0
        %3624 = vmatprep.subr.mxu0 0.0
        %3625 = vmatpush1.msra.mxu0 0.0
        %3626 = vmatprep.subr.mxu0 0.0
        %3627 = vmatpush1.msra.mxu0 0.0
        %3628 = vmatprep.subr.mxu0 0.0
        %3629 = vmatpush1.msra.mxu0 0.0
        %3630 = vmatprep.subr.mxu0 0.0
        %3631 = vmatpush1.msra.mxu0 0.0
        %3632 = vmatprep.subr.mxu0 0.0
        %3633 = vmatpush1.msra.mxu0 0.0
        %3634 = vmatprep.subr.mxu0 0.0
        %3635 = vmatpush1.msra.mxu0 0.0
        %3636 = vmatprep.subr.mxu0 0.0
        %3637 = vmatpush1.msra.mxu0 0.0
        %3638 = vmatprep.subr.mxu0 0.0
        %3639 = vmatpush1.msra.mxu0 0.0
        %3640 = vmatprep.subr.mxu0 0.0
        %3641 = vmatpush1.msra.mxu0 0.0
        %3642 = vmatprep.subr.mxu0 0.0
        %3643 = vmatpush1.msra.mxu0 0.0
        %3644 = vmatprep.subr.mxu0 0.0
        %3645 = vmatpush1.msra.mxu0 0.0
        %3646 = vmatprep.subr.mxu0 0.0
        %3647 = vmatpush1.msra.mxu0 0.0
        %3648 = vmatprep.subr.mxu0 0.0
        %3649 = vmatpush1.msra.mxu0 0.0
        %3650 = vmatprep.mubr.f32.mxu0 0.0
        %3651 = vmatmul.mubr.f32.gmra.mrb[0].mxu0 %v3395
        %v3652 = vpop.f32.mrb[0].mxu0
        %v3653 = vadd.f32 0.0, %v3652
        %v3654 = vpop.f32.mrb[0].mxu0
        %3655 = vmatprep.mubr.f32.mxu0 0.0
        %3656 = vmatmul.mubr.f32.gmra.mrb[0].mxu0 %v3398
        %v3657 = vpop.f32.mrb[0].mxu0
        %v3658 = vadd.f32 0.0, %v3657
        %v3659 = vpop.f32.mrb[0].mxu0
        %3660 = vmatprep.mubr.f32.mxu0 0.0
        %3661 = vmatmul.mubr.f32.gmra.mrb[0].mxu0 %v3401
        %v3662 = vpop.f32.mrb[0].mxu0
        %v3663 = vadd.f32 0.0, %v3662
        %v3664 = vpop.f32.mrb[0].mxu0
        %3665 = vmatprep.mubr.f32.mxu0 0.0
        %3666 = vmatmul.mubr.f32.gmra.mrb[0].mxu0 %v3404
        %v3667 = vpop.f32.mrb[0].mxu0
        %v3668 = vadd.f32 0.0, %v3667
        %v3669 = vpop.f32.mrb[0].mxu0
        %3670 = vmatprep.mubr.f32.mxu0 0.0
        %3671 = vmatmul.mubr.f32.gmra.mrb[0].mxu0 %v3407
        %v3672 = vpop.f32.mrb[0].mxu0
        %v3673 = vadd.f32 0.0, %v3672
        %v3674 = vpop.f32.mrb[0].mxu0
        %3675 = vmatprep.mubr.f32.mxu0 0.0
        %3676 = vmatmul.mubr.f32.gmra.mrb[0].mxu0 %v3410
        %v3677 = vpop.f32.mrb[0].mxu0
        %v3678 = vadd.f32 0.0, %v3677
        %v3679 = vpop.f32.mrb[0].mxu0
        %3680 = vmatprep.mubr.f32.mxu0 0.0
        %3681 = vmatmul.mubr.f32.gmra.mrb[0].mxu0 %v3413
        %v3682 = vpop.f32.mrb[0].mxu0
        %v3683 = vadd.f32 0.0, %v3682
        %v3684 = vpop.f32.mrb[0].mxu0
        %3685 = vmatprep.mubr.f32.mxu0 0.0
        %3686 = vmatmul.mubr.f32.gmra.mrb[0].mxu0 %v3416
        %v3687 = vpop.f32.mrb[0].mxu0
        %v3688 = vadd.f32 0.0, %v3687
        %v3689 = vpop.f32.mrb[0].mxu0
        %3690 = vmatprep.mubr.f32.mxu0 0.0
        %3691 = vmatmul.mubr.f32.gmra.mrb[0].mxu0 %v3419
        %v3692 = vpop.f32.mrb[0].mxu0
        %v3693 = vadd.f32 0.0, %v3692
        %v3694 = vpop.f32.mrb[0].mxu0
        %3695 = vmatprep.mubr.f32.mxu0 0.0
        %3696 = vmatmul.mubr.f32.gmra.mrb[0].mxu0 %v3422
        %v3697 = vpop.f32.mrb[0].mxu0
        %v3698 = vadd.f32 0.0, %v3697
        %v3699 = vpop.f32.mrb[0].mxu0
        %3700 = vmatprep.mubr.f32.mxu0 0.0
        %3701 = vmatmul.mubr.f32.gmra.mrb[0].mxu0 %v3425
        %v3702 = vpop.f32.mrb[0].mxu0
        %v3703 = vadd.f32 0.0, %v3702
        %v3704 = vpop.f32.mrb[0].mxu0
        %3705 = vmatprep.mubr.f32.mxu0 0.0
        %3706 = vmatmul.mubr.f32.gmra.mrb[0].mxu0 %v3428
        %v3707 = vpop.f32.mrb[0].mxu0
        %v3708 = vadd.f32 0.0, %v3707
        %v3709 = vpop.f32.mrb[0].mxu0
        %3710 = vmatprep.mubr.f32.mxu0 0.0
        %3711 = vmatmul.mubr.f32.gmra.mrb[0].mxu0 %v3431
        %v3712 = vpop.f32.mrb[0].mxu0
        %v3713 = vadd.f32 0.0, %v3712
        %v3714 = vpop.f32.mrb[0].mxu0
        %3715 = vmatprep.mubr.f32.mxu0 0.0
        %3716 = vmatmul.mubr.f32.gmra.mrb[0].mxu0 %v3434
        %v3717 = vpop.f32.mrb[0].mxu0
        %v3718 = vadd.f32 0.0, %v3717
        %v3719 = vpop.f32.mrb[0].mxu0
        %3720 = vmatprep.mubr.f32.mxu0 0.0
        %3721 = vmatmul.mubr.f32.gmra.mrb[0].mxu0 %v3437
        %v3722 = vpop.f32.mrb[0].mxu0
        %v3723 = vadd.f32 0.0, %v3722
        %v3724 = vpop.f32.mrb[0].mxu0
        %3725 = vmatprep.mubr.f32.mxu0 0.0
        %3726 = vmatmul.mubr.f32.gmra.mrb[0].mxu0 %v3440
        %v3727 = vpop.f32.mrb[0].mxu0
        %v3728 = vadd.f32 0.0, %v3727
        %v3729 = vpop.f32.mrb[0].mxu0
        %3730 = vmatprep.mubr.f32.mxu0 0.0
        %3731 = vmatmul.mubr.f32.gmra.mrb[0].mxu0 %v3443
        %v3732 = vpop.f32.mrb[0].mxu0
        %v3733 = vadd.f32 0.0, %v3732
        %v3734 = vpop.f32.mrb[0].mxu0
        %3735 = vmatprep.mubr.f32.mxu0 0.0
        %3736 = vmatmul.mubr.f32.gmra.mrb[0].mxu0 %v3446
        %v3737 = vpop.f32.mrb[0].mxu0
        %v3738 = vadd.f32 0.0, %v3737
        %v3739 = vpop.f32.mrb[0].mxu0
        %3740 = vmatprep.mubr.f32.mxu0 0.0
        %3741 = vmatmul.mubr.f32.gmra.mrb[0].mxu0 %v3449
        %v3742 = vpop.f32.mrb[0].mxu0
        %v3743 = vadd.f32 0.0, %v3742
        %v3744 = vpop.f32.mrb[0].mxu0
        %3745 = vmatprep.mubr.f32.mxu0 0.0
        %3746 = vmatmul.mubr.f32.gmra.mrb[0].mxu0 %v3452
        %v3747 = vpop.f32.mrb[0].mxu0
        %v3748 = vadd.f32 0.0, %v3747
        %v3749 = vpop.f32.mrb[0].mxu0
        %3750 = vmatprep.mubr.f32.mxu0 0.0
        %3751 = vmatmul.mubr.f32.gmra.mrb[0].mxu0 %v3455
        %v3752 = vpop.f32.mrb[0].mxu0
        %v3753 = vadd.f32 0.0, %v3752
        %v3754 = vpop.f32.mrb[0].mxu0
        %3755 = vmatprep.mubr.f32.mxu0 0.0
        %3756 = vmatmul.mubr.f32.gmra.mrb[0].mxu0 %v3458
        %v3757 = vpop.f32.mrb[0].mxu0
        %v3758 = vadd.f32 0.0, %v3757
        %v3759 = vpop.f32.mrb[0].mxu0
        %3760 = vmatprep.mubr.f32.mxu0 0.0
        %3761 = vmatmul.mubr.f32.gmra.mrb[0].mxu0 %v3461
        %v3762 = vpop.f32.mrb[0].mxu0
        %v3763 = vadd.f32 0.0, %v3762
        %v3764 = vpop.f32.mrb[0].mxu0
        %3765 = vmatprep.mubr.f32.mxu0 0.0
        %3766 = vmatmul.mubr.f32.gmra.mrb[0].mxu0 %v3464
        %v3767 = vpop.f32.mrb[0].mxu0
        %v3768 = vadd.f32 0.0, %v3767
        %v3769 = vpop.f32.mrb[0].mxu0
        %3770 = vmatprep.mubr.f32.mxu0 0.0
        %3771 = vmatmul.mubr.f32.gmra.mrb[0].mxu0 %v3467
        %v3772 = vpop.f32.mrb[0].mxu0
        %v3773 = vadd.f32 0.0, %v3772
        %v3774 = vpop.f32.mrb[0].mxu0
        %3775 = vmatprep.mubr.f32.mxu0 0.0
        %3776 = vmatmul.mubr.f32.gmra.mrb[0].mxu0 %v3470
        %v3777 = vpop.f32.mrb[0].mxu0
        %v3778 = vadd.f32 0.0, %v3777
        %v3779 = vpop.f32.mrb[0].mxu0
        %3780 = vmatprep.mubr.f32.mxu0 0.0
        %3781 = vmatmul.mubr.f32.gmra.mrb[0].mxu0 %v3473
        %v3782 = vpop.f32.mrb[0].mxu0
        %v3783 = vadd.f32 0.0, %v3782
        %v3784 = vpop.f32.mrb[0].mxu0
        %3785 = vmatprep.mubr.f32.mxu0 0.0
        %3786 = vmatmul.mubr.f32.gmra.mrb[0].mxu0 %v3476
        %v3787 = vpop.f32.mrb[0].mxu0
        %v3788 = vadd.f32 0.0, %v3787
        %v3789 = vpop.f32.mrb[0].mxu0
        %3790 = vmatprep.mubr.f32.mxu0 0.0
        %3791 = vmatmul.mubr.f32.gmra.mrb[0].mxu0 %v3479
        %v3792 = vpop.f32.mrb[0].mxu0
        %v3793 = vadd.f32 0.0, %v3792
        %v3794 = vpop.f32.mrb[0].mxu0
        %3795 = vmatprep.mubr.f32.mxu0 0.0
        %3796 = vmatmul.mubr.f32.gmra.mrb[0].mxu0 %v3482
        %v3797 = vpop.f32.mrb[0].mxu0
        %v3798 = vadd.f32 0.0, %v3797
        %v3799 = vpop.f32.mrb[0].mxu0
        %3800 = vmatprep.mubr.f32.mxu0 0.0
        %3801 = vmatmul.mubr.f32.gmra.mrb[0].mxu0 %v3485
        %v3802 = vpop.f32.mrb[0].mxu0
        %v3803 = vadd.f32 0.0, %v3802
        %v3804 = vpop.f32.mrb[0].mxu0
        %3805 = vmatprep.mubr.f32.mxu0 0.0
        %3806 = vmatmul.mubr.f32.gmra.mrb[0].mxu0 %v3488
        %v3807 = vpop.f32.mrb[0].mxu0
        %v3808 = vadd.f32 0.0, %v3807
        %v3809 = vpop.f32.mrb[0].mxu0
        %3810 = vmatprep.mubr.f32.mxu0 0.0
        %3811 = vmatmul.mubr.f32.gmra.mrb[0].mxu0 %v3491
        %v3812 = vpop.f32.mrb[0].mxu0
        %v3813 = vadd.f32 0.0, %v3812
        %v3814 = vpop.f32.mrb[0].mxu0
        %3815 = vmatprep.mubr.f32.mxu0 0.0
        %3816 = vmatmul.mubr.f32.gmra.mrb[0].mxu0 %v3494
        %v3817 = vpop.f32.mrb[0].mxu0
        %v3818 = vadd.f32 0.0, %v3817
        %v3819 = vpop.f32.mrb[0].mxu0
        %3820 = vmatprep.mubr.f32.mxu0 0.0
        %3821 = vmatmul.mubr.f32.gmra.mrb[0].mxu0 %v3497
        %v3822 = vpop.f32.mrb[0].mxu0
        %v3823 = vadd.f32 0.0, %v3822
        %v3824 = vpop.f32.mrb[0].mxu0
        %3825 = vmatprep.mubr.f32.mxu0 0.0
        %3826 = vmatmul.mubr.f32.gmra.mrb[0].mxu0 %v3500
        %v3827 = vpop.f32.mrb[0].mxu0
        %v3828 = vadd.f32 0.0, %v3827
        %v3829 = vpop.f32.mrb[0].mxu0
        %3830 = vmatprep.mubr.f32.mxu0 0.0
        %3831 = vmatmul.mubr.f32.gmra.mrb[0].mxu0 %v3503
        %v3832 = vpop.f32.mrb[0].mxu0
        %v3833 = vadd.f32 0.0, %v3832
        %v3834 = vpop.f32.mrb[0].mxu0
        %3835 = vmatprep.mubr.f32.mxu0 0.0
        %3836 = vmatmul.mubr.f32.gmra.mrb[0].mxu0 %v3506
        %v3837 = vpop.f32.mrb[0].mxu0
        %v3838 = vadd.f32 0.0, %v3837
        %v3839 = vpop.f32.mrb[0].mxu0
        %3840 = vmatprep.mubr.f32.mxu0 0.0
        %3841 = vmatmul.mubr.f32.gmra.mrb[0].mxu0 %v3509
        %v3842 = vpop.f32.mrb[0].mxu0
        %v3843 = vadd.f32 0.0, %v3842
        %v3844 = vpop.f32.mrb[0].mxu0
        %3845 = vmatprep.mubr.f32.mxu0 0.0
        %3846 = vmatmul.mubr.f32.gmra.mrb[0].mxu0 %v3512
        %v3847 = vpop.f32.mrb[0].mxu0
        %v3848 = vadd.f32 0.0, %v3847
        %v3849 = vpop.f32.mrb[0].mxu0
        %3850 = vmatprep.mubr.f32.mxu0 0.0
        %3851 = vmatmul.mubr.f32.gmra.mrb[0].mxu0 %v3515
        %v3852 = vpop.f32.mrb[0].mxu0
        %v3853 = vadd.f32 0.0, %v3852
        %v3854 = vpop.f32.mrb[0].mxu0
        %3855 = vmatprep.mubr.f32.mxu0 0.0
        %3856 = vmatmul.mubr.f32.gmra.mrb[0].mxu0 %v3518
        %v3857 = vpop.f32.mrb[0].mxu0
        %v3858 = vadd.f32 0.0, %v3857
        %v3859 = vpop.f32.mrb[0].mxu0
        %3860 = vmatprep.mubr.f32.mxu0 0.0
        %3861 = vmatmul.mubr.f32.gmra.mrb[0].mxu0 %v3521
        %v3862 = vpop.f32.mrb[0].mxu0
        %v3863 = vadd.f32 0.0, %v3862
        %v3864 = vpop.f32.mrb[0].mxu0
        %3865 = vmatprep.mubr.f32.mxu0 0.0
        %3866 = vmatmul.mubr.f32.gmra.mrb[0].mxu0 %v3524
        %v3867 = vpop.f32.mrb[0].mxu0
        %v3868 = vadd.f32 0.0, %v3867
        %v3869 = vpop.f32.mrb[0].mxu0
        %3870 = vmatprep.mubr.f32.mxu0 0.0
        %3871 = vmatmul.mubr.f32.gmra.mrb[0].mxu0 %v3527
        %v3872 = vpop.f32.mrb[0].mxu0
        %v3873 = vadd.f32 0.0, %v3872
        %v3874 = vpop.f32.mrb[0].mxu0
        %3875 = vmatprep.mubr.f32.mxu0 0.0
        %3876 = vmatmul.mubr.f32.gmra.mrb[0].mxu0 %v3530
        %v3877 = vpop.f32.mrb[0].mxu0
        %v3878 = vadd.f32 0.0, %v3877
        %v3879 = vpop.f32.mrb[0].mxu0
        %3880 = vmatprep.mubr.f32.mxu0 0.0
        %3881 = vmatmul.mubr.f32.gmra.mrb[0].mxu0 %v3533
        %v3882 = vpop.f32.mrb[0].mxu0
        %v3883 = vadd.f32 0.0, %v3882
        %v3884 = vpop.f32.mrb[0].mxu0
        %3885 = vmatprep.mubr.f32.mxu0 0.0
        %3886 = vmatmul.mubr.f32.gmra.mrb[0].mxu0 %v3536
        %v3887 = vpop.f32.mrb[0].mxu0
        %v3888 = vadd.f32 0.0, %v3887
        %v3889 = vpop.f32.mrb[0].mxu0
        %3890 = vmatprep.mubr.f32.mxu0 0.0
        %3891 = vmatmul.mubr.f32.gmra.mrb[0].mxu0 %v3539
        %v3892 = vpop.f32.mrb[0].mxu0
        %v3893 = vadd.f32 0.0, %v3892
        %v3894 = vpop.f32.mrb[0].mxu0
        %3895 = vmatprep.mubr.f32.mxu0 0.0
        %3896 = vmatmul.mubr.f32.gmra.mrb[0].mxu0 %v3542
        %v3897 = vpop.f32.mrb[0].mxu0
        %v3898 = vadd.f32 0.0, %v3897
        %v3899 = vpop.f32.mrb[0].mxu0
        %3900 = vmatprep.mubr.f32.mxu0 0.0
        %3901 = vmatmul.mubr.f32.gmra.mrb[0].mxu0 %v3545
        %v3902 = vpop.f32.mrb[0].mxu0
        %v3903 = vadd.f32 0.0, %v3902
        %v3904 = vpop.f32.mrb[0].mxu0
        %3905 = vmatprep.mubr.f32.mxu0 0.0
        %3906 = vmatmul.mubr.f32.gmra.mrb[0].mxu0 %v3548
        %v3907 = vpop.f32.mrb[0].mxu0
        %v3908 = vadd.f32 0.0, %v3907
        %v3909 = vpop.f32.mrb[0].mxu0
        %3910 = vmatprep.mubr.f32.mxu0 0.0
        %3911 = vmatmul.mubr.f32.gmra.mrb[0].mxu0 %v3551
        %v3912 = vpop.f32.mrb[0].mxu0
        %v3913 = vadd.f32 0.0, %v3912
        %v3914 = vpop.f32.mrb[0].mxu0
        %3915 = vmatprep.mubr.f32.mxu0 0.0
        %3916 = vmatmul.mubr.f32.gmra.mrb[0].mxu0 %v3554
        %v3917 = vpop.f32.mrb[0].mxu0
        %v3918 = vadd.f32 0.0, %v3917
        %v3919 = vpop.f32.mrb[0].mxu0
        %3920 = vmatprep.mubr.f32.mxu0 0.0
        %3921 = vmatmul.mubr.f32.gmra.mrb[0].mxu0 %v3557
        %v3922 = vpop.f32.mrb[0].mxu0
        %v3923 = vadd.f32 0.0, %v3922
        %v3924 = vpop.f32.mrb[0].mxu0
        %3925 = vmatprep.mubr.f32.mxu0 0.0
        %3926 = vmatmul.mubr.f32.gmra.mrb[0].mxu0 %v3560
        %v3927 = vpop.f32.mrb[0].mxu0
        %v3928 = vadd.f32 0.0, %v3927
        %v3929 = vpop.f32.mrb[0].mxu0
        %3930 = vmatprep.mubr.f32.mxu0 0.0
        %3931 = vmatmul.mubr.f32.gmra.mrb[0].mxu0 %v3563
        %v3932 = vpop.f32.mrb[0].mxu0
        %v3933 = vadd.f32 0.0, %v3932
        %v3934 = vpop.f32.mrb[0].mxu0
        %3935 = vmatprep.mubr.f32.mxu0 0.0
        %3936 = vmatmul.mubr.f32.gmra.mrb[0].mxu0 %v3566
        %v3937 = vpop.f32.mrb[0].mxu0
        %v3938 = vadd.f32 0.0, %v3937
        %v3939 = vpop.f32.mrb[0].mxu0
        %3940 = vmatprep.mubr.f32.mxu0 0.0
        %3941 = vmatmul.mubr.f32.gmra.mrb[0].mxu0 %v3569
        %v3942 = vpop.f32.mrb[0].mxu0
        %v3943 = vadd.f32 0.0, %v3942
        %v3944 = vpop.f32.mrb[0].mxu0
        %3945 = vmatprep.mubr.f32.mxu0 0.0
        %3946 = vmatmul.mubr.f32.gmra.mrb[0].mxu0 %v3572
        %v3947 = vpop.f32.mrb[0].mxu0
        %v3948 = vadd.f32 0.0, %v3947
        %v3949 = vpop.f32.mrb[0].mxu0
        %3950 = vmatprep.mubr.f32.mxu0 0.0
        %3951 = vmatmul.mubr.f32.gmra.mrb[0].mxu0 %v3575
        %v3952 = vpop.f32.mrb[0].mxu0
        %v3953 = vadd.f32 0.0, %v3952
        %v3954 = vpop.f32.mrb[0].mxu0
        %3955 = vmatprep.mubr.f32.mxu0 0.0
        %3956 = vmatmul.mubr.f32.gmra.mrb[0].mxu0 %v3578
        %v3957 = vpop.f32.mrb[0].mxu0
        %v3958 = vadd.f32 0.0, %v3957
        %v3959 = vpop.f32.mrb[0].mxu0
        %3960 = vmatprep.mubr.f32.mxu0 0.0
        %3961 = vmatmul.mubr.f32.gmra.mrb[0].mxu0 %v3581
        %v3962 = vpop.f32.mrb[0].mxu0
        %v3963 = vadd.f32 0.0, %v3962
        %v3964 = vpop.f32.mrb[0].mxu0
        %3965 = vmatprep.mubr.f32.mxu0 0.0
        %3966 = vmatmul.mubr.f32.gmra.mrb[0].mxu0 %v3584
        %v3967 = vpop.f32.mrb[0].mxu0
        %v3968 = vadd.f32 0.0, %v3967
        %v3969 = vpop.f32.mrb[0].mxu0
        %3970 = vdwg.mxu0
        %v3971 = vmul.f32 %v3653, %v373
        %v3972 = vmul.f32 %v3658, %v374
        %v3973 = vmul.f32 %v3663, %v375
        %v3974 = vmul.f32 %v3668, %v376
        %v3975 = vmul.f32 %v3673, %v377
        %v3976 = vmul.f32 %v3678, %v378
        %v3977 = vmul.f32 %v3683, %v379
        %v3978 = vmul.f32 %v3688, %v380
        %v3979 = vmul.f32 %v3693, %v381
        %v3980 = vmul.f32 %v3698, %v382
        %v3981 = vmul.f32 %v3703, %v383
        %v3982 = vmul.f32 %v3708, %v384
        %v3983 = vmul.f32 %v3713, %v385
        %v3984 = vmul.f32 %v3718, %v386
        %v3985 = vmul.f32 %v3723, %v387
        %v3986 = vmul.f32 %v3728, %v388
        %v3987 = vmul.f32 %v3733, %v389
        %v3988 = vmul.f32 %v3738, %v390
        %v3989 = vmul.f32 %v3743, %v391
        %v3990 = vmul.f32 %v3748, %v392
        %v3991 = vmul.f32 %v3753, %v393
        %v3992 = vmul.f32 %v3758, %v394
        %v3993 = vmul.f32 %v3763, %v395
        %v3994 = vmul.f32 %v3768, %v396
        %v3995 = vmul.f32 %v3773, %v397
        %v3996 = vmul.f32 %v3778, %v398
        %v3997 = vmul.f32 %v3783, %v399
        %v3998 = vmul.f32 %v3788, %v400
        %v3999 = vmul.f32 %v3793, %v401
        %v4000 = vmul.f32 %v3798, %v402
        %v4001 = vmul.f32 %v3803, %v403
        %v4002 = vmul.f32 %v3808, %v404
        %v4003 = vmul.f32 %v3813, %v373
        %v4004 = vmul.f32 %v3818, %v374
        %v4005 = vmul.f32 %v3823, %v375
        %v4006 = vmul.f32 %v3828, %v376
        %v4007 = vmul.f32 %v3833, %v377
        %v4008 = vmul.f32 %v3838, %v378
        %v4009 = vmul.f32 %v3843, %v379
        %v4010 = vmul.f32 %v3848, %v380
        %v4011 = vmul.f32 %v3853, %v381
        %v4012 = vmul.f32 %v3858, %v382
        %v4013 = vmul.f32 %v3863, %v383
        %v4014 = vmul.f32 %v3868, %v384
        %v4015 = vmul.f32 %v3873, %v385
        %v4016 = vmul.f32 %v3878, %v386
        %v4017 = vmul.f32 %v3883, %v387
        %v4018 = vmul.f32 %v3888, %v388
        %v4019 = vmul.f32 %v3893, %v389
        %v4020 = vmul.f32 %v3898, %v390
        %v4021 = vmul.f32 %v3903, %v391
        %v4022 = vmul.f32 %v3908, %v392
        %v4023 = vmul.f32 %v3913, %v393
        %v4024 = vmul.f32 %v3918, %v394
        %v4025 = vmul.f32 %v3923, %v395
        %v4026 = vmul.f32 %v3928, %v396
        %v4027 = vmul.f32 %v3933, %v397
        %v4028 = vmul.f32 %v3938, %v398
        %v4029 = vmul.f32 %v3943, %v399
        %v4030 = vmul.f32 %v3948, %v400
        %v4031 = vmul.f32 %v3953, %v401
        %v4032 = vmul.f32 %v3958, %v402
        %v4033 = vmul.f32 %v3963, %v403
        %v4034 = vmul.f32 %v3968, %v404
        %v4035 = vsub.f32 %v1960, %v4003
        %v4036 = vsub.f32 %v1961, %v4004
        %v4037 = vsub.f32 %v1962, %v4005
        %v4038 = vsub.f32 %v1963, %v4006
        %v4039 = vsub.f32 %v1964, %v4007
        %v4040 = vsub.f32 %v1965, %v4008
        %v4041 = vsub.f32 %v1966, %v4009
        %v4042 = vsub.f32 %v1967, %v4010
        %v4043 = vsub.f32 %v1968, %v4011
        %v4044 = vsub.f32 %v1969, %v4012
        %v4045 = vsub.f32 %v1970, %v4013
        %v4046 = vsub.f32 %v1971, %v4014
        %v4047 = vsub.f32 %v1972, %v4015
        %v4048 = vsub.f32 %v1973, %v4016
        %v4049 = vsub.f32 %v1974, %v4017
        %v4050 = vsub.f32 %v1975, %v4018
        %v4051 = vsub.f32 %v1976, %v4019
        %v4052 = vsub.f32 %v1977, %v4020
        %v4053 = vsub.f32 %v1978, %v4021
        %v4054 = vsub.f32 %v1979, %v4022
        %v4055 = vsub.f32 %v1980, %v4023
        %v4056 = vsub.f32 %v1981, %v4024
        %v4057 = vsub.f32 %v1982, %v4025
        %v4058 = vsub.f32 %v1983, %v4026
        %v4059 = vsub.f32 %v1984, %v4027
        %v4060 = vsub.f32 %v1985, %v4028
        %v4061 = vsub.f32 %v1986, %v4029
        %v4062 = vsub.f32 %v1987, %v4030
        %v4063 = vsub.f32 %v1988, %v4031
        %v4064 = vsub.f32 %v1989, %v4032
        %v4065 = vsub.f32 %v1990, %v4033
        %v4066 = vsub.f32 %v1991, %v4034
        %v4067 = vadd.f32 %v1992, %v3971
        %v4068 = vadd.f32 %v1993, %v3972
        %v4069 = vadd.f32 %v1994, %v3973
        %v4070 = vadd.f32 %v1995, %v3974
        %v4071 = vadd.f32 %v1996, %v3975
        %v4072 = vadd.f32 %v1997, %v3976
        %v4073 = vadd.f32 %v1998, %v3977
        %v4074 = vadd.f32 %v1999, %v3978
        %v4075 = vadd.f32 %v2000, %v3979
        %v4076 = vadd.f32 %v2001, %v3980
        %v4077 = vadd.f32 %v2002, %v3981
        %v4078 = vadd.f32 %v2003, %v3982
        %v4079 = vadd.f32 %v2004, %v3983
        %v4080 = vadd.f32 %v2005, %v3984
        %v4081 = vadd.f32 %v2006, %v3985
        %v4082 = vadd.f32 %v2007, %v3986
        %v4083 = vadd.f32 %v2008, %v3987
        %v4084 = vadd.f32 %v2009, %v3988
        %v4085 = vadd.f32 %v2010, %v3989
        %v4086 = vadd.f32 %v2011, %v3990
        %v4087 = vadd.f32 %v2012, %v3991
        %v4088 = vadd.f32 %v2013, %v3992
        %v4089 = vadd.f32 %v2014, %v3993
        %v4090 = vadd.f32 %v2015, %v3994
        %v4091 = vadd.f32 %v2016, %v3995
        %v4092 = vadd.f32 %v2017, %v3996
        %v4093 = vadd.f32 %v2018, %v3997
        %v4094 = vadd.f32 %v2019, %v3998
        %v4095 = vadd.f32 %v2020, %v3999
        %v4096 = vadd.f32 %v2021, %v4000
        %v4097 = vadd.f32 %v2022, %v4001
        %v4098 = vadd.f32 %v2023, %v4002
        %v4099 = vadd.f32 %v2024, %v4003
        %v4100 = vadd.f32 %v2025, %v4004
        %v4101 = vadd.f32 %v2026, %v4005
        %v4102 = vadd.f32 %v2027, %v4006
        %v4103 = vadd.f32 %v2028, %v4007
        %v4104 = vadd.f32 %v2029, %v4008
        %v4105 = vadd.f32 %v2030, %v4009
        %v4106 = vadd.f32 %v2031, %v4010
        %v4107 = vadd.f32 %v2032, %v4011
        %v4108 = vadd.f32 %v2033, %v4012
        %v4109 = vadd.f32 %v2034, %v4013
        %v4110 = vadd.f32 %v2035, %v4014
        %v4111 = vadd.f32 %v2036, %v4015
        %v4112 = vadd.f32 %v2037, %v4016
        %v4113 = vadd.f32 %v2038, %v4017
        %v4114 = vadd.f32 %v2039, %v4018
        %v4115 = vadd.f32 %v2040, %v4019
        %v4116 = vadd.f32 %v2041, %v4020
        %v4117 = vadd.f32 %v2042, %v4021
        %v4118 = vadd.f32 %v2043, %v4022
        %v4119 = vadd.f32 %v2044, %v4023
        %v4120 = vadd.f32 %v2045, %v4024
        %v4121 = vadd.f32 %v2046, %v4025
        %v4122 = vadd.f32 %v2047, %v4026
        %v4123 = vadd.f32 %v2048, %v4027
        %v4124 = vadd.f32 %v2049, %v4028
        %v4125 = vadd.f32 %v2050, %v4029
        %v4126 = vadd.f32 %v2051, %v4030
        %v4127 = vadd.f32 %v2052, %v4031
        %v4128 = vadd.f32 %v2053, %v4032
        %v4129 = vadd.f32 %v2054, %v4033
        %v4130 = vadd.f32 %v2055, %v4034
        %v4131 = vcvt.s32.f32 %v3235
        %v4132 = vcvt.s32.f32 %v3237
        %v4133 = vcvt.s32.f32 %v3239
        %v4134 = vcvt.s32.f32 %v3241
        %v4135 = vcvt.s32.f32 %v3243
        %v4136 = vcvt.s32.f32 %v3245
        %v4137 = vcvt.s32.f32 %v3247
        %v4138 = vcvt.s32.f32 %v3249
        %v4139 = vcvt.s32.f32 %v3251
        %v4140 = vcvt.s32.f32 %v3253
        %v4141 = vcvt.s32.f32 %v3255
        %v4142 = vcvt.s32.f32 %v3257
        %v4143 = vcvt.s32.f32 %v3259
        %v4144 = vcvt.s32.f32 %v3261
        %v4145 = vcvt.s32.f32 %v3263
        %v4146 = vcvt.s32.f32 %v3265
        %v4147 = vcvt.s32.f32 %v3267
        %v4148 = vcvt.s32.f32 %v3269
        %v4149 = vcvt.s32.f32 %v3271
        %v4150 = vcvt.s32.f32 %v3273
        %v4151 = vcvt.s32.f32 %v3275
        %v4152 = vcvt.s32.f32 %v3277
        %v4153 = vcvt.s32.f32 %v3279
        %v4154 = vcvt.s32.f32 %v3281
        %v4155 = vcvt.s32.f32 %v3283
        %v4156 = vcvt.s32.f32 %v3285
        %v4157 = vcvt.s32.f32 %v3287
        %v4158 = vcvt.s32.f32 %v3289
        %v4159 = vcvt.s32.f32 %v3291
        %v4160 = vcvt.s32.f32 %v3293
        %v4161 = vcvt.s32.f32 %v3295
        %v4162 = vcvt.s32.f32 %v3297
        %v4163 = vsub.f32 %v210, %v4067
        %v4164 = vsub.f32 %v211, %v4068
        %v4165 = vsub.f32 %v212, %v4069
        %v4166 = vsub.f32 %v213, %v4070
        %v4167 = vsub.f32 %v214, %v4071
        %v4168 = vsub.f32 %v215, %v4072
        %v4169 = vsub.f32 %v216, %v4073
        %v4170 = vsub.f32 %v217, %v4074
        %v4171 = vsub.f32 %v218, %v4075
        %v4172 = vsub.f32 %v219, %v4076
        %v4173 = vsub.f32 %v220, %v4077
        %v4174 = vsub.f32 %v221, %v4078
        %v4175 = vsub.f32 %v222, %v4079
        %v4176 = vsub.f32 %v223, %v4080
        %v4177 = vsub.f32 %v224, %v4081
        %v4178 = vsub.f32 %v225, %v4082
        %v4179 = vsub.f32 %v226, %v4083
        %v4180 = vsub.f32 %v227, %v4084
        %v4181 = vsub.f32 %v228, %v4085
        %v4182 = vsub.f32 %v229, %v4086
        %v4183 = vsub.f32 %v230, %v4087
        %v4184 = vsub.f32 %v231, %v4088
        %v4185 = vsub.f32 %v232, %v4089
        %v4186 = vsub.f32 %v233, %v4090
        %v4187 = vsub.f32 %v234, %v4091
        %v4188 = vsub.f32 %v235, %v4092
        %v4189 = vsub.f32 %v236, %v4093
        %v4190 = vsub.f32 %v237, %v4094
        %v4191 = vsub.f32 %v238, %v4095
        %v4192 = vsub.f32 %v239, %v4096
        %v4193 = vsub.f32 %v240, %v4097
        %v4194 = vsub.f32 %v241, %v4098
        %v4195 = vsub.f32 %v210, %v4099
        %v4196 = vsub.f32 %v211, %v4100
        %v4197 = vsub.f32 %v212, %v4101
        %v4198 = vsub.f32 %v213, %v4102
        %v4199 = vsub.f32 %v214, %v4103
        %v4200 = vsub.f32 %v215, %v4104
        %v4201 = vsub.f32 %v216, %v4105
        %v4202 = vsub.f32 %v217, %v4106
        %v4203 = vsub.f32 %v218, %v4107
        %v4204 = vsub.f32 %v219, %v4108
        %v4205 = vsub.f32 %v220, %v4109
        %v4206 = vsub.f32 %v221, %v4110
        %v4207 = vsub.f32 %v222, %v4111
        %v4208 = vsub.f32 %v223, %v4112
        %v4209 = vsub.f32 %v224, %v4113
        %v4210 = vsub.f32 %v225, %v4114
        %v4211 = vsub.f32 %v226, %v4115
        %v4212 = vsub.f32 %v227, %v4116
        %v4213 = vsub.f32 %v228, %v4117
        %v4214 = vsub.f32 %v229, %v4118
        %v4215 = vsub.f32 %v230, %v4119
        %v4216 = vsub.f32 %v231, %v4120
        %v4217 = vsub.f32 %v232, %v4121
        %v4218 = vsub.f32 %v233, %v4122
        %v4219 = vsub.f32 %v234, %v4123
        %v4220 = vsub.f32 %v235, %v4124
        %v4221 = vsub.f32 %v236, %v4125
        %v4222 = vsub.f32 %v237, %v4126
        %v4223 = vsub.f32 %v238, %v4127
        %v4224 = vsub.f32 %v239, %v4128
        %v4225 = vsub.f32 %v240, %v4129
        %v4226 = vsub.f32 %v241, %v4130
        %v4227 = vmul.f32 %v4163, %v4163
        %v4228 = vmul.f32 %v4164, %v4164
        %v4229 = vmul.f32 %v4165, %v4165
        %v4230 = vmul.f32 %v4166, %v4166
        %v4231 = vmul.f32 %v4167, %v4167
        %v4232 = vmul.f32 %v4168, %v4168
        %v4233 = vmul.f32 %v4169, %v4169
        %v4234 = vmul.f32 %v4170, %v4170
        %v4235 = vmul.f32 %v4171, %v4171
        %v4236 = vmul.f32 %v4172, %v4172
        %v4237 = vmul.f32 %v4173, %v4173
        %v4238 = vmul.f32 %v4174, %v4174
        %v4239 = vmul.f32 %v4175, %v4175
        %v4240 = vmul.f32 %v4176, %v4176
        %v4241 = vmul.f32 %v4177, %v4177
        %v4242 = vmul.f32 %v4178, %v4178
        %v4243 = vmul.f32 %v4179, %v4179
        %v4244 = vmul.f32 %v4180, %v4180
        %v4245 = vmul.f32 %v4181, %v4181
        %v4246 = vmul.f32 %v4182, %v4182
        %v4247 = vmul.f32 %v4183, %v4183
        %v4248 = vmul.f32 %v4184, %v4184
        %v4249 = vmul.f32 %v4185, %v4185
        %v4250 = vmul.f32 %v4186, %v4186
        %v4251 = vmul.f32 %v4187, %v4187
        %v4252 = vmul.f32 %v4188, %v4188
        %v4253 = vmul.f32 %v4189, %v4189
        %v4254 = vmul.f32 %v4190, %v4190
        %v4255 = vmul.f32 %v4191, %v4191
        %v4256 = vmul.f32 %v4192, %v4192
        %v4257 = vmul.f32 %v4193, %v4193
        %v4258 = vmul.f32 %v4194, %v4194
        %v4259 = vsel %vm408, %v4227, 0.0
        %4260 = vadd.xlane.f32.xlu0 %v4259
        %v4261 = vpop.xlane.xlu0 %4260
        %v4262 = vsel %vm408, %v4228, 0.0
        %4263 = vadd.xlane.f32.xlu0 %v4262
        %v4264 = vpop.xlane.xlu0 %4263
        %v4265 = vsel %vm408, %v4229, 0.0
        %4266 = vadd.xlane.f32.xlu0 %v4265
        %v4267 = vpop.xlane.xlu0 %4266
        %v4268 = vsel %vm408, %v4230, 0.0
        %4269 = vadd.xlane.f32.xlu0 %v4268
        %v4270 = vpop.xlane.xlu0 %4269
        %v4271 = vsel %vm408, %v4231, 0.0
        %4272 = vadd.xlane.f32.xlu0 %v4271
        %v4273 = vpop.xlane.xlu0 %4272
        %v4274 = vsel %vm408, %v4232, 0.0
        %4275 = vadd.xlane.f32.xlu0 %v4274
        %v4276 = vpop.xlane.xlu0 %4275
        %v4277 = vsel %vm408, %v4233, 0.0
        %4278 = vadd.xlane.f32.xlu0 %v4277
        %v4279 = vpop.xlane.xlu0 %4278
        %v4280 = vsel %vm408, %v4234, 0.0
        %4281 = vadd.xlane.f32.xlu0 %v4280
        %v4282 = vpop.xlane.xlu0 %4281
        %v4283 = vsel %vm408, %v4235, 0.0
        %4284 = vadd.xlane.f32.xlu0 %v4283
        %v4285 = vpop.xlane.xlu0 %4284
        %v4286 = vsel %vm408, %v4236, 0.0
        %4287 = vadd.xlane.f32.xlu0 %v4286
        %v4288 = vpop.xlane.xlu0 %4287
        %v4289 = vsel %vm408, %v4237, 0.0
        %4290 = vadd.xlane.f32.xlu0 %v4289
        %v4291 = vpop.xlane.xlu0 %4290
        %v4292 = vsel %vm408, %v4238, 0.0
        %4293 = vadd.xlane.f32.xlu0 %v4292
        %v4294 = vpop.xlane.xlu0 %4293
        %v4295 = vsel %vm408, %v4239, 0.0
        %4296 = vadd.xlane.f32.xlu0 %v4295
        %v4297 = vpop.xlane.xlu0 %4296
        %v4298 = vsel %vm408, %v4240, 0.0
        %4299 = vadd.xlane.f32.xlu0 %v4298
        %v4300 = vpop.xlane.xlu0 %4299
        %v4301 = vsel %vm408, %v4241, 0.0
        %4302 = vadd.xlane.f32.xlu0 %v4301
        %v4303 = vpop.xlane.xlu0 %4302
        %v4304 = vsel %vm408, %v4242, 0.0
        %4305 = vadd.xlane.f32.xlu0 %v4304
        %v4306 = vpop.xlane.xlu0 %4305
        %v4307 = vsel %vm408, %v4243, 0.0
        %4308 = vadd.xlane.f32.xlu0 %v4307
        %v4309 = vpop.xlane.xlu0 %4308
        %v4310 = vsel %vm408, %v4244, 0.0
        %4311 = vadd.xlane.f32.xlu0 %v4310
        %v4312 = vpop.xlane.xlu0 %4311
        %v4313 = vsel %vm408, %v4245, 0.0
        %4314 = vadd.xlane.f32.xlu0 %v4313
        %v4315 = vpop.xlane.xlu0 %4314
        %v4316 = vsel %vm408, %v4246, 0.0
        %4317 = vadd.xlane.f32.xlu0 %v4316
        %v4318 = vpop.xlane.xlu0 %4317
        %v4319 = vsel %vm408, %v4247, 0.0
        %4320 = vadd.xlane.f32.xlu0 %v4319
        %v4321 = vpop.xlane.xlu0 %4320
        %v4322 = vsel %vm408, %v4248, 0.0
        %4323 = vadd.xlane.f32.xlu0 %v4322
        %v4324 = vpop.xlane.xlu0 %4323
        %v4325 = vsel %vm408, %v4249, 0.0
        %4326 = vadd.xlane.f32.xlu0 %v4325
        %v4327 = vpop.xlane.xlu0 %4326
        %v4328 = vsel %vm408, %v4250, 0.0
        %4329 = vadd.xlane.f32.xlu0 %v4328
        %v4330 = vpop.xlane.xlu0 %4329
        %v4331 = vsel %vm408, %v4251, 0.0
        %4332 = vadd.xlane.f32.xlu0 %v4331
        %v4333 = vpop.xlane.xlu0 %4332
        %v4334 = vsel %vm408, %v4252, 0.0
        %4335 = vadd.xlane.f32.xlu0 %v4334
        %v4336 = vpop.xlane.xlu0 %4335
        %v4337 = vsel %vm408, %v4253, 0.0
        %4338 = vadd.xlane.f32.xlu0 %v4337
        %v4339 = vpop.xlane.xlu0 %4338
        %v4340 = vsel %vm408, %v4254, 0.0
        %4341 = vadd.xlane.f32.xlu0 %v4340
        %v4342 = vpop.xlane.xlu0 %4341
        %v4343 = vsel %vm408, %v4255, 0.0
        %4344 = vadd.xlane.f32.xlu0 %v4343
        %v4345 = vpop.xlane.xlu0 %4344
        %v4346 = vsel %vm408, %v4256, 0.0
        %4347 = vadd.xlane.f32.xlu0 %v4346
        %v4348 = vpop.xlane.xlu0 %4347
        %v4349 = vsel %vm408, %v4257, 0.0
        %4350 = vadd.xlane.f32.xlu0 %v4349
        %v4351 = vpop.xlane.xlu0 %4350
        %v4352 = vsel %vm408, %v4258, 0.0
        %4353 = vadd.xlane.f32.xlu0 %v4352
        %v4354 = vpop.xlane.xlu0 %4353
        %v4355 = vadd.f32 %v4261, %v4264
        %v4356 = vadd.f32 %v4355, %v4267
        %v4357 = vadd.f32 %v4356, %v4270
        %v4358 = vadd.f32 %v4357, %v4273
        %v4359 = vadd.f32 %v4358, %v4276
        %v4360 = vadd.f32 %v4359, %v4279
        %v4361 = vadd.f32 %v4360, %v4282
        %v4362 = vadd.f32 %v4361, %v4285
        %v4363 = vadd.f32 %v4362, %v4288
        %v4364 = vadd.f32 %v4363, %v4291
        %v4365 = vadd.f32 %v4364, %v4294
        %v4366 = vadd.f32 %v4365, %v4297
        %v4367 = vadd.f32 %v4366, %v4300
        %v4368 = vadd.f32 %v4367, %v4303
        %v4369 = vadd.f32 %v4368, %v4306
        %v4370 = vadd.f32 %v4369, %v4309
        %v4371 = vadd.f32 %v4370, %v4312
        %v4372 = vadd.f32 %v4371, %v4315
        %v4373 = vadd.f32 %v4372, %v4318
        %v4374 = vadd.f32 %v4373, %v4321
        %v4375 = vadd.f32 %v4374, %v4324
        %v4376 = vadd.f32 %v4375, %v4327
        %v4377 = vadd.f32 %v4376, %v4330
        %v4378 = vadd.f32 %v4377, %v4333
        %v4379 = vadd.f32 %v4378, %v4336
        %v4380 = vadd.f32 %v4379, %v4339
        %v4381 = vadd.f32 %v4380, %v4342
        %v4382 = vadd.f32 %v4381, %v4345
        %v4383 = vadd.f32 %v4382, %v4348
        %v4384 = vadd.f32 %v4383, %v4351
        %v4385 = vadd.f32 %v4384, %v4354
        %v4386 = vrot.slane %v4385, 4
        %v4387 = vadd.f32 %v4385, %v4386
        %v4388 = vrot.slane %v4387, 2
        %v4389 = vadd.f32 %v4387, %v4388
        %v4390 = vrot.slane %v4389, 1
        %v4391 = vadd.f32 %v4389, %v4390
        %v4392 = vadd.f32 %v2317, %v4391
        %v4393 = vmul.f32 %v4195, %v4195
        %v4394 = vmul.f32 %v4196, %v4196
        %v4395 = vmul.f32 %v4197, %v4197
        %v4396 = vmul.f32 %v4198, %v4198
        %v4397 = vmul.f32 %v4199, %v4199
        %v4398 = vmul.f32 %v4200, %v4200
        %v4399 = vmul.f32 %v4201, %v4201
        %v4400 = vmul.f32 %v4202, %v4202
        %v4401 = vmul.f32 %v4203, %v4203
        %v4402 = vmul.f32 %v4204, %v4204
        %v4403 = vmul.f32 %v4205, %v4205
        %v4404 = vmul.f32 %v4206, %v4206
        %v4405 = vmul.f32 %v4207, %v4207
        %v4406 = vmul.f32 %v4208, %v4208
        %v4407 = vmul.f32 %v4209, %v4209
        %v4408 = vmul.f32 %v4210, %v4210
        %v4409 = vmul.f32 %v4211, %v4211
        %v4410 = vmul.f32 %v4212, %v4212
        %v4411 = vmul.f32 %v4213, %v4213
        %v4412 = vmul.f32 %v4214, %v4214
        %v4413 = vmul.f32 %v4215, %v4215
        %v4414 = vmul.f32 %v4216, %v4216
        %v4415 = vmul.f32 %v4217, %v4217
        %v4416 = vmul.f32 %v4218, %v4218
        %v4417 = vmul.f32 %v4219, %v4219
        %v4418 = vmul.f32 %v4220, %v4220
        %v4419 = vmul.f32 %v4221, %v4221
        %v4420 = vmul.f32 %v4222, %v4222
        %v4421 = vmul.f32 %v4223, %v4223
        %v4422 = vmul.f32 %v4224, %v4224
        %v4423 = vmul.f32 %v4225, %v4225
        %v4424 = vmul.f32 %v4226, %v4226
        %v4425 = vsel %vm408, %v4393, 0.0
        %4426 = vadd.xlane.f32.xlu0 %v4425
        %v4427 = vpop.xlane.xlu0 %4426
        %v4428 = vsel %vm408, %v4394, 0.0
        %4429 = vadd.xlane.f32.xlu0 %v4428
        %v4430 = vpop.xlane.xlu0 %4429
        %v4431 = vsel %vm408, %v4395, 0.0
        %4432 = vadd.xlane.f32.xlu0 %v4431
        %v4433 = vpop.xlane.xlu0 %4432
        %v4434 = vsel %vm408, %v4396, 0.0
        %4435 = vadd.xlane.f32.xlu0 %v4434
        %v4436 = vpop.xlane.xlu0 %4435
        %v4437 = vsel %vm408, %v4397, 0.0
        %4438 = vadd.xlane.f32.xlu0 %v4437
        %v4439 = vpop.xlane.xlu0 %4438
        %v4440 = vsel %vm408, %v4398, 0.0
        %4441 = vadd.xlane.f32.xlu0 %v4440
        %v4442 = vpop.xlane.xlu0 %4441
        %v4443 = vsel %vm408, %v4399, 0.0
        %4444 = vadd.xlane.f32.xlu0 %v4443
        %v4445 = vpop.xlane.xlu0 %4444
        %v4446 = vsel %vm408, %v4400, 0.0
        %4447 = vadd.xlane.f32.xlu0 %v4446
        %v4448 = vpop.xlane.xlu0 %4447
        %v4449 = vsel %vm408, %v4401, 0.0
        %4450 = vadd.xlane.f32.xlu0 %v4449
        %v4451 = vpop.xlane.xlu0 %4450
        %v4452 = vsel %vm408, %v4402, 0.0
        %4453 = vadd.xlane.f32.xlu0 %v4452
        %v4454 = vpop.xlane.xlu0 %4453
        %v4455 = vsel %vm408, %v4403, 0.0
        %4456 = vadd.xlane.f32.xlu0 %v4455
        %v4457 = vpop.xlane.xlu0 %4456
        %v4458 = vsel %vm408, %v4404, 0.0
        %4459 = vadd.xlane.f32.xlu0 %v4458
        %v4460 = vpop.xlane.xlu0 %4459
        %v4461 = vsel %vm408, %v4405, 0.0
        %4462 = vadd.xlane.f32.xlu0 %v4461
        %v4463 = vpop.xlane.xlu0 %4462
        %v4464 = vsel %vm408, %v4406, 0.0
        %4465 = vadd.xlane.f32.xlu0 %v4464
        %v4466 = vpop.xlane.xlu0 %4465
        %v4467 = vsel %vm408, %v4407, 0.0
        %4468 = vadd.xlane.f32.xlu0 %v4467
        %v4469 = vpop.xlane.xlu0 %4468
        %v4470 = vsel %vm408, %v4408, 0.0
        %4471 = vadd.xlane.f32.xlu0 %v4470
        %v4472 = vpop.xlane.xlu0 %4471
        %v4473 = vsel %vm408, %v4409, 0.0
        %4474 = vadd.xlane.f32.xlu0 %v4473
        %v4475 = vpop.xlane.xlu0 %4474
        %v4476 = vsel %vm408, %v4410, 0.0
        %4477 = vadd.xlane.f32.xlu0 %v4476
        %v4478 = vpop.xlane.xlu0 %4477
        %v4479 = vsel %vm408, %v4411, 0.0
        %4480 = vadd.xlane.f32.xlu0 %v4479
        %v4481 = vpop.xlane.xlu0 %4480
        %v4482 = vsel %vm408, %v4412, 0.0
        %4483 = vadd.xlane.f32.xlu0 %v4482
        %v4484 = vpop.xlane.xlu0 %4483
        %v4485 = vsel %vm408, %v4413, 0.0
        %4486 = vadd.xlane.f32.xlu0 %v4485
        %v4487 = vpop.xlane.xlu0 %4486
        %v4488 = vsel %vm408, %v4414, 0.0
        %4489 = vadd.xlane.f32.xlu0 %v4488
        %v4490 = vpop.xlane.xlu0 %4489
        %v4491 = vsel %vm408, %v4415, 0.0
        %4492 = vadd.xlane.f32.xlu0 %v4491
        %v4493 = vpop.xlane.xlu0 %4492
        %v4494 = vsel %vm408, %v4416, 0.0
        %4495 = vadd.xlane.f32.xlu0 %v4494
        %v4496 = vpop.xlane.xlu0 %4495
        %v4497 = vsel %vm408, %v4417, 0.0
        %4498 = vadd.xlane.f32.xlu0 %v4497
        %v4499 = vpop.xlane.xlu0 %4498
        %v4500 = vsel %vm408, %v4418, 0.0
        %4501 = vadd.xlane.f32.xlu0 %v4500
        %v4502 = vpop.xlane.xlu0 %4501
        %v4503 = vsel %vm408, %v4419, 0.0
        %4504 = vadd.xlane.f32.xlu0 %v4503
        %v4505 = vpop.xlane.xlu0 %4504
        %v4506 = vsel %vm408, %v4420, 0.0
        %4507 = vadd.xlane.f32.xlu0 %v4506
        %v4508 = vpop.xlane.xlu0 %4507
        %v4509 = vsel %vm408, %v4421, 0.0
        %4510 = vadd.xlane.f32.xlu0 %v4509
        %v4511 = vpop.xlane.xlu0 %4510
        %v4512 = vsel %vm408, %v4422, 0.0
        %4513 = vadd.xlane.f32.xlu0 %v4512
        %v4514 = vpop.xlane.xlu0 %4513
        %v4515 = vsel %vm408, %v4423, 0.0
        %4516 = vadd.xlane.f32.xlu0 %v4515
        %v4517 = vpop.xlane.xlu0 %4516
        %v4518 = vsel %vm408, %v4424, 0.0
        %4519 = vadd.xlane.f32.xlu0 %v4518
        %v4520 = vpop.xlane.xlu0 %4519
        %v4521 = vadd.f32 %v4427, %v4430
        %v4522 = vadd.f32 %v4521, %v4433
        %v4523 = vadd.f32 %v4522, %v4436
        %v4524 = vadd.f32 %v4523, %v4439
        %v4525 = vadd.f32 %v4524, %v4442
        %v4526 = vadd.f32 %v4525, %v4445
        %v4527 = vadd.f32 %v4526, %v4448
        %v4528 = vadd.f32 %v4527, %v4451
        %v4529 = vadd.f32 %v4528, %v4454
        %v4530 = vadd.f32 %v4529, %v4457
        %v4531 = vadd.f32 %v4530, %v4460
        %v4532 = vadd.f32 %v4531, %v4463
        %v4533 = vadd.f32 %v4532, %v4466
        %v4534 = vadd.f32 %v4533, %v4469
        %v4535 = vadd.f32 %v4534, %v4472
        %v4536 = vadd.f32 %v4535, %v4475
        %v4537 = vadd.f32 %v4536, %v4478
        %v4538 = vadd.f32 %v4537, %v4481
        %v4539 = vadd.f32 %v4538, %v4484
        %v4540 = vadd.f32 %v4539, %v4487
        %v4541 = vadd.f32 %v4540, %v4490
        %v4542 = vadd.f32 %v4541, %v4493
        %v4543 = vadd.f32 %v4542, %v4496
        %v4544 = vadd.f32 %v4543, %v4499
        %v4545 = vadd.f32 %v4544, %v4502
        %v4546 = vadd.f32 %v4545, %v4505
        %v4547 = vadd.f32 %v4546, %v4508
        %v4548 = vadd.f32 %v4547, %v4511
        %v4549 = vadd.f32 %v4548, %v4514
        %v4550 = vadd.f32 %v4549, %v4517
        %v4551 = vadd.f32 %v4550, %v4520
        %v4552 = vrot.slane %v4551, 4
        %v4553 = vadd.f32 %v4551, %v4552
        %v4554 = vrot.slane %v4553, 2
        %v4555 = vadd.f32 %v4553, %v4554
        %v4556 = vrot.slane %v4555, 1
        %v4557 = vadd.f32 %v4555, %v4556
        %v4558 = vadd.f32 %v2483, %v4557
        %s4559 = scalar_lea.vmem %s1, 32
        %v4560 = vld [vmem:[%s4559] sm:$0xff]
        %v4561 = vld [vmem:[%s4559 + $0x8] sm:$0xff]
        %v4563 = vsel %vm408, %v4035, 0
        %v4566 = vsel %vm408, %v4036, 0
        %v4569 = vsel %vm408, %v4037, 0
        %v4572 = vsel %vm408, %v4038, 0
        %v4575 = vsel %vm408, %v4039, 0
        %v4578 = vsel %vm408, %v4040, 0
        %v4581 = vsel %vm408, %v4041, 0
        %v4584 = vsel %vm408, %v4042, 0
        %v4587 = vsel %vm408, %v4043, 0
        %v4590 = vsel %vm408, %v4044, 0
        %v4593 = vsel %vm408, %v4045, 0
        %v4596 = vsel %vm408, %v4046, 0
        %v4599 = vsel %vm408, %v4047, 0
        %v4602 = vsel %vm408, %v4048, 0
        %v4605 = vsel %vm408, %v4049, 0
        %v4608 = vsel %vm408, %v4050, 0
        %v4611 = vsel %vm408, %v4051, 0
        %v4614 = vsel %vm408, %v4052, 0
        %v4617 = vsel %vm408, %v4053, 0
        %v4620 = vsel %vm408, %v4054, 0
        %v4623 = vsel %vm408, %v4055, 0
        %v4626 = vsel %vm408, %v4056, 0
        %v4629 = vsel %vm408, %v4057, 0
        %v4632 = vsel %vm408, %v4058, 0
        %v4635 = vsel %vm408, %v4059, 0
        %v4638 = vsel %vm408, %v4060, 0
        %v4641 = vsel %vm408, %v4061, 0
        %v4644 = vsel %vm408, %v4062, 0
        %v4647 = vsel %vm408, %v4063, 0
        %v4650 = vsel %vm408, %v4064, 0
        %v4653 = vsel %vm408, %v4065, 0
        %v4656 = vsel %vm408, %v4066, 0
        %v4659 = vsel %vm408, %v4560, 0
        %v4662 = vsel %vm408, %v4561, 0
        %4664 = vmatprep.subr.mxu0 0.0
        %4665 = vmatpush1.xpose.msra.mxu0 %v4659
        %4666 = vmatprep.subr.mxu0 0.0
        %4667 = vmatpush1.xpose.msra.mxu0 %v4662
        %4668 = vmatprep.subr.mxu0 0.0
        %4669 = vmatpush1.xpose.msra.mxu0 0.0
        %4670 = vmatprep.subr.mxu0 0.0
        %4671 = vmatpush1.xpose.msra.mxu0 0.0
        %4672 = vmatprep.subr.mxu0 0.0
        %4673 = vmatpush1.xpose.msra.mxu0 0.0
        %4674 = vmatprep.subr.mxu0 0.0
        %4675 = vmatpush1.xpose.msra.mxu0 0.0
        %4676 = vmatprep.subr.mxu0 0.0
        %4677 = vmatpush1.xpose.msra.mxu0 0.0
        %4678 = vmatprep.subr.mxu0 0.0
        %4679 = vmatpush1.xpose.msra.mxu0 0.0
        %4680 = vmatprep.subr.mxu0 0.0
        %4681 = vmatpush1.xpose.msra.mxu0 0.0
        %4682 = vmatprep.subr.mxu0 0.0
        %4683 = vmatpush1.xpose.msra.mxu0 0.0
        %4684 = vmatprep.subr.mxu0 0.0
        %4685 = vmatpush1.xpose.msra.mxu0 0.0
        %4686 = vmatprep.subr.mxu0 0.0
        %4687 = vmatpush1.xpose.msra.mxu0 0.0
        %4688 = vmatprep.subr.mxu0 0.0
        %4689 = vmatpush1.xpose.msra.mxu0 0.0
        %4690 = vmatprep.subr.mxu0 0.0
        %4691 = vmatpush1.xpose.msra.mxu0 0.0
        %4692 = vmatprep.subr.mxu0 0.0
        %4693 = vmatpush1.xpose.msra.mxu0 0.0
        %4694 = vmatprep.subr.mxu0 0.0
        %4695 = vmatpush1.xpose.msra.mxu0 0.0
        %4696 = vmatprep.subr.mxu0 0.0
        %4697 = vmatpush1.xpose.msra.mxu0 0.0
        %4698 = vmatprep.subr.mxu0 0.0
        %4699 = vmatpush1.xpose.msra.mxu0 0.0
        %4700 = vmatprep.subr.mxu0 0.0
        %4701 = vmatpush1.xpose.msra.mxu0 0.0
        %4702 = vmatprep.subr.mxu0 0.0
        %4703 = vmatpush1.xpose.msra.mxu0 0.0
        %4704 = vmatprep.subr.mxu0 0.0
        %4705 = vmatpush1.xpose.msra.mxu0 0.0
        %4706 = vmatprep.subr.mxu0 0.0
        %4707 = vmatpush1.xpose.msra.mxu0 0.0
        %4708 = vmatprep.subr.mxu0 0.0
        %4709 = vmatpush1.xpose.msra.mxu0 0.0
        %4710 = vmatprep.subr.mxu0 0.0
        %4711 = vmatpush1.xpose.msra.mxu0 0.0
        %4712 = vmatprep.subr.mxu0 0.0
        %4713 = vmatpush1.xpose.msra.mxu0 0.0
        %4714 = vmatprep.subr.mxu0 0.0
        %4715 = vmatpush1.xpose.msra.mxu0 0.0
        %4716 = vmatprep.subr.mxu0 0.0
        %4717 = vmatpush1.xpose.msra.mxu0 0.0
        %4718 = vmatprep.subr.mxu0 0.0
        %4719 = vmatpush1.xpose.msra.mxu0 0.0
        %4720 = vmatprep.subr.mxu0 0.0
        %4721 = vmatpush1.xpose.msra.mxu0 0.0
        %4722 = vmatprep.subr.mxu0 0.0
        %4723 = vmatpush1.xpose.msra.mxu0 0.0
        %4724 = vmatprep.subr.mxu0 0.0
        %4725 = vmatpush1.xpose.msra.mxu0 0.0
        %4726 = vmatprep.subr.mxu0 0.0
        %4727 = vmatpush1.xpose.msra.mxu0 0.0
        %4728 = vmatprep.mubr.f32.mxu0 0.0
        %4729 = vmatmul.mubr.f32.gmra.mrb[0].mxu0 %v4563
        %v4730 = vpop.f32.mrb[0].mxu0
        %v4731 = vadd.f32 0.0, %v4730
        %v4732 = vpop.f32.mrb[0].mxu0
        %4733 = vmatprep.mubr.f32.mxu0 0.0
        %4734 = vmatmul.mubr.f32.gmra.mrb[0].mxu0 %v4566
        %v4735 = vpop.f32.mrb[0].mxu0
        %v4736 = vadd.f32 0.0, %v4735
        %v4737 = vpop.f32.mrb[0].mxu0
        %4738 = vmatprep.mubr.f32.mxu0 0.0
        %4739 = vmatmul.mubr.f32.gmra.mrb[0].mxu0 %v4569
        %v4740 = vpop.f32.mrb[0].mxu0
        %v4741 = vadd.f32 0.0, %v4740
        %v4742 = vpop.f32.mrb[0].mxu0
        %4743 = vmatprep.mubr.f32.mxu0 0.0
        %4744 = vmatmul.mubr.f32.gmra.mrb[0].mxu0 %v4572
        %v4745 = vpop.f32.mrb[0].mxu0
        %v4746 = vadd.f32 0.0, %v4745
        %v4747 = vpop.f32.mrb[0].mxu0
        %4748 = vmatprep.mubr.f32.mxu0 0.0
        %4749 = vmatmul.mubr.f32.gmra.mrb[0].mxu0 %v4575
        %v4750 = vpop.f32.mrb[0].mxu0
        %v4751 = vadd.f32 0.0, %v4750
        %v4752 = vpop.f32.mrb[0].mxu0
        %4753 = vmatprep.mubr.f32.mxu0 0.0
        %4754 = vmatmul.mubr.f32.gmra.mrb[0].mxu0 %v4578
        %v4755 = vpop.f32.mrb[0].mxu0
        %v4756 = vadd.f32 0.0, %v4755
        %v4757 = vpop.f32.mrb[0].mxu0
        %4758 = vmatprep.mubr.f32.mxu0 0.0
        %4759 = vmatmul.mubr.f32.gmra.mrb[0].mxu0 %v4581
        %v4760 = vpop.f32.mrb[0].mxu0
        %v4761 = vadd.f32 0.0, %v4760
        %v4762 = vpop.f32.mrb[0].mxu0
        %4763 = vmatprep.mubr.f32.mxu0 0.0
        %4764 = vmatmul.mubr.f32.gmra.mrb[0].mxu0 %v4584
        %v4765 = vpop.f32.mrb[0].mxu0
        %v4766 = vadd.f32 0.0, %v4765
        %v4767 = vpop.f32.mrb[0].mxu0
        %4768 = vmatprep.mubr.f32.mxu0 0.0
        %4769 = vmatmul.mubr.f32.gmra.mrb[0].mxu0 %v4587
        %v4770 = vpop.f32.mrb[0].mxu0
        %v4771 = vadd.f32 0.0, %v4770
        %v4772 = vpop.f32.mrb[0].mxu0
        %4773 = vmatprep.mubr.f32.mxu0 0.0
        %4774 = vmatmul.mubr.f32.gmra.mrb[0].mxu0 %v4590
        %v4775 = vpop.f32.mrb[0].mxu0
        %v4776 = vadd.f32 0.0, %v4775
        %v4777 = vpop.f32.mrb[0].mxu0
        %4778 = vmatprep.mubr.f32.mxu0 0.0
        %4779 = vmatmul.mubr.f32.gmra.mrb[0].mxu0 %v4593
        %v4780 = vpop.f32.mrb[0].mxu0
        %v4781 = vadd.f32 0.0, %v4780
        %v4782 = vpop.f32.mrb[0].mxu0
        %4783 = vmatprep.mubr.f32.mxu0 0.0
        %4784 = vmatmul.mubr.f32.gmra.mrb[0].mxu0 %v4596
        %v4785 = vpop.f32.mrb[0].mxu0
        %v4786 = vadd.f32 0.0, %v4785
        %v4787 = vpop.f32.mrb[0].mxu0
        %4788 = vmatprep.mubr.f32.mxu0 0.0
        %4789 = vmatmul.mubr.f32.gmra.mrb[0].mxu0 %v4599
        %v4790 = vpop.f32.mrb[0].mxu0
        %v4791 = vadd.f32 0.0, %v4790
        %v4792 = vpop.f32.mrb[0].mxu0
        %4793 = vmatprep.mubr.f32.mxu0 0.0
        %4794 = vmatmul.mubr.f32.gmra.mrb[0].mxu0 %v4602
        %v4795 = vpop.f32.mrb[0].mxu0
        %v4796 = vadd.f32 0.0, %v4795
        %v4797 = vpop.f32.mrb[0].mxu0
        %4798 = vmatprep.mubr.f32.mxu0 0.0
        %4799 = vmatmul.mubr.f32.gmra.mrb[0].mxu0 %v4605
        %v4800 = vpop.f32.mrb[0].mxu0
        %v4801 = vadd.f32 0.0, %v4800
        %v4802 = vpop.f32.mrb[0].mxu0
        %4803 = vmatprep.mubr.f32.mxu0 0.0
        %4804 = vmatmul.mubr.f32.gmra.mrb[0].mxu0 %v4608
        %v4805 = vpop.f32.mrb[0].mxu0
        %v4806 = vadd.f32 0.0, %v4805
        %v4807 = vpop.f32.mrb[0].mxu0
        %4808 = vmatprep.mubr.f32.mxu0 0.0
        %4809 = vmatmul.mubr.f32.gmra.mrb[0].mxu0 %v4611
        %v4810 = vpop.f32.mrb[0].mxu0
        %v4811 = vadd.f32 0.0, %v4810
        %v4812 = vpop.f32.mrb[0].mxu0
        %4813 = vmatprep.mubr.f32.mxu0 0.0
        %4814 = vmatmul.mubr.f32.gmra.mrb[0].mxu0 %v4614
        %v4815 = vpop.f32.mrb[0].mxu0
        %v4816 = vadd.f32 0.0, %v4815
        %v4817 = vpop.f32.mrb[0].mxu0
        %4818 = vmatprep.mubr.f32.mxu0 0.0
        %4819 = vmatmul.mubr.f32.gmra.mrb[0].mxu0 %v4617
        %v4820 = vpop.f32.mrb[0].mxu0
        %v4821 = vadd.f32 0.0, %v4820
        %v4822 = vpop.f32.mrb[0].mxu0
        %4823 = vmatprep.mubr.f32.mxu0 0.0
        %4824 = vmatmul.mubr.f32.gmra.mrb[0].mxu0 %v4620
        %v4825 = vpop.f32.mrb[0].mxu0
        %v4826 = vadd.f32 0.0, %v4825
        %v4827 = vpop.f32.mrb[0].mxu0
        %4828 = vmatprep.mubr.f32.mxu0 0.0
        %4829 = vmatmul.mubr.f32.gmra.mrb[0].mxu0 %v4623
        %v4830 = vpop.f32.mrb[0].mxu0
        %v4831 = vadd.f32 0.0, %v4830
        %v4832 = vpop.f32.mrb[0].mxu0
        %4833 = vmatprep.mubr.f32.mxu0 0.0
        %4834 = vmatmul.mubr.f32.gmra.mrb[0].mxu0 %v4626
        %v4835 = vpop.f32.mrb[0].mxu0
        %v4836 = vadd.f32 0.0, %v4835
        %v4837 = vpop.f32.mrb[0].mxu0
        %4838 = vmatprep.mubr.f32.mxu0 0.0
        %4839 = vmatmul.mubr.f32.gmra.mrb[0].mxu0 %v4629
        %v4840 = vpop.f32.mrb[0].mxu0
        %v4841 = vadd.f32 0.0, %v4840
        %v4842 = vpop.f32.mrb[0].mxu0
        %4843 = vmatprep.mubr.f32.mxu0 0.0
        %4844 = vmatmul.mubr.f32.gmra.mrb[0].mxu0 %v4632
        %v4845 = vpop.f32.mrb[0].mxu0
        %v4846 = vadd.f32 0.0, %v4845
        %v4847 = vpop.f32.mrb[0].mxu0
        %4848 = vmatprep.mubr.f32.mxu0 0.0
        %4849 = vmatmul.mubr.f32.gmra.mrb[0].mxu0 %v4635
        %v4850 = vpop.f32.mrb[0].mxu0
        %v4851 = vadd.f32 0.0, %v4850
        %v4852 = vpop.f32.mrb[0].mxu0
        %4853 = vmatprep.mubr.f32.mxu0 0.0
        %4854 = vmatmul.mubr.f32.gmra.mrb[0].mxu0 %v4638
        %v4855 = vpop.f32.mrb[0].mxu0
        %v4856 = vadd.f32 0.0, %v4855
        %v4857 = vpop.f32.mrb[0].mxu0
        %4858 = vmatprep.mubr.f32.mxu0 0.0
        %4859 = vmatmul.mubr.f32.gmra.mrb[0].mxu0 %v4641
        %v4860 = vpop.f32.mrb[0].mxu0
        %v4861 = vadd.f32 0.0, %v4860
        %v4862 = vpop.f32.mrb[0].mxu0
        %4863 = vmatprep.mubr.f32.mxu0 0.0
        %4864 = vmatmul.mubr.f32.gmra.mrb[0].mxu0 %v4644
        %v4865 = vpop.f32.mrb[0].mxu0
        %v4866 = vadd.f32 0.0, %v4865
        %v4867 = vpop.f32.mrb[0].mxu0
        %4868 = vmatprep.mubr.f32.mxu0 0.0
        %4869 = vmatmul.mubr.f32.gmra.mrb[0].mxu0 %v4647
        %v4870 = vpop.f32.mrb[0].mxu0
        %v4871 = vadd.f32 0.0, %v4870
        %v4872 = vpop.f32.mrb[0].mxu0
        %4873 = vmatprep.mubr.f32.mxu0 0.0
        %4874 = vmatmul.mubr.f32.gmra.mrb[0].mxu0 %v4650
        %v4875 = vpop.f32.mrb[0].mxu0
        %v4876 = vadd.f32 0.0, %v4875
        %v4877 = vpop.f32.mrb[0].mxu0
        %4878 = vmatprep.mubr.f32.mxu0 0.0
        %4879 = vmatmul.mubr.f32.gmra.mrb[0].mxu0 %v4653
        %v4880 = vpop.f32.mrb[0].mxu0
        %v4881 = vadd.f32 0.0, %v4880
        %v4882 = vpop.f32.mrb[0].mxu0
        %4883 = vmatprep.mubr.f32.mxu0 0.0
        %4884 = vmatmul.mubr.f32.gmra.mrb[0].mxu0 %v4656
        %v4885 = vpop.f32.mrb[0].mxu0
        %v4886 = vadd.f32 0.0, %v4885
        %v4887 = vpop.f32.mrb[0].mxu0
        %4888 = vdwg.mxu0
        %v4889 = vmul.f32 %v4731, 2.0
        %v4890 = vmul.f32 %v4736, 2.0
        %v4891 = vmul.f32 %v4741, 2.0
        %v4892 = vmul.f32 %v4746, 2.0
        %v4893 = vmul.f32 %v4751, 2.0
        %v4894 = vmul.f32 %v4756, 2.0
        %v4895 = vmul.f32 %v4761, 2.0
        %v4896 = vmul.f32 %v4766, 2.0
        %v4897 = vmul.f32 %v4771, 2.0
        %v4898 = vmul.f32 %v4776, 2.0
        %v4899 = vmul.f32 %v4781, 2.0
        %v4900 = vmul.f32 %v4786, 2.0
        %v4901 = vmul.f32 %v4791, 2.0
        %v4902 = vmul.f32 %v4796, 2.0
        %v4903 = vmul.f32 %v4801, 2.0
        %v4904 = vmul.f32 %v4806, 2.0
        %v4905 = vmul.f32 %v4811, 2.0
        %v4906 = vmul.f32 %v4816, 2.0
        %v4907 = vmul.f32 %v4821, 2.0
        %v4908 = vmul.f32 %v4826, 2.0
        %v4909 = vmul.f32 %v4831, 2.0
        %v4910 = vmul.f32 %v4836, 2.0
        %v4911 = vmul.f32 %v4841, 2.0
        %v4912 = vmul.f32 %v4846, 2.0
        %v4913 = vmul.f32 %v4851, 2.0
        %v4914 = vmul.f32 %v4856, 2.0
        %v4915 = vmul.f32 %v4861, 2.0
        %v4916 = vmul.f32 %v4866, 2.0
        %v4917 = vmul.f32 %v4871, 2.0
        %v4918 = vmul.f32 %v4876, 2.0
        %v4919 = vmul.f32 %v4881, 2.0
        %v4920 = vmul.f32 %v4886, 2.0
        %v4921 = vlaneseq
        %v4922 = vshrl.u32 %v4921, 7
        %v4923 = vsub.s32 2, %v4922
        %v4924 = vrot.slane %v405, %v4923
        %v4925 = vsub.f32 %v4889, %v4924
        %v4926 = vsub.f32 %v4890, %v4924
        %v4927 = vsub.f32 %v4891, %v4924
        %v4928 = vsub.f32 %v4892, %v4924
        %v4929 = vsub.f32 %v4893, %v4924
        %v4930 = vsub.f32 %v4894, %v4924
        %v4931 = vsub.f32 %v4895, %v4924
        %v4932 = vsub.f32 %v4896, %v4924
        %v4933 = vsub.f32 %v4897, %v4924
        %v4934 = vsub.f32 %v4898, %v4924
        %v4935 = vsub.f32 %v4899, %v4924
        %v4936 = vsub.f32 %v4900, %v4924
        %v4937 = vsub.f32 %v4901, %v4924
        %v4938 = vsub.f32 %v4902, %v4924
        %v4939 = vsub.f32 %v4903, %v4924
        %v4940 = vsub.f32 %v4904, %v4924
        %v4941 = vsub.f32 %v4905, %v4924
        %v4942 = vsub.f32 %v4906, %v4924
        %v4943 = vsub.f32 %v4907, %v4924
        %v4944 = vsub.f32 %v4908, %v4924
        %v4945 = vsub.f32 %v4909, %v4924
        %v4946 = vsub.f32 %v4910, %v4924
        %v4947 = vsub.f32 %v4911, %v4924
        %v4948 = vsub.f32 %v4912, %v4924
        %v4949 = vsub.f32 %v4913, %v4924
        %v4950 = vsub.f32 %v4914, %v4924
        %v4951 = vsub.f32 %v4915, %v4924
        %v4952 = vsub.f32 %v4916, %v4924
        %v4953 = vsub.f32 %v4917, %v4924
        %v4954 = vsub.f32 %v4918, %v4924
        %v4955 = vsub.f32 %v4919, %v4924
        %v4956 = vsub.f32 %v4920, %v4924
        %v4957 = vsel %vm804, %v4925, -inf
        %4958 = vmax.xlane.f32.xlu0 %v4957
        %v4959 = vpop.xlane.xlu0 %4958
        %v4960 = vsel %vm804, %v4926, -inf
        %4961 = vmax.xlane.f32.xlu0 %v4960
        %v4962 = vpop.xlane.xlu0 %4961
        %v4963 = vsel %vm804, %v4927, -inf
        %4964 = vmax.xlane.f32.xlu0 %v4963
        %v4965 = vpop.xlane.xlu0 %4964
        %v4966 = vsel %vm804, %v4928, -inf
        %4967 = vmax.xlane.f32.xlu0 %v4966
        %v4968 = vpop.xlane.xlu0 %4967
        %v4969 = vsel %vm804, %v4929, -inf
        %4970 = vmax.xlane.f32.xlu0 %v4969
        %v4971 = vpop.xlane.xlu0 %4970
        %v4972 = vsel %vm804, %v4930, -inf
        %4973 = vmax.xlane.f32.xlu0 %v4972
        %v4974 = vpop.xlane.xlu0 %4973
        %v4975 = vsel %vm804, %v4931, -inf
        %4976 = vmax.xlane.f32.xlu0 %v4975
        %v4977 = vpop.xlane.xlu0 %4976
        %v4978 = vsel %vm804, %v4932, -inf
        %4979 = vmax.xlane.f32.xlu0 %v4978
        %v4980 = vpop.xlane.xlu0 %4979
        %v4981 = vsel %vm804, %v4933, -inf
        %4982 = vmax.xlane.f32.xlu0 %v4981
        %v4983 = vpop.xlane.xlu0 %4982
        %v4984 = vsel %vm804, %v4934, -inf
        %4985 = vmax.xlane.f32.xlu0 %v4984
        %v4986 = vpop.xlane.xlu0 %4985
        %v4987 = vsel %vm804, %v4935, -inf
        %4988 = vmax.xlane.f32.xlu0 %v4987
        %v4989 = vpop.xlane.xlu0 %4988
        %v4990 = vsel %vm804, %v4936, -inf
        %4991 = vmax.xlane.f32.xlu0 %v4990
        %v4992 = vpop.xlane.xlu0 %4991
        %v4993 = vsel %vm804, %v4937, -inf
        %4994 = vmax.xlane.f32.xlu0 %v4993
        %v4995 = vpop.xlane.xlu0 %4994
        %v4996 = vsel %vm804, %v4938, -inf
        %4997 = vmax.xlane.f32.xlu0 %v4996
        %v4998 = vpop.xlane.xlu0 %4997
        %v4999 = vsel %vm804, %v4939, -inf
        %5000 = vmax.xlane.f32.xlu0 %v4999
        %v5001 = vpop.xlane.xlu0 %5000
        %v5002 = vsel %vm804, %v4940, -inf
        %5003 = vmax.xlane.f32.xlu0 %v5002
        %v5004 = vpop.xlane.xlu0 %5003
        %v5005 = vsel %vm804, %v4941, -inf
        %5006 = vmax.xlane.f32.xlu0 %v5005
        %v5007 = vpop.xlane.xlu0 %5006
        %v5008 = vsel %vm804, %v4942, -inf
        %5009 = vmax.xlane.f32.xlu0 %v5008
        %v5010 = vpop.xlane.xlu0 %5009
        %v5011 = vsel %vm804, %v4943, -inf
        %5012 = vmax.xlane.f32.xlu0 %v5011
        %v5013 = vpop.xlane.xlu0 %5012
        %v5014 = vsel %vm804, %v4944, -inf
        %5015 = vmax.xlane.f32.xlu0 %v5014
        %v5016 = vpop.xlane.xlu0 %5015
        %v5017 = vsel %vm804, %v4945, -inf
        %5018 = vmax.xlane.f32.xlu0 %v5017
        %v5019 = vpop.xlane.xlu0 %5018
        %v5020 = vsel %vm804, %v4946, -inf
        %5021 = vmax.xlane.f32.xlu0 %v5020
        %v5022 = vpop.xlane.xlu0 %5021
        %v5023 = vsel %vm804, %v4947, -inf
        %5024 = vmax.xlane.f32.xlu0 %v5023
        %v5025 = vpop.xlane.xlu0 %5024
        %v5026 = vsel %vm804, %v4948, -inf
        %5027 = vmax.xlane.f32.xlu0 %v5026
        %v5028 = vpop.xlane.xlu0 %5027
        %v5029 = vsel %vm804, %v4949, -inf
        %5030 = vmax.xlane.f32.xlu0 %v5029
        %v5031 = vpop.xlane.xlu0 %5030
        %v5032 = vsel %vm804, %v4950, -inf
        %5033 = vmax.xlane.f32.xlu0 %v5032
        %v5034 = vpop.xlane.xlu0 %5033
        %v5035 = vsel %vm804, %v4951, -inf
        %5036 = vmax.xlane.f32.xlu0 %v5035
        %v5037 = vpop.xlane.xlu0 %5036
        %v5038 = vsel %vm804, %v4952, -inf
        %5039 = vmax.xlane.f32.xlu0 %v5038
        %v5040 = vpop.xlane.xlu0 %5039
        %v5041 = vsel %vm804, %v4953, -inf
        %5042 = vmax.xlane.f32.xlu0 %v5041
        %v5043 = vpop.xlane.xlu0 %5042
        %v5044 = vsel %vm804, %v4954, -inf
        %5045 = vmax.xlane.f32.xlu0 %v5044
        %v5046 = vpop.xlane.xlu0 %5045
        %v5047 = vsel %vm804, %v4955, -inf
        %5048 = vmax.xlane.f32.xlu0 %v5047
        %v5049 = vpop.xlane.xlu0 %5048
        %v5050 = vsel %vm804, %v4956, -inf
        %5051 = vmax.xlane.f32.xlu0 %v5050
        %v5052 = vpop.xlane.xlu0 %5051
        %v5053 = vsub.f32 %v4925, %v4959
        %v5054 = vsub.f32 %v4926, %v4962
        %v5055 = vsub.f32 %v4927, %v4965
        %v5056 = vsub.f32 %v4928, %v4968
        %v5057 = vsub.f32 %v4929, %v4971
        %v5058 = vsub.f32 %v4930, %v4974
        %v5059 = vsub.f32 %v4931, %v4977
        %v5060 = vsub.f32 %v4932, %v4980
        %v5061 = vsub.f32 %v4933, %v4983
        %v5062 = vsub.f32 %v4934, %v4986
        %v5063 = vsub.f32 %v4935, %v4989
        %v5064 = vsub.f32 %v4936, %v4992
        %v5065 = vsub.f32 %v4937, %v4995
        %v5066 = vsub.f32 %v4938, %v4998
        %v5067 = vsub.f32 %v4939, %v5001
        %v5068 = vsub.f32 %v4940, %v5004
        %v5069 = vsub.f32 %v4941, %v5007
        %v5070 = vsub.f32 %v4942, %v5010
        %v5071 = vsub.f32 %v4943, %v5013
        %v5072 = vsub.f32 %v4944, %v5016
        %v5073 = vsub.f32 %v4945, %v5019
        %v5074 = vsub.f32 %v4946, %v5022
        %v5075 = vsub.f32 %v4947, %v5025
        %v5076 = vsub.f32 %v4948, %v5028
        %v5077 = vsub.f32 %v4949, %v5031
        %v5078 = vsub.f32 %v4950, %v5034
        %v5079 = vsub.f32 %v4951, %v5037
        %v5080 = vsub.f32 %v4952, %v5040
        %v5081 = vsub.f32 %v4953, %v5043
        %v5082 = vsub.f32 %v4954, %v5046
        %v5083 = vsub.f32 %v4955, %v5049
        %v5084 = vsub.f32 %v4956, %v5052
        %v5085 = vmul.f32 %v5053, 1.442695
        %v5086 = vpow.pop %v5085
        %v5087 = vmul.f32 %v5054, 1.442695
        %v5088 = vpow.pop %v5087
        %v5089 = vmul.f32 %v5055, 1.442695
        %v5090 = vpow.pop %v5089
        %v5091 = vmul.f32 %v5056, 1.442695
        %v5092 = vpow.pop %v5091
        %v5093 = vmul.f32 %v5057, 1.442695
        %v5094 = vpow.pop %v5093
        %v5095 = vmul.f32 %v5058, 1.442695
        %v5096 = vpow.pop %v5095
        %v5097 = vmul.f32 %v5059, 1.442695
        %v5098 = vpow.pop %v5097
        %v5099 = vmul.f32 %v5060, 1.442695
        %v5100 = vpow.pop %v5099
        %v5101 = vmul.f32 %v5061, 1.442695
        %v5102 = vpow.pop %v5101
        %v5103 = vmul.f32 %v5062, 1.442695
        %v5104 = vpow.pop %v5103
        %v5105 = vmul.f32 %v5063, 1.442695
        %v5106 = vpow.pop %v5105
        %v5107 = vmul.f32 %v5064, 1.442695
        %v5108 = vpow.pop %v5107
        %v5109 = vmul.f32 %v5065, 1.442695
        %v5110 = vpow.pop %v5109
        %v5111 = vmul.f32 %v5066, 1.442695
        %v5112 = vpow.pop %v5111
        %v5113 = vmul.f32 %v5067, 1.442695
        %v5114 = vpow.pop %v5113
        %v5115 = vmul.f32 %v5068, 1.442695
        %v5116 = vpow.pop %v5115
        %v5117 = vmul.f32 %v5069, 1.442695
        %v5118 = vpow.pop %v5117
        %v5119 = vmul.f32 %v5070, 1.442695
        %v5120 = vpow.pop %v5119
        %v5121 = vmul.f32 %v5071, 1.442695
        %v5122 = vpow.pop %v5121
        %v5123 = vmul.f32 %v5072, 1.442695
        %v5124 = vpow.pop %v5123
        %v5125 = vmul.f32 %v5073, 1.442695
        %v5126 = vpow.pop %v5125
        %v5127 = vmul.f32 %v5074, 1.442695
        %v5128 = vpow.pop %v5127
        %v5129 = vmul.f32 %v5075, 1.442695
        %v5130 = vpow.pop %v5129
        %v5131 = vmul.f32 %v5076, 1.442695
        %v5132 = vpow.pop %v5131
        %v5133 = vmul.f32 %v5077, 1.442695
        %v5134 = vpow.pop %v5133
        %v5135 = vmul.f32 %v5078, 1.442695
        %v5136 = vpow.pop %v5135
        %v5137 = vmul.f32 %v5079, 1.442695
        %v5138 = vpow.pop %v5137
        %v5139 = vmul.f32 %v5080, 1.442695
        %v5140 = vpow.pop %v5139
        %v5141 = vmul.f32 %v5081, 1.442695
        %v5142 = vpow.pop %v5141
        %v5143 = vmul.f32 %v5082, 1.442695
        %v5144 = vpow.pop %v5143
        %v5145 = vmul.f32 %v5083, 1.442695
        %v5146 = vpow.pop %v5145
        %v5147 = vmul.f32 %v5084, 1.442695
        %v5148 = vpow.pop %v5147
        %v5149 = vsel %vm804, %v5086, 0.0
        %5150 = vadd.xlane.f32.xlu0 %v5149
        %v5151 = vpop.xlane.xlu0 %5150
        %v5152 = vsel %vm804, %v5088, 0.0
        %5153 = vadd.xlane.f32.xlu0 %v5152
        %v5154 = vpop.xlane.xlu0 %5153
        %v5155 = vsel %vm804, %v5090, 0.0
        %5156 = vadd.xlane.f32.xlu0 %v5155
        %v5157 = vpop.xlane.xlu0 %5156
        %v5158 = vsel %vm804, %v5092, 0.0
        %5159 = vadd.xlane.f32.xlu0 %v5158
        %v5160 = vpop.xlane.xlu0 %5159
        %v5161 = vsel %vm804, %v5094, 0.0
        %5162 = vadd.xlane.f32.xlu0 %v5161
        %v5163 = vpop.xlane.xlu0 %5162
        %v5164 = vsel %vm804, %v5096, 0.0
        %5165 = vadd.xlane.f32.xlu0 %v5164
        %v5166 = vpop.xlane.xlu0 %5165
        %v5167 = vsel %vm804, %v5098, 0.0
        %5168 = vadd.xlane.f32.xlu0 %v5167
        %v5169 = vpop.xlane.xlu0 %5168
        %v5170 = vsel %vm804, %v5100, 0.0
        %5171 = vadd.xlane.f32.xlu0 %v5170
        %v5172 = vpop.xlane.xlu0 %5171
        %v5173 = vsel %vm804, %v5102, 0.0
        %5174 = vadd.xlane.f32.xlu0 %v5173
        %v5175 = vpop.xlane.xlu0 %5174
        %v5176 = vsel %vm804, %v5104, 0.0
        %5177 = vadd.xlane.f32.xlu0 %v5176
        %v5178 = vpop.xlane.xlu0 %5177
        %v5179 = vsel %vm804, %v5106, 0.0
        %5180 = vadd.xlane.f32.xlu0 %v5179
        %v5181 = vpop.xlane.xlu0 %5180
        %v5182 = vsel %vm804, %v5108, 0.0
        %5183 = vadd.xlane.f32.xlu0 %v5182
        %v5184 = vpop.xlane.xlu0 %5183
        %v5185 = vsel %vm804, %v5110, 0.0
        %5186 = vadd.xlane.f32.xlu0 %v5185
        %v5187 = vpop.xlane.xlu0 %5186
        %v5188 = vsel %vm804, %v5112, 0.0
        %5189 = vadd.xlane.f32.xlu0 %v5188
        %v5190 = vpop.xlane.xlu0 %5189
        %v5191 = vsel %vm804, %v5114, 0.0
        %5192 = vadd.xlane.f32.xlu0 %v5191
        %v5193 = vpop.xlane.xlu0 %5192
        %v5194 = vsel %vm804, %v5116, 0.0
        %5195 = vadd.xlane.f32.xlu0 %v5194
        %v5196 = vpop.xlane.xlu0 %5195
        %v5197 = vsel %vm804, %v5118, 0.0
        %5198 = vadd.xlane.f32.xlu0 %v5197
        %v5199 = vpop.xlane.xlu0 %5198
        %v5200 = vsel %vm804, %v5120, 0.0
        %5201 = vadd.xlane.f32.xlu0 %v5200
        %v5202 = vpop.xlane.xlu0 %5201
        %v5203 = vsel %vm804, %v5122, 0.0
        %5204 = vadd.xlane.f32.xlu0 %v5203
        %v5205 = vpop.xlane.xlu0 %5204
        %v5206 = vsel %vm804, %v5124, 0.0
        %5207 = vadd.xlane.f32.xlu0 %v5206
        %v5208 = vpop.xlane.xlu0 %5207
        %v5209 = vsel %vm804, %v5126, 0.0
        %5210 = vadd.xlane.f32.xlu0 %v5209
        %v5211 = vpop.xlane.xlu0 %5210
        %v5212 = vsel %vm804, %v5128, 0.0
        %5213 = vadd.xlane.f32.xlu0 %v5212
        %v5214 = vpop.xlane.xlu0 %5213
        %v5215 = vsel %vm804, %v5130, 0.0
        %5216 = vadd.xlane.f32.xlu0 %v5215
        %v5217 = vpop.xlane.xlu0 %5216
        %v5218 = vsel %vm804, %v5132, 0.0
        %5219 = vadd.xlane.f32.xlu0 %v5218
        %v5220 = vpop.xlane.xlu0 %5219
        %v5221 = vsel %vm804, %v5134, 0.0
        %5222 = vadd.xlane.f32.xlu0 %v5221
        %v5223 = vpop.xlane.xlu0 %5222
        %v5224 = vsel %vm804, %v5136, 0.0
        %5225 = vadd.xlane.f32.xlu0 %v5224
        %v5226 = vpop.xlane.xlu0 %5225
        %v5227 = vsel %vm804, %v5138, 0.0
        %5228 = vadd.xlane.f32.xlu0 %v5227
        %v5229 = vpop.xlane.xlu0 %5228
        %v5230 = vsel %vm804, %v5140, 0.0
        %5231 = vadd.xlane.f32.xlu0 %v5230
        %v5232 = vpop.xlane.xlu0 %5231
        %v5233 = vsel %vm804, %v5142, 0.0
        %5234 = vadd.xlane.f32.xlu0 %v5233
        %v5235 = vpop.xlane.xlu0 %5234
        %v5236 = vsel %vm804, %v5144, 0.0
        %5237 = vadd.xlane.f32.xlu0 %v5236
        %v5238 = vpop.xlane.xlu0 %5237
        %v5239 = vsel %vm804, %v5146, 0.0
        %5240 = vadd.xlane.f32.xlu0 %v5239
        %v5241 = vpop.xlane.xlu0 %5240
        %v5242 = vsel %vm804, %v5148, 0.0
        %5243 = vadd.xlane.f32.xlu0 %v5242
        %v5244 = vpop.xlane.xlu0 %5243
        %v5245 = vrcp.pop %v5151
        %v5246 = vrcp.pop %v5154
        %v5247 = vrcp.pop %v5157
        %v5248 = vrcp.pop %v5160
        %v5249 = vrcp.pop %v5163
        %v5250 = vrcp.pop %v5166
        %v5251 = vrcp.pop %v5169
        %v5252 = vrcp.pop %v5172
        %v5253 = vrcp.pop %v5175
        %v5254 = vrcp.pop %v5178
        %v5255 = vrcp.pop %v5181
        %v5256 = vrcp.pop %v5184
        %v5257 = vrcp.pop %v5187
        %v5258 = vrcp.pop %v5190
        %v5259 = vrcp.pop %v5193
        %v5260 = vrcp.pop %v5196
        %v5261 = vrcp.pop %v5199
        %v5262 = vrcp.pop %v5202
        %v5263 = vrcp.pop %v5205
        %v5264 = vrcp.pop %v5208
        %v5265 = vrcp.pop %v5211
        %v5266 = vrcp.pop %v5214
        %v5267 = vrcp.pop %v5217
        %v5268 = vrcp.pop %v5220
        %v5269 = vrcp.pop %v5223
        %v5270 = vrcp.pop %v5226
        %v5271 = vrcp.pop %v5229
        %v5272 = vrcp.pop %v5232
        %v5273 = vrcp.pop %v5235
        %v5274 = vrcp.pop %v5238
        %v5275 = vrcp.pop %v5241
        %v5276 = vrcp.pop %v5244
        %v5277 = vmul.f32 %v5086, %v5245
        %v5278 = vmul.f32 %v5088, %v5246
        %v5279 = vmul.f32 %v5090, %v5247
        %v5280 = vmul.f32 %v5092, %v5248
        %v5281 = vmul.f32 %v5094, %v5249
        %v5282 = vmul.f32 %v5096, %v5250
        %v5283 = vmul.f32 %v5098, %v5251
        %v5284 = vmul.f32 %v5100, %v5252
        %v5285 = vmul.f32 %v5102, %v5253
        %v5286 = vmul.f32 %v5104, %v5254
        %v5287 = vmul.f32 %v5106, %v5255
        %v5288 = vmul.f32 %v5108, %v5256
        %v5289 = vmul.f32 %v5110, %v5257
        %v5290 = vmul.f32 %v5112, %v5258
        %v5291 = vmul.f32 %v5114, %v5259
        %v5292 = vmul.f32 %v5116, %v5260
        %v5293 = vmul.f32 %v5118, %v5261
        %v5294 = vmul.f32 %v5120, %v5262
        %v5295 = vmul.f32 %v5122, %v5263
        %v5296 = vmul.f32 %v5124, %v5264
        %v5297 = vmul.f32 %v5126, %v5265
        %v5298 = vmul.f32 %v5128, %v5266
        %v5299 = vmul.f32 %v5130, %v5267
        %v5300 = vmul.f32 %v5132, %v5268
        %v5301 = vmul.f32 %v5134, %v5269
        %v5302 = vmul.f32 %v5136, %v5270
        %v5303 = vmul.f32 %v5138, %v5271
        %v5304 = vmul.f32 %v5140, %v5272
        %v5305 = vmul.f32 %v5142, %v5273
        %v5306 = vmul.f32 %v5144, %v5274
        %v5307 = vmul.f32 %v5146, %v5275
        %v5308 = vmul.f32 %v5148, %v5276
        %5309 = vmax.index.xlane.f32.xlu0 %v4957
        %v5310 = vpop.xlane.xlu0 %5309
        %5311 = vmax.index.xlane.f32.xlu0 %v4960
        %v5312 = vpop.xlane.xlu0 %5311
        %5313 = vmax.index.xlane.f32.xlu0 %v4963
        %v5314 = vpop.xlane.xlu0 %5313
        %5315 = vmax.index.xlane.f32.xlu0 %v4966
        %v5316 = vpop.xlane.xlu0 %5315
        %5317 = vmax.index.xlane.f32.xlu0 %v4969
        %v5318 = vpop.xlane.xlu0 %5317
        %5319 = vmax.index.xlane.f32.xlu0 %v4972
        %v5320 = vpop.xlane.xlu0 %5319
        %5321 = vmax.index.xlane.f32.xlu0 %v4975
        %v5322 = vpop.xlane.xlu0 %5321
        %5323 = vmax.index.xlane.f32.xlu0 %v4978
        %v5324 = vpop.xlane.xlu0 %5323
        %5325 = vmax.index.xlane.f32.xlu0 %v4981
        %v5326 = vpop.xlane.xlu0 %5325
        %5327 = vmax.index.xlane.f32.xlu0 %v4984
        %v5328 = vpop.xlane.xlu0 %5327
        %5329 = vmax.index.xlane.f32.xlu0 %v4987
        %v5330 = vpop.xlane.xlu0 %5329
        %5331 = vmax.index.xlane.f32.xlu0 %v4990
        %v5332 = vpop.xlane.xlu0 %5331
        %5333 = vmax.index.xlane.f32.xlu0 %v4993
        %v5334 = vpop.xlane.xlu0 %5333
        %5335 = vmax.index.xlane.f32.xlu0 %v4996
        %v5336 = vpop.xlane.xlu0 %5335
        %5337 = vmax.index.xlane.f32.xlu0 %v4999
        %v5338 = vpop.xlane.xlu0 %5337
        %5339 = vmax.index.xlane.f32.xlu0 %v5002
        %v5340 = vpop.xlane.xlu0 %5339
        %5341 = vmax.index.xlane.f32.xlu0 %v5005
        %v5342 = vpop.xlane.xlu0 %5341
        %5343 = vmax.index.xlane.f32.xlu0 %v5008
        %v5344 = vpop.xlane.xlu0 %5343
        %5345 = vmax.index.xlane.f32.xlu0 %v5011
        %v5346 = vpop.xlane.xlu0 %5345
        %5347 = vmax.index.xlane.f32.xlu0 %v5014
        %v5348 = vpop.xlane.xlu0 %5347
        %5349 = vmax.index.xlane.f32.xlu0 %v5017
        %v5350 = vpop.xlane.xlu0 %5349
        %5351 = vmax.index.xlane.f32.xlu0 %v5020
        %v5352 = vpop.xlane.xlu0 %5351
        %5353 = vmax.index.xlane.f32.xlu0 %v5023
        %v5354 = vpop.xlane.xlu0 %5353
        %5355 = vmax.index.xlane.f32.xlu0 %v5026
        %v5356 = vpop.xlane.xlu0 %5355
        %5357 = vmax.index.xlane.f32.xlu0 %v5029
        %v5358 = vpop.xlane.xlu0 %5357
        %5359 = vmax.index.xlane.f32.xlu0 %v5032
        %v5360 = vpop.xlane.xlu0 %5359
        %5361 = vmax.index.xlane.f32.xlu0 %v5035
        %v5362 = vpop.xlane.xlu0 %5361
        %5363 = vmax.index.xlane.f32.xlu0 %v5038
        %v5364 = vpop.xlane.xlu0 %5363
        %5365 = vmax.index.xlane.f32.xlu0 %v5041
        %v5366 = vpop.xlane.xlu0 %5365
        %5367 = vmax.index.xlane.f32.xlu0 %v5044
        %v5368 = vpop.xlane.xlu0 %5367
        %5369 = vmax.index.xlane.f32.xlu0 %v5047
        %v5370 = vpop.xlane.xlu0 %5369
        %5371 = vmax.index.xlane.f32.xlu0 %v5050
        %v5372 = vpop.xlane.xlu0 %5371
        %vm5373 = vcmp.eq.s32.totalorder %v1222, %v5310
        %vm5374 = vcmp.eq.s32.totalorder %v1222, %v5312
        %vm5375 = vcmp.eq.s32.totalorder %v1222, %v5314
        %vm5376 = vcmp.eq.s32.totalorder %v1222, %v5316
        %vm5377 = vcmp.eq.s32.totalorder %v1222, %v5318
        %vm5378 = vcmp.eq.s32.totalorder %v1222, %v5320
        %vm5379 = vcmp.eq.s32.totalorder %v1222, %v5322
        %vm5380 = vcmp.eq.s32.totalorder %v1222, %v5324
        %vm5381 = vcmp.eq.s32.totalorder %v1222, %v5326
        %vm5382 = vcmp.eq.s32.totalorder %v1222, %v5328
        %vm5383 = vcmp.eq.s32.totalorder %v1222, %v5330
        %vm5384 = vcmp.eq.s32.totalorder %v1222, %v5332
        %vm5385 = vcmp.eq.s32.totalorder %v1222, %v5334
        %vm5386 = vcmp.eq.s32.totalorder %v1222, %v5336
        %vm5387 = vcmp.eq.s32.totalorder %v1222, %v5338
        %vm5388 = vcmp.eq.s32.totalorder %v1222, %v5340
        %vm5389 = vcmp.eq.s32.totalorder %v1222, %v5342
        %vm5390 = vcmp.eq.s32.totalorder %v1222, %v5344
        %vm5391 = vcmp.eq.s32.totalorder %v1222, %v5346
        %vm5392 = vcmp.eq.s32.totalorder %v1222, %v5348
        %vm5393 = vcmp.eq.s32.totalorder %v1222, %v5350
        %vm5394 = vcmp.eq.s32.totalorder %v1222, %v5352
        %vm5395 = vcmp.eq.s32.totalorder %v1222, %v5354
        %vm5396 = vcmp.eq.s32.totalorder %v1222, %v5356
        %vm5397 = vcmp.eq.s32.totalorder %v1222, %v5358
        %vm5398 = vcmp.eq.s32.totalorder %v1222, %v5360
        %vm5399 = vcmp.eq.s32.totalorder %v1222, %v5362
        %vm5400 = vcmp.eq.s32.totalorder %v1222, %v5364
        %vm5401 = vcmp.eq.s32.totalorder %v1222, %v5366
        %vm5402 = vcmp.eq.s32.totalorder %v1222, %v5368
        %vm5403 = vcmp.eq.s32.totalorder %v1222, %v5370
        %vm5404 = vcmp.eq.s32.totalorder %v1222, %v5372
        %v5405 = vsel %vm5373, 1, 0
        %v5406 = vsel %vm5374, 1, 0
        %v5407 = vsel %vm5375, 1, 0
        %v5408 = vsel %vm5376, 1, 0
        %v5409 = vsel %vm5377, 1, 0
        %v5410 = vsel %vm5378, 1, 0
        %v5411 = vsel %vm5379, 1, 0
        %v5412 = vsel %vm5380, 1, 0
        %v5413 = vsel %vm5381, 1, 0
        %v5414 = vsel %vm5382, 1, 0
        %v5415 = vsel %vm5383, 1, 0
        %v5416 = vsel %vm5384, 1, 0
        %v5417 = vsel %vm5385, 1, 0
        %v5418 = vsel %vm5386, 1, 0
        %v5419 = vsel %vm5387, 1, 0
        %v5420 = vsel %vm5388, 1, 0
        %v5421 = vsel %vm5389, 1, 0
        %v5422 = vsel %vm5390, 1, 0
        %v5423 = vsel %vm5391, 1, 0
        %v5424 = vsel %vm5392, 1, 0
        %v5425 = vsel %vm5393, 1, 0
        %v5426 = vsel %vm5394, 1, 0
        %v5427 = vsel %vm5395, 1, 0
        %v5428 = vsel %vm5396, 1, 0
        %v5429 = vsel %vm5397, 1, 0
        %v5430 = vsel %vm5398, 1, 0
        %v5431 = vsel %vm5399, 1, 0
        %v5432 = vsel %vm5400, 1, 0
        %v5433 = vsel %vm5401, 1, 0
        %v5434 = vsel %vm5402, 1, 0
        %v5435 = vsel %vm5403, 1, 0
        %v5436 = vsel %vm5404, 1, 0
        %v5437 = vcvt.s32.f32 %v5405
        %v5438 = vcvt.s32.f32 %v5406
        %v5439 = vcvt.s32.f32 %v5407
        %v5440 = vcvt.s32.f32 %v5408
        %v5441 = vcvt.s32.f32 %v5409
        %v5442 = vcvt.s32.f32 %v5410
        %v5443 = vcvt.s32.f32 %v5411
        %v5444 = vcvt.s32.f32 %v5412
        %v5445 = vcvt.s32.f32 %v5413
        %v5446 = vcvt.s32.f32 %v5414
        %v5447 = vcvt.s32.f32 %v5415
        %v5448 = vcvt.s32.f32 %v5416
        %v5449 = vcvt.s32.f32 %v5417
        %v5450 = vcvt.s32.f32 %v5418
        %v5451 = vcvt.s32.f32 %v5419
        %v5452 = vcvt.s32.f32 %v5420
        %v5453 = vcvt.s32.f32 %v5421
        %v5454 = vcvt.s32.f32 %v5422
        %v5455 = vcvt.s32.f32 %v5423
        %v5456 = vcvt.s32.f32 %v5424
        %v5457 = vcvt.s32.f32 %v5425
        %v5458 = vcvt.s32.f32 %v5426
        %v5459 = vcvt.s32.f32 %v5427
        %v5460 = vcvt.s32.f32 %v5428
        %v5461 = vcvt.s32.f32 %v5429
        %v5462 = vcvt.s32.f32 %v5430
        %v5463 = vcvt.s32.f32 %v5431
        %v5464 = vcvt.s32.f32 %v5432
        %v5465 = vcvt.s32.f32 %v5433
        %v5466 = vcvt.s32.f32 %v5434
        %v5467 = vcvt.s32.f32 %v5435
        %v5468 = vcvt.s32.f32 %v5436
        %v5470 = vsel %vm804, %v5277, 0
        %v5473 = vsel %vm804, %v5278, 0
        %v5476 = vsel %vm804, %v5279, 0
        %v5479 = vsel %vm804, %v5280, 0
        %v5482 = vsel %vm804, %v5281, 0
        %v5485 = vsel %vm804, %v5282, 0
        %v5488 = vsel %vm804, %v5283, 0
        %v5491 = vsel %vm804, %v5284, 0
        %v5494 = vsel %vm804, %v5285, 0
        %v5497 = vsel %vm804, %v5286, 0
        %v5500 = vsel %vm804, %v5287, 0
        %v5503 = vsel %vm804, %v5288, 0
        %v5506 = vsel %vm804, %v5289, 0
        %v5509 = vsel %vm804, %v5290, 0
        %v5512 = vsel %vm804, %v5291, 0
        %v5515 = vsel %vm804, %v5292, 0
        %v5518 = vsel %vm804, %v5293, 0
        %v5521 = vsel %vm804, %v5294, 0
        %v5524 = vsel %vm804, %v5295, 0
        %v5527 = vsel %vm804, %v5296, 0
        %v5530 = vsel %vm804, %v5297, 0
        %v5533 = vsel %vm804, %v5298, 0
        %v5536 = vsel %vm804, %v5299, 0
        %v5539 = vsel %vm804, %v5300, 0
        %v5542 = vsel %vm804, %v5301, 0
        %v5545 = vsel %vm804, %v5302, 0
        %v5548 = vsel %vm804, %v5303, 0
        %v5551 = vsel %vm804, %v5304, 0
        %v5554 = vsel %vm804, %v5305, 0
        %v5557 = vsel %vm804, %v5306, 0
        %v5560 = vsel %vm804, %v5307, 0
        %v5563 = vsel %vm804, %v5308, 0
        %v5566 = vsel %vm804, %v5437, 0
        %v5569 = vsel %vm804, %v5438, 0
        %v5572 = vsel %vm804, %v5439, 0
        %v5575 = vsel %vm804, %v5440, 0
        %v5578 = vsel %vm804, %v5441, 0
        %v5581 = vsel %vm804, %v5442, 0
        %v5584 = vsel %vm804, %v5443, 0
        %v5587 = vsel %vm804, %v5444, 0
        %v5590 = vsel %vm804, %v5445, 0
        %v5593 = vsel %vm804, %v5446, 0
        %v5596 = vsel %vm804, %v5447, 0
        %v5599 = vsel %vm804, %v5448, 0
        %v5602 = vsel %vm804, %v5449, 0
        %v5605 = vsel %vm804, %v5450, 0
        %v5608 = vsel %vm804, %v5451, 0
        %v5611 = vsel %vm804, %v5452, 0
        %v5614 = vsel %vm804, %v5453, 0
        %v5617 = vsel %vm804, %v5454, 0
        %v5620 = vsel %vm804, %v5455, 0
        %v5623 = vsel %vm804, %v5456, 0
        %v5626 = vsel %vm804, %v5457, 0
        %v5629 = vsel %vm804, %v5458, 0
        %v5632 = vsel %vm804, %v5459, 0
        %v5635 = vsel %vm804, %v5460, 0
        %v5638 = vsel %vm804, %v5461, 0
        %v5641 = vsel %vm804, %v5462, 0
        %v5644 = vsel %vm804, %v5463, 0
        %v5647 = vsel %vm804, %v5464, 0
        %v5650 = vsel %vm804, %v5465, 0
        %v5653 = vsel %vm804, %v5466, 0
        %v5656 = vsel %vm804, %v5467, 0
        %v5659 = vsel %vm804, %v5468, 0
        %5661 = vmatprep.subr.mxu0 0.0
        %5662 = vmatpush1.msra.mxu0 %v4560
        %5663 = vmatprep.subr.mxu0 0.0
        %5664 = vmatpush1.msra.mxu0 %v4561
        %5665 = vmatprep.subr.mxu0 0.0
        %5666 = vmatpush1.msra.mxu0 0.0
        %5667 = vmatprep.subr.mxu0 0.0
        %5668 = vmatpush1.msra.mxu0 0.0
        %5669 = vmatprep.subr.mxu0 0.0
        %5670 = vmatpush1.msra.mxu0 0.0
        %5671 = vmatprep.subr.mxu0 0.0
        %5672 = vmatpush1.msra.mxu0 0.0
        %5673 = vmatprep.subr.mxu0 0.0
        %5674 = vmatpush1.msra.mxu0 0.0
        %5675 = vmatprep.subr.mxu0 0.0
        %5676 = vmatpush1.msra.mxu0 0.0
        %5677 = vmatprep.subr.mxu0 0.0
        %5678 = vmatpush1.msra.mxu0 0.0
        %5679 = vmatprep.subr.mxu0 0.0
        %5680 = vmatpush1.msra.mxu0 0.0
        %5681 = vmatprep.subr.mxu0 0.0
        %5682 = vmatpush1.msra.mxu0 0.0
        %5683 = vmatprep.subr.mxu0 0.0
        %5684 = vmatpush1.msra.mxu0 0.0
        %5685 = vmatprep.subr.mxu0 0.0
        %5686 = vmatpush1.msra.mxu0 0.0
        %5687 = vmatprep.subr.mxu0 0.0
        %5688 = vmatpush1.msra.mxu0 0.0
        %5689 = vmatprep.subr.mxu0 0.0
        %5690 = vmatpush1.msra.mxu0 0.0
        %5691 = vmatprep.subr.mxu0 0.0
        %5692 = vmatpush1.msra.mxu0 0.0
        %5693 = vmatprep.subr.mxu0 0.0
        %5694 = vmatpush1.msra.mxu0 0.0
        %5695 = vmatprep.subr.mxu0 0.0
        %5696 = vmatpush1.msra.mxu0 0.0
        %5697 = vmatprep.subr.mxu0 0.0
        %5698 = vmatpush1.msra.mxu0 0.0
        %5699 = vmatprep.subr.mxu0 0.0
        %5700 = vmatpush1.msra.mxu0 0.0
        %5701 = vmatprep.subr.mxu0 0.0
        %5702 = vmatpush1.msra.mxu0 0.0
        %5703 = vmatprep.subr.mxu0 0.0
        %5704 = vmatpush1.msra.mxu0 0.0
        %5705 = vmatprep.subr.mxu0 0.0
        %5706 = vmatpush1.msra.mxu0 0.0
        %5707 = vmatprep.subr.mxu0 0.0
        %5708 = vmatpush1.msra.mxu0 0.0
        %5709 = vmatprep.subr.mxu0 0.0
        %5710 = vmatpush1.msra.mxu0 0.0
        %5711 = vmatprep.subr.mxu0 0.0
        %5712 = vmatpush1.msra.mxu0 0.0
        %5713 = vmatprep.subr.mxu0 0.0
        %5714 = vmatpush1.msra.mxu0 0.0
        %5715 = vmatprep.subr.mxu0 0.0
        %5716 = vmatpush1.msra.mxu0 0.0
        %5717 = vmatprep.subr.mxu0 0.0
        %5718 = vmatpush1.msra.mxu0 0.0
        %5719 = vmatprep.subr.mxu0 0.0
        %5720 = vmatpush1.msra.mxu0 0.0
        %5721 = vmatprep.subr.mxu0 0.0
        %5722 = vmatpush1.msra.mxu0 0.0
        %5723 = vmatprep.subr.mxu0 0.0
        %5724 = vmatpush1.msra.mxu0 0.0
        %5725 = vmatprep.mubr.f32.mxu0 0.0
        %5726 = vmatmul.mubr.f32.gmra.mrb[0].mxu0 %v5470
        %v5727 = vpop.f32.mrb[0].mxu0
        %v5728 = vadd.f32 0.0, %v5727
        %v5729 = vpop.f32.mrb[0].mxu0
        %5730 = vmatprep.mubr.f32.mxu0 0.0
        %5731 = vmatmul.mubr.f32.gmra.mrb[0].mxu0 %v5473
        %v5732 = vpop.f32.mrb[0].mxu0
        %v5733 = vadd.f32 0.0, %v5732
        %v5734 = vpop.f32.mrb[0].mxu0
        %5735 = vmatprep.mubr.f32.mxu0 0.0
        %5736 = vmatmul.mubr.f32.gmra.mrb[0].mxu0 %v5476
        %v5737 = vpop.f32.mrb[0].mxu0
        %v5738 = vadd.f32 0.0, %v5737
        %v5739 = vpop.f32.mrb[0].mxu0
        %5740 = vmatprep.mubr.f32.mxu0 0.0
        %5741 = vmatmul.mubr.f32.gmra.mrb[0].mxu0 %v5479
        %v5742 = vpop.f32.mrb[0].mxu0
        %v5743 = vadd.f32 0.0, %v5742
        %v5744 = vpop.f32.mrb[0].mxu0
        %5745 = vmatprep.mubr.f32.mxu0 0.0
        %5746 = vmatmul.mubr.f32.gmra.mrb[0].mxu0 %v5482
        %v5747 = vpop.f32.mrb[0].mxu0
        %v5748 = vadd.f32 0.0, %v5747
        %v5749 = vpop.f32.mrb[0].mxu0
        %5750 = vmatprep.mubr.f32.mxu0 0.0
        %5751 = vmatmul.mubr.f32.gmra.mrb[0].mxu0 %v5485
        %v5752 = vpop.f32.mrb[0].mxu0
        %v5753 = vadd.f32 0.0, %v5752
        %v5754 = vpop.f32.mrb[0].mxu0
        %5755 = vmatprep.mubr.f32.mxu0 0.0
        %5756 = vmatmul.mubr.f32.gmra.mrb[0].mxu0 %v5488
        %v5757 = vpop.f32.mrb[0].mxu0
        %v5758 = vadd.f32 0.0, %v5757
        %v5759 = vpop.f32.mrb[0].mxu0
        %5760 = vmatprep.mubr.f32.mxu0 0.0
        %5761 = vmatmul.mubr.f32.gmra.mrb[0].mxu0 %v5491
        %v5762 = vpop.f32.mrb[0].mxu0
        %v5763 = vadd.f32 0.0, %v5762
        %v5764 = vpop.f32.mrb[0].mxu0
        %5765 = vmatprep.mubr.f32.mxu0 0.0
        %5766 = vmatmul.mubr.f32.gmra.mrb[0].mxu0 %v5494
        %v5767 = vpop.f32.mrb[0].mxu0
        %v5768 = vadd.f32 0.0, %v5767
        %v5769 = vpop.f32.mrb[0].mxu0
        %5770 = vmatprep.mubr.f32.mxu0 0.0
        %5771 = vmatmul.mubr.f32.gmra.mrb[0].mxu0 %v5497
        %v5772 = vpop.f32.mrb[0].mxu0
        %v5773 = vadd.f32 0.0, %v5772
        %v5774 = vpop.f32.mrb[0].mxu0
        %5775 = vmatprep.mubr.f32.mxu0 0.0
        %5776 = vmatmul.mubr.f32.gmra.mrb[0].mxu0 %v5500
        %v5777 = vpop.f32.mrb[0].mxu0
        %v5778 = vadd.f32 0.0, %v5777
        %v5779 = vpop.f32.mrb[0].mxu0
        %5780 = vmatprep.mubr.f32.mxu0 0.0
        %5781 = vmatmul.mubr.f32.gmra.mrb[0].mxu0 %v5503
        %v5782 = vpop.f32.mrb[0].mxu0
        %v5783 = vadd.f32 0.0, %v5782
        %v5784 = vpop.f32.mrb[0].mxu0
        %5785 = vmatprep.mubr.f32.mxu0 0.0
        %5786 = vmatmul.mubr.f32.gmra.mrb[0].mxu0 %v5506
        %v5787 = vpop.f32.mrb[0].mxu0
        %v5788 = vadd.f32 0.0, %v5787
        %v5789 = vpop.f32.mrb[0].mxu0
        %5790 = vmatprep.mubr.f32.mxu0 0.0
        %5791 = vmatmul.mubr.f32.gmra.mrb[0].mxu0 %v5509
        %v5792 = vpop.f32.mrb[0].mxu0
        %v5793 = vadd.f32 0.0, %v5792
        %v5794 = vpop.f32.mrb[0].mxu0
        %5795 = vmatprep.mubr.f32.mxu0 0.0
        %5796 = vmatmul.mubr.f32.gmra.mrb[0].mxu0 %v5512
        %v5797 = vpop.f32.mrb[0].mxu0
        %v5798 = vadd.f32 0.0, %v5797
        %v5799 = vpop.f32.mrb[0].mxu0
        %5800 = vmatprep.mubr.f32.mxu0 0.0
        %5801 = vmatmul.mubr.f32.gmra.mrb[0].mxu0 %v5515
        %v5802 = vpop.f32.mrb[0].mxu0
        %v5803 = vadd.f32 0.0, %v5802
        %v5804 = vpop.f32.mrb[0].mxu0
        %5805 = vmatprep.mubr.f32.mxu0 0.0
        %5806 = vmatmul.mubr.f32.gmra.mrb[0].mxu0 %v5518
        %v5807 = vpop.f32.mrb[0].mxu0
        %v5808 = vadd.f32 0.0, %v5807
        %v5809 = vpop.f32.mrb[0].mxu0
        %5810 = vmatprep.mubr.f32.mxu0 0.0
        %5811 = vmatmul.mubr.f32.gmra.mrb[0].mxu0 %v5521
        %v5812 = vpop.f32.mrb[0].mxu0
        %v5813 = vadd.f32 0.0, %v5812
        %v5814 = vpop.f32.mrb[0].mxu0
        %5815 = vmatprep.mubr.f32.mxu0 0.0
        %5816 = vmatmul.mubr.f32.gmra.mrb[0].mxu0 %v5524
        %v5817 = vpop.f32.mrb[0].mxu0
        %v5818 = vadd.f32 0.0, %v5817
        %v5819 = vpop.f32.mrb[0].mxu0
        %5820 = vmatprep.mubr.f32.mxu0 0.0
        %5821 = vmatmul.mubr.f32.gmra.mrb[0].mxu0 %v5527
        %v5822 = vpop.f32.mrb[0].mxu0
        %v5823 = vadd.f32 0.0, %v5822
        %v5824 = vpop.f32.mrb[0].mxu0
        %5825 = vmatprep.mubr.f32.mxu0 0.0
        %5826 = vmatmul.mubr.f32.gmra.mrb[0].mxu0 %v5530
        %v5827 = vpop.f32.mrb[0].mxu0
        %v5828 = vadd.f32 0.0, %v5827
        %v5829 = vpop.f32.mrb[0].mxu0
        %5830 = vmatprep.mubr.f32.mxu0 0.0
        %5831 = vmatmul.mubr.f32.gmra.mrb[0].mxu0 %v5533
        %v5832 = vpop.f32.mrb[0].mxu0
        %v5833 = vadd.f32 0.0, %v5832
        %v5834 = vpop.f32.mrb[0].mxu0
        %5835 = vmatprep.mubr.f32.mxu0 0.0
        %5836 = vmatmul.mubr.f32.gmra.mrb[0].mxu0 %v5536
        %v5837 = vpop.f32.mrb[0].mxu0
        %v5838 = vadd.f32 0.0, %v5837
        %v5839 = vpop.f32.mrb[0].mxu0
        %5840 = vmatprep.mubr.f32.mxu0 0.0
        %5841 = vmatmul.mubr.f32.gmra.mrb[0].mxu0 %v5539
        %v5842 = vpop.f32.mrb[0].mxu0
        %v5843 = vadd.f32 0.0, %v5842
        %v5844 = vpop.f32.mrb[0].mxu0
        %5845 = vmatprep.mubr.f32.mxu0 0.0
        %5846 = vmatmul.mubr.f32.gmra.mrb[0].mxu0 %v5542
        %v5847 = vpop.f32.mrb[0].mxu0
        %v5848 = vadd.f32 0.0, %v5847
        %v5849 = vpop.f32.mrb[0].mxu0
        %5850 = vmatprep.mubr.f32.mxu0 0.0
        %5851 = vmatmul.mubr.f32.gmra.mrb[0].mxu0 %v5545
        %v5852 = vpop.f32.mrb[0].mxu0
        %v5853 = vadd.f32 0.0, %v5852
        %v5854 = vpop.f32.mrb[0].mxu0
        %5855 = vmatprep.mubr.f32.mxu0 0.0
        %5856 = vmatmul.mubr.f32.gmra.mrb[0].mxu0 %v5548
        %v5857 = vpop.f32.mrb[0].mxu0
        %v5858 = vadd.f32 0.0, %v5857
        %v5859 = vpop.f32.mrb[0].mxu0
        %5860 = vmatprep.mubr.f32.mxu0 0.0
        %5861 = vmatmul.mubr.f32.gmra.mrb[0].mxu0 %v5551
        %v5862 = vpop.f32.mrb[0].mxu0
        %v5863 = vadd.f32 0.0, %v5862
        %v5864 = vpop.f32.mrb[0].mxu0
        %5865 = vmatprep.mubr.f32.mxu0 0.0
        %5866 = vmatmul.mubr.f32.gmra.mrb[0].mxu0 %v5554
        %v5867 = vpop.f32.mrb[0].mxu0
        %v5868 = vadd.f32 0.0, %v5867
        %v5869 = vpop.f32.mrb[0].mxu0
        %5870 = vmatprep.mubr.f32.mxu0 0.0
        %5871 = vmatmul.mubr.f32.gmra.mrb[0].mxu0 %v5557
        %v5872 = vpop.f32.mrb[0].mxu0
        %v5873 = vadd.f32 0.0, %v5872
        %v5874 = vpop.f32.mrb[0].mxu0
        %5875 = vmatprep.mubr.f32.mxu0 0.0
        %5876 = vmatmul.mubr.f32.gmra.mrb[0].mxu0 %v5560
        %v5877 = vpop.f32.mrb[0].mxu0
        %v5878 = vadd.f32 0.0, %v5877
        %v5879 = vpop.f32.mrb[0].mxu0
        %5880 = vmatprep.mubr.f32.mxu0 0.0
        %5881 = vmatmul.mubr.f32.gmra.mrb[0].mxu0 %v5563
        %v5882 = vpop.f32.mrb[0].mxu0
        %v5883 = vadd.f32 0.0, %v5882
        %v5884 = vpop.f32.mrb[0].mxu0
        %5885 = vmatprep.mubr.f32.mxu0 0.0
        %5886 = vmatmul.mubr.f32.gmra.mrb[0].mxu0 %v5566
        %v5887 = vpop.f32.mrb[0].mxu0
        %v5888 = vadd.f32 0.0, %v5887
        %v5889 = vpop.f32.mrb[0].mxu0
        %5890 = vmatprep.mubr.f32.mxu0 0.0
        %5891 = vmatmul.mubr.f32.gmra.mrb[0].mxu0 %v5569
        %v5892 = vpop.f32.mrb[0].mxu0
        %v5893 = vadd.f32 0.0, %v5892
        %v5894 = vpop.f32.mrb[0].mxu0
        %5895 = vmatprep.mubr.f32.mxu0 0.0
        %5896 = vmatmul.mubr.f32.gmra.mrb[0].mxu0 %v5572
        %v5897 = vpop.f32.mrb[0].mxu0
        %v5898 = vadd.f32 0.0, %v5897
        %v5899 = vpop.f32.mrb[0].mxu0
        %5900 = vmatprep.mubr.f32.mxu0 0.0
        %5901 = vmatmul.mubr.f32.gmra.mrb[0].mxu0 %v5575
        %v5902 = vpop.f32.mrb[0].mxu0
        %v5903 = vadd.f32 0.0, %v5902
        %v5904 = vpop.f32.mrb[0].mxu0
        %5905 = vmatprep.mubr.f32.mxu0 0.0
        %5906 = vmatmul.mubr.f32.gmra.mrb[0].mxu0 %v5578
        %v5907 = vpop.f32.mrb[0].mxu0
        %v5908 = vadd.f32 0.0, %v5907
        %v5909 = vpop.f32.mrb[0].mxu0
        %5910 = vmatprep.mubr.f32.mxu0 0.0
        %5911 = vmatmul.mubr.f32.gmra.mrb[0].mxu0 %v5581
        %v5912 = vpop.f32.mrb[0].mxu0
        %v5913 = vadd.f32 0.0, %v5912
        %v5914 = vpop.f32.mrb[0].mxu0
        %5915 = vmatprep.mubr.f32.mxu0 0.0
        %5916 = vmatmul.mubr.f32.gmra.mrb[0].mxu0 %v5584
        %v5917 = vpop.f32.mrb[0].mxu0
        %v5918 = vadd.f32 0.0, %v5917
        %v5919 = vpop.f32.mrb[0].mxu0
        %5920 = vmatprep.mubr.f32.mxu0 0.0
        %5921 = vmatmul.mubr.f32.gmra.mrb[0].mxu0 %v5587
        %v5922 = vpop.f32.mrb[0].mxu0
        %v5923 = vadd.f32 0.0, %v5922
        %v5924 = vpop.f32.mrb[0].mxu0
        %5925 = vmatprep.mubr.f32.mxu0 0.0
        %5926 = vmatmul.mubr.f32.gmra.mrb[0].mxu0 %v5590
        %v5927 = vpop.f32.mrb[0].mxu0
        %v5928 = vadd.f32 0.0, %v5927
        %v5929 = vpop.f32.mrb[0].mxu0
        %5930 = vmatprep.mubr.f32.mxu0 0.0
        %5931 = vmatmul.mubr.f32.gmra.mrb[0].mxu0 %v5593
        %v5932 = vpop.f32.mrb[0].mxu0
        %v5933 = vadd.f32 0.0, %v5932
        %v5934 = vpop.f32.mrb[0].mxu0
        %5935 = vmatprep.mubr.f32.mxu0 0.0
        %5936 = vmatmul.mubr.f32.gmra.mrb[0].mxu0 %v5596
        %v5937 = vpop.f32.mrb[0].mxu0
        %v5938 = vadd.f32 0.0, %v5937
        %v5939 = vpop.f32.mrb[0].mxu0
        %5940 = vmatprep.mubr.f32.mxu0 0.0
        %5941 = vmatmul.mubr.f32.gmra.mrb[0].mxu0 %v5599
        %v5942 = vpop.f32.mrb[0].mxu0
        %v5943 = vadd.f32 0.0, %v5942
        %v5944 = vpop.f32.mrb[0].mxu0
        %5945 = vmatprep.mubr.f32.mxu0 0.0
        %5946 = vmatmul.mubr.f32.gmra.mrb[0].mxu0 %v5602
        %v5947 = vpop.f32.mrb[0].mxu0
        %v5948 = vadd.f32 0.0, %v5947
        %v5949 = vpop.f32.mrb[0].mxu0
        %5950 = vmatprep.mubr.f32.mxu0 0.0
        %5951 = vmatmul.mubr.f32.gmra.mrb[0].mxu0 %v5605
        %v5952 = vpop.f32.mrb[0].mxu0
        %v5953 = vadd.f32 0.0, %v5952
        %v5954 = vpop.f32.mrb[0].mxu0
        %5955 = vmatprep.mubr.f32.mxu0 0.0
        %5956 = vmatmul.mubr.f32.gmra.mrb[0].mxu0 %v5608
        %v5957 = vpop.f32.mrb[0].mxu0
        %v5958 = vadd.f32 0.0, %v5957
        %v5959 = vpop.f32.mrb[0].mxu0
        %5960 = vmatprep.mubr.f32.mxu0 0.0
        %5961 = vmatmul.mubr.f32.gmra.mrb[0].mxu0 %v5611
        %v5962 = vpop.f32.mrb[0].mxu0
        %v5963 = vadd.f32 0.0, %v5962
        %v5964 = vpop.f32.mrb[0].mxu0
        %5965 = vmatprep.mubr.f32.mxu0 0.0
        %5966 = vmatmul.mubr.f32.gmra.mrb[0].mxu0 %v5614
        %v5967 = vpop.f32.mrb[0].mxu0
        %v5968 = vadd.f32 0.0, %v5967
        %v5969 = vpop.f32.mrb[0].mxu0
        %5970 = vmatprep.mubr.f32.mxu0 0.0
        %5971 = vmatmul.mubr.f32.gmra.mrb[0].mxu0 %v5617
        %v5972 = vpop.f32.mrb[0].mxu0
        %v5973 = vadd.f32 0.0, %v5972
        %v5974 = vpop.f32.mrb[0].mxu0
        %5975 = vmatprep.mubr.f32.mxu0 0.0
        %5976 = vmatmul.mubr.f32.gmra.mrb[0].mxu0 %v5620
        %v5977 = vpop.f32.mrb[0].mxu0
        %v5978 = vadd.f32 0.0, %v5977
        %v5979 = vpop.f32.mrb[0].mxu0
        %5980 = vmatprep.mubr.f32.mxu0 0.0
        %5981 = vmatmul.mubr.f32.gmra.mrb[0].mxu0 %v5623
        %v5982 = vpop.f32.mrb[0].mxu0
        %v5983 = vadd.f32 0.0, %v5982
        %v5984 = vpop.f32.mrb[0].mxu0
        %5985 = vmatprep.mubr.f32.mxu0 0.0
        %5986 = vmatmul.mubr.f32.gmra.mrb[0].mxu0 %v5626
        %v5987 = vpop.f32.mrb[0].mxu0
        %v5988 = vadd.f32 0.0, %v5987
        %v5989 = vpop.f32.mrb[0].mxu0
        %5990 = vmatprep.mubr.f32.mxu0 0.0
        %5991 = vmatmul.mubr.f32.gmra.mrb[0].mxu0 %v5629
        %v5992 = vpop.f32.mrb[0].mxu0
        %v5993 = vadd.f32 0.0, %v5992
        %v5994 = vpop.f32.mrb[0].mxu0
        %5995 = vmatprep.mubr.f32.mxu0 0.0
        %5996 = vmatmul.mubr.f32.gmra.mrb[0].mxu0 %v5632
        %v5997 = vpop.f32.mrb[0].mxu0
        %v5998 = vadd.f32 0.0, %v5997
        %v5999 = vpop.f32.mrb[0].mxu0
        %6000 = vmatprep.mubr.f32.mxu0 0.0
        %6001 = vmatmul.mubr.f32.gmra.mrb[0].mxu0 %v5635
        %v6002 = vpop.f32.mrb[0].mxu0
        %v6003 = vadd.f32 0.0, %v6002
        %v6004 = vpop.f32.mrb[0].mxu0
        %6005 = vmatprep.mubr.f32.mxu0 0.0
        %6006 = vmatmul.mubr.f32.gmra.mrb[0].mxu0 %v5638
        %v6007 = vpop.f32.mrb[0].mxu0
        %v6008 = vadd.f32 0.0, %v6007
        %v6009 = vpop.f32.mrb[0].mxu0
        %6010 = vmatprep.mubr.f32.mxu0 0.0
        %6011 = vmatmul.mubr.f32.gmra.mrb[0].mxu0 %v5641
        %v6012 = vpop.f32.mrb[0].mxu0
        %v6013 = vadd.f32 0.0, %v6012
        %v6014 = vpop.f32.mrb[0].mxu0
        %6015 = vmatprep.mubr.f32.mxu0 0.0
        %6016 = vmatmul.mubr.f32.gmra.mrb[0].mxu0 %v5644
        %v6017 = vpop.f32.mrb[0].mxu0
        %v6018 = vadd.f32 0.0, %v6017
        %v6019 = vpop.f32.mrb[0].mxu0
        %6020 = vmatprep.mubr.f32.mxu0 0.0
        %6021 = vmatmul.mubr.f32.gmra.mrb[0].mxu0 %v5647
        %v6022 = vpop.f32.mrb[0].mxu0
        %v6023 = vadd.f32 0.0, %v6022
        %v6024 = vpop.f32.mrb[0].mxu0
        %6025 = vmatprep.mubr.f32.mxu0 0.0
        %6026 = vmatmul.mubr.f32.gmra.mrb[0].mxu0 %v5650
        %v6027 = vpop.f32.mrb[0].mxu0
        %v6028 = vadd.f32 0.0, %v6027
        %v6029 = vpop.f32.mrb[0].mxu0
        %6030 = vmatprep.mubr.f32.mxu0 0.0
        %6031 = vmatmul.mubr.f32.gmra.mrb[0].mxu0 %v5653
        %v6032 = vpop.f32.mrb[0].mxu0
        %v6033 = vadd.f32 0.0, %v6032
        %v6034 = vpop.f32.mrb[0].mxu0
        %6035 = vmatprep.mubr.f32.mxu0 0.0
        %6036 = vmatmul.mubr.f32.gmra.mrb[0].mxu0 %v5656
        %v6037 = vpop.f32.mrb[0].mxu0
        %v6038 = vadd.f32 0.0, %v6037
        %v6039 = vpop.f32.mrb[0].mxu0
        %6040 = vmatprep.mubr.f32.mxu0 0.0
        %6041 = vmatmul.mubr.f32.gmra.mrb[0].mxu0 %v5659
        %v6042 = vpop.f32.mrb[0].mxu0
        %v6043 = vadd.f32 0.0, %v6042
        %v6044 = vpop.f32.mrb[0].mxu0
        %6045 = vdwg.mxu0
        %v6046 = vmul.f32 %v5728, %v373
        %v6047 = vmul.f32 %v5733, %v374
        %v6048 = vmul.f32 %v5738, %v375
        %v6049 = vmul.f32 %v5743, %v376
        %v6050 = vmul.f32 %v5748, %v377
        %v6051 = vmul.f32 %v5753, %v378
        %v6052 = vmul.f32 %v5758, %v379
        %v6053 = vmul.f32 %v5763, %v380
        %v6054 = vmul.f32 %v5768, %v381
        %v6055 = vmul.f32 %v5773, %v382
        %v6056 = vmul.f32 %v5778, %v383
        %v6057 = vmul.f32 %v5783, %v384
        %v6058 = vmul.f32 %v5788, %v385
        %v6059 = vmul.f32 %v5793, %v386
        %v6060 = vmul.f32 %v5798, %v387
        %v6061 = vmul.f32 %v5803, %v388
        %v6062 = vmul.f32 %v5808, %v389
        %v6063 = vmul.f32 %v5813, %v390
        %v6064 = vmul.f32 %v5818, %v391
        %v6065 = vmul.f32 %v5823, %v392
        %v6066 = vmul.f32 %v5828, %v393
        %v6067 = vmul.f32 %v5833, %v394
        %v6068 = vmul.f32 %v5838, %v395
        %v6069 = vmul.f32 %v5843, %v396
        %v6070 = vmul.f32 %v5848, %v397
        %v6071 = vmul.f32 %v5853, %v398
        %v6072 = vmul.f32 %v5858, %v399
        %v6073 = vmul.f32 %v5863, %v400
        %v6074 = vmul.f32 %v5868, %v401
        %v6075 = vmul.f32 %v5873, %v402
        %v6076 = vmul.f32 %v5878, %v403
        %v6077 = vmul.f32 %v5883, %v404
        %v6078 = vmul.f32 %v5888, %v373
        %v6079 = vmul.f32 %v5893, %v374
        %v6080 = vmul.f32 %v5898, %v375
        %v6081 = vmul.f32 %v5903, %v376
        %v6082 = vmul.f32 %v5908, %v377
        %v6083 = vmul.f32 %v5913, %v378
        %v6084 = vmul.f32 %v5918, %v379
        %v6085 = vmul.f32 %v5923, %v380
        %v6086 = vmul.f32 %v5928, %v381
        %v6087 = vmul.f32 %v5933, %v382
        %v6088 = vmul.f32 %v5938, %v383
        %v6089 = vmul.f32 %v5943, %v384
        %v6090 = vmul.f32 %v5948, %v385
        %v6091 = vmul.f32 %v5953, %v386
        %v6092 = vmul.f32 %v5958, %v387
        %v6093 = vmul.f32 %v5963, %v388
        %v6094 = vmul.f32 %v5968, %v389
        %v6095 = vmul.f32 %v5973, %v390
        %v6096 = vmul.f32 %v5978, %v391
        %v6097 = vmul.f32 %v5983, %v392
        %v6098 = vmul.f32 %v5988, %v393
        %v6099 = vmul.f32 %v5993, %v394
        %v6100 = vmul.f32 %v5998, %v395
        %v6101 = vmul.f32 %v6003, %v396
        %v6102 = vmul.f32 %v6008, %v397
        %v6103 = vmul.f32 %v6013, %v398
        %v6104 = vmul.f32 %v6018, %v399
        %v6105 = vmul.f32 %v6023, %v400
        %v6106 = vmul.f32 %v6028, %v401
        %v6107 = vmul.f32 %v6033, %v402
        %v6108 = vmul.f32 %v6038, %v403
        %v6109 = vmul.f32 %v6043, %v404
        %v6110 = vsub.f32 %v4035, %v6078
        %v6111 = vsub.f32 %v4036, %v6079
        %v6112 = vsub.f32 %v4037, %v6080
        %v6113 = vsub.f32 %v4038, %v6081
        %v6114 = vsub.f32 %v4039, %v6082
        %v6115 = vsub.f32 %v4040, %v6083
        %v6116 = vsub.f32 %v4041, %v6084
        %v6117 = vsub.f32 %v4042, %v6085
        %v6118 = vsub.f32 %v4043, %v6086
        %v6119 = vsub.f32 %v4044, %v6087
        %v6120 = vsub.f32 %v4045, %v6088
        %v6121 = vsub.f32 %v4046, %v6089
        %v6122 = vsub.f32 %v4047, %v6090
        %v6123 = vsub.f32 %v4048, %v6091
        %v6124 = vsub.f32 %v4049, %v6092
        %v6125 = vsub.f32 %v4050, %v6093
        %v6126 = vsub.f32 %v4051, %v6094
        %v6127 = vsub.f32 %v4052, %v6095
        %v6128 = vsub.f32 %v4053, %v6096
        %v6129 = vsub.f32 %v4054, %v6097
        %v6130 = vsub.f32 %v4055, %v6098
        %v6131 = vsub.f32 %v4056, %v6099
        %v6132 = vsub.f32 %v4057, %v6100
        %v6133 = vsub.f32 %v4058, %v6101
        %v6134 = vsub.f32 %v4059, %v6102
        %v6135 = vsub.f32 %v4060, %v6103
        %v6136 = vsub.f32 %v4061, %v6104
        %v6137 = vsub.f32 %v4062, %v6105
        %v6138 = vsub.f32 %v4063, %v6106
        %v6139 = vsub.f32 %v4064, %v6107
        %v6140 = vsub.f32 %v4065, %v6108
        %v6141 = vsub.f32 %v4066, %v6109
        %v6142 = vadd.f32 %v4067, %v6046
        %v6143 = vadd.f32 %v4068, %v6047
        %v6144 = vadd.f32 %v4069, %v6048
        %v6145 = vadd.f32 %v4070, %v6049
        %v6146 = vadd.f32 %v4071, %v6050
        %v6147 = vadd.f32 %v4072, %v6051
        %v6148 = vadd.f32 %v4073, %v6052
        %v6149 = vadd.f32 %v4074, %v6053
        %v6150 = vadd.f32 %v4075, %v6054
        %v6151 = vadd.f32 %v4076, %v6055
        %v6152 = vadd.f32 %v4077, %v6056
        %v6153 = vadd.f32 %v4078, %v6057
        %v6154 = vadd.f32 %v4079, %v6058
        %v6155 = vadd.f32 %v4080, %v6059
        %v6156 = vadd.f32 %v4081, %v6060
        %v6157 = vadd.f32 %v4082, %v6061
        %v6158 = vadd.f32 %v4083, %v6062
        %v6159 = vadd.f32 %v4084, %v6063
        %v6160 = vadd.f32 %v4085, %v6064
        %v6161 = vadd.f32 %v4086, %v6065
        %v6162 = vadd.f32 %v4087, %v6066
        %v6163 = vadd.f32 %v4088, %v6067
        %v6164 = vadd.f32 %v4089, %v6068
        %v6165 = vadd.f32 %v4090, %v6069
        %v6166 = vadd.f32 %v4091, %v6070
        %v6167 = vadd.f32 %v4092, %v6071
        %v6168 = vadd.f32 %v4093, %v6072
        %v6169 = vadd.f32 %v4094, %v6073
        %v6170 = vadd.f32 %v4095, %v6074
        %v6171 = vadd.f32 %v4096, %v6075
        %v6172 = vadd.f32 %v4097, %v6076
        %v6173 = vadd.f32 %v4098, %v6077
        %v6174 = vadd.f32 %v4099, %v6078
        %v6175 = vadd.f32 %v4100, %v6079
        %v6176 = vadd.f32 %v4101, %v6080
        %v6177 = vadd.f32 %v4102, %v6081
        %v6178 = vadd.f32 %v4103, %v6082
        %v6179 = vadd.f32 %v4104, %v6083
        %v6180 = vadd.f32 %v4105, %v6084
        %v6181 = vadd.f32 %v4106, %v6085
        %v6182 = vadd.f32 %v4107, %v6086
        %v6183 = vadd.f32 %v4108, %v6087
        %v6184 = vadd.f32 %v4109, %v6088
        %v6185 = vadd.f32 %v4110, %v6089
        %v6186 = vadd.f32 %v4111, %v6090
        %v6187 = vadd.f32 %v4112, %v6091
        %v6188 = vadd.f32 %v4113, %v6092
        %v6189 = vadd.f32 %v4114, %v6093
        %v6190 = vadd.f32 %v4115, %v6094
        %v6191 = vadd.f32 %v4116, %v6095
        %v6192 = vadd.f32 %v4117, %v6096
        %v6193 = vadd.f32 %v4118, %v6097
        %v6194 = vadd.f32 %v4119, %v6098
        %v6195 = vadd.f32 %v4120, %v6099
        %v6196 = vadd.f32 %v4121, %v6100
        %v6197 = vadd.f32 %v4122, %v6101
        %v6198 = vadd.f32 %v4123, %v6102
        %v6199 = vadd.f32 %v4124, %v6103
        %v6200 = vadd.f32 %v4125, %v6104
        %v6201 = vadd.f32 %v4126, %v6105
        %v6202 = vadd.f32 %v4127, %v6106
        %v6203 = vadd.f32 %v4128, %v6107
        %v6204 = vadd.f32 %v4129, %v6108
        %v6205 = vadd.f32 %v4130, %v6109
        %v6206 = vcvt.s32.f32 %v5310
        %v6207 = vcvt.s32.f32 %v5312
        %v6208 = vcvt.s32.f32 %v5314
        %v6209 = vcvt.s32.f32 %v5316
        %v6210 = vcvt.s32.f32 %v5318
        %v6211 = vcvt.s32.f32 %v5320
        %v6212 = vcvt.s32.f32 %v5322
        %v6213 = vcvt.s32.f32 %v5324
        %v6214 = vcvt.s32.f32 %v5326
        %v6215 = vcvt.s32.f32 %v5328
        %v6216 = vcvt.s32.f32 %v5330
        %v6217 = vcvt.s32.f32 %v5332
        %v6218 = vcvt.s32.f32 %v5334
        %v6219 = vcvt.s32.f32 %v5336
        %v6220 = vcvt.s32.f32 %v5338
        %v6221 = vcvt.s32.f32 %v5340
        %v6222 = vcvt.s32.f32 %v5342
        %v6223 = vcvt.s32.f32 %v5344
        %v6224 = vcvt.s32.f32 %v5346
        %v6225 = vcvt.s32.f32 %v5348
        %v6226 = vcvt.s32.f32 %v5350
        %v6227 = vcvt.s32.f32 %v5352
        %v6228 = vcvt.s32.f32 %v5354
        %v6229 = vcvt.s32.f32 %v5356
        %v6230 = vcvt.s32.f32 %v5358
        %v6231 = vcvt.s32.f32 %v5360
        %v6232 = vcvt.s32.f32 %v5362
        %v6233 = vcvt.s32.f32 %v5364
        %v6234 = vcvt.s32.f32 %v5366
        %v6235 = vcvt.s32.f32 %v5368
        %v6236 = vcvt.s32.f32 %v5370
        %v6237 = vcvt.s32.f32 %v5372
        %v6238 = vsub.f32 %v210, %v6142
        %v6239 = vsub.f32 %v211, %v6143
        %v6240 = vsub.f32 %v212, %v6144
        %v6241 = vsub.f32 %v213, %v6145
        %v6242 = vsub.f32 %v214, %v6146
        %v6243 = vsub.f32 %v215, %v6147
        %v6244 = vsub.f32 %v216, %v6148
        %v6245 = vsub.f32 %v217, %v6149
        %v6246 = vsub.f32 %v218, %v6150
        %v6247 = vsub.f32 %v219, %v6151
        %v6248 = vsub.f32 %v220, %v6152
        %v6249 = vsub.f32 %v221, %v6153
        %v6250 = vsub.f32 %v222, %v6154
        %v6251 = vsub.f32 %v223, %v6155
        %v6252 = vsub.f32 %v224, %v6156
        %v6253 = vsub.f32 %v225, %v6157
        %v6254 = vsub.f32 %v226, %v6158
        %v6255 = vsub.f32 %v227, %v6159
        %v6256 = vsub.f32 %v228, %v6160
        %v6257 = vsub.f32 %v229, %v6161
        %v6258 = vsub.f32 %v230, %v6162
        %v6259 = vsub.f32 %v231, %v6163
        %v6260 = vsub.f32 %v232, %v6164
        %v6261 = vsub.f32 %v233, %v6165
        %v6262 = vsub.f32 %v234, %v6166
        %v6263 = vsub.f32 %v235, %v6167
        %v6264 = vsub.f32 %v236, %v6168
        %v6265 = vsub.f32 %v237, %v6169
        %v6266 = vsub.f32 %v238, %v6170
        %v6267 = vsub.f32 %v239, %v6171
        %v6268 = vsub.f32 %v240, %v6172
        %v6269 = vsub.f32 %v241, %v6173
        %v6270 = vsub.f32 %v210, %v6174
        %v6271 = vsub.f32 %v211, %v6175
        %v6272 = vsub.f32 %v212, %v6176
        %v6273 = vsub.f32 %v213, %v6177
        %v6274 = vsub.f32 %v214, %v6178
        %v6275 = vsub.f32 %v215, %v6179
        %v6276 = vsub.f32 %v216, %v6180
        %v6277 = vsub.f32 %v217, %v6181
        %v6278 = vsub.f32 %v218, %v6182
        %v6279 = vsub.f32 %v219, %v6183
        %v6280 = vsub.f32 %v220, %v6184
        %v6281 = vsub.f32 %v221, %v6185
        %v6282 = vsub.f32 %v222, %v6186
        %v6283 = vsub.f32 %v223, %v6187
        %v6284 = vsub.f32 %v224, %v6188
        %v6285 = vsub.f32 %v225, %v6189
        %v6286 = vsub.f32 %v226, %v6190
        %v6287 = vsub.f32 %v227, %v6191
        %v6288 = vsub.f32 %v228, %v6192
        %v6289 = vsub.f32 %v229, %v6193
        %v6290 = vsub.f32 %v230, %v6194
        %v6291 = vsub.f32 %v231, %v6195
        %v6292 = vsub.f32 %v232, %v6196
        %v6293 = vsub.f32 %v233, %v6197
        %v6294 = vsub.f32 %v234, %v6198
        %v6295 = vsub.f32 %v235, %v6199
        %v6296 = vsub.f32 %v236, %v6200
        %v6297 = vsub.f32 %v237, %v6201
        %v6298 = vsub.f32 %v238, %v6202
        %v6299 = vsub.f32 %v239, %v6203
        %v6300 = vsub.f32 %v240, %v6204
        %v6301 = vsub.f32 %v241, %v6205
        %v6302 = vmul.f32 %v6238, %v6238
        %v6303 = vmul.f32 %v6239, %v6239
        %v6304 = vmul.f32 %v6240, %v6240
        %v6305 = vmul.f32 %v6241, %v6241
        %v6306 = vmul.f32 %v6242, %v6242
        %v6307 = vmul.f32 %v6243, %v6243
        %v6308 = vmul.f32 %v6244, %v6244
        %v6309 = vmul.f32 %v6245, %v6245
        %v6310 = vmul.f32 %v6246, %v6246
        %v6311 = vmul.f32 %v6247, %v6247
        %v6312 = vmul.f32 %v6248, %v6248
        %v6313 = vmul.f32 %v6249, %v6249
        %v6314 = vmul.f32 %v6250, %v6250
        %v6315 = vmul.f32 %v6251, %v6251
        %v6316 = vmul.f32 %v6252, %v6252
        %v6317 = vmul.f32 %v6253, %v6253
        %v6318 = vmul.f32 %v6254, %v6254
        %v6319 = vmul.f32 %v6255, %v6255
        %v6320 = vmul.f32 %v6256, %v6256
        %v6321 = vmul.f32 %v6257, %v6257
        %v6322 = vmul.f32 %v6258, %v6258
        %v6323 = vmul.f32 %v6259, %v6259
        %v6324 = vmul.f32 %v6260, %v6260
        %v6325 = vmul.f32 %v6261, %v6261
        %v6326 = vmul.f32 %v6262, %v6262
        %v6327 = vmul.f32 %v6263, %v6263
        %v6328 = vmul.f32 %v6264, %v6264
        %v6329 = vmul.f32 %v6265, %v6265
        %v6330 = vmul.f32 %v6266, %v6266
        %v6331 = vmul.f32 %v6267, %v6267
        %v6332 = vmul.f32 %v6268, %v6268
        %v6333 = vmul.f32 %v6269, %v6269
        %v6334 = vsel %vm408, %v6302, 0.0
        %6335 = vadd.xlane.f32.xlu0 %v6334
        %v6336 = vpop.xlane.xlu0 %6335
        %v6337 = vsel %vm408, %v6303, 0.0
        %6338 = vadd.xlane.f32.xlu0 %v6337
        %v6339 = vpop.xlane.xlu0 %6338
        %v6340 = vsel %vm408, %v6304, 0.0
        %6341 = vadd.xlane.f32.xlu0 %v6340
        %v6342 = vpop.xlane.xlu0 %6341
        %v6343 = vsel %vm408, %v6305, 0.0
        %6344 = vadd.xlane.f32.xlu0 %v6343
        %v6345 = vpop.xlane.xlu0 %6344
        %v6346 = vsel %vm408, %v6306, 0.0
        %6347 = vadd.xlane.f32.xlu0 %v6346
        %v6348 = vpop.xlane.xlu0 %6347
        %v6349 = vsel %vm408, %v6307, 0.0
        %6350 = vadd.xlane.f32.xlu0 %v6349
        %v6351 = vpop.xlane.xlu0 %6350
        %v6352 = vsel %vm408, %v6308, 0.0
        %6353 = vadd.xlane.f32.xlu0 %v6352
        %v6354 = vpop.xlane.xlu0 %6353
        %v6355 = vsel %vm408, %v6309, 0.0
        %6356 = vadd.xlane.f32.xlu0 %v6355
        %v6357 = vpop.xlane.xlu0 %6356
        %v6358 = vsel %vm408, %v6310, 0.0
        %6359 = vadd.xlane.f32.xlu0 %v6358
        %v6360 = vpop.xlane.xlu0 %6359
        %v6361 = vsel %vm408, %v6311, 0.0
        %6362 = vadd.xlane.f32.xlu0 %v6361
        %v6363 = vpop.xlane.xlu0 %6362
        %v6364 = vsel %vm408, %v6312, 0.0
        %6365 = vadd.xlane.f32.xlu0 %v6364
        %v6366 = vpop.xlane.xlu0 %6365
        %v6367 = vsel %vm408, %v6313, 0.0
        %6368 = vadd.xlane.f32.xlu0 %v6367
        %v6369 = vpop.xlane.xlu0 %6368
        %v6370 = vsel %vm408, %v6314, 0.0
        %6371 = vadd.xlane.f32.xlu0 %v6370
        %v6372 = vpop.xlane.xlu0 %6371
        %v6373 = vsel %vm408, %v6315, 0.0
        %6374 = vadd.xlane.f32.xlu0 %v6373
        %v6375 = vpop.xlane.xlu0 %6374
        %v6376 = vsel %vm408, %v6316, 0.0
        %6377 = vadd.xlane.f32.xlu0 %v6376
        %v6378 = vpop.xlane.xlu0 %6377
        %v6379 = vsel %vm408, %v6317, 0.0
        %6380 = vadd.xlane.f32.xlu0 %v6379
        %v6381 = vpop.xlane.xlu0 %6380
        %v6382 = vsel %vm408, %v6318, 0.0
        %6383 = vadd.xlane.f32.xlu0 %v6382
        %v6384 = vpop.xlane.xlu0 %6383
        %v6385 = vsel %vm408, %v6319, 0.0
        %6386 = vadd.xlane.f32.xlu0 %v6385
        %v6387 = vpop.xlane.xlu0 %6386
        %v6388 = vsel %vm408, %v6320, 0.0
        %6389 = vadd.xlane.f32.xlu0 %v6388
        %v6390 = vpop.xlane.xlu0 %6389
        %v6391 = vsel %vm408, %v6321, 0.0
        %6392 = vadd.xlane.f32.xlu0 %v6391
        %v6393 = vpop.xlane.xlu0 %6392
        %v6394 = vsel %vm408, %v6322, 0.0
        %6395 = vadd.xlane.f32.xlu0 %v6394
        %v6396 = vpop.xlane.xlu0 %6395
        %v6397 = vsel %vm408, %v6323, 0.0
        %6398 = vadd.xlane.f32.xlu0 %v6397
        %v6399 = vpop.xlane.xlu0 %6398
        %v6400 = vsel %vm408, %v6324, 0.0
        %6401 = vadd.xlane.f32.xlu0 %v6400
        %v6402 = vpop.xlane.xlu0 %6401
        %v6403 = vsel %vm408, %v6325, 0.0
        %6404 = vadd.xlane.f32.xlu0 %v6403
        %v6405 = vpop.xlane.xlu0 %6404
        %v6406 = vsel %vm408, %v6326, 0.0
        %6407 = vadd.xlane.f32.xlu0 %v6406
        %v6408 = vpop.xlane.xlu0 %6407
        %v6409 = vsel %vm408, %v6327, 0.0
        %6410 = vadd.xlane.f32.xlu0 %v6409
        %v6411 = vpop.xlane.xlu0 %6410
        %v6412 = vsel %vm408, %v6328, 0.0
        %6413 = vadd.xlane.f32.xlu0 %v6412
        %v6414 = vpop.xlane.xlu0 %6413
        %v6415 = vsel %vm408, %v6329, 0.0
        %6416 = vadd.xlane.f32.xlu0 %v6415
        %v6417 = vpop.xlane.xlu0 %6416
        %v6418 = vsel %vm408, %v6330, 0.0
        %6419 = vadd.xlane.f32.xlu0 %v6418
        %v6420 = vpop.xlane.xlu0 %6419
        %v6421 = vsel %vm408, %v6331, 0.0
        %6422 = vadd.xlane.f32.xlu0 %v6421
        %v6423 = vpop.xlane.xlu0 %6422
        %v6424 = vsel %vm408, %v6332, 0.0
        %6425 = vadd.xlane.f32.xlu0 %v6424
        %v6426 = vpop.xlane.xlu0 %6425
        %v6427 = vsel %vm408, %v6333, 0.0
        %6428 = vadd.xlane.f32.xlu0 %v6427
        %v6429 = vpop.xlane.xlu0 %6428
        %v6430 = vadd.f32 %v6336, %v6339
        %v6431 = vadd.f32 %v6430, %v6342
        %v6432 = vadd.f32 %v6431, %v6345
        %v6433 = vadd.f32 %v6432, %v6348
        %v6434 = vadd.f32 %v6433, %v6351
        %v6435 = vadd.f32 %v6434, %v6354
        %v6436 = vadd.f32 %v6435, %v6357
        %v6437 = vadd.f32 %v6436, %v6360
        %v6438 = vadd.f32 %v6437, %v6363
        %v6439 = vadd.f32 %v6438, %v6366
        %v6440 = vadd.f32 %v6439, %v6369
        %v6441 = vadd.f32 %v6440, %v6372
        %v6442 = vadd.f32 %v6441, %v6375
        %v6443 = vadd.f32 %v6442, %v6378
        %v6444 = vadd.f32 %v6443, %v6381
        %v6445 = vadd.f32 %v6444, %v6384
        %v6446 = vadd.f32 %v6445, %v6387
        %v6447 = vadd.f32 %v6446, %v6390
        %v6448 = vadd.f32 %v6447, %v6393
        %v6449 = vadd.f32 %v6448, %v6396
        %v6450 = vadd.f32 %v6449, %v6399
        %v6451 = vadd.f32 %v6450, %v6402
        %v6452 = vadd.f32 %v6451, %v6405
        %v6453 = vadd.f32 %v6452, %v6408
        %v6454 = vadd.f32 %v6453, %v6411
        %v6455 = vadd.f32 %v6454, %v6414
        %v6456 = vadd.f32 %v6455, %v6417
        %v6457 = vadd.f32 %v6456, %v6420
        %v6458 = vadd.f32 %v6457, %v6423
        %v6459 = vadd.f32 %v6458, %v6426
        %v6460 = vadd.f32 %v6459, %v6429
        %v6461 = vrot.slane %v6460, 4
        %v6462 = vadd.f32 %v6460, %v6461
        %v6463 = vrot.slane %v6462, 2
        %v6464 = vadd.f32 %v6462, %v6463
        %v6465 = vrot.slane %v6464, 1
        %v6466 = vadd.f32 %v6464, %v6465
        %v6467 = vadd.f32 %v4392, %v6466
        %v6468 = vmul.f32 %v6270, %v6270
        %v6469 = vmul.f32 %v6271, %v6271
        %v6470 = vmul.f32 %v6272, %v6272
        %v6471 = vmul.f32 %v6273, %v6273
        %v6472 = vmul.f32 %v6274, %v6274
        %v6473 = vmul.f32 %v6275, %v6275
        %v6474 = vmul.f32 %v6276, %v6276
        %v6475 = vmul.f32 %v6277, %v6277
        %v6476 = vmul.f32 %v6278, %v6278
        %v6477 = vmul.f32 %v6279, %v6279
        %v6478 = vmul.f32 %v6280, %v6280
        %v6479 = vmul.f32 %v6281, %v6281
        %v6480 = vmul.f32 %v6282, %v6282
        %v6481 = vmul.f32 %v6283, %v6283
        %v6482 = vmul.f32 %v6284, %v6284
        %v6483 = vmul.f32 %v6285, %v6285
        %v6484 = vmul.f32 %v6286, %v6286
        %v6485 = vmul.f32 %v6287, %v6287
        %v6486 = vmul.f32 %v6288, %v6288
        %v6487 = vmul.f32 %v6289, %v6289
        %v6488 = vmul.f32 %v6290, %v6290
        %v6489 = vmul.f32 %v6291, %v6291
        %v6490 = vmul.f32 %v6292, %v6292
        %v6491 = vmul.f32 %v6293, %v6293
        %v6492 = vmul.f32 %v6294, %v6294
        %v6493 = vmul.f32 %v6295, %v6295
        %v6494 = vmul.f32 %v6296, %v6296
        %v6495 = vmul.f32 %v6297, %v6297
        %v6496 = vmul.f32 %v6298, %v6298
        %v6497 = vmul.f32 %v6299, %v6299
        %v6498 = vmul.f32 %v6300, %v6300
        %v6499 = vmul.f32 %v6301, %v6301
        %v6500 = vsel %vm408, %v6468, 0.0
        %6501 = vadd.xlane.f32.xlu0 %v6500
        %v6502 = vpop.xlane.xlu0 %6501
        %v6503 = vsel %vm408, %v6469, 0.0
        %6504 = vadd.xlane.f32.xlu0 %v6503
        %v6505 = vpop.xlane.xlu0 %6504
        %v6506 = vsel %vm408, %v6470, 0.0
        %6507 = vadd.xlane.f32.xlu0 %v6506
        %v6508 = vpop.xlane.xlu0 %6507
        %v6509 = vsel %vm408, %v6471, 0.0
        %6510 = vadd.xlane.f32.xlu0 %v6509
        %v6511 = vpop.xlane.xlu0 %6510
        %v6512 = vsel %vm408, %v6472, 0.0
        %6513 = vadd.xlane.f32.xlu0 %v6512
        %v6514 = vpop.xlane.xlu0 %6513
        %v6515 = vsel %vm408, %v6473, 0.0
        %6516 = vadd.xlane.f32.xlu0 %v6515
        %v6517 = vpop.xlane.xlu0 %6516
        %v6518 = vsel %vm408, %v6474, 0.0
        %6519 = vadd.xlane.f32.xlu0 %v6518
        %v6520 = vpop.xlane.xlu0 %6519
        %v6521 = vsel %vm408, %v6475, 0.0
        %6522 = vadd.xlane.f32.xlu0 %v6521
        %v6523 = vpop.xlane.xlu0 %6522
        %v6524 = vsel %vm408, %v6476, 0.0
        %6525 = vadd.xlane.f32.xlu0 %v6524
        %v6526 = vpop.xlane.xlu0 %6525
        %v6527 = vsel %vm408, %v6477, 0.0
        %6528 = vadd.xlane.f32.xlu0 %v6527
        %v6529 = vpop.xlane.xlu0 %6528
        %v6530 = vsel %vm408, %v6478, 0.0
        %6531 = vadd.xlane.f32.xlu0 %v6530
        %v6532 = vpop.xlane.xlu0 %6531
        %v6533 = vsel %vm408, %v6479, 0.0
        %6534 = vadd.xlane.f32.xlu0 %v6533
        %v6535 = vpop.xlane.xlu0 %6534
        %v6536 = vsel %vm408, %v6480, 0.0
        %6537 = vadd.xlane.f32.xlu0 %v6536
        %v6538 = vpop.xlane.xlu0 %6537
        %v6539 = vsel %vm408, %v6481, 0.0
        %6540 = vadd.xlane.f32.xlu0 %v6539
        %v6541 = vpop.xlane.xlu0 %6540
        %v6542 = vsel %vm408, %v6482, 0.0
        %6543 = vadd.xlane.f32.xlu0 %v6542
        %v6544 = vpop.xlane.xlu0 %6543
        %v6545 = vsel %vm408, %v6483, 0.0
        %6546 = vadd.xlane.f32.xlu0 %v6545
        %v6547 = vpop.xlane.xlu0 %6546
        %v6548 = vsel %vm408, %v6484, 0.0
        %6549 = vadd.xlane.f32.xlu0 %v6548
        %v6550 = vpop.xlane.xlu0 %6549
        %v6551 = vsel %vm408, %v6485, 0.0
        %6552 = vadd.xlane.f32.xlu0 %v6551
        %v6553 = vpop.xlane.xlu0 %6552
        %v6554 = vsel %vm408, %v6486, 0.0
        %6555 = vadd.xlane.f32.xlu0 %v6554
        %v6556 = vpop.xlane.xlu0 %6555
        %v6557 = vsel %vm408, %v6487, 0.0
        %6558 = vadd.xlane.f32.xlu0 %v6557
        %v6559 = vpop.xlane.xlu0 %6558
        %v6560 = vsel %vm408, %v6488, 0.0
        %6561 = vadd.xlane.f32.xlu0 %v6560
        %v6562 = vpop.xlane.xlu0 %6561
        %v6563 = vsel %vm408, %v6489, 0.0
        %6564 = vadd.xlane.f32.xlu0 %v6563
        %v6565 = vpop.xlane.xlu0 %6564
        %v6566 = vsel %vm408, %v6490, 0.0
        %6567 = vadd.xlane.f32.xlu0 %v6566
        %v6568 = vpop.xlane.xlu0 %6567
        %v6569 = vsel %vm408, %v6491, 0.0
        %6570 = vadd.xlane.f32.xlu0 %v6569
        %v6571 = vpop.xlane.xlu0 %6570
        %v6572 = vsel %vm408, %v6492, 0.0
        %6573 = vadd.xlane.f32.xlu0 %v6572
        %v6574 = vpop.xlane.xlu0 %6573
        %v6575 = vsel %vm408, %v6493, 0.0
        %6576 = vadd.xlane.f32.xlu0 %v6575
        %v6577 = vpop.xlane.xlu0 %6576
        %v6578 = vsel %vm408, %v6494, 0.0
        %6579 = vadd.xlane.f32.xlu0 %v6578
        %v6580 = vpop.xlane.xlu0 %6579
        %v6581 = vsel %vm408, %v6495, 0.0
        %6582 = vadd.xlane.f32.xlu0 %v6581
        %v6583 = vpop.xlane.xlu0 %6582
        %v6584 = vsel %vm408, %v6496, 0.0
        %6585 = vadd.xlane.f32.xlu0 %v6584
        %v6586 = vpop.xlane.xlu0 %6585
        %v6587 = vsel %vm408, %v6497, 0.0
        %6588 = vadd.xlane.f32.xlu0 %v6587
        %v6589 = vpop.xlane.xlu0 %6588
        %v6590 = vsel %vm408, %v6498, 0.0
        %6591 = vadd.xlane.f32.xlu0 %v6590
        %v6592 = vpop.xlane.xlu0 %6591
        %v6593 = vsel %vm408, %v6499, 0.0
        %6594 = vadd.xlane.f32.xlu0 %v6593
        %v6595 = vpop.xlane.xlu0 %6594
        %v6596 = vadd.f32 %v6502, %v6505
        %v6597 = vadd.f32 %v6596, %v6508
        %v6598 = vadd.f32 %v6597, %v6511
        %v6599 = vadd.f32 %v6598, %v6514
        %v6600 = vadd.f32 %v6599, %v6517
        %v6601 = vadd.f32 %v6600, %v6520
        %v6602 = vadd.f32 %v6601, %v6523
        %v6603 = vadd.f32 %v6602, %v6526
        %v6604 = vadd.f32 %v6603, %v6529
        %v6605 = vadd.f32 %v6604, %v6532
        %v6606 = vadd.f32 %v6605, %v6535
        %v6607 = vadd.f32 %v6606, %v6538
        %v6608 = vadd.f32 %v6607, %v6541
        %v6609 = vadd.f32 %v6608, %v6544
        %v6610 = vadd.f32 %v6609, %v6547
        %v6611 = vadd.f32 %v6610, %v6550
        %v6612 = vadd.f32 %v6611, %v6553
        %v6613 = vadd.f32 %v6612, %v6556
        %v6614 = vadd.f32 %v6613, %v6559
        %v6615 = vadd.f32 %v6614, %v6562
        %v6616 = vadd.f32 %v6615, %v6565
        %v6617 = vadd.f32 %v6616, %v6568
        %v6618 = vadd.f32 %v6617, %v6571
        %v6619 = vadd.f32 %v6618, %v6574
        %v6620 = vadd.f32 %v6619, %v6577
        %v6621 = vadd.f32 %v6620, %v6580
        %v6622 = vadd.f32 %v6621, %v6583
        %v6623 = vadd.f32 %v6622, %v6586
        %v6624 = vadd.f32 %v6623, %v6589
        %v6625 = vadd.f32 %v6624, %v6592
        %v6626 = vadd.f32 %v6625, %v6595
        %v6627 = vrot.slane %v6626, 4
        %v6628 = vadd.f32 %v6626, %v6627
        %v6629 = vrot.slane %v6628, 2
        %v6630 = vadd.f32 %v6628, %v6629
        %v6631 = vrot.slane %v6630, 1
        %v6632 = vadd.f32 %v6630, %v6631
        %v6633 = vadd.f32 %v4558, %v6632
        %s6634 = scalar_lea.vmem %s1, 48
        %v6635 = vld [vmem:[%s6634] sm:$0xff]
        %v6636 = vld [vmem:[%s6634 + $0x8] sm:$0xff]
        %v6638 = vsel %vm408, %v6110, 0
        %v6641 = vsel %vm408, %v6111, 0
        %v6644 = vsel %vm408, %v6112, 0
        %v6647 = vsel %vm408, %v6113, 0
        %v6650 = vsel %vm408, %v6114, 0
        %v6653 = vsel %vm408, %v6115, 0
        %v6656 = vsel %vm408, %v6116, 0
        %v6659 = vsel %vm408, %v6117, 0
        %v6662 = vsel %vm408, %v6118, 0
        %v6665 = vsel %vm408, %v6119, 0
        %v6668 = vsel %vm408, %v6120, 0
        %v6671 = vsel %vm408, %v6121, 0
        %v6674 = vsel %vm408, %v6122, 0
        %v6677 = vsel %vm408, %v6123, 0
        %v6680 = vsel %vm408, %v6124, 0
        %v6683 = vsel %vm408, %v6125, 0
        %v6686 = vsel %vm408, %v6126, 0
        %v6689 = vsel %vm408, %v6127, 0
        %v6692 = vsel %vm408, %v6128, 0
        %v6695 = vsel %vm408, %v6129, 0
        %v6698 = vsel %vm408, %v6130, 0
        %v6701 = vsel %vm408, %v6131, 0
        %v6704 = vsel %vm408, %v6132, 0
        %v6707 = vsel %vm408, %v6133, 0
        %v6710 = vsel %vm408, %v6134, 0
        %v6713 = vsel %vm408, %v6135, 0
        %v6716 = vsel %vm408, %v6136, 0
        %v6719 = vsel %vm408, %v6137, 0
        %v6722 = vsel %vm408, %v6138, 0
        %v6725 = vsel %vm408, %v6139, 0
        %v6728 = vsel %vm408, %v6140, 0
        %v6731 = vsel %vm408, %v6141, 0
        %v6734 = vsel %vm408, %v6635, 0
        %v6737 = vsel %vm408, %v6636, 0
        %6739 = vmatprep.subr.mxu0 0.0
        %6740 = vmatpush1.xpose.msra.mxu0 %v6734
        %6741 = vmatprep.subr.mxu0 0.0
        %6742 = vmatpush1.xpose.msra.mxu0 %v6737
        %6743 = vmatprep.subr.mxu0 0.0
        %6744 = vmatpush1.xpose.msra.mxu0 0.0
        %6745 = vmatprep.subr.mxu0 0.0
        %6746 = vmatpush1.xpose.msra.mxu0 0.0
        %6747 = vmatprep.subr.mxu0 0.0
        %6748 = vmatpush1.xpose.msra.mxu0 0.0
        %6749 = vmatprep.subr.mxu0 0.0
        %6750 = vmatpush1.xpose.msra.mxu0 0.0
        %6751 = vmatprep.subr.mxu0 0.0
        %6752 = vmatpush1.xpose.msra.mxu0 0.0
        %6753 = vmatprep.subr.mxu0 0.0
        %6754 = vmatpush1.xpose.msra.mxu0 0.0
        %6755 = vmatprep.subr.mxu0 0.0
        %6756 = vmatpush1.xpose.msra.mxu0 0.0
        %6757 = vmatprep.subr.mxu0 0.0
        %6758 = vmatpush1.xpose.msra.mxu0 0.0
        %6759 = vmatprep.subr.mxu0 0.0
        %6760 = vmatpush1.xpose.msra.mxu0 0.0
        %6761 = vmatprep.subr.mxu0 0.0
        %6762 = vmatpush1.xpose.msra.mxu0 0.0
        %6763 = vmatprep.subr.mxu0 0.0
        %6764 = vmatpush1.xpose.msra.mxu0 0.0
        %6765 = vmatprep.subr.mxu0 0.0
        %6766 = vmatpush1.xpose.msra.mxu0 0.0
        %6767 = vmatprep.subr.mxu0 0.0
        %6768 = vmatpush1.xpose.msra.mxu0 0.0
        %6769 = vmatprep.subr.mxu0 0.0
        %6770 = vmatpush1.xpose.msra.mxu0 0.0
        %6771 = vmatprep.subr.mxu0 0.0
        %6772 = vmatpush1.xpose.msra.mxu0 0.0
        %6773 = vmatprep.subr.mxu0 0.0
        %6774 = vmatpush1.xpose.msra.mxu0 0.0
        %6775 = vmatprep.subr.mxu0 0.0
        %6776 = vmatpush1.xpose.msra.mxu0 0.0
        %6777 = vmatprep.subr.mxu0 0.0
        %6778 = vmatpush1.xpose.msra.mxu0 0.0
        %6779 = vmatprep.subr.mxu0 0.0
        %6780 = vmatpush1.xpose.msra.mxu0 0.0
        %6781 = vmatprep.subr.mxu0 0.0
        %6782 = vmatpush1.xpose.msra.mxu0 0.0
        %6783 = vmatprep.subr.mxu0 0.0
        %6784 = vmatpush1.xpose.msra.mxu0 0.0
        %6785 = vmatprep.subr.mxu0 0.0
        %6786 = vmatpush1.xpose.msra.mxu0 0.0
        %6787 = vmatprep.subr.mxu0 0.0
        %6788 = vmatpush1.xpose.msra.mxu0 0.0
        %6789 = vmatprep.subr.mxu0 0.0
        %6790 = vmatpush1.xpose.msra.mxu0 0.0
        %6791 = vmatprep.subr.mxu0 0.0
        %6792 = vmatpush1.xpose.msra.mxu0 0.0
        %6793 = vmatprep.subr.mxu0 0.0
        %6794 = vmatpush1.xpose.msra.mxu0 0.0
        %6795 = vmatprep.subr.mxu0 0.0
        %6796 = vmatpush1.xpose.msra.mxu0 0.0
        %6797 = vmatprep.subr.mxu0 0.0
        %6798 = vmatpush1.xpose.msra.mxu0 0.0
        %6799 = vmatprep.subr.mxu0 0.0
        %6800 = vmatpush1.xpose.msra.mxu0 0.0
        %6801 = vmatprep.subr.mxu0 0.0
        %6802 = vmatpush1.xpose.msra.mxu0 0.0
        %6803 = vmatprep.mubr.f32.mxu0 0.0
        %6804 = vmatmul.mubr.f32.gmra.mrb[0].mxu0 %v6638
        %v6805 = vpop.f32.mrb[0].mxu0
        %v6806 = vadd.f32 0.0, %v6805
        %v6807 = vpop.f32.mrb[0].mxu0
        %6808 = vmatprep.mubr.f32.mxu0 0.0
        %6809 = vmatmul.mubr.f32.gmra.mrb[0].mxu0 %v6641
        %v6810 = vpop.f32.mrb[0].mxu0
        %v6811 = vadd.f32 0.0, %v6810
        %v6812 = vpop.f32.mrb[0].mxu0
        %6813 = vmatprep.mubr.f32.mxu0 0.0
        %6814 = vmatmul.mubr.f32.gmra.mrb[0].mxu0 %v6644
        %v6815 = vpop.f32.mrb[0].mxu0
        %v6816 = vadd.f32 0.0, %v6815
        %v6817 = vpop.f32.mrb[0].mxu0
        %6818 = vmatprep.mubr.f32.mxu0 0.0
        %6819 = vmatmul.mubr.f32.gmra.mrb[0].mxu0 %v6647
        %v6820 = vpop.f32.mrb[0].mxu0
        %v6821 = vadd.f32 0.0, %v6820
        %v6822 = vpop.f32.mrb[0].mxu0
        %6823 = vmatprep.mubr.f32.mxu0 0.0
        %6824 = vmatmul.mubr.f32.gmra.mrb[0].mxu0 %v6650
        %v6825 = vpop.f32.mrb[0].mxu0
        %v6826 = vadd.f32 0.0, %v6825
        %v6827 = vpop.f32.mrb[0].mxu0
        %6828 = vmatprep.mubr.f32.mxu0 0.0
        %6829 = vmatmul.mubr.f32.gmra.mrb[0].mxu0 %v6653
        %v6830 = vpop.f32.mrb[0].mxu0
        %v6831 = vadd.f32 0.0, %v6830
        %v6832 = vpop.f32.mrb[0].mxu0
        %6833 = vmatprep.mubr.f32.mxu0 0.0
        %6834 = vmatmul.mubr.f32.gmra.mrb[0].mxu0 %v6656
        %v6835 = vpop.f32.mrb[0].mxu0
        %v6836 = vadd.f32 0.0, %v6835
        %v6837 = vpop.f32.mrb[0].mxu0
        %6838 = vmatprep.mubr.f32.mxu0 0.0
        %6839 = vmatmul.mubr.f32.gmra.mrb[0].mxu0 %v6659
        %v6840 = vpop.f32.mrb[0].mxu0
        %v6841 = vadd.f32 0.0, %v6840
        %v6842 = vpop.f32.mrb[0].mxu0
        %6843 = vmatprep.mubr.f32.mxu0 0.0
        %6844 = vmatmul.mubr.f32.gmra.mrb[0].mxu0 %v6662
        %v6845 = vpop.f32.mrb[0].mxu0
        %v6846 = vadd.f32 0.0, %v6845
        %v6847 = vpop.f32.mrb[0].mxu0
        %6848 = vmatprep.mubr.f32.mxu0 0.0
        %6849 = vmatmul.mubr.f32.gmra.mrb[0].mxu0 %v6665
        %v6850 = vpop.f32.mrb[0].mxu0
        %v6851 = vadd.f32 0.0, %v6850
        %v6852 = vpop.f32.mrb[0].mxu0
        %6853 = vmatprep.mubr.f32.mxu0 0.0
        %6854 = vmatmul.mubr.f32.gmra.mrb[0].mxu0 %v6668
        %v6855 = vpop.f32.mrb[0].mxu0
        %v6856 = vadd.f32 0.0, %v6855
        %v6857 = vpop.f32.mrb[0].mxu0
        %6858 = vmatprep.mubr.f32.mxu0 0.0
        %6859 = vmatmul.mubr.f32.gmra.mrb[0].mxu0 %v6671
        %v6860 = vpop.f32.mrb[0].mxu0
        %v6861 = vadd.f32 0.0, %v6860
        %v6862 = vpop.f32.mrb[0].mxu0
        %6863 = vmatprep.mubr.f32.mxu0 0.0
        %6864 = vmatmul.mubr.f32.gmra.mrb[0].mxu0 %v6674
        %v6865 = vpop.f32.mrb[0].mxu0
        %v6866 = vadd.f32 0.0, %v6865
        %v6867 = vpop.f32.mrb[0].mxu0
        %6868 = vmatprep.mubr.f32.mxu0 0.0
        %6869 = vmatmul.mubr.f32.gmra.mrb[0].mxu0 %v6677
        %v6870 = vpop.f32.mrb[0].mxu0
        %v6871 = vadd.f32 0.0, %v6870
        %v6872 = vpop.f32.mrb[0].mxu0
        %6873 = vmatprep.mubr.f32.mxu0 0.0
        %6874 = vmatmul.mubr.f32.gmra.mrb[0].mxu0 %v6680
        %v6875 = vpop.f32.mrb[0].mxu0
        %v6876 = vadd.f32 0.0, %v6875
        %v6877 = vpop.f32.mrb[0].mxu0
        %6878 = vmatprep.mubr.f32.mxu0 0.0
        %6879 = vmatmul.mubr.f32.gmra.mrb[0].mxu0 %v6683
        %v6880 = vpop.f32.mrb[0].mxu0
        %v6881 = vadd.f32 0.0, %v6880
        %v6882 = vpop.f32.mrb[0].mxu0
        %6883 = vmatprep.mubr.f32.mxu0 0.0
        %6884 = vmatmul.mubr.f32.gmra.mrb[0].mxu0 %v6686
        %v6885 = vpop.f32.mrb[0].mxu0
        %v6886 = vadd.f32 0.0, %v6885
        %v6887 = vpop.f32.mrb[0].mxu0
        %6888 = vmatprep.mubr.f32.mxu0 0.0
        %6889 = vmatmul.mubr.f32.gmra.mrb[0].mxu0 %v6689
        %v6890 = vpop.f32.mrb[0].mxu0
        %v6891 = vadd.f32 0.0, %v6890
        %v6892 = vpop.f32.mrb[0].mxu0
        %6893 = vmatprep.mubr.f32.mxu0 0.0
        %6894 = vmatmul.mubr.f32.gmra.mrb[0].mxu0 %v6692
        %v6895 = vpop.f32.mrb[0].mxu0
        %v6896 = vadd.f32 0.0, %v6895
        %v6897 = vpop.f32.mrb[0].mxu0
        %6898 = vmatprep.mubr.f32.mxu0 0.0
        %6899 = vmatmul.mubr.f32.gmra.mrb[0].mxu0 %v6695
        %v6900 = vpop.f32.mrb[0].mxu0
        %v6901 = vadd.f32 0.0, %v6900
        %v6902 = vpop.f32.mrb[0].mxu0
        %6903 = vmatprep.mubr.f32.mxu0 0.0
        %6904 = vmatmul.mubr.f32.gmra.mrb[0].mxu0 %v6698
        %v6905 = vpop.f32.mrb[0].mxu0
        %v6906 = vadd.f32 0.0, %v6905
        %v6907 = vpop.f32.mrb[0].mxu0
        %6908 = vmatprep.mubr.f32.mxu0 0.0
        %6909 = vmatmul.mubr.f32.gmra.mrb[0].mxu0 %v6701
        %v6910 = vpop.f32.mrb[0].mxu0
        %v6911 = vadd.f32 0.0, %v6910
        %v6912 = vpop.f32.mrb[0].mxu0
        %6913 = vmatprep.mubr.f32.mxu0 0.0
        %6914 = vmatmul.mubr.f32.gmra.mrb[0].mxu0 %v6704
        %v6915 = vpop.f32.mrb[0].mxu0
        %v6916 = vadd.f32 0.0, %v6915
        %v6917 = vpop.f32.mrb[0].mxu0
        %6918 = vmatprep.mubr.f32.mxu0 0.0
        %6919 = vmatmul.mubr.f32.gmra.mrb[0].mxu0 %v6707
        %v6920 = vpop.f32.mrb[0].mxu0
        %v6921 = vadd.f32 0.0, %v6920
        %v6922 = vpop.f32.mrb[0].mxu0
        %6923 = vmatprep.mubr.f32.mxu0 0.0
        %6924 = vmatmul.mubr.f32.gmra.mrb[0].mxu0 %v6710
        %v6925 = vpop.f32.mrb[0].mxu0
        %v6926 = vadd.f32 0.0, %v6925
        %v6927 = vpop.f32.mrb[0].mxu0
        %6928 = vmatprep.mubr.f32.mxu0 0.0
        %6929 = vmatmul.mubr.f32.gmra.mrb[0].mxu0 %v6713
        %v6930 = vpop.f32.mrb[0].mxu0
        %v6931 = vadd.f32 0.0, %v6930
        %v6932 = vpop.f32.mrb[0].mxu0
        %6933 = vmatprep.mubr.f32.mxu0 0.0
        %6934 = vmatmul.mubr.f32.gmra.mrb[0].mxu0 %v6716
        %v6935 = vpop.f32.mrb[0].mxu0
        %v6936 = vadd.f32 0.0, %v6935
        %v6937 = vpop.f32.mrb[0].mxu0
        %6938 = vmatprep.mubr.f32.mxu0 0.0
        %6939 = vmatmul.mubr.f32.gmra.mrb[0].mxu0 %v6719
        %v6940 = vpop.f32.mrb[0].mxu0
        %v6941 = vadd.f32 0.0, %v6940
        %v6942 = vpop.f32.mrb[0].mxu0
        %6943 = vmatprep.mubr.f32.mxu0 0.0
        %6944 = vmatmul.mubr.f32.gmra.mrb[0].mxu0 %v6722
        %v6945 = vpop.f32.mrb[0].mxu0
        %v6946 = vadd.f32 0.0, %v6945
        %v6947 = vpop.f32.mrb[0].mxu0
        %6948 = vmatprep.mubr.f32.mxu0 0.0
        %6949 = vmatmul.mubr.f32.gmra.mrb[0].mxu0 %v6725
        %v6950 = vpop.f32.mrb[0].mxu0
        %v6951 = vadd.f32 0.0, %v6950
        %v6952 = vpop.f32.mrb[0].mxu0
        %6953 = vmatprep.mubr.f32.mxu0 0.0
        %6954 = vmatmul.mubr.f32.gmra.mrb[0].mxu0 %v6728
        %v6955 = vpop.f32.mrb[0].mxu0
        %v6956 = vadd.f32 0.0, %v6955
        %v6957 = vpop.f32.mrb[0].mxu0
        %6958 = vmatprep.mubr.f32.mxu0 0.0
        %6959 = vmatmul.mubr.f32.gmra.mrb[0].mxu0 %v6731
        %v6960 = vpop.f32.mrb[0].mxu0
        %v6961 = vadd.f32 0.0, %v6960
        %v6962 = vpop.f32.mrb[0].mxu0
        %6963 = vdwg.mxu0
        %v6964 = vmul.f32 %v6806, 2.0
        %v6965 = vmul.f32 %v6811, 2.0
        %v6966 = vmul.f32 %v6816, 2.0
        %v6967 = vmul.f32 %v6821, 2.0
        %v6968 = vmul.f32 %v6826, 2.0
        %v6969 = vmul.f32 %v6831, 2.0
        %v6970 = vmul.f32 %v6836, 2.0
        %v6971 = vmul.f32 %v6841, 2.0
        %v6972 = vmul.f32 %v6846, 2.0
        %v6973 = vmul.f32 %v6851, 2.0
        %v6974 = vmul.f32 %v6856, 2.0
        %v6975 = vmul.f32 %v6861, 2.0
        %v6976 = vmul.f32 %v6866, 2.0
        %v6977 = vmul.f32 %v6871, 2.0
        %v6978 = vmul.f32 %v6876, 2.0
        %v6979 = vmul.f32 %v6881, 2.0
        %v6980 = vmul.f32 %v6886, 2.0
        %v6981 = vmul.f32 %v6891, 2.0
        %v6982 = vmul.f32 %v6896, 2.0
        %v6983 = vmul.f32 %v6901, 2.0
        %v6984 = vmul.f32 %v6906, 2.0
        %v6985 = vmul.f32 %v6911, 2.0
        %v6986 = vmul.f32 %v6916, 2.0
        %v6987 = vmul.f32 %v6921, 2.0
        %v6988 = vmul.f32 %v6926, 2.0
        %v6989 = vmul.f32 %v6931, 2.0
        %v6990 = vmul.f32 %v6936, 2.0
        %v6991 = vmul.f32 %v6941, 2.0
        %v6992 = vmul.f32 %v6946, 2.0
        %v6993 = vmul.f32 %v6951, 2.0
        %v6994 = vmul.f32 %v6956, 2.0
        %v6995 = vmul.f32 %v6961, 2.0
        %v6996 = vlaneseq
        %v6997 = vshrl.u32 %v6996, 7
        %v6998 = vsub.s32 3, %v6997
        %v6999 = vrot.slane %v405, %v6998
        %v7000 = vsub.f32 %v6964, %v6999
        %v7001 = vsub.f32 %v6965, %v6999
        %v7002 = vsub.f32 %v6966, %v6999
        %v7003 = vsub.f32 %v6967, %v6999
        %v7004 = vsub.f32 %v6968, %v6999
        %v7005 = vsub.f32 %v6969, %v6999
        %v7006 = vsub.f32 %v6970, %v6999
        %v7007 = vsub.f32 %v6971, %v6999
        %v7008 = vsub.f32 %v6972, %v6999
        %v7009 = vsub.f32 %v6973, %v6999
        %v7010 = vsub.f32 %v6974, %v6999
        %v7011 = vsub.f32 %v6975, %v6999
        %v7012 = vsub.f32 %v6976, %v6999
        %v7013 = vsub.f32 %v6977, %v6999
        %v7014 = vsub.f32 %v6978, %v6999
        %v7015 = vsub.f32 %v6979, %v6999
        %v7016 = vsub.f32 %v6980, %v6999
        %v7017 = vsub.f32 %v6981, %v6999
        %v7018 = vsub.f32 %v6982, %v6999
        %v7019 = vsub.f32 %v6983, %v6999
        %v7020 = vsub.f32 %v6984, %v6999
        %v7021 = vsub.f32 %v6985, %v6999
        %v7022 = vsub.f32 %v6986, %v6999
        %v7023 = vsub.f32 %v6987, %v6999
        %v7024 = vsub.f32 %v6988, %v6999
        %v7025 = vsub.f32 %v6989, %v6999
        %v7026 = vsub.f32 %v6990, %v6999
        %v7027 = vsub.f32 %v6991, %v6999
        %v7028 = vsub.f32 %v6992, %v6999
        %v7029 = vsub.f32 %v6993, %v6999
        %v7030 = vsub.f32 %v6994, %v6999
        %v7031 = vsub.f32 %v6995, %v6999
        %v7032 = vsel %vm804, %v7000, -inf
        %7033 = vmax.xlane.f32.xlu0 %v7032
        %v7034 = vpop.xlane.xlu0 %7033
        %v7035 = vsel %vm804, %v7001, -inf
        %7036 = vmax.xlane.f32.xlu0 %v7035
        %v7037 = vpop.xlane.xlu0 %7036
        %v7038 = vsel %vm804, %v7002, -inf
        %7039 = vmax.xlane.f32.xlu0 %v7038
        %v7040 = vpop.xlane.xlu0 %7039
        %v7041 = vsel %vm804, %v7003, -inf
        %7042 = vmax.xlane.f32.xlu0 %v7041
        %v7043 = vpop.xlane.xlu0 %7042
        %v7044 = vsel %vm804, %v7004, -inf
        %7045 = vmax.xlane.f32.xlu0 %v7044
        %v7046 = vpop.xlane.xlu0 %7045
        %v7047 = vsel %vm804, %v7005, -inf
        %7048 = vmax.xlane.f32.xlu0 %v7047
        %v7049 = vpop.xlane.xlu0 %7048
        %v7050 = vsel %vm804, %v7006, -inf
        %7051 = vmax.xlane.f32.xlu0 %v7050
        %v7052 = vpop.xlane.xlu0 %7051
        %v7053 = vsel %vm804, %v7007, -inf
        %7054 = vmax.xlane.f32.xlu0 %v7053
        %v7055 = vpop.xlane.xlu0 %7054
        %v7056 = vsel %vm804, %v7008, -inf
        %7057 = vmax.xlane.f32.xlu0 %v7056
        %v7058 = vpop.xlane.xlu0 %7057
        %v7059 = vsel %vm804, %v7009, -inf
        %7060 = vmax.xlane.f32.xlu0 %v7059
        %v7061 = vpop.xlane.xlu0 %7060
        %v7062 = vsel %vm804, %v7010, -inf
        %7063 = vmax.xlane.f32.xlu0 %v7062
        %v7064 = vpop.xlane.xlu0 %7063
        %v7065 = vsel %vm804, %v7011, -inf
        %7066 = vmax.xlane.f32.xlu0 %v7065
        %v7067 = vpop.xlane.xlu0 %7066
        %v7068 = vsel %vm804, %v7012, -inf
        %7069 = vmax.xlane.f32.xlu0 %v7068
        %v7070 = vpop.xlane.xlu0 %7069
        %v7071 = vsel %vm804, %v7013, -inf
        %7072 = vmax.xlane.f32.xlu0 %v7071
        %v7073 = vpop.xlane.xlu0 %7072
        %v7074 = vsel %vm804, %v7014, -inf
        %7075 = vmax.xlane.f32.xlu0 %v7074
        %v7076 = vpop.xlane.xlu0 %7075
        %v7077 = vsel %vm804, %v7015, -inf
        %7078 = vmax.xlane.f32.xlu0 %v7077
        %v7079 = vpop.xlane.xlu0 %7078
        %v7080 = vsel %vm804, %v7016, -inf
        %7081 = vmax.xlane.f32.xlu0 %v7080
        %v7082 = vpop.xlane.xlu0 %7081
        %v7083 = vsel %vm804, %v7017, -inf
        %7084 = vmax.xlane.f32.xlu0 %v7083
        %v7085 = vpop.xlane.xlu0 %7084
        %v7086 = vsel %vm804, %v7018, -inf
        %7087 = vmax.xlane.f32.xlu0 %v7086
        %v7088 = vpop.xlane.xlu0 %7087
        %v7089 = vsel %vm804, %v7019, -inf
        %7090 = vmax.xlane.f32.xlu0 %v7089
        %v7091 = vpop.xlane.xlu0 %7090
        %v7092 = vsel %vm804, %v7020, -inf
        %7093 = vmax.xlane.f32.xlu0 %v7092
        %v7094 = vpop.xlane.xlu0 %7093
        %v7095 = vsel %vm804, %v7021, -inf
        %7096 = vmax.xlane.f32.xlu0 %v7095
        %v7097 = vpop.xlane.xlu0 %7096
        %v7098 = vsel %vm804, %v7022, -inf
        %7099 = vmax.xlane.f32.xlu0 %v7098
        %v7100 = vpop.xlane.xlu0 %7099
        %v7101 = vsel %vm804, %v7023, -inf
        %7102 = vmax.xlane.f32.xlu0 %v7101
        %v7103 = vpop.xlane.xlu0 %7102
        %v7104 = vsel %vm804, %v7024, -inf
        %7105 = vmax.xlane.f32.xlu0 %v7104
        %v7106 = vpop.xlane.xlu0 %7105
        %v7107 = vsel %vm804, %v7025, -inf
        %7108 = vmax.xlane.f32.xlu0 %v7107
        %v7109 = vpop.xlane.xlu0 %7108
        %v7110 = vsel %vm804, %v7026, -inf
        %7111 = vmax.xlane.f32.xlu0 %v7110
        %v7112 = vpop.xlane.xlu0 %7111
        %v7113 = vsel %vm804, %v7027, -inf
        %7114 = vmax.xlane.f32.xlu0 %v7113
        %v7115 = vpop.xlane.xlu0 %7114
        %v7116 = vsel %vm804, %v7028, -inf
        %7117 = vmax.xlane.f32.xlu0 %v7116
        %v7118 = vpop.xlane.xlu0 %7117
        %v7119 = vsel %vm804, %v7029, -inf
        %7120 = vmax.xlane.f32.xlu0 %v7119
        %v7121 = vpop.xlane.xlu0 %7120
        %v7122 = vsel %vm804, %v7030, -inf
        %7123 = vmax.xlane.f32.xlu0 %v7122
        %v7124 = vpop.xlane.xlu0 %7123
        %v7125 = vsel %vm804, %v7031, -inf
        %7126 = vmax.xlane.f32.xlu0 %v7125
        %v7127 = vpop.xlane.xlu0 %7126
        %v7128 = vsub.f32 %v7000, %v7034
        %v7129 = vsub.f32 %v7001, %v7037
        %v7130 = vsub.f32 %v7002, %v7040
        %v7131 = vsub.f32 %v7003, %v7043
        %v7132 = vsub.f32 %v7004, %v7046
        %v7133 = vsub.f32 %v7005, %v7049
        %v7134 = vsub.f32 %v7006, %v7052
        %v7135 = vsub.f32 %v7007, %v7055
        %v7136 = vsub.f32 %v7008, %v7058
        %v7137 = vsub.f32 %v7009, %v7061
        %v7138 = vsub.f32 %v7010, %v7064
        %v7139 = vsub.f32 %v7011, %v7067
        %v7140 = vsub.f32 %v7012, %v7070
        %v7141 = vsub.f32 %v7013, %v7073
        %v7142 = vsub.f32 %v7014, %v7076
        %v7143 = vsub.f32 %v7015, %v7079
        %v7144 = vsub.f32 %v7016, %v7082
        %v7145 = vsub.f32 %v7017, %v7085
        %v7146 = vsub.f32 %v7018, %v7088
        %v7147 = vsub.f32 %v7019, %v7091
        %v7148 = vsub.f32 %v7020, %v7094
        %v7149 = vsub.f32 %v7021, %v7097
        %v7150 = vsub.f32 %v7022, %v7100
        %v7151 = vsub.f32 %v7023, %v7103
        %v7152 = vsub.f32 %v7024, %v7106
        %v7153 = vsub.f32 %v7025, %v7109
        %v7154 = vsub.f32 %v7026, %v7112
        %v7155 = vsub.f32 %v7027, %v7115
        %v7156 = vsub.f32 %v7028, %v7118
        %v7157 = vsub.f32 %v7029, %v7121
        %v7158 = vsub.f32 %v7030, %v7124
        %v7159 = vsub.f32 %v7031, %v7127
        %v7160 = vmul.f32 %v7128, 1.442695
        %v7161 = vpow.pop %v7160
        %v7162 = vmul.f32 %v7129, 1.442695
        %v7163 = vpow.pop %v7162
        %v7164 = vmul.f32 %v7130, 1.442695
        %v7165 = vpow.pop %v7164
        %v7166 = vmul.f32 %v7131, 1.442695
        %v7167 = vpow.pop %v7166
        %v7168 = vmul.f32 %v7132, 1.442695
        %v7169 = vpow.pop %v7168
        %v7170 = vmul.f32 %v7133, 1.442695
        %v7171 = vpow.pop %v7170
        %v7172 = vmul.f32 %v7134, 1.442695
        %v7173 = vpow.pop %v7172
        %v7174 = vmul.f32 %v7135, 1.442695
        %v7175 = vpow.pop %v7174
        %v7176 = vmul.f32 %v7136, 1.442695
        %v7177 = vpow.pop %v7176
        %v7178 = vmul.f32 %v7137, 1.442695
        %v7179 = vpow.pop %v7178
        %v7180 = vmul.f32 %v7138, 1.442695
        %v7181 = vpow.pop %v7180
        %v7182 = vmul.f32 %v7139, 1.442695
        %v7183 = vpow.pop %v7182
        %v7184 = vmul.f32 %v7140, 1.442695
        %v7185 = vpow.pop %v7184
        %v7186 = vmul.f32 %v7141, 1.442695
        %v7187 = vpow.pop %v7186
        %v7188 = vmul.f32 %v7142, 1.442695
        %v7189 = vpow.pop %v7188
        %v7190 = vmul.f32 %v7143, 1.442695
        %v7191 = vpow.pop %v7190
        %v7192 = vmul.f32 %v7144, 1.442695
        %v7193 = vpow.pop %v7192
        %v7194 = vmul.f32 %v7145, 1.442695
        %v7195 = vpow.pop %v7194
        %v7196 = vmul.f32 %v7146, 1.442695
        %v7197 = vpow.pop %v7196
        %v7198 = vmul.f32 %v7147, 1.442695
        %v7199 = vpow.pop %v7198
        %v7200 = vmul.f32 %v7148, 1.442695
        %v7201 = vpow.pop %v7200
        %v7202 = vmul.f32 %v7149, 1.442695
        %v7203 = vpow.pop %v7202
        %v7204 = vmul.f32 %v7150, 1.442695
        %v7205 = vpow.pop %v7204
        %v7206 = vmul.f32 %v7151, 1.442695
        %v7207 = vpow.pop %v7206
        %v7208 = vmul.f32 %v7152, 1.442695
        %v7209 = vpow.pop %v7208
        %v7210 = vmul.f32 %v7153, 1.442695
        %v7211 = vpow.pop %v7210
        %v7212 = vmul.f32 %v7154, 1.442695
        %v7213 = vpow.pop %v7212
        %v7214 = vmul.f32 %v7155, 1.442695
        %v7215 = vpow.pop %v7214
        %v7216 = vmul.f32 %v7156, 1.442695
        %v7217 = vpow.pop %v7216
        %v7218 = vmul.f32 %v7157, 1.442695
        %v7219 = vpow.pop %v7218
        %v7220 = vmul.f32 %v7158, 1.442695
        %v7221 = vpow.pop %v7220
        %v7222 = vmul.f32 %v7159, 1.442695
        %v7223 = vpow.pop %v7222
        %v7224 = vsel %vm804, %v7161, 0.0
        %7225 = vadd.xlane.f32.xlu0 %v7224
        %v7226 = vpop.xlane.xlu0 %7225
        %v7227 = vsel %vm804, %v7163, 0.0
        %7228 = vadd.xlane.f32.xlu0 %v7227
        %v7229 = vpop.xlane.xlu0 %7228
        %v7230 = vsel %vm804, %v7165, 0.0
        %7231 = vadd.xlane.f32.xlu0 %v7230
        %v7232 = vpop.xlane.xlu0 %7231
        %v7233 = vsel %vm804, %v7167, 0.0
        %7234 = vadd.xlane.f32.xlu0 %v7233
        %v7235 = vpop.xlane.xlu0 %7234
        %v7236 = vsel %vm804, %v7169, 0.0
        %7237 = vadd.xlane.f32.xlu0 %v7236
        %v7238 = vpop.xlane.xlu0 %7237
        %v7239 = vsel %vm804, %v7171, 0.0
        %7240 = vadd.xlane.f32.xlu0 %v7239
        %v7241 = vpop.xlane.xlu0 %7240
        %v7242 = vsel %vm804, %v7173, 0.0
        %7243 = vadd.xlane.f32.xlu0 %v7242
        %v7244 = vpop.xlane.xlu0 %7243
        %v7245 = vsel %vm804, %v7175, 0.0
        %7246 = vadd.xlane.f32.xlu0 %v7245
        %v7247 = vpop.xlane.xlu0 %7246
        %v7248 = vsel %vm804, %v7177, 0.0
        %7249 = vadd.xlane.f32.xlu0 %v7248
        %v7250 = vpop.xlane.xlu0 %7249
        %v7251 = vsel %vm804, %v7179, 0.0
        %7252 = vadd.xlane.f32.xlu0 %v7251
        %v7253 = vpop.xlane.xlu0 %7252
        %v7254 = vsel %vm804, %v7181, 0.0
        %7255 = vadd.xlane.f32.xlu0 %v7254
        %v7256 = vpop.xlane.xlu0 %7255
        %v7257 = vsel %vm804, %v7183, 0.0
        %7258 = vadd.xlane.f32.xlu0 %v7257
        %v7259 = vpop.xlane.xlu0 %7258
        %v7260 = vsel %vm804, %v7185, 0.0
        %7261 = vadd.xlane.f32.xlu0 %v7260
        %v7262 = vpop.xlane.xlu0 %7261
        %v7263 = vsel %vm804, %v7187, 0.0
        %7264 = vadd.xlane.f32.xlu0 %v7263
        %v7265 = vpop.xlane.xlu0 %7264
        %v7266 = vsel %vm804, %v7189, 0.0
        %7267 = vadd.xlane.f32.xlu0 %v7266
        %v7268 = vpop.xlane.xlu0 %7267
        %v7269 = vsel %vm804, %v7191, 0.0
        %7270 = vadd.xlane.f32.xlu0 %v7269
        %v7271 = vpop.xlane.xlu0 %7270
        %v7272 = vsel %vm804, %v7193, 0.0
        %7273 = vadd.xlane.f32.xlu0 %v7272
        %v7274 = vpop.xlane.xlu0 %7273
        %v7275 = vsel %vm804, %v7195, 0.0
        %7276 = vadd.xlane.f32.xlu0 %v7275
        %v7277 = vpop.xlane.xlu0 %7276
        %v7278 = vsel %vm804, %v7197, 0.0
        %7279 = vadd.xlane.f32.xlu0 %v7278
        %v7280 = vpop.xlane.xlu0 %7279
        %v7281 = vsel %vm804, %v7199, 0.0
        %7282 = vadd.xlane.f32.xlu0 %v7281
        %v7283 = vpop.xlane.xlu0 %7282
        %v7284 = vsel %vm804, %v7201, 0.0
        %7285 = vadd.xlane.f32.xlu0 %v7284
        %v7286 = vpop.xlane.xlu0 %7285
        %v7287 = vsel %vm804, %v7203, 0.0
        %7288 = vadd.xlane.f32.xlu0 %v7287
        %v7289 = vpop.xlane.xlu0 %7288
        %v7290 = vsel %vm804, %v7205, 0.0
        %7291 = vadd.xlane.f32.xlu0 %v7290
        %v7292 = vpop.xlane.xlu0 %7291
        %v7293 = vsel %vm804, %v7207, 0.0
        %7294 = vadd.xlane.f32.xlu0 %v7293
        %v7295 = vpop.xlane.xlu0 %7294
        %v7296 = vsel %vm804, %v7209, 0.0
        %7297 = vadd.xlane.f32.xlu0 %v7296
        %v7298 = vpop.xlane.xlu0 %7297
        %v7299 = vsel %vm804, %v7211, 0.0
        %7300 = vadd.xlane.f32.xlu0 %v7299
        %v7301 = vpop.xlane.xlu0 %7300
        %v7302 = vsel %vm804, %v7213, 0.0
        %7303 = vadd.xlane.f32.xlu0 %v7302
        %v7304 = vpop.xlane.xlu0 %7303
        %v7305 = vsel %vm804, %v7215, 0.0
        %7306 = vadd.xlane.f32.xlu0 %v7305
        %v7307 = vpop.xlane.xlu0 %7306
        %v7308 = vsel %vm804, %v7217, 0.0
        %7309 = vadd.xlane.f32.xlu0 %v7308
        %v7310 = vpop.xlane.xlu0 %7309
        %v7311 = vsel %vm804, %v7219, 0.0
        %7312 = vadd.xlane.f32.xlu0 %v7311
        %v7313 = vpop.xlane.xlu0 %7312
        %v7314 = vsel %vm804, %v7221, 0.0
        %7315 = vadd.xlane.f32.xlu0 %v7314
        %v7316 = vpop.xlane.xlu0 %7315
        %v7317 = vsel %vm804, %v7223, 0.0
        %7318 = vadd.xlane.f32.xlu0 %v7317
        %v7319 = vpop.xlane.xlu0 %7318
        %v7320 = vrcp.pop %v7226
        %v7321 = vrcp.pop %v7229
        %v7322 = vrcp.pop %v7232
        %v7323 = vrcp.pop %v7235
        %v7324 = vrcp.pop %v7238
        %v7325 = vrcp.pop %v7241
        %v7326 = vrcp.pop %v7244
        %v7327 = vrcp.pop %v7247
        %v7328 = vrcp.pop %v7250
        %v7329 = vrcp.pop %v7253
        %v7330 = vrcp.pop %v7256
        %v7331 = vrcp.pop %v7259
        %v7332 = vrcp.pop %v7262
        %v7333 = vrcp.pop %v7265
        %v7334 = vrcp.pop %v7268
        %v7335 = vrcp.pop %v7271
        %v7336 = vrcp.pop %v7274
        %v7337 = vrcp.pop %v7277
        %v7338 = vrcp.pop %v7280
        %v7339 = vrcp.pop %v7283
        %v7340 = vrcp.pop %v7286
        %v7341 = vrcp.pop %v7289
        %v7342 = vrcp.pop %v7292
        %v7343 = vrcp.pop %v7295
        %v7344 = vrcp.pop %v7298
        %v7345 = vrcp.pop %v7301
        %v7346 = vrcp.pop %v7304
        %v7347 = vrcp.pop %v7307
        %v7348 = vrcp.pop %v7310
        %v7349 = vrcp.pop %v7313
        %v7350 = vrcp.pop %v7316
        %v7351 = vrcp.pop %v7319
        %v7352 = vmul.f32 %v7161, %v7320
        %v7353 = vmul.f32 %v7163, %v7321
        %v7354 = vmul.f32 %v7165, %v7322
        %v7355 = vmul.f32 %v7167, %v7323
        %v7356 = vmul.f32 %v7169, %v7324
        %v7357 = vmul.f32 %v7171, %v7325
        %v7358 = vmul.f32 %v7173, %v7326
        %v7359 = vmul.f32 %v7175, %v7327
        %v7360 = vmul.f32 %v7177, %v7328
        %v7361 = vmul.f32 %v7179, %v7329
        %v7362 = vmul.f32 %v7181, %v7330
        %v7363 = vmul.f32 %v7183, %v7331
        %v7364 = vmul.f32 %v7185, %v7332
        %v7365 = vmul.f32 %v7187, %v7333
        %v7366 = vmul.f32 %v7189, %v7334
        %v7367 = vmul.f32 %v7191, %v7335
        %v7368 = vmul.f32 %v7193, %v7336
        %v7369 = vmul.f32 %v7195, %v7337
        %v7370 = vmul.f32 %v7197, %v7338
        %v7371 = vmul.f32 %v7199, %v7339
        %v7372 = vmul.f32 %v7201, %v7340
        %v7373 = vmul.f32 %v7203, %v7341
        %v7374 = vmul.f32 %v7205, %v7342
        %v7375 = vmul.f32 %v7207, %v7343
        %v7376 = vmul.f32 %v7209, %v7344
        %v7377 = vmul.f32 %v7211, %v7345
        %v7378 = vmul.f32 %v7213, %v7346
        %v7379 = vmul.f32 %v7215, %v7347
        %v7380 = vmul.f32 %v7217, %v7348
        %v7381 = vmul.f32 %v7219, %v7349
        %v7382 = vmul.f32 %v7221, %v7350
        %v7383 = vmul.f32 %v7223, %v7351
        %7384 = vmax.index.xlane.f32.xlu0 %v7032
        %v7385 = vpop.xlane.xlu0 %7384
        %7386 = vmax.index.xlane.f32.xlu0 %v7035
        %v7387 = vpop.xlane.xlu0 %7386
        %7388 = vmax.index.xlane.f32.xlu0 %v7038
        %v7389 = vpop.xlane.xlu0 %7388
        %7390 = vmax.index.xlane.f32.xlu0 %v7041
        %v7391 = vpop.xlane.xlu0 %7390
        %7392 = vmax.index.xlane.f32.xlu0 %v7044
        %v7393 = vpop.xlane.xlu0 %7392
        %7394 = vmax.index.xlane.f32.xlu0 %v7047
        %v7395 = vpop.xlane.xlu0 %7394
        %7396 = vmax.index.xlane.f32.xlu0 %v7050
        %v7397 = vpop.xlane.xlu0 %7396
        %7398 = vmax.index.xlane.f32.xlu0 %v7053
        %v7399 = vpop.xlane.xlu0 %7398
        %7400 = vmax.index.xlane.f32.xlu0 %v7056
        %v7401 = vpop.xlane.xlu0 %7400
        %7402 = vmax.index.xlane.f32.xlu0 %v7059
        %v7403 = vpop.xlane.xlu0 %7402
        %7404 = vmax.index.xlane.f32.xlu0 %v7062
        %v7405 = vpop.xlane.xlu0 %7404
        %7406 = vmax.index.xlane.f32.xlu0 %v7065
        %v7407 = vpop.xlane.xlu0 %7406
        %7408 = vmax.index.xlane.f32.xlu0 %v7068
        %v7409 = vpop.xlane.xlu0 %7408
        %7410 = vmax.index.xlane.f32.xlu0 %v7071
        %v7411 = vpop.xlane.xlu0 %7410
        %7412 = vmax.index.xlane.f32.xlu0 %v7074
        %v7413 = vpop.xlane.xlu0 %7412
        %7414 = vmax.index.xlane.f32.xlu0 %v7077
        %v7415 = vpop.xlane.xlu0 %7414
        %7416 = vmax.index.xlane.f32.xlu0 %v7080
        %v7417 = vpop.xlane.xlu0 %7416
        %7418 = vmax.index.xlane.f32.xlu0 %v7083
        %v7419 = vpop.xlane.xlu0 %7418
        %7420 = vmax.index.xlane.f32.xlu0 %v7086
        %v7421 = vpop.xlane.xlu0 %7420
        %7422 = vmax.index.xlane.f32.xlu0 %v7089
        %v7423 = vpop.xlane.xlu0 %7422
        %7424 = vmax.index.xlane.f32.xlu0 %v7092
        %v7425 = vpop.xlane.xlu0 %7424
        %7426 = vmax.index.xlane.f32.xlu0 %v7095
        %v7427 = vpop.xlane.xlu0 %7426
        %7428 = vmax.index.xlane.f32.xlu0 %v7098
        %v7429 = vpop.xlane.xlu0 %7428
        %7430 = vmax.index.xlane.f32.xlu0 %v7101
        %v7431 = vpop.xlane.xlu0 %7430
        %7432 = vmax.index.xlane.f32.xlu0 %v7104
        %v7433 = vpop.xlane.xlu0 %7432
        %7434 = vmax.index.xlane.f32.xlu0 %v7107
        %v7435 = vpop.xlane.xlu0 %7434
        %7436 = vmax.index.xlane.f32.xlu0 %v7110
        %v7437 = vpop.xlane.xlu0 %7436
        %7438 = vmax.index.xlane.f32.xlu0 %v7113
        %v7439 = vpop.xlane.xlu0 %7438
        %7440 = vmax.index.xlane.f32.xlu0 %v7116
        %v7441 = vpop.xlane.xlu0 %7440
        %7442 = vmax.index.xlane.f32.xlu0 %v7119
        %v7443 = vpop.xlane.xlu0 %7442
        %7444 = vmax.index.xlane.f32.xlu0 %v7122
        %v7445 = vpop.xlane.xlu0 %7444
        %7446 = vmax.index.xlane.f32.xlu0 %v7125
        %v7447 = vpop.xlane.xlu0 %7446
        %vm7448 = vcmp.eq.s32.totalorder %v1222, %v7385
        %vm7449 = vcmp.eq.s32.totalorder %v1222, %v7387
        %vm7450 = vcmp.eq.s32.totalorder %v1222, %v7389
        %vm7451 = vcmp.eq.s32.totalorder %v1222, %v7391
        %vm7452 = vcmp.eq.s32.totalorder %v1222, %v7393
        %vm7453 = vcmp.eq.s32.totalorder %v1222, %v7395
        %vm7454 = vcmp.eq.s32.totalorder %v1222, %v7397
        %vm7455 = vcmp.eq.s32.totalorder %v1222, %v7399
        %vm7456 = vcmp.eq.s32.totalorder %v1222, %v7401
        %vm7457 = vcmp.eq.s32.totalorder %v1222, %v7403
        %vm7458 = vcmp.eq.s32.totalorder %v1222, %v7405
        %vm7459 = vcmp.eq.s32.totalorder %v1222, %v7407
        %vm7460 = vcmp.eq.s32.totalorder %v1222, %v7409
        %vm7461 = vcmp.eq.s32.totalorder %v1222, %v7411
        %vm7462 = vcmp.eq.s32.totalorder %v1222, %v7413
        %vm7463 = vcmp.eq.s32.totalorder %v1222, %v7415
        %vm7464 = vcmp.eq.s32.totalorder %v1222, %v7417
        %vm7465 = vcmp.eq.s32.totalorder %v1222, %v7419
        %vm7466 = vcmp.eq.s32.totalorder %v1222, %v7421
        %vm7467 = vcmp.eq.s32.totalorder %v1222, %v7423
        %vm7468 = vcmp.eq.s32.totalorder %v1222, %v7425
        %vm7469 = vcmp.eq.s32.totalorder %v1222, %v7427
        %vm7470 = vcmp.eq.s32.totalorder %v1222, %v7429
        %vm7471 = vcmp.eq.s32.totalorder %v1222, %v7431
        %vm7472 = vcmp.eq.s32.totalorder %v1222, %v7433
        %vm7473 = vcmp.eq.s32.totalorder %v1222, %v7435
        %vm7474 = vcmp.eq.s32.totalorder %v1222, %v7437
        %vm7475 = vcmp.eq.s32.totalorder %v1222, %v7439
        %vm7476 = vcmp.eq.s32.totalorder %v1222, %v7441
        %vm7477 = vcmp.eq.s32.totalorder %v1222, %v7443
        %vm7478 = vcmp.eq.s32.totalorder %v1222, %v7445
        %vm7479 = vcmp.eq.s32.totalorder %v1222, %v7447
        %v7480 = vsel %vm7448, 1, 0
        %v7481 = vsel %vm7449, 1, 0
        %v7482 = vsel %vm7450, 1, 0
        %v7483 = vsel %vm7451, 1, 0
        %v7484 = vsel %vm7452, 1, 0
        %v7485 = vsel %vm7453, 1, 0
        %v7486 = vsel %vm7454, 1, 0
        %v7487 = vsel %vm7455, 1, 0
        %v7488 = vsel %vm7456, 1, 0
        %v7489 = vsel %vm7457, 1, 0
        %v7490 = vsel %vm7458, 1, 0
        %v7491 = vsel %vm7459, 1, 0
        %v7492 = vsel %vm7460, 1, 0
        %v7493 = vsel %vm7461, 1, 0
        %v7494 = vsel %vm7462, 1, 0
        %v7495 = vsel %vm7463, 1, 0
        %v7496 = vsel %vm7464, 1, 0
        %v7497 = vsel %vm7465, 1, 0
        %v7498 = vsel %vm7466, 1, 0
        %v7499 = vsel %vm7467, 1, 0
        %v7500 = vsel %vm7468, 1, 0
        %v7501 = vsel %vm7469, 1, 0
        %v7502 = vsel %vm7470, 1, 0
        %v7503 = vsel %vm7471, 1, 0
        %v7504 = vsel %vm7472, 1, 0
        %v7505 = vsel %vm7473, 1, 0
        %v7506 = vsel %vm7474, 1, 0
        %v7507 = vsel %vm7475, 1, 0
        %v7508 = vsel %vm7476, 1, 0
        %v7509 = vsel %vm7477, 1, 0
        %v7510 = vsel %vm7478, 1, 0
        %v7511 = vsel %vm7479, 1, 0
        %v7512 = vcvt.s32.f32 %v7480
        %v7513 = vcvt.s32.f32 %v7481
        %v7514 = vcvt.s32.f32 %v7482
        %v7515 = vcvt.s32.f32 %v7483
        %v7516 = vcvt.s32.f32 %v7484
        %v7517 = vcvt.s32.f32 %v7485
        %v7518 = vcvt.s32.f32 %v7486
        %v7519 = vcvt.s32.f32 %v7487
        %v7520 = vcvt.s32.f32 %v7488
        %v7521 = vcvt.s32.f32 %v7489
        %v7522 = vcvt.s32.f32 %v7490
        %v7523 = vcvt.s32.f32 %v7491
        %v7524 = vcvt.s32.f32 %v7492
        %v7525 = vcvt.s32.f32 %v7493
        %v7526 = vcvt.s32.f32 %v7494
        %v7527 = vcvt.s32.f32 %v7495
        %v7528 = vcvt.s32.f32 %v7496
        %v7529 = vcvt.s32.f32 %v7497
        %v7530 = vcvt.s32.f32 %v7498
        %v7531 = vcvt.s32.f32 %v7499
        %v7532 = vcvt.s32.f32 %v7500
        %v7533 = vcvt.s32.f32 %v7501
        %v7534 = vcvt.s32.f32 %v7502
        %v7535 = vcvt.s32.f32 %v7503
        %v7536 = vcvt.s32.f32 %v7504
        %v7537 = vcvt.s32.f32 %v7505
        %v7538 = vcvt.s32.f32 %v7506
        %v7539 = vcvt.s32.f32 %v7507
        %v7540 = vcvt.s32.f32 %v7508
        %v7541 = vcvt.s32.f32 %v7509
        %v7542 = vcvt.s32.f32 %v7510
        %v7543 = vcvt.s32.f32 %v7511
        %v7545 = vsel %vm804, %v7352, 0
        %v7548 = vsel %vm804, %v7353, 0
        %v7551 = vsel %vm804, %v7354, 0
        %v7554 = vsel %vm804, %v7355, 0
        %v7557 = vsel %vm804, %v7356, 0
        %v7560 = vsel %vm804, %v7357, 0
        %v7563 = vsel %vm804, %v7358, 0
        %v7566 = vsel %vm804, %v7359, 0
        %v7569 = vsel %vm804, %v7360, 0
        %v7572 = vsel %vm804, %v7361, 0
        %v7575 = vsel %vm804, %v7362, 0
        %v7578 = vsel %vm804, %v7363, 0
        %v7581 = vsel %vm804, %v7364, 0
        %v7584 = vsel %vm804, %v7365, 0
        %v7587 = vsel %vm804, %v7366, 0
        %v7590 = vsel %vm804, %v7367, 0
        %v7593 = vsel %vm804, %v7368, 0
        %v7596 = vsel %vm804, %v7369, 0
        %v7599 = vsel %vm804, %v7370, 0
        %v7602 = vsel %vm804, %v7371, 0
        %v7605 = vsel %vm804, %v7372, 0
        %v7608 = vsel %vm804, %v7373, 0
        %v7611 = vsel %vm804, %v7374, 0
        %v7614 = vsel %vm804, %v7375, 0
        %v7617 = vsel %vm804, %v7376, 0
        %v7620 = vsel %vm804, %v7377, 0
        %v7623 = vsel %vm804, %v7378, 0
        %v7626 = vsel %vm804, %v7379, 0
        %v7629 = vsel %vm804, %v7380, 0
        %v7632 = vsel %vm804, %v7381, 0
        %v7635 = vsel %vm804, %v7382, 0
        %v7638 = vsel %vm804, %v7383, 0
        %v7641 = vsel %vm804, %v7512, 0
        %v7644 = vsel %vm804, %v7513, 0
        %v7647 = vsel %vm804, %v7514, 0
        %v7650 = vsel %vm804, %v7515, 0
        %v7653 = vsel %vm804, %v7516, 0
        %v7656 = vsel %vm804, %v7517, 0
        %v7659 = vsel %vm804, %v7518, 0
        %v7662 = vsel %vm804, %v7519, 0
        %v7665 = vsel %vm804, %v7520, 0
        %v7668 = vsel %vm804, %v7521, 0
        %v7671 = vsel %vm804, %v7522, 0
        %v7674 = vsel %vm804, %v7523, 0
        %v7677 = vsel %vm804, %v7524, 0
        %v7680 = vsel %vm804, %v7525, 0
        %v7683 = vsel %vm804, %v7526, 0
        %v7686 = vsel %vm804, %v7527, 0
        %v7689 = vsel %vm804, %v7528, 0
        %v7692 = vsel %vm804, %v7529, 0
        %v7695 = vsel %vm804, %v7530, 0
        %v7698 = vsel %vm804, %v7531, 0
        %v7701 = vsel %vm804, %v7532, 0
        %v7704 = vsel %vm804, %v7533, 0
        %v7707 = vsel %vm804, %v7534, 0
        %v7710 = vsel %vm804, %v7535, 0
        %v7713 = vsel %vm804, %v7536, 0
        %v7716 = vsel %vm804, %v7537, 0
        %v7719 = vsel %vm804, %v7538, 0
        %v7722 = vsel %vm804, %v7539, 0
        %v7725 = vsel %vm804, %v7540, 0
        %v7728 = vsel %vm804, %v7541, 0
        %v7731 = vsel %vm804, %v7542, 0
        %v7734 = vsel %vm804, %v7543, 0
        %7736 = vmatprep.subr.mxu0 0.0
        %7737 = vmatpush1.msra.mxu0 %v6635
        %7738 = vmatprep.subr.mxu0 0.0
        %7739 = vmatpush1.msra.mxu0 %v6636
        %7740 = vmatprep.subr.mxu0 0.0
        %7741 = vmatpush1.msra.mxu0 0.0
        %7742 = vmatprep.subr.mxu0 0.0
        %7743 = vmatpush1.msra.mxu0 0.0
        %7744 = vmatprep.subr.mxu0 0.0
        %7745 = vmatpush1.msra.mxu0 0.0
        %7746 = vmatprep.subr.mxu0 0.0
        %7747 = vmatpush1.msra.mxu0 0.0
        %7748 = vmatprep.subr.mxu0 0.0
        %7749 = vmatpush1.msra.mxu0 0.0
        %7750 = vmatprep.subr.mxu0 0.0
        %7751 = vmatpush1.msra.mxu0 0.0
        %7752 = vmatprep.subr.mxu0 0.0
        %7753 = vmatpush1.msra.mxu0 0.0
        %7754 = vmatprep.subr.mxu0 0.0
        %7755 = vmatpush1.msra.mxu0 0.0
        %7756 = vmatprep.subr.mxu0 0.0
        %7757 = vmatpush1.msra.mxu0 0.0
        %7758 = vmatprep.subr.mxu0 0.0
        %7759 = vmatpush1.msra.mxu0 0.0
        %7760 = vmatprep.subr.mxu0 0.0
        %7761 = vmatpush1.msra.mxu0 0.0
        %7762 = vmatprep.subr.mxu0 0.0
        %7763 = vmatpush1.msra.mxu0 0.0
        %7764 = vmatprep.subr.mxu0 0.0
        %7765 = vmatpush1.msra.mxu0 0.0
        %7766 = vmatprep.subr.mxu0 0.0
        %7767 = vmatpush1.msra.mxu0 0.0
        %7768 = vmatprep.subr.mxu0 0.0
        %7769 = vmatpush1.msra.mxu0 0.0
        %7770 = vmatprep.subr.mxu0 0.0
        %7771 = vmatpush1.msra.mxu0 0.0
        %7772 = vmatprep.subr.mxu0 0.0
        %7773 = vmatpush1.msra.mxu0 0.0
        %7774 = vmatprep.subr.mxu0 0.0
        %7775 = vmatpush1.msra.mxu0 0.0
        %7776 = vmatprep.subr.mxu0 0.0
        %7777 = vmatpush1.msra.mxu0 0.0
        %7778 = vmatprep.subr.mxu0 0.0
        %7779 = vmatpush1.msra.mxu0 0.0
        %7780 = vmatprep.subr.mxu0 0.0
        %7781 = vmatpush1.msra.mxu0 0.0
        %7782 = vmatprep.subr.mxu0 0.0
        %7783 = vmatpush1.msra.mxu0 0.0
        %7784 = vmatprep.subr.mxu0 0.0
        %7785 = vmatpush1.msra.mxu0 0.0
        %7786 = vmatprep.subr.mxu0 0.0
        %7787 = vmatpush1.msra.mxu0 0.0
        %7788 = vmatprep.subr.mxu0 0.0
        %7789 = vmatpush1.msra.mxu0 0.0
        %7790 = vmatprep.subr.mxu0 0.0
        %7791 = vmatpush1.msra.mxu0 0.0
        %7792 = vmatprep.subr.mxu0 0.0
        %7793 = vmatpush1.msra.mxu0 0.0
        %7794 = vmatprep.subr.mxu0 0.0
        %7795 = vmatpush1.msra.mxu0 0.0
        %7796 = vmatprep.subr.mxu0 0.0
        %7797 = vmatpush1.msra.mxu0 0.0
        %7798 = vmatprep.subr.mxu0 0.0
        %7799 = vmatpush1.msra.mxu0 0.0
        %7800 = vmatprep.mubr.f32.mxu0 0.0
        %7801 = vmatmul.mubr.f32.gmra.mrb[0].mxu0 %v7545
        %v7802 = vpop.f32.mrb[0].mxu0
        %v7803 = vadd.f32 0.0, %v7802
        %v7804 = vpop.f32.mrb[0].mxu0
        %7805 = vmatprep.mubr.f32.mxu0 0.0
        %7806 = vmatmul.mubr.f32.gmra.mrb[0].mxu0 %v7548
        %v7807 = vpop.f32.mrb[0].mxu0
        %v7808 = vadd.f32 0.0, %v7807
        %v7809 = vpop.f32.mrb[0].mxu0
        %7810 = vmatprep.mubr.f32.mxu0 0.0
        %7811 = vmatmul.mubr.f32.gmra.mrb[0].mxu0 %v7551
        %v7812 = vpop.f32.mrb[0].mxu0
        %v7813 = vadd.f32 0.0, %v7812
        %v7814 = vpop.f32.mrb[0].mxu0
        %7815 = vmatprep.mubr.f32.mxu0 0.0
        %7816 = vmatmul.mubr.f32.gmra.mrb[0].mxu0 %v7554
        %v7817 = vpop.f32.mrb[0].mxu0
        %v7818 = vadd.f32 0.0, %v7817
        %v7819 = vpop.f32.mrb[0].mxu0
        %7820 = vmatprep.mubr.f32.mxu0 0.0
        %7821 = vmatmul.mubr.f32.gmra.mrb[0].mxu0 %v7557
        %v7822 = vpop.f32.mrb[0].mxu0
        %v7823 = vadd.f32 0.0, %v7822
        %v7824 = vpop.f32.mrb[0].mxu0
        %7825 = vmatprep.mubr.f32.mxu0 0.0
        %7826 = vmatmul.mubr.f32.gmra.mrb[0].mxu0 %v7560
        %v7827 = vpop.f32.mrb[0].mxu0
        %v7828 = vadd.f32 0.0, %v7827
        %v7829 = vpop.f32.mrb[0].mxu0
        %7830 = vmatprep.mubr.f32.mxu0 0.0
        %7831 = vmatmul.mubr.f32.gmra.mrb[0].mxu0 %v7563
        %v7832 = vpop.f32.mrb[0].mxu0
        %v7833 = vadd.f32 0.0, %v7832
        %v7834 = vpop.f32.mrb[0].mxu0
        %7835 = vmatprep.mubr.f32.mxu0 0.0
        %7836 = vmatmul.mubr.f32.gmra.mrb[0].mxu0 %v7566
        %v7837 = vpop.f32.mrb[0].mxu0
        %v7838 = vadd.f32 0.0, %v7837
        %v7839 = vpop.f32.mrb[0].mxu0
        %7840 = vmatprep.mubr.f32.mxu0 0.0
        %7841 = vmatmul.mubr.f32.gmra.mrb[0].mxu0 %v7569
        %v7842 = vpop.f32.mrb[0].mxu0
        %v7843 = vadd.f32 0.0, %v7842
        %v7844 = vpop.f32.mrb[0].mxu0
        %7845 = vmatprep.mubr.f32.mxu0 0.0
        %7846 = vmatmul.mubr.f32.gmra.mrb[0].mxu0 %v7572
        %v7847 = vpop.f32.mrb[0].mxu0
        %v7848 = vadd.f32 0.0, %v7847
        %v7849 = vpop.f32.mrb[0].mxu0
        %7850 = vmatprep.mubr.f32.mxu0 0.0
        %7851 = vmatmul.mubr.f32.gmra.mrb[0].mxu0 %v7575
        %v7852 = vpop.f32.mrb[0].mxu0
        %v7853 = vadd.f32 0.0, %v7852
        %v7854 = vpop.f32.mrb[0].mxu0
        %7855 = vmatprep.mubr.f32.mxu0 0.0
        %7856 = vmatmul.mubr.f32.gmra.mrb[0].mxu0 %v7578
        %v7857 = vpop.f32.mrb[0].mxu0
        %v7858 = vadd.f32 0.0, %v7857
        %v7859 = vpop.f32.mrb[0].mxu0
        %7860 = vmatprep.mubr.f32.mxu0 0.0
        %7861 = vmatmul.mubr.f32.gmra.mrb[0].mxu0 %v7581
        %v7862 = vpop.f32.mrb[0].mxu0
        %v7863 = vadd.f32 0.0, %v7862
        %v7864 = vpop.f32.mrb[0].mxu0
        %7865 = vmatprep.mubr.f32.mxu0 0.0
        %7866 = vmatmul.mubr.f32.gmra.mrb[0].mxu0 %v7584
        %v7867 = vpop.f32.mrb[0].mxu0
        %v7868 = vadd.f32 0.0, %v7867
        %v7869 = vpop.f32.mrb[0].mxu0
        %7870 = vmatprep.mubr.f32.mxu0 0.0
        %7871 = vmatmul.mubr.f32.gmra.mrb[0].mxu0 %v7587
        %v7872 = vpop.f32.mrb[0].mxu0
        %v7873 = vadd.f32 0.0, %v7872
        %v7874 = vpop.f32.mrb[0].mxu0
        %7875 = vmatprep.mubr.f32.mxu0 0.0
        %7876 = vmatmul.mubr.f32.gmra.mrb[0].mxu0 %v7590
        %v7877 = vpop.f32.mrb[0].mxu0
        %v7878 = vadd.f32 0.0, %v7877
        %v7879 = vpop.f32.mrb[0].mxu0
        %7880 = vmatprep.mubr.f32.mxu0 0.0
        %7881 = vmatmul.mubr.f32.gmra.mrb[0].mxu0 %v7593
        %v7882 = vpop.f32.mrb[0].mxu0
        %v7883 = vadd.f32 0.0, %v7882
        %v7884 = vpop.f32.mrb[0].mxu0
        %7885 = vmatprep.mubr.f32.mxu0 0.0
        %7886 = vmatmul.mubr.f32.gmra.mrb[0].mxu0 %v7596
        %v7887 = vpop.f32.mrb[0].mxu0
        %v7888 = vadd.f32 0.0, %v7887
        %v7889 = vpop.f32.mrb[0].mxu0
        %7890 = vmatprep.mubr.f32.mxu0 0.0
        %7891 = vmatmul.mubr.f32.gmra.mrb[0].mxu0 %v7599
        %v7892 = vpop.f32.mrb[0].mxu0
        %v7893 = vadd.f32 0.0, %v7892
        %v7894 = vpop.f32.mrb[0].mxu0
        %7895 = vmatprep.mubr.f32.mxu0 0.0
        %7896 = vmatmul.mubr.f32.gmra.mrb[0].mxu0 %v7602
        %v7897 = vpop.f32.mrb[0].mxu0
        %v7898 = vadd.f32 0.0, %v7897
        %v7899 = vpop.f32.mrb[0].mxu0
        %7900 = vmatprep.mubr.f32.mxu0 0.0
        %7901 = vmatmul.mubr.f32.gmra.mrb[0].mxu0 %v7605
        %v7902 = vpop.f32.mrb[0].mxu0
        %v7903 = vadd.f32 0.0, %v7902
        %v7904 = vpop.f32.mrb[0].mxu0
        %7905 = vmatprep.mubr.f32.mxu0 0.0
        %7906 = vmatmul.mubr.f32.gmra.mrb[0].mxu0 %v7608
        %v7907 = vpop.f32.mrb[0].mxu0
        %v7908 = vadd.f32 0.0, %v7907
        %v7909 = vpop.f32.mrb[0].mxu0
        %7910 = vmatprep.mubr.f32.mxu0 0.0
        %7911 = vmatmul.mubr.f32.gmra.mrb[0].mxu0 %v7611
        %v7912 = vpop.f32.mrb[0].mxu0
        %v7913 = vadd.f32 0.0, %v7912
        %v7914 = vpop.f32.mrb[0].mxu0
        %7915 = vmatprep.mubr.f32.mxu0 0.0
        %7916 = vmatmul.mubr.f32.gmra.mrb[0].mxu0 %v7614
        %v7917 = vpop.f32.mrb[0].mxu0
        %v7918 = vadd.f32 0.0, %v7917
        %v7919 = vpop.f32.mrb[0].mxu0
        %7920 = vmatprep.mubr.f32.mxu0 0.0
        %7921 = vmatmul.mubr.f32.gmra.mrb[0].mxu0 %v7617
        %v7922 = vpop.f32.mrb[0].mxu0
        %v7923 = vadd.f32 0.0, %v7922
        %v7924 = vpop.f32.mrb[0].mxu0
        %7925 = vmatprep.mubr.f32.mxu0 0.0
        %7926 = vmatmul.mubr.f32.gmra.mrb[0].mxu0 %v7620
        %v7927 = vpop.f32.mrb[0].mxu0
        %v7928 = vadd.f32 0.0, %v7927
        %v7929 = vpop.f32.mrb[0].mxu0
        %7930 = vmatprep.mubr.f32.mxu0 0.0
        %7931 = vmatmul.mubr.f32.gmra.mrb[0].mxu0 %v7623
        %v7932 = vpop.f32.mrb[0].mxu0
        %v7933 = vadd.f32 0.0, %v7932
        %v7934 = vpop.f32.mrb[0].mxu0
        %7935 = vmatprep.mubr.f32.mxu0 0.0
        %7936 = vmatmul.mubr.f32.gmra.mrb[0].mxu0 %v7626
        %v7937 = vpop.f32.mrb[0].mxu0
        %v7938 = vadd.f32 0.0, %v7937
        %v7939 = vpop.f32.mrb[0].mxu0
        %7940 = vmatprep.mubr.f32.mxu0 0.0
        %7941 = vmatmul.mubr.f32.gmra.mrb[0].mxu0 %v7629
        %v7942 = vpop.f32.mrb[0].mxu0
        %v7943 = vadd.f32 0.0, %v7942
        %v7944 = vpop.f32.mrb[0].mxu0
        %7945 = vmatprep.mubr.f32.mxu0 0.0
        %7946 = vmatmul.mubr.f32.gmra.mrb[0].mxu0 %v7632
        %v7947 = vpop.f32.mrb[0].mxu0
        %v7948 = vadd.f32 0.0, %v7947
        %v7949 = vpop.f32.mrb[0].mxu0
        %7950 = vmatprep.mubr.f32.mxu0 0.0
        %7951 = vmatmul.mubr.f32.gmra.mrb[0].mxu0 %v7635
        %v7952 = vpop.f32.mrb[0].mxu0
        %v7953 = vadd.f32 0.0, %v7952
        %v7954 = vpop.f32.mrb[0].mxu0
        %7955 = vmatprep.mubr.f32.mxu0 0.0
        %7956 = vmatmul.mubr.f32.gmra.mrb[0].mxu0 %v7638
        %v7957 = vpop.f32.mrb[0].mxu0
        %v7958 = vadd.f32 0.0, %v7957
        %v7959 = vpop.f32.mrb[0].mxu0
        %7960 = vmatprep.mubr.f32.mxu0 0.0
        %7961 = vmatmul.mubr.f32.gmra.mrb[0].mxu0 %v7641
        %v7962 = vpop.f32.mrb[0].mxu0
        %v7963 = vadd.f32 0.0, %v7962
        %v7964 = vpop.f32.mrb[0].mxu0
        %7965 = vmatprep.mubr.f32.mxu0 0.0
        %7966 = vmatmul.mubr.f32.gmra.mrb[0].mxu0 %v7644
        %v7967 = vpop.f32.mrb[0].mxu0
        %v7968 = vadd.f32 0.0, %v7967
        %v7969 = vpop.f32.mrb[0].mxu0
        %7970 = vmatprep.mubr.f32.mxu0 0.0
        %7971 = vmatmul.mubr.f32.gmra.mrb[0].mxu0 %v7647
        %v7972 = vpop.f32.mrb[0].mxu0
        %v7973 = vadd.f32 0.0, %v7972
        %v7974 = vpop.f32.mrb[0].mxu0
        %7975 = vmatprep.mubr.f32.mxu0 0.0
        %7976 = vmatmul.mubr.f32.gmra.mrb[0].mxu0 %v7650
        %v7977 = vpop.f32.mrb[0].mxu0
        %v7978 = vadd.f32 0.0, %v7977
        %v7979 = vpop.f32.mrb[0].mxu0
        %7980 = vmatprep.mubr.f32.mxu0 0.0
        %7981 = vmatmul.mubr.f32.gmra.mrb[0].mxu0 %v7653
        %v7982 = vpop.f32.mrb[0].mxu0
        %v7983 = vadd.f32 0.0, %v7982
        %v7984 = vpop.f32.mrb[0].mxu0
        %7985 = vmatprep.mubr.f32.mxu0 0.0
        %7986 = vmatmul.mubr.f32.gmra.mrb[0].mxu0 %v7656
        %v7987 = vpop.f32.mrb[0].mxu0
        %v7988 = vadd.f32 0.0, %v7987
        %v7989 = vpop.f32.mrb[0].mxu0
        %7990 = vmatprep.mubr.f32.mxu0 0.0
        %7991 = vmatmul.mubr.f32.gmra.mrb[0].mxu0 %v7659
        %v7992 = vpop.f32.mrb[0].mxu0
        %v7993 = vadd.f32 0.0, %v7992
        %v7994 = vpop.f32.mrb[0].mxu0
        %7995 = vmatprep.mubr.f32.mxu0 0.0
        %7996 = vmatmul.mubr.f32.gmra.mrb[0].mxu0 %v7662
        %v7997 = vpop.f32.mrb[0].mxu0
        %v7998 = vadd.f32 0.0, %v7997
        %v7999 = vpop.f32.mrb[0].mxu0
        %8000 = vmatprep.mubr.f32.mxu0 0.0
        %8001 = vmatmul.mubr.f32.gmra.mrb[0].mxu0 %v7665
        %v8002 = vpop.f32.mrb[0].mxu0
        %v8003 = vadd.f32 0.0, %v8002
        %v8004 = vpop.f32.mrb[0].mxu0
        %8005 = vmatprep.mubr.f32.mxu0 0.0
        %8006 = vmatmul.mubr.f32.gmra.mrb[0].mxu0 %v7668
        %v8007 = vpop.f32.mrb[0].mxu0
        %v8008 = vadd.f32 0.0, %v8007
        %v8009 = vpop.f32.mrb[0].mxu0
        %8010 = vmatprep.mubr.f32.mxu0 0.0
        %8011 = vmatmul.mubr.f32.gmra.mrb[0].mxu0 %v7671
        %v8012 = vpop.f32.mrb[0].mxu0
        %v8013 = vadd.f32 0.0, %v8012
        %v8014 = vpop.f32.mrb[0].mxu0
        %8015 = vmatprep.mubr.f32.mxu0 0.0
        %8016 = vmatmul.mubr.f32.gmra.mrb[0].mxu0 %v7674
        %v8017 = vpop.f32.mrb[0].mxu0
        %v8018 = vadd.f32 0.0, %v8017
        %v8019 = vpop.f32.mrb[0].mxu0
        %8020 = vmatprep.mubr.f32.mxu0 0.0
        %8021 = vmatmul.mubr.f32.gmra.mrb[0].mxu0 %v7677
        %v8022 = vpop.f32.mrb[0].mxu0
        %v8023 = vadd.f32 0.0, %v8022
        %v8024 = vpop.f32.mrb[0].mxu0
        %8025 = vmatprep.mubr.f32.mxu0 0.0
        %8026 = vmatmul.mubr.f32.gmra.mrb[0].mxu0 %v7680
        %v8027 = vpop.f32.mrb[0].mxu0
        %v8028 = vadd.f32 0.0, %v8027
        %v8029 = vpop.f32.mrb[0].mxu0
        %8030 = vmatprep.mubr.f32.mxu0 0.0
        %8031 = vmatmul.mubr.f32.gmra.mrb[0].mxu0 %v7683
        %v8032 = vpop.f32.mrb[0].mxu0
        %v8033 = vadd.f32 0.0, %v8032
        %v8034 = vpop.f32.mrb[0].mxu0
        %8035 = vmatprep.mubr.f32.mxu0 0.0
        %8036 = vmatmul.mubr.f32.gmra.mrb[0].mxu0 %v7686
        %v8037 = vpop.f32.mrb[0].mxu0
        %v8038 = vadd.f32 0.0, %v8037
        %v8039 = vpop.f32.mrb[0].mxu0
        %8040 = vmatprep.mubr.f32.mxu0 0.0
        %8041 = vmatmul.mubr.f32.gmra.mrb[0].mxu0 %v7689
        %v8042 = vpop.f32.mrb[0].mxu0
        %v8043 = vadd.f32 0.0, %v8042
        %v8044 = vpop.f32.mrb[0].mxu0
        %8045 = vmatprep.mubr.f32.mxu0 0.0
        %8046 = vmatmul.mubr.f32.gmra.mrb[0].mxu0 %v7692
        %v8047 = vpop.f32.mrb[0].mxu0
        %v8048 = vadd.f32 0.0, %v8047
        %v8049 = vpop.f32.mrb[0].mxu0
        %8050 = vmatprep.mubr.f32.mxu0 0.0
        %8051 = vmatmul.mubr.f32.gmra.mrb[0].mxu0 %v7695
        %v8052 = vpop.f32.mrb[0].mxu0
        %v8053 = vadd.f32 0.0, %v8052
        %v8054 = vpop.f32.mrb[0].mxu0
        %8055 = vmatprep.mubr.f32.mxu0 0.0
        %8056 = vmatmul.mubr.f32.gmra.mrb[0].mxu0 %v7698
        %v8057 = vpop.f32.mrb[0].mxu0
        %v8058 = vadd.f32 0.0, %v8057
        %v8059 = vpop.f32.mrb[0].mxu0
        %8060 = vmatprep.mubr.f32.mxu0 0.0
        %8061 = vmatmul.mubr.f32.gmra.mrb[0].mxu0 %v7701
        %v8062 = vpop.f32.mrb[0].mxu0
        %v8063 = vadd.f32 0.0, %v8062
        %v8064 = vpop.f32.mrb[0].mxu0
        %8065 = vmatprep.mubr.f32.mxu0 0.0
        %8066 = vmatmul.mubr.f32.gmra.mrb[0].mxu0 %v7704
        %v8067 = vpop.f32.mrb[0].mxu0
        %v8068 = vadd.f32 0.0, %v8067
        %v8069 = vpop.f32.mrb[0].mxu0
        %8070 = vmatprep.mubr.f32.mxu0 0.0
        %8071 = vmatmul.mubr.f32.gmra.mrb[0].mxu0 %v7707
        %v8072 = vpop.f32.mrb[0].mxu0
        %v8073 = vadd.f32 0.0, %v8072
        %v8074 = vpop.f32.mrb[0].mxu0
        %8075 = vmatprep.mubr.f32.mxu0 0.0
        %8076 = vmatmul.mubr.f32.gmra.mrb[0].mxu0 %v7710
        %v8077 = vpop.f32.mrb[0].mxu0
        %v8078 = vadd.f32 0.0, %v8077
        %v8079 = vpop.f32.mrb[0].mxu0
        %8080 = vmatprep.mubr.f32.mxu0 0.0
        %8081 = vmatmul.mubr.f32.gmra.mrb[0].mxu0 %v7713
        %v8082 = vpop.f32.mrb[0].mxu0
        %v8083 = vadd.f32 0.0, %v8082
        %v8084 = vpop.f32.mrb[0].mxu0
        %8085 = vmatprep.mubr.f32.mxu0 0.0
        %8086 = vmatmul.mubr.f32.gmra.mrb[0].mxu0 %v7716
        %v8087 = vpop.f32.mrb[0].mxu0
        %v8088 = vadd.f32 0.0, %v8087
        %v8089 = vpop.f32.mrb[0].mxu0
        %8090 = vmatprep.mubr.f32.mxu0 0.0
        %8091 = vmatmul.mubr.f32.gmra.mrb[0].mxu0 %v7719
        %v8092 = vpop.f32.mrb[0].mxu0
        %v8093 = vadd.f32 0.0, %v8092
        %v8094 = vpop.f32.mrb[0].mxu0
        %8095 = vmatprep.mubr.f32.mxu0 0.0
        %8096 = vmatmul.mubr.f32.gmra.mrb[0].mxu0 %v7722
        %v8097 = vpop.f32.mrb[0].mxu0
        %v8098 = vadd.f32 0.0, %v8097
        %v8099 = vpop.f32.mrb[0].mxu0
        %8100 = vmatprep.mubr.f32.mxu0 0.0
        %8101 = vmatmul.mubr.f32.gmra.mrb[0].mxu0 %v7725
        %v8102 = vpop.f32.mrb[0].mxu0
        %v8103 = vadd.f32 0.0, %v8102
        %v8104 = vpop.f32.mrb[0].mxu0
        %8105 = vmatprep.mubr.f32.mxu0 0.0
        %8106 = vmatmul.mubr.f32.gmra.mrb[0].mxu0 %v7728
        %v8107 = vpop.f32.mrb[0].mxu0
        %v8108 = vadd.f32 0.0, %v8107
        %v8109 = vpop.f32.mrb[0].mxu0
        %8110 = vmatprep.mubr.f32.mxu0 0.0
        %8111 = vmatmul.mubr.f32.gmra.mrb[0].mxu0 %v7731
        %v8112 = vpop.f32.mrb[0].mxu0
        %v8113 = vadd.f32 0.0, %v8112
        %v8114 = vpop.f32.mrb[0].mxu0
        %8115 = vmatprep.mubr.f32.mxu0 0.0
        %8116 = vmatmul.mubr.f32.gmra.mrb[0].mxu0 %v7734
        %v8117 = vpop.f32.mrb[0].mxu0
        %v8118 = vadd.f32 0.0, %v8117
        %v8119 = vpop.f32.mrb[0].mxu0
        %8120 = vdwg.mxu0
        %v8121 = vmul.f32 %v7803, %v373
        %v8122 = vmul.f32 %v7808, %v374
        %v8123 = vmul.f32 %v7813, %v375
        %v8124 = vmul.f32 %v7818, %v376
        %v8125 = vmul.f32 %v7823, %v377
        %v8126 = vmul.f32 %v7828, %v378
        %v8127 = vmul.f32 %v7833, %v379
        %v8128 = vmul.f32 %v7838, %v380
        %v8129 = vmul.f32 %v7843, %v381
        %v8130 = vmul.f32 %v7848, %v382
        %v8131 = vmul.f32 %v7853, %v383
        %v8132 = vmul.f32 %v7858, %v384
        %v8133 = vmul.f32 %v7863, %v385
        %v8134 = vmul.f32 %v7868, %v386
        %v8135 = vmul.f32 %v7873, %v387
        %v8136 = vmul.f32 %v7878, %v388
        %v8137 = vmul.f32 %v7883, %v389
        %v8138 = vmul.f32 %v7888, %v390
        %v8139 = vmul.f32 %v7893, %v391
        %v8140 = vmul.f32 %v7898, %v392
        %v8141 = vmul.f32 %v7903, %v393
        %v8142 = vmul.f32 %v7908, %v394
        %v8143 = vmul.f32 %v7913, %v395
        %v8144 = vmul.f32 %v7918, %v396
        %v8145 = vmul.f32 %v7923, %v397
        %v8146 = vmul.f32 %v7928, %v398
        %v8147 = vmul.f32 %v7933, %v399
        %v8148 = vmul.f32 %v7938, %v400
        %v8149 = vmul.f32 %v7943, %v401
        %v8150 = vmul.f32 %v7948, %v402
        %v8151 = vmul.f32 %v7953, %v403
        %v8152 = vmul.f32 %v7958, %v404
        %v8153 = vmul.f32 %v7963, %v373
        %v8154 = vmul.f32 %v7968, %v374
        %v8155 = vmul.f32 %v7973, %v375
        %v8156 = vmul.f32 %v7978, %v376
        %v8157 = vmul.f32 %v7983, %v377
        %v8158 = vmul.f32 %v7988, %v378
        %v8159 = vmul.f32 %v7993, %v379
        %v8160 = vmul.f32 %v7998, %v380
        %v8161 = vmul.f32 %v8003, %v381
        %v8162 = vmul.f32 %v8008, %v382
        %v8163 = vmul.f32 %v8013, %v383
        %v8164 = vmul.f32 %v8018, %v384
        %v8165 = vmul.f32 %v8023, %v385
        %v8166 = vmul.f32 %v8028, %v386
        %v8167 = vmul.f32 %v8033, %v387
        %v8168 = vmul.f32 %v8038, %v388
        %v8169 = vmul.f32 %v8043, %v389
        %v8170 = vmul.f32 %v8048, %v390
        %v8171 = vmul.f32 %v8053, %v391
        %v8172 = vmul.f32 %v8058, %v392
        %v8173 = vmul.f32 %v8063, %v393
        %v8174 = vmul.f32 %v8068, %v394
        %v8175 = vmul.f32 %v8073, %v395
        %v8176 = vmul.f32 %v8078, %v396
        %v8177 = vmul.f32 %v8083, %v397
        %v8178 = vmul.f32 %v8088, %v398
        %v8179 = vmul.f32 %v8093, %v399
        %v8180 = vmul.f32 %v8098, %v400
        %v8181 = vmul.f32 %v8103, %v401
        %v8182 = vmul.f32 %v8108, %v402
        %v8183 = vmul.f32 %v8113, %v403
        %v8184 = vmul.f32 %v8118, %v404
        %v8185 = vadd.f32 %v6142, %v8121
        %v8186 = vadd.f32 %v6143, %v8122
        %v8187 = vadd.f32 %v6144, %v8123
        %v8188 = vadd.f32 %v6145, %v8124
        %v8189 = vadd.f32 %v6146, %v8125
        %v8190 = vadd.f32 %v6147, %v8126
        %v8191 = vadd.f32 %v6148, %v8127
        %v8192 = vadd.f32 %v6149, %v8128
        %v8193 = vadd.f32 %v6150, %v8129
        %v8194 = vadd.f32 %v6151, %v8130
        %v8195 = vadd.f32 %v6152, %v8131
        %v8196 = vadd.f32 %v6153, %v8132
        %v8197 = vadd.f32 %v6154, %v8133
        %v8198 = vadd.f32 %v6155, %v8134
        %v8199 = vadd.f32 %v6156, %v8135
        %v8200 = vadd.f32 %v6157, %v8136
        %v8201 = vadd.f32 %v6158, %v8137
        %v8202 = vadd.f32 %v6159, %v8138
        %v8203 = vadd.f32 %v6160, %v8139
        %v8204 = vadd.f32 %v6161, %v8140
        %v8205 = vadd.f32 %v6162, %v8141
        %v8206 = vadd.f32 %v6163, %v8142
        %v8207 = vadd.f32 %v6164, %v8143
        %v8208 = vadd.f32 %v6165, %v8144
        %v8209 = vadd.f32 %v6166, %v8145
        %v8210 = vadd.f32 %v6167, %v8146
        %v8211 = vadd.f32 %v6168, %v8147
        %v8212 = vadd.f32 %v6169, %v8148
        %v8213 = vadd.f32 %v6170, %v8149
        %v8214 = vadd.f32 %v6171, %v8150
        %v8215 = vadd.f32 %v6172, %v8151
        %v8216 = vadd.f32 %v6173, %v8152
        %v8217 = vadd.f32 %v6174, %v8153
        %v8218 = vadd.f32 %v6175, %v8154
        %v8219 = vadd.f32 %v6176, %v8155
        %v8220 = vadd.f32 %v6177, %v8156
        %v8221 = vadd.f32 %v6178, %v8157
        %v8222 = vadd.f32 %v6179, %v8158
        %v8223 = vadd.f32 %v6180, %v8159
        %v8224 = vadd.f32 %v6181, %v8160
        %v8225 = vadd.f32 %v6182, %v8161
        %v8226 = vadd.f32 %v6183, %v8162
        %v8227 = vadd.f32 %v6184, %v8163
        %v8228 = vadd.f32 %v6185, %v8164
        %v8229 = vadd.f32 %v6186, %v8165
        %v8230 = vadd.f32 %v6187, %v8166
        %v8231 = vadd.f32 %v6188, %v8167
        %v8232 = vadd.f32 %v6189, %v8168
        %v8233 = vadd.f32 %v6190, %v8169
        %v8234 = vadd.f32 %v6191, %v8170
        %v8235 = vadd.f32 %v6192, %v8171
        %v8236 = vadd.f32 %v6193, %v8172
        %v8237 = vadd.f32 %v6194, %v8173
        %v8238 = vadd.f32 %v6195, %v8174
        %v8239 = vadd.f32 %v6196, %v8175
        %v8240 = vadd.f32 %v6197, %v8176
        %v8241 = vadd.f32 %v6198, %v8177
        %v8242 = vadd.f32 %v6199, %v8178
        %v8243 = vadd.f32 %v6200, %v8179
        %v8244 = vadd.f32 %v6201, %v8180
        %v8245 = vadd.f32 %v6202, %v8181
        %v8246 = vadd.f32 %v6203, %v8182
        %v8247 = vadd.f32 %v6204, %v8183
        %v8248 = vadd.f32 %v6205, %v8184
        %v8249 = vcvt.s32.f32 %v7385
        %v8250 = vcvt.s32.f32 %v7387
        %v8251 = vcvt.s32.f32 %v7389
        %v8252 = vcvt.s32.f32 %v7391
        %v8253 = vcvt.s32.f32 %v7393
        %v8254 = vcvt.s32.f32 %v7395
        %v8255 = vcvt.s32.f32 %v7397
        %v8256 = vcvt.s32.f32 %v7399
        %v8257 = vcvt.s32.f32 %v7401
        %v8258 = vcvt.s32.f32 %v7403
        %v8259 = vcvt.s32.f32 %v7405
        %v8260 = vcvt.s32.f32 %v7407
        %v8261 = vcvt.s32.f32 %v7409
        %v8262 = vcvt.s32.f32 %v7411
        %v8263 = vcvt.s32.f32 %v7413
        %v8264 = vcvt.s32.f32 %v7415
        %v8265 = vcvt.s32.f32 %v7417
        %v8266 = vcvt.s32.f32 %v7419
        %v8267 = vcvt.s32.f32 %v7421
        %v8268 = vcvt.s32.f32 %v7423
        %v8269 = vcvt.s32.f32 %v7425
        %v8270 = vcvt.s32.f32 %v7427
        %v8271 = vcvt.s32.f32 %v7429
        %v8272 = vcvt.s32.f32 %v7431
        %v8273 = vcvt.s32.f32 %v7433
        %v8274 = vcvt.s32.f32 %v7435
        %v8275 = vcvt.s32.f32 %v7437
        %v8276 = vcvt.s32.f32 %v7439
        %v8277 = vcvt.s32.f32 %v7441
        %v8278 = vcvt.s32.f32 %v7443
        %v8279 = vcvt.s32.f32 %v7445
        %v8280 = vcvt.s32.f32 %v7447
        %v8281 = vsub.f32 %v210, %v8185
        %v8282 = vsub.f32 %v211, %v8186
        %v8283 = vsub.f32 %v212, %v8187
        %v8284 = vsub.f32 %v213, %v8188
        %v8285 = vsub.f32 %v214, %v8189
        %v8286 = vsub.f32 %v215, %v8190
        %v8287 = vsub.f32 %v216, %v8191
        %v8288 = vsub.f32 %v217, %v8192
        %v8289 = vsub.f32 %v218, %v8193
        %v8290 = vsub.f32 %v219, %v8194
        %v8291 = vsub.f32 %v220, %v8195
        %v8292 = vsub.f32 %v221, %v8196
        %v8293 = vsub.f32 %v222, %v8197
        %v8294 = vsub.f32 %v223, %v8198
        %v8295 = vsub.f32 %v224, %v8199
        %v8296 = vsub.f32 %v225, %v8200
        %v8297 = vsub.f32 %v226, %v8201
        %v8298 = vsub.f32 %v227, %v8202
        %v8299 = vsub.f32 %v228, %v8203
        %v8300 = vsub.f32 %v229, %v8204
        %v8301 = vsub.f32 %v230, %v8205
        %v8302 = vsub.f32 %v231, %v8206
        %v8303 = vsub.f32 %v232, %v8207
        %v8304 = vsub.f32 %v233, %v8208
        %v8305 = vsub.f32 %v234, %v8209
        %v8306 = vsub.f32 %v235, %v8210
        %v8307 = vsub.f32 %v236, %v8211
        %v8308 = vsub.f32 %v237, %v8212
        %v8309 = vsub.f32 %v238, %v8213
        %v8310 = vsub.f32 %v239, %v8214
        %v8311 = vsub.f32 %v240, %v8215
        %v8312 = vsub.f32 %v241, %v8216
        %v8313 = vsub.f32 %v210, %v8217
        %v8314 = vsub.f32 %v211, %v8218
        %v8315 = vsub.f32 %v212, %v8219
        %v8316 = vsub.f32 %v213, %v8220
        %v8317 = vsub.f32 %v214, %v8221
        %v8318 = vsub.f32 %v215, %v8222
        %v8319 = vsub.f32 %v216, %v8223
        %v8320 = vsub.f32 %v217, %v8224
        %v8321 = vsub.f32 %v218, %v8225
        %v8322 = vsub.f32 %v219, %v8226
        %v8323 = vsub.f32 %v220, %v8227
        %v8324 = vsub.f32 %v221, %v8228
        %v8325 = vsub.f32 %v222, %v8229
        %v8326 = vsub.f32 %v223, %v8230
        %v8327 = vsub.f32 %v224, %v8231
        %v8328 = vsub.f32 %v225, %v8232
        %v8329 = vsub.f32 %v226, %v8233
        %v8330 = vsub.f32 %v227, %v8234
        %v8331 = vsub.f32 %v228, %v8235
        %v8332 = vsub.f32 %v229, %v8236
        %v8333 = vsub.f32 %v230, %v8237
        %v8334 = vsub.f32 %v231, %v8238
        %v8335 = vsub.f32 %v232, %v8239
        %v8336 = vsub.f32 %v233, %v8240
        %v8337 = vsub.f32 %v234, %v8241
        %v8338 = vsub.f32 %v235, %v8242
        %v8339 = vsub.f32 %v236, %v8243
        %v8340 = vsub.f32 %v237, %v8244
        %v8341 = vsub.f32 %v238, %v8245
        %v8342 = vsub.f32 %v239, %v8246
        %v8343 = vsub.f32 %v240, %v8247
        %v8344 = vsub.f32 %v241, %v8248
        %v8345 = vmul.f32 %v8281, %v8281
        %v8346 = vmul.f32 %v8282, %v8282
        %v8347 = vmul.f32 %v8283, %v8283
        %v8348 = vmul.f32 %v8284, %v8284
        %v8349 = vmul.f32 %v8285, %v8285
        %v8350 = vmul.f32 %v8286, %v8286
        %v8351 = vmul.f32 %v8287, %v8287
        %v8352 = vmul.f32 %v8288, %v8288
        %v8353 = vmul.f32 %v8289, %v8289
        %v8354 = vmul.f32 %v8290, %v8290
        %v8355 = vmul.f32 %v8291, %v8291
        %v8356 = vmul.f32 %v8292, %v8292
        %v8357 = vmul.f32 %v8293, %v8293
        %v8358 = vmul.f32 %v8294, %v8294
        %v8359 = vmul.f32 %v8295, %v8295
        %v8360 = vmul.f32 %v8296, %v8296
        %v8361 = vmul.f32 %v8297, %v8297
        %v8362 = vmul.f32 %v8298, %v8298
        %v8363 = vmul.f32 %v8299, %v8299
        %v8364 = vmul.f32 %v8300, %v8300
        %v8365 = vmul.f32 %v8301, %v8301
        %v8366 = vmul.f32 %v8302, %v8302
        %v8367 = vmul.f32 %v8303, %v8303
        %v8368 = vmul.f32 %v8304, %v8304
        %v8369 = vmul.f32 %v8305, %v8305
        %v8370 = vmul.f32 %v8306, %v8306
        %v8371 = vmul.f32 %v8307, %v8307
        %v8372 = vmul.f32 %v8308, %v8308
        %v8373 = vmul.f32 %v8309, %v8309
        %v8374 = vmul.f32 %v8310, %v8310
        %v8375 = vmul.f32 %v8311, %v8311
        %v8376 = vmul.f32 %v8312, %v8312
        %v8377 = vsel %vm408, %v8345, 0.0
        %8378 = vadd.xlane.f32.xlu0 %v8377
        %v8379 = vpop.xlane.xlu0 %8378
        %v8380 = vsel %vm408, %v8346, 0.0
        %8381 = vadd.xlane.f32.xlu0 %v8380
        %v8382 = vpop.xlane.xlu0 %8381
        %v8383 = vsel %vm408, %v8347, 0.0
        %8384 = vadd.xlane.f32.xlu0 %v8383
        %v8385 = vpop.xlane.xlu0 %8384
        %v8386 = vsel %vm408, %v8348, 0.0
        %8387 = vadd.xlane.f32.xlu0 %v8386
        %v8388 = vpop.xlane.xlu0 %8387
        %v8389 = vsel %vm408, %v8349, 0.0
        %8390 = vadd.xlane.f32.xlu0 %v8389
        %v8391 = vpop.xlane.xlu0 %8390
        %v8392 = vsel %vm408, %v8350, 0.0
        %8393 = vadd.xlane.f32.xlu0 %v8392
        %v8394 = vpop.xlane.xlu0 %8393
        %v8395 = vsel %vm408, %v8351, 0.0
        %8396 = vadd.xlane.f32.xlu0 %v8395
        %v8397 = vpop.xlane.xlu0 %8396
        %v8398 = vsel %vm408, %v8352, 0.0
        %8399 = vadd.xlane.f32.xlu0 %v8398
        %v8400 = vpop.xlane.xlu0 %8399
        %v8401 = vsel %vm408, %v8353, 0.0
        %8402 = vadd.xlane.f32.xlu0 %v8401
        %v8403 = vpop.xlane.xlu0 %8402
        %v8404 = vsel %vm408, %v8354, 0.0
        %8405 = vadd.xlane.f32.xlu0 %v8404
        %v8406 = vpop.xlane.xlu0 %8405
        %v8407 = vsel %vm408, %v8355, 0.0
        %8408 = vadd.xlane.f32.xlu0 %v8407
        %v8409 = vpop.xlane.xlu0 %8408
        %v8410 = vsel %vm408, %v8356, 0.0
        %8411 = vadd.xlane.f32.xlu0 %v8410
        %v8412 = vpop.xlane.xlu0 %8411
        %v8413 = vsel %vm408, %v8357, 0.0
        %8414 = vadd.xlane.f32.xlu0 %v8413
        %v8415 = vpop.xlane.xlu0 %8414
        %v8416 = vsel %vm408, %v8358, 0.0
        %8417 = vadd.xlane.f32.xlu0 %v8416
        %v8418 = vpop.xlane.xlu0 %8417
        %v8419 = vsel %vm408, %v8359, 0.0
        %8420 = vadd.xlane.f32.xlu0 %v8419
        %v8421 = vpop.xlane.xlu0 %8420
        %v8422 = vsel %vm408, %v8360, 0.0
        %8423 = vadd.xlane.f32.xlu0 %v8422
        %v8424 = vpop.xlane.xlu0 %8423
        %v8425 = vsel %vm408, %v8361, 0.0
        %8426 = vadd.xlane.f32.xlu0 %v8425
        %v8427 = vpop.xlane.xlu0 %8426
        %v8428 = vsel %vm408, %v8362, 0.0
        %8429 = vadd.xlane.f32.xlu0 %v8428
        %v8430 = vpop.xlane.xlu0 %8429
        %v8431 = vsel %vm408, %v8363, 0.0
        %8432 = vadd.xlane.f32.xlu0 %v8431
        %v8433 = vpop.xlane.xlu0 %8432
        %v8434 = vsel %vm408, %v8364, 0.0
        %8435 = vadd.xlane.f32.xlu0 %v8434
        %v8436 = vpop.xlane.xlu0 %8435
        %v8437 = vsel %vm408, %v8365, 0.0
        %8438 = vadd.xlane.f32.xlu0 %v8437
        %v8439 = vpop.xlane.xlu0 %8438
        %v8440 = vsel %vm408, %v8366, 0.0
        %8441 = vadd.xlane.f32.xlu0 %v8440
        %v8442 = vpop.xlane.xlu0 %8441
        %v8443 = vsel %vm408, %v8367, 0.0
        %8444 = vadd.xlane.f32.xlu0 %v8443
        %v8445 = vpop.xlane.xlu0 %8444
        %v8446 = vsel %vm408, %v8368, 0.0
        %8447 = vadd.xlane.f32.xlu0 %v8446
        %v8448 = vpop.xlane.xlu0 %8447
        %v8449 = vsel %vm408, %v8369, 0.0
        %8450 = vadd.xlane.f32.xlu0 %v8449
        %v8451 = vpop.xlane.xlu0 %8450
        %v8452 = vsel %vm408, %v8370, 0.0
        %8453 = vadd.xlane.f32.xlu0 %v8452
        %v8454 = vpop.xlane.xlu0 %8453
        %v8455 = vsel %vm408, %v8371, 0.0
        %8456 = vadd.xlane.f32.xlu0 %v8455
        %v8457 = vpop.xlane.xlu0 %8456
        %v8458 = vsel %vm408, %v8372, 0.0
        %8459 = vadd.xlane.f32.xlu0 %v8458
        %v8460 = vpop.xlane.xlu0 %8459
        %v8461 = vsel %vm408, %v8373, 0.0
        %8462 = vadd.xlane.f32.xlu0 %v8461
        %v8463 = vpop.xlane.xlu0 %8462
        %v8464 = vsel %vm408, %v8374, 0.0
        %8465 = vadd.xlane.f32.xlu0 %v8464
        %v8466 = vpop.xlane.xlu0 %8465
        %v8467 = vsel %vm408, %v8375, 0.0
        %8468 = vadd.xlane.f32.xlu0 %v8467
        %v8469 = vpop.xlane.xlu0 %8468
        %v8470 = vsel %vm408, %v8376, 0.0
        %8471 = vadd.xlane.f32.xlu0 %v8470
        %v8472 = vpop.xlane.xlu0 %8471
        %v8473 = vadd.f32 %v8379, %v8382
        %v8474 = vadd.f32 %v8473, %v8385
        %v8475 = vadd.f32 %v8474, %v8388
        %v8476 = vadd.f32 %v8475, %v8391
        %v8477 = vadd.f32 %v8476, %v8394
        %v8478 = vadd.f32 %v8477, %v8397
        %v8479 = vadd.f32 %v8478, %v8400
        %v8480 = vadd.f32 %v8479, %v8403
        %v8481 = vadd.f32 %v8480, %v8406
        %v8482 = vadd.f32 %v8481, %v8409
        %v8483 = vadd.f32 %v8482, %v8412
        %v8484 = vadd.f32 %v8483, %v8415
        %v8485 = vadd.f32 %v8484, %v8418
        %v8486 = vadd.f32 %v8485, %v8421
        %v8487 = vadd.f32 %v8486, %v8424
        %v8488 = vadd.f32 %v8487, %v8427
        %v8489 = vadd.f32 %v8488, %v8430
        %v8490 = vadd.f32 %v8489, %v8433
        %v8491 = vadd.f32 %v8490, %v8436
        %v8492 = vadd.f32 %v8491, %v8439
        %v8493 = vadd.f32 %v8492, %v8442
        %v8494 = vadd.f32 %v8493, %v8445
        %v8495 = vadd.f32 %v8494, %v8448
        %v8496 = vadd.f32 %v8495, %v8451
        %v8497 = vadd.f32 %v8496, %v8454
        %v8498 = vadd.f32 %v8497, %v8457
        %v8499 = vadd.f32 %v8498, %v8460
        %v8500 = vadd.f32 %v8499, %v8463
        %v8501 = vadd.f32 %v8500, %v8466
        %v8502 = vadd.f32 %v8501, %v8469
        %v8503 = vadd.f32 %v8502, %v8472
        %v8504 = vrot.slane %v8503, 4
        %v8505 = vadd.f32 %v8503, %v8504
        %v8506 = vrot.slane %v8505, 2
        %v8507 = vadd.f32 %v8505, %v8506
        %v8508 = vrot.slane %v8507, 1
        %v8509 = vadd.f32 %v8507, %v8508
        %v8510 = vadd.f32 %v6467, %v8509
        %v8511 = vmul.f32 %v8313, %v8313
        %v8512 = vmul.f32 %v8314, %v8314
        %v8513 = vmul.f32 %v8315, %v8315
        %v8514 = vmul.f32 %v8316, %v8316
        %v8515 = vmul.f32 %v8317, %v8317
        %v8516 = vmul.f32 %v8318, %v8318
        %v8517 = vmul.f32 %v8319, %v8319
        %v8518 = vmul.f32 %v8320, %v8320
        %v8519 = vmul.f32 %v8321, %v8321
        %v8520 = vmul.f32 %v8322, %v8322
        %v8521 = vmul.f32 %v8323, %v8323
        %v8522 = vmul.f32 %v8324, %v8324
        %v8523 = vmul.f32 %v8325, %v8325
        %v8524 = vmul.f32 %v8326, %v8326
        %v8525 = vmul.f32 %v8327, %v8327
        %v8526 = vmul.f32 %v8328, %v8328
        %v8527 = vmul.f32 %v8329, %v8329
        %v8528 = vmul.f32 %v8330, %v8330
        %v8529 = vmul.f32 %v8331, %v8331
        %v8530 = vmul.f32 %v8332, %v8332
        %v8531 = vmul.f32 %v8333, %v8333
        %v8532 = vmul.f32 %v8334, %v8334
        %v8533 = vmul.f32 %v8335, %v8335
        %v8534 = vmul.f32 %v8336, %v8336
        %v8535 = vmul.f32 %v8337, %v8337
        %v8536 = vmul.f32 %v8338, %v8338
        %v8537 = vmul.f32 %v8339, %v8339
        %v8538 = vmul.f32 %v8340, %v8340
        %v8539 = vmul.f32 %v8341, %v8341
        %v8540 = vmul.f32 %v8342, %v8342
        %v8541 = vmul.f32 %v8343, %v8343
        %v8542 = vmul.f32 %v8344, %v8344
        %v8543 = vsel %vm408, %v8511, 0.0
        %8544 = vadd.xlane.f32.xlu0 %v8543
        %v8545 = vpop.xlane.xlu0 %8544
        %v8546 = vsel %vm408, %v8512, 0.0
        %8547 = vadd.xlane.f32.xlu0 %v8546
        %v8548 = vpop.xlane.xlu0 %8547
        %v8549 = vsel %vm408, %v8513, 0.0
        %8550 = vadd.xlane.f32.xlu0 %v8549
        %v8551 = vpop.xlane.xlu0 %8550
        %v8552 = vsel %vm408, %v8514, 0.0
        %8553 = vadd.xlane.f32.xlu0 %v8552
        %v8554 = vpop.xlane.xlu0 %8553
        %v8555 = vsel %vm408, %v8515, 0.0
        %8556 = vadd.xlane.f32.xlu0 %v8555
        %v8557 = vpop.xlane.xlu0 %8556
        %v8558 = vsel %vm408, %v8516, 0.0
        %8559 = vadd.xlane.f32.xlu0 %v8558
        %v8560 = vpop.xlane.xlu0 %8559
        %v8561 = vsel %vm408, %v8517, 0.0
        %8562 = vadd.xlane.f32.xlu0 %v8561
        %v8563 = vpop.xlane.xlu0 %8562
        %v8564 = vsel %vm408, %v8518, 0.0
        %8565 = vadd.xlane.f32.xlu0 %v8564
        %v8566 = vpop.xlane.xlu0 %8565
        %v8567 = vsel %vm408, %v8519, 0.0
        %8568 = vadd.xlane.f32.xlu0 %v8567
        %v8569 = vpop.xlane.xlu0 %8568
        %v8570 = vsel %vm408, %v8520, 0.0
        %8571 = vadd.xlane.f32.xlu0 %v8570
        %v8572 = vpop.xlane.xlu0 %8571
        %v8573 = vsel %vm408, %v8521, 0.0
        %8574 = vadd.xlane.f32.xlu0 %v8573
        %v8575 = vpop.xlane.xlu0 %8574
        %v8576 = vsel %vm408, %v8522, 0.0
        %8577 = vadd.xlane.f32.xlu0 %v8576
        %v8578 = vpop.xlane.xlu0 %8577
        %v8579 = vsel %vm408, %v8523, 0.0
        %8580 = vadd.xlane.f32.xlu0 %v8579
        %v8581 = vpop.xlane.xlu0 %8580
        %v8582 = vsel %vm408, %v8524, 0.0
        %8583 = vadd.xlane.f32.xlu0 %v8582
        %v8584 = vpop.xlane.xlu0 %8583
        %v8585 = vsel %vm408, %v8525, 0.0
        %8586 = vadd.xlane.f32.xlu0 %v8585
        %v8587 = vpop.xlane.xlu0 %8586
        %v8588 = vsel %vm408, %v8526, 0.0
        %8589 = vadd.xlane.f32.xlu0 %v8588
        %v8590 = vpop.xlane.xlu0 %8589
        %v8591 = vsel %vm408, %v8527, 0.0
        %8592 = vadd.xlane.f32.xlu0 %v8591
        %v8593 = vpop.xlane.xlu0 %8592
        %v8594 = vsel %vm408, %v8528, 0.0
        %8595 = vadd.xlane.f32.xlu0 %v8594
        %v8596 = vpop.xlane.xlu0 %8595
        %v8597 = vsel %vm408, %v8529, 0.0
        %8598 = vadd.xlane.f32.xlu0 %v8597
        %v8599 = vpop.xlane.xlu0 %8598
        %v8600 = vsel %vm408, %v8530, 0.0
        %8601 = vadd.xlane.f32.xlu0 %v8600
        %v8602 = vpop.xlane.xlu0 %8601
        %v8603 = vsel %vm408, %v8531, 0.0
        %8604 = vadd.xlane.f32.xlu0 %v8603
        %v8605 = vpop.xlane.xlu0 %8604
        %v8606 = vsel %vm408, %v8532, 0.0
        %8607 = vadd.xlane.f32.xlu0 %v8606
        %v8608 = vpop.xlane.xlu0 %8607
        %v8609 = vsel %vm408, %v8533, 0.0
        %8610 = vadd.xlane.f32.xlu0 %v8609
        %v8611 = vpop.xlane.xlu0 %8610
        %v8612 = vsel %vm408, %v8534, 0.0
        %8613 = vadd.xlane.f32.xlu0 %v8612
        %v8614 = vpop.xlane.xlu0 %8613
        %v8615 = vsel %vm408, %v8535, 0.0
        %8616 = vadd.xlane.f32.xlu0 %v8615
        %v8617 = vpop.xlane.xlu0 %8616
        %v8618 = vsel %vm408, %v8536, 0.0
        %8619 = vadd.xlane.f32.xlu0 %v8618
        %v8620 = vpop.xlane.xlu0 %8619
        %v8621 = vsel %vm408, %v8537, 0.0
        %8622 = vadd.xlane.f32.xlu0 %v8621
        %v8623 = vpop.xlane.xlu0 %8622
        %v8624 = vsel %vm408, %v8538, 0.0
        %8625 = vadd.xlane.f32.xlu0 %v8624
        %v8626 = vpop.xlane.xlu0 %8625
        %v8627 = vsel %vm408, %v8539, 0.0
        %8628 = vadd.xlane.f32.xlu0 %v8627
        %v8629 = vpop.xlane.xlu0 %8628
        %v8630 = vsel %vm408, %v8540, 0.0
        %8631 = vadd.xlane.f32.xlu0 %v8630
        %v8632 = vpop.xlane.xlu0 %8631
        %v8633 = vsel %vm408, %v8541, 0.0
        %8634 = vadd.xlane.f32.xlu0 %v8633
        %v8635 = vpop.xlane.xlu0 %8634
        %v8636 = vsel %vm408, %v8542, 0.0
        %8637 = vadd.xlane.f32.xlu0 %v8636
        %v8638 = vpop.xlane.xlu0 %8637
        %v8639 = vadd.f32 %v8545, %v8548
        %v8640 = vadd.f32 %v8639, %v8551
        %v8641 = vadd.f32 %v8640, %v8554
        %v8642 = vadd.f32 %v8641, %v8557
        %v8643 = vadd.f32 %v8642, %v8560
        %v8644 = vadd.f32 %v8643, %v8563
        %v8645 = vadd.f32 %v8644, %v8566
        %v8646 = vadd.f32 %v8645, %v8569
        %v8647 = vadd.f32 %v8646, %v8572
        %v8648 = vadd.f32 %v8647, %v8575
        %v8649 = vadd.f32 %v8648, %v8578
        %v8650 = vadd.f32 %v8649, %v8581
        %v8651 = vadd.f32 %v8650, %v8584
        %v8652 = vadd.f32 %v8651, %v8587
        %v8653 = vadd.f32 %v8652, %v8590
        %v8654 = vadd.f32 %v8653, %v8593
        %v8655 = vadd.f32 %v8654, %v8596
        %v8656 = vadd.f32 %v8655, %v8599
        %v8657 = vadd.f32 %v8656, %v8602
        %v8658 = vadd.f32 %v8657, %v8605
        %v8659 = vadd.f32 %v8658, %v8608
        %v8660 = vadd.f32 %v8659, %v8611
        %v8661 = vadd.f32 %v8660, %v8614
        %v8662 = vadd.f32 %v8661, %v8617
        %v8663 = vadd.f32 %v8662, %v8620
        %v8664 = vadd.f32 %v8663, %v8623
        %v8665 = vadd.f32 %v8664, %v8626
        %v8666 = vadd.f32 %v8665, %v8629
        %v8667 = vadd.f32 %v8666, %v8632
        %v8668 = vadd.f32 %v8667, %v8635
        %v8669 = vadd.f32 %v8668, %v8638
        %v8670 = vrot.slane %v8669, 4
        %v8671 = vadd.f32 %v8669, %v8670
        %v8672 = vrot.slane %v8671, 2
        %v8673 = vadd.f32 %v8671, %v8672
        %v8674 = vrot.slane %v8673, 1
        %v8675 = vadd.f32 %v8673, %v8674
        %v8676 = vadd.f32 %v6633, %v8675
        %v8677 = vsub.f32 %v8185, %v8217
        %v8678 = vsub.f32 %v8186, %v8218
        %v8679 = vsub.f32 %v8187, %v8219
        %v8680 = vsub.f32 %v8188, %v8220
        %v8681 = vsub.f32 %v8189, %v8221
        %v8682 = vsub.f32 %v8190, %v8222
        %v8683 = vsub.f32 %v8191, %v8223
        %v8684 = vsub.f32 %v8192, %v8224
        %v8685 = vsub.f32 %v8193, %v8225
        %v8686 = vsub.f32 %v8194, %v8226
        %v8687 = vsub.f32 %v8195, %v8227
        %v8688 = vsub.f32 %v8196, %v8228
        %v8689 = vsub.f32 %v8197, %v8229
        %v8690 = vsub.f32 %v8198, %v8230
        %v8691 = vsub.f32 %v8199, %v8231
        %v8692 = vsub.f32 %v8200, %v8232
        %v8693 = vsub.f32 %v8201, %v8233
        %v8694 = vsub.f32 %v8202, %v8234
        %v8695 = vsub.f32 %v8203, %v8235
        %v8696 = vsub.f32 %v8204, %v8236
        %v8697 = vsub.f32 %v8205, %v8237
        %v8698 = vsub.f32 %v8206, %v8238
        %v8699 = vsub.f32 %v8207, %v8239
        %v8700 = vsub.f32 %v8208, %v8240
        %v8701 = vsub.f32 %v8209, %v8241
        %v8702 = vsub.f32 %v8210, %v8242
        %v8703 = vsub.f32 %v8211, %v8243
        %v8704 = vsub.f32 %v8212, %v8244
        %v8705 = vsub.f32 %v8213, %v8245
        %v8706 = vsub.f32 %v8214, %v8246
        %v8707 = vsub.f32 %v8215, %v8247
        %v8708 = vsub.f32 %v8216, %v8248
        %v8709 = vmul.f32 %v8677, %v8677
        %v8710 = vmul.f32 %v8678, %v8678
        %v8711 = vmul.f32 %v8679, %v8679
        %v8712 = vmul.f32 %v8680, %v8680
        %v8713 = vmul.f32 %v8681, %v8681
        %v8714 = vmul.f32 %v8682, %v8682
        %v8715 = vmul.f32 %v8683, %v8683
        %v8716 = vmul.f32 %v8684, %v8684
        %v8717 = vmul.f32 %v8685, %v8685
        %v8718 = vmul.f32 %v8686, %v8686
        %v8719 = vmul.f32 %v8687, %v8687
        %v8720 = vmul.f32 %v8688, %v8688
        %v8721 = vmul.f32 %v8689, %v8689
        %v8722 = vmul.f32 %v8690, %v8690
        %v8723 = vmul.f32 %v8691, %v8691
        %v8724 = vmul.f32 %v8692, %v8692
        %v8725 = vmul.f32 %v8693, %v8693
        %v8726 = vmul.f32 %v8694, %v8694
        %v8727 = vmul.f32 %v8695, %v8695
        %v8728 = vmul.f32 %v8696, %v8696
        %v8729 = vmul.f32 %v8697, %v8697
        %v8730 = vmul.f32 %v8698, %v8698
        %v8731 = vmul.f32 %v8699, %v8699
        %v8732 = vmul.f32 %v8700, %v8700
        %v8733 = vmul.f32 %v8701, %v8701
        %v8734 = vmul.f32 %v8702, %v8702
        %v8735 = vmul.f32 %v8703, %v8703
        %v8736 = vmul.f32 %v8704, %v8704
        %v8737 = vmul.f32 %v8705, %v8705
        %v8738 = vmul.f32 %v8706, %v8706
        %v8739 = vmul.f32 %v8707, %v8707
        %v8740 = vmul.f32 %v8708, %v8708
        %v8741 = vsel %vm408, %v8709, 0.0
        %8742 = vadd.xlane.f32.xlu0 %v8741
        %v8743 = vpop.xlane.xlu0 %8742
        %v8744 = vsel %vm408, %v8710, 0.0
        %8745 = vadd.xlane.f32.xlu0 %v8744
        %v8746 = vpop.xlane.xlu0 %8745
        %v8747 = vsel %vm408, %v8711, 0.0
        %8748 = vadd.xlane.f32.xlu0 %v8747
        %v8749 = vpop.xlane.xlu0 %8748
        %v8750 = vsel %vm408, %v8712, 0.0
        %8751 = vadd.xlane.f32.xlu0 %v8750
        %v8752 = vpop.xlane.xlu0 %8751
        %v8753 = vsel %vm408, %v8713, 0.0
        %8754 = vadd.xlane.f32.xlu0 %v8753
        %v8755 = vpop.xlane.xlu0 %8754
        %v8756 = vsel %vm408, %v8714, 0.0
        %8757 = vadd.xlane.f32.xlu0 %v8756
        %v8758 = vpop.xlane.xlu0 %8757
        %v8759 = vsel %vm408, %v8715, 0.0
        %8760 = vadd.xlane.f32.xlu0 %v8759
        %v8761 = vpop.xlane.xlu0 %8760
        %v8762 = vsel %vm408, %v8716, 0.0
        %8763 = vadd.xlane.f32.xlu0 %v8762
        %v8764 = vpop.xlane.xlu0 %8763
        %v8765 = vsel %vm408, %v8717, 0.0
        %8766 = vadd.xlane.f32.xlu0 %v8765
        %v8767 = vpop.xlane.xlu0 %8766
        %v8768 = vsel %vm408, %v8718, 0.0
        %8769 = vadd.xlane.f32.xlu0 %v8768
        %v8770 = vpop.xlane.xlu0 %8769
        %v8771 = vsel %vm408, %v8719, 0.0
        %8772 = vadd.xlane.f32.xlu0 %v8771
        %v8773 = vpop.xlane.xlu0 %8772
        %v8774 = vsel %vm408, %v8720, 0.0
        %8775 = vadd.xlane.f32.xlu0 %v8774
        %v8776 = vpop.xlane.xlu0 %8775
        %v8777 = vsel %vm408, %v8721, 0.0
        %8778 = vadd.xlane.f32.xlu0 %v8777
        %v8779 = vpop.xlane.xlu0 %8778
        %v8780 = vsel %vm408, %v8722, 0.0
        %8781 = vadd.xlane.f32.xlu0 %v8780
        %v8782 = vpop.xlane.xlu0 %8781
        %v8783 = vsel %vm408, %v8723, 0.0
        %8784 = vadd.xlane.f32.xlu0 %v8783
        %v8785 = vpop.xlane.xlu0 %8784
        %v8786 = vsel %vm408, %v8724, 0.0
        %8787 = vadd.xlane.f32.xlu0 %v8786
        %v8788 = vpop.xlane.xlu0 %8787
        %v8789 = vsel %vm408, %v8725, 0.0
        %8790 = vadd.xlane.f32.xlu0 %v8789
        %v8791 = vpop.xlane.xlu0 %8790
        %v8792 = vsel %vm408, %v8726, 0.0
        %8793 = vadd.xlane.f32.xlu0 %v8792
        %v8794 = vpop.xlane.xlu0 %8793
        %v8795 = vsel %vm408, %v8727, 0.0
        %8796 = vadd.xlane.f32.xlu0 %v8795
        %v8797 = vpop.xlane.xlu0 %8796
        %v8798 = vsel %vm408, %v8728, 0.0
        %8799 = vadd.xlane.f32.xlu0 %v8798
        %v8800 = vpop.xlane.xlu0 %8799
        %v8801 = vsel %vm408, %v8729, 0.0
        %8802 = vadd.xlane.f32.xlu0 %v8801
        %v8803 = vpop.xlane.xlu0 %8802
        %v8804 = vsel %vm408, %v8730, 0.0
        %8805 = vadd.xlane.f32.xlu0 %v8804
        %v8806 = vpop.xlane.xlu0 %8805
        %v8807 = vsel %vm408, %v8731, 0.0
        %8808 = vadd.xlane.f32.xlu0 %v8807
        %v8809 = vpop.xlane.xlu0 %8808
        %v8810 = vsel %vm408, %v8732, 0.0
        %8811 = vadd.xlane.f32.xlu0 %v8810
        %v8812 = vpop.xlane.xlu0 %8811
        %v8813 = vsel %vm408, %v8733, 0.0
        %8814 = vadd.xlane.f32.xlu0 %v8813
        %v8815 = vpop.xlane.xlu0 %8814
        %v8816 = vsel %vm408, %v8734, 0.0
        %8817 = vadd.xlane.f32.xlu0 %v8816
        %v8818 = vpop.xlane.xlu0 %8817
        %v8819 = vsel %vm408, %v8735, 0.0
        %8820 = vadd.xlane.f32.xlu0 %v8819
        %v8821 = vpop.xlane.xlu0 %8820
        %v8822 = vsel %vm408, %v8736, 0.0
        %8823 = vadd.xlane.f32.xlu0 %v8822
        %v8824 = vpop.xlane.xlu0 %8823
        %v8825 = vsel %vm408, %v8737, 0.0
        %8826 = vadd.xlane.f32.xlu0 %v8825
        %v8827 = vpop.xlane.xlu0 %8826
        %v8828 = vsel %vm408, %v8738, 0.0
        %8829 = vadd.xlane.f32.xlu0 %v8828
        %v8830 = vpop.xlane.xlu0 %8829
        %v8831 = vsel %vm408, %v8739, 0.0
        %8832 = vadd.xlane.f32.xlu0 %v8831
        %v8833 = vpop.xlane.xlu0 %8832
        %v8834 = vsel %vm408, %v8740, 0.0
        %8835 = vadd.xlane.f32.xlu0 %v8834
        %v8836 = vpop.xlane.xlu0 %8835
        %v8837 = vadd.f32 %v8743, %v8746
        %v8838 = vadd.f32 %v8837, %v8749
        %v8839 = vadd.f32 %v8838, %v8752
        %v8840 = vadd.f32 %v8839, %v8755
        %v8841 = vadd.f32 %v8840, %v8758
        %v8842 = vadd.f32 %v8841, %v8761
        %v8843 = vadd.f32 %v8842, %v8764
        %v8844 = vadd.f32 %v8843, %v8767
        %v8845 = vadd.f32 %v8844, %v8770
        %v8846 = vadd.f32 %v8845, %v8773
        %v8847 = vadd.f32 %v8846, %v8776
        %v8848 = vadd.f32 %v8847, %v8779
        %v8849 = vadd.f32 %v8848, %v8782
        %v8850 = vadd.f32 %v8849, %v8785
        %v8851 = vadd.f32 %v8850, %v8788
        %v8852 = vadd.f32 %v8851, %v8791
        %v8853 = vadd.f32 %v8852, %v8794
        %v8854 = vadd.f32 %v8853, %v8797
        %v8855 = vadd.f32 %v8854, %v8800
        %v8856 = vadd.f32 %v8855, %v8803
        %v8857 = vadd.f32 %v8856, %v8806
        %v8858 = vadd.f32 %v8857, %v8809
        %v8859 = vadd.f32 %v8858, %v8812
        %v8860 = vadd.f32 %v8859, %v8815
        %v8861 = vadd.f32 %v8860, %v8818
        %v8862 = vadd.f32 %v8861, %v8821
        %v8863 = vadd.f32 %v8862, %v8824
        %v8864 = vadd.f32 %v8863, %v8827
        %v8865 = vadd.f32 %v8864, %v8830
        %v8866 = vadd.f32 %v8865, %v8833
        %v8867 = vadd.f32 %v8866, %v8836
        %v8868 = vrot.slane %v8867, 4
        %v8869 = vadd.f32 %v8867, %v8868
        %v8870 = vrot.slane %v8869, 2
        %v8871 = vadd.f32 %v8869, %v8870
        %v8872 = vrot.slane %v8871, 1
        %v8873 = vadd.f32 %v8871, %v8872
        %vm8874 = vcmask 7168
        %v8875 = vsel %vm8874, %v2056, %v4131
        %v8876 = vsel %vm8874, %v2057, %v4132
        %v8877 = vsel %vm8874, %v2058, %v4133
        %v8878 = vsel %vm8874, %v2059, %v4134
        %v8879 = vsel %vm8874, %v2060, %v4135
        %v8880 = vsel %vm8874, %v2061, %v4136
        %v8881 = vsel %vm8874, %v2062, %v4137
        %v8882 = vsel %vm8874, %v2063, %v4138
        %v8883 = vsel %vm8874, %v2064, %v4139
        %v8884 = vsel %vm8874, %v2065, %v4140
        %v8885 = vsel %vm8874, %v2066, %v4141
        %v8886 = vsel %vm8874, %v2067, %v4142
        %v8887 = vsel %vm8874, %v2068, %v4143
        %v8888 = vsel %vm8874, %v2069, %v4144
        %v8889 = vsel %vm8874, %v2070, %v4145
        %v8890 = vsel %vm8874, %v2071, %v4146
        %v8891 = vsel %vm8874, %v2072, %v4147
        %v8892 = vsel %vm8874, %v2073, %v4148
        %v8893 = vsel %vm8874, %v2074, %v4149
        %v8894 = vsel %vm8874, %v2075, %v4150
        %v8895 = vsel %vm8874, %v2076, %v4151
        %v8896 = vsel %vm8874, %v2077, %v4152
        %v8897 = vsel %vm8874, %v2078, %v4153
        %v8898 = vsel %vm8874, %v2079, %v4154
        %v8899 = vsel %vm8874, %v2080, %v4155
        %v8900 = vsel %vm8874, %v2081, %v4156
        %v8901 = vsel %vm8874, %v2082, %v4157
        %v8902 = vsel %vm8874, %v2083, %v4158
        %v8903 = vsel %vm8874, %v2084, %v4159
        %v8904 = vsel %vm8874, %v2085, %v4160
        %v8905 = vsel %vm8874, %v2086, %v4161
        %v8906 = vsel %vm8874, %v2087, %v4162
        %vm8907 = vcmask 15360
        %v8908 = vsel %vm8907, %v8875, %v6206
        %v8909 = vsel %vm8907, %v8876, %v6207
        %v8910 = vsel %vm8907, %v8877, %v6208
        %v8911 = vsel %vm8907, %v8878, %v6209
        %v8912 = vsel %vm8907, %v8879, %v6210
        %v8913 = vsel %vm8907, %v8880, %v6211
        %v8914 = vsel %vm8907, %v8881, %v6212
        %v8915 = vsel %vm8907, %v8882, %v6213
        %v8916 = vsel %vm8907, %v8883, %v6214
        %v8917 = vsel %vm8907, %v8884, %v6215
        %v8918 = vsel %vm8907, %v8885, %v6216
        %v8919 = vsel %vm8907, %v8886, %v6217
        %v8920 = vsel %vm8907, %v8887, %v6218
        %v8921 = vsel %vm8907, %v8888, %v6219
        %v8922 = vsel %vm8907, %v8889, %v6220
        %v8923 = vsel %vm8907, %v8890, %v6221
        %v8924 = vsel %vm8907, %v8891, %v6222
        %v8925 = vsel %vm8907, %v8892, %v6223
        %v8926 = vsel %vm8907, %v8893, %v6224
        %v8927 = vsel %vm8907, %v8894, %v6225
        %v8928 = vsel %vm8907, %v8895, %v6226
        %v8929 = vsel %vm8907, %v8896, %v6227
        %v8930 = vsel %vm8907, %v8897, %v6228
        %v8931 = vsel %vm8907, %v8898, %v6229
        %v8932 = vsel %vm8907, %v8899, %v6230
        %v8933 = vsel %vm8907, %v8900, %v6231
        %v8934 = vsel %vm8907, %v8901, %v6232
        %v8935 = vsel %vm8907, %v8902, %v6233
        %v8936 = vsel %vm8907, %v8903, %v6234
        %v8937 = vsel %vm8907, %v8904, %v6235
        %v8938 = vsel %vm8907, %v8905, %v6236
        %v8939 = vsel %vm8907, %v8906, %v6237
        %vm8940 = vcmask 23552
        %v8941 = vsel %vm8940, %v8908, %v8249
        %v8942 = vsel %vm8940, %v8909, %v8250
        %v8943 = vsel %vm8940, %v8910, %v8251
        %v8944 = vsel %vm8940, %v8911, %v8252
        %v8945 = vsel %vm8940, %v8912, %v8253
        %v8946 = vsel %vm8940, %v8913, %v8254
        %v8947 = vsel %vm8940, %v8914, %v8255
        %v8948 = vsel %vm8940, %v8915, %v8256
        %v8949 = vsel %vm8940, %v8916, %v8257
        %v8950 = vsel %vm8940, %v8917, %v8258
        %v8951 = vsel %vm8940, %v8918, %v8259
        %v8952 = vsel %vm8940, %v8919, %v8260
        %v8953 = vsel %vm8940, %v8920, %v8261
        %v8954 = vsel %vm8940, %v8921, %v8262
        %v8955 = vsel %vm8940, %v8922, %v8263
        %v8956 = vsel %vm8940, %v8923, %v8264
        %v8957 = vsel %vm8940, %v8924, %v8265
        %v8958 = vsel %vm8940, %v8925, %v8266
        %v8959 = vsel %vm8940, %v8926, %v8267
        %v8960 = vsel %vm8940, %v8927, %v8268
        %v8961 = vsel %vm8940, %v8928, %v8269
        %v8962 = vsel %vm8940, %v8929, %v8270
        %v8963 = vsel %vm8940, %v8930, %v8271
        %v8964 = vsel %vm8940, %v8931, %v8272
        %v8965 = vsel %vm8940, %v8932, %v8273
        %v8966 = vsel %vm8940, %v8933, %v8274
        %v8967 = vsel %vm8940, %v8934, %v8275
        %v8968 = vsel %vm8940, %v8935, %v8276
        %v8969 = vsel %vm8940, %v8936, %v8277
        %v8970 = vsel %vm8940, %v8937, %v8278
        %v8971 = vsel %vm8940, %v8938, %v8279
        %v8972 = vsel %vm8940, %v8939, %v8280
        %vm8973 = vcmask 31744
        %v8974 = vsel %vm8973, %v8941, 0.0
        %v8975 = vsel %vm8973, %v8942, 0.0
        %v8976 = vsel %vm8973, %v8943, 0.0
        %v8977 = vsel %vm8973, %v8944, 0.0
        %v8978 = vsel %vm8973, %v8945, 0.0
        %v8979 = vsel %vm8973, %v8946, 0.0
        %v8980 = vsel %vm8973, %v8947, 0.0
        %v8981 = vsel %vm8973, %v8948, 0.0
        %v8982 = vsel %vm8973, %v8949, 0.0
        %v8983 = vsel %vm8973, %v8950, 0.0
        %v8984 = vsel %vm8973, %v8951, 0.0
        %v8985 = vsel %vm8973, %v8952, 0.0
        %v8986 = vsel %vm8973, %v8953, 0.0
        %v8987 = vsel %vm8973, %v8954, 0.0
        %v8988 = vsel %vm8973, %v8955, 0.0
        %v8989 = vsel %vm8973, %v8956, 0.0
        %v8990 = vsel %vm8973, %v8957, 0.0
        %v8991 = vsel %vm8973, %v8958, 0.0
        %v8992 = vsel %vm8973, %v8959, 0.0
        %v8993 = vsel %vm8973, %v8960, 0.0
        %v8994 = vsel %vm8973, %v8961, 0.0
        %v8995 = vsel %vm8973, %v8962, 0.0
        %v8996 = vsel %vm8973, %v8963, 0.0
        %v8997 = vsel %vm8973, %v8964, 0.0
        %v8998 = vsel %vm8973, %v8965, 0.0
        %v8999 = vsel %vm8973, %v8966, 0.0
        %v9000 = vsel %vm8973, %v8967, 0.0
        %v9001 = vsel %vm8973, %v8968, 0.0
        %v9002 = vsel %vm8973, %v8969, 0.0
        %v9003 = vsel %vm8973, %v8970, 0.0
        %v9004 = vsel %vm8973, %v8971, 0.0
        %v9005 = vsel %vm8973, %v8972, 0.0
        %9006 = vxpose.xlu0.b32.start [1/16] %v8974, 128
        %9007 = vxpose.xlu0.b32.cont [2/16] %v8975, 128
        %9008 = vxpose.xlu0.b32.cont [3/16] %v8976, 128
        %9009 = vxpose.xlu0.b32.cont [4/16] %v8977, 128
        %9010 = vxpose.xlu0.b32.cont [5/16] %v8978, 128
        %9011 = vxpose.xlu0.b32.cont [6/16] %v8979, 128
        %9012 = vxpose.xlu0.b32.cont [7/16] %v8980, 128
        %9013 = vxpose.xlu0.b32.cont [8/16] %v8981, 128
        %9014 = vxpose.xlu0.b32.cont [9/16] %v8982, 128
        %9015 = vxpose.xlu0.b32.cont [10/16] %v8983, 128
        %9016 = vxpose.xlu0.b32.cont [11/16] %v8984, 128
        %9017 = vxpose.xlu0.b32.cont [12/16] %v8985, 128
        %9018 = vxpose.xlu0.b32.cont [13/16] %v8986, 128
        %9019 = vxpose.xlu0.b32.cont [14/16] %v8987, 128
        %9020 = vxpose.xlu0.b32.cont [15/16] %v8988, 128
        %9021 = vxpose.xlu0.b32.end [16/16] %v8989, 128
        %v9022 = vpop.trf.xlu0
        %v9023 = vpop.trf.xlu0
        %v9024 = vpop.trf.xlu0
        %v9025 = vpop.trf.xlu0
        %v9026 = vpop.trf.xlu0
        %v9027 = vpop.trf.xlu0
        %v9028 = vpop.trf.xlu0
        %v9029 = vpop.trf.xlu0
        %v9030 = vpop.trf.xlu0
        %v9031 = vpop.trf.xlu0
        %v9032 = vpop.trf.xlu0
        %v9033 = vpop.trf.xlu0
        %v9034 = vpop.trf.xlu0
        %v9035 = vpop.trf.xlu0
        %v9036 = vpop.trf.xlu0
        %v9037 = vpop.trf.xlu0
        %9038 = vxpose.xlu0.b32.start [1/16] %v8990, 128
        %9039 = vxpose.xlu0.b32.cont [2/16] %v8991, 128
        %9040 = vxpose.xlu0.b32.cont [3/16] %v8992, 128
        %9041 = vxpose.xlu0.b32.cont [4/16] %v8993, 128
        %9042 = vxpose.xlu0.b32.cont [5/16] %v8994, 128
        %9043 = vxpose.xlu0.b32.cont [6/16] %v8995, 128
        %9044 = vxpose.xlu0.b32.cont [7/16] %v8996, 128
        %9045 = vxpose.xlu0.b32.cont [8/16] %v8997, 128
        %9046 = vxpose.xlu0.b32.cont [9/16] %v8998, 128
        %9047 = vxpose.xlu0.b32.cont [10/16] %v8999, 128
        %9048 = vxpose.xlu0.b32.cont [11/16] %v9000, 128
        %9049 = vxpose.xlu0.b32.cont [12/16] %v9001, 128
        %9050 = vxpose.xlu0.b32.cont [13/16] %v9002, 128
        %9051 = vxpose.xlu0.b32.cont [14/16] %v9003, 128
        %9052 = vxpose.xlu0.b32.cont [15/16] %v9004, 128
        %9053 = vxpose.xlu0.b32.end [16/16] %v9005, 128
        %v9054 = vpop.trf.xlu0
        %v9055 = vpop.trf.xlu0
        %v9056 = vpop.trf.xlu0
        %v9057 = vpop.trf.xlu0
        %v9058 = vpop.trf.xlu0
        %v9059 = vpop.trf.xlu0
        %v9060 = vpop.trf.xlu0
        %v9061 = vpop.trf.xlu0
        %v9062 = vpop.trf.xlu0
        %v9063 = vpop.trf.xlu0
        %v9064 = vpop.trf.xlu0
        %v9065 = vpop.trf.xlu0
        %v9066 = vpop.trf.xlu0
        %v9067 = vpop.trf.xlu0
        %v9068 = vpop.trf.xlu0
        %v9069 = vpop.trf.xlu0
        %v9070 = vcvt.f32.s32.to.zero.pseudo %v9022
        %v9071 = vcvt.f32.s32.to.zero.pseudo %v9054
        %v9072 = vcombine.low %v9070, %v9071
        %9073 = vst [vmem:[%s195] sm:$0xff] %v9072
        %vm9074 = vcmp.eq.s32.totalorder %v243, 0
        %vm9075 = vcmp.eq.s32.totalorder %v1222, 0
        %vm9076 = vmand %vm9074, %vm9075
        %vm9077 = vcmp.eq.s32.totalorder %v1222, 1
        %vm9078 = vmand %vm9074, %vm9077
        %vm9079 = vcmp.eq.s32.totalorder %v1222, 2
        %vm9080 = vmand %vm9074, %vm9079
        %v9081 = vsel %vm9080, %v8873, 0.0
        %v9082 = vsel %vm9078, %v8676, %v9081
        %v9083 = vsel %vm9076, %v8510, %v9082
        %9084 = vst [vmem:[%s202] sm:$0xff] %v9083
        %s9085 = sand.u32 %s98, 1
        %s9086 = scalar_lea.sflag [#allocation3], %s9085
        %s9087 = sand.u32 %s98, 1
        %s9088 = smul.addr %s9087, 8
        %s9089 = scalar_lea.vmem [#allocation2], %s9088
        %s9090 = sand.u32 %s124, 1
        %s9091 = scalar_lea.sflag [#allocation5], %s9090
        %s9092 = sand.u32 %s124, 1
        %s9093 = smul.addr %s9092, 8
        %s9094 = scalar_lea.vmem [#allocation4], %s9093
        // Predicated region
        $region33: #{tpu_custom_call.1} parent=31 // pred_check
          %p9095 = pneg %p108
        $region34: #{tpu_custom_call.1} parent=31 // pred_check_branch
          %9097 = sbr.rel (%p9095) target = $region36
        $region35: #{tpu_custom_call.1} parent=31 // pred_region
          %s9098 = smul.u32 2, %s22
          %s9100 = ssub.s32 128, 128
          %9101 = vsyncadd %s9086, %s9100
          %s9102 = smul.addr %s9098, 64
          %s9103 = scalar_lea.hbm %s3, %s9102
          %s9105 = sshll.u32 %s9089, 4
          %s9106 = int_to_ptr.vmem [resolvable:$true] %s9105
          %9108 = dma.vmem_to_hbm [thread:$0]  %s9106, 128, %s9103, %s9086
        $region36: #{tpu_custom_call.1} parent=31 // pred_fallthru
          _
        // Predicated region
        $region37: #{tpu_custom_call.1} parent=31 // pred_check
          %p9109 = pneg %p134
        $region38: #{tpu_custom_call.1} parent=31 // pred_check_branch
          %9111 = sbr.rel (%p9109) target = $region40
        $region39: #{tpu_custom_call.1} parent=31 // pred_region
          %s9113 = ssub.s32 128, 128
          %9114 = vsyncadd %s9091, %s9113
          %s9115 = smul.addr %s22, 128
          %s9116 = scalar_lea.hbm %s4, %s9115
          %s9118 = sshll.u32 %s9094, 4
          %s9119 = int_to_ptr.vmem [resolvable:$true] %s9118
          %9121 = dma.vmem_to_hbm [thread:$0]  %s9119, 128, %s9116, %s9091
        $region40: #{tpu_custom_call.1} parent=31 // pred_fallthru
          _
      $region32: #{tpu_custom_call.1} parent=5 // pred_fallthru
        _
      %p9122 = scmp.le.s32.totalorder 2, %s17
      // Predicated region
      $region41: #{tpu_custom_call.1} parent=5 // pred_check
        %p9123 = pneg %p9122
      $region42: #{tpu_custom_call.1} parent=5 // pred_check_branch
        %9125 = sbr.rel (%p9123) target = $region44
      $region43: #{tpu_custom_call.1} parent=5 // pred_region
        %s9126 = ssub.s32 %s17, 2
        // Predicated region
        $region45: #{tpu_custom_call.1} parent=43 // pred_check
          %p9127 = pneg %p114
        $region46: #{tpu_custom_call.1} parent=43 // pred_check_branch
          %9129 = sbr.rel (%p9127) target = $region48
        $region47: #{tpu_custom_call.1} parent=43 // pred_region
          %s9130 = sand.u32 %s99, 1
          %s9131 = scalar_lea.sflag [#allocation3], %s9130
          %s9132 = sand.u32 %s99, 1
          %s9133 = smul.addr %s9132, 8
          %s9134 = scalar_lea.vmem [#allocation2], %s9133
          %9135 = dma.done %s9131, 128
        $region48: #{tpu_custom_call.1} parent=43 // pred_fallthru
          _
        // Predicated region
        $region49: #{tpu_custom_call.1} parent=43 // pred_check
          %p9136 = pneg %p140
        $region50: #{tpu_custom_call.1} parent=43 // pred_check_branch
          %9138 = sbr.rel (%p9136) target = $region52
        $region51: #{tpu_custom_call.1} parent=43 // pred_region
          %s9139 = sand.u32 %s125, 1
          %s9140 = scalar_lea.sflag [#allocation5], %s9139
          %s9141 = sand.u32 %s125, 1
          %s9142 = smul.addr %s9141, 8
          %s9143 = scalar_lea.vmem [#allocation4], %s9142
          %9144 = dma.done %s9140, 128
        $region52: #{tpu_custom_call.1} parent=43 // pred_fallthru
          _
      $region44: #{tpu_custom_call.1} parent=5 // pred_fallthru
        _
    $region6: #{tpu_custom_call.1} parent=1 // loop_footer
      %s21 = sadd.s32 1, %s17
    $region7: #{tpu_custom_call.1} parent=1 // loop_footer_branch
      %16 = sbr.rel target = $region3
    $region8: #{tpu_custom_call.1} parent=1 // loop_exit
      _
    %9145 = vsyncpa [#allocation3], 1
    %s9146 = scalar_lea.sflag [#allocation3], 1
    %9147 = vsyncpa %s9146, 1
    %9148 = vsyncpa [#allocation5], 1
    %s9149 = scalar_lea.sflag [#allocation5], 1
    %9150 = vsyncpa %s9149, 1

</llo_original>
